<compile_context>
chip_gen: v5e
topology: v5e:2x2
jax: 0.10.0
libtpu: 0.0.40
codegen_flags: <defaults>
</compile_context>

<pallas_src>
import jax
import jax.numpy as jnp
import numpy as np
from jax import lax
from jax.experimental import pallas as pl
from jax.experimental.pallas import tpu as pltpu

EPS = 1e-5


def _vmem_capacity_bytes():
    try:
        info = pltpu.get_tpu_info()
        cap = int(getattr(info, "vmem_capacity_bytes", 0))
        if cap > 0:
            return cap
    except Exception:
        pass
    return 64 * 1024 * 1024          # conservative fallback (v7x-sized VMEM)


_VMEM_CAP = _vmem_capacity_bytes()
_TILE_BUDGET = int(0.40 * _VMEM_CAP)                          # for picking (tc, tn)
_VMEM_LIMIT = max(48 * 1024 * 1024, int(0.75 * _VMEM_CAP))    # scoped-VMEM request


# ---------------------------------------------------------------------------
# Tap tables.  A "tap" = (input_block, sy, sx, weight_index): read the input
# block shifted by sy rows / sx cols (pre-upsample block coordinates), matmul
# against weight tap `weight_index`, mask rows whose source pixel is outside
# the image (mask AFTER the dot), accumulate into one output block.
# ---------------------------------------------------------------------------
def _taps_std(kh, kw):
    """Plain (kh x kw) conv, standard layout in and out (1 block each)."""
    taps = []
    for dy in range(-(kh // 2), kh // 2 + 1):
        for dx in range(-(kw // 2), kw // 2 + 1):
            taps.append((0, dy, dx, (dy + kh // 2) * kw + (dx + kw // 2)))
    return [taps]


def _taps_up5():
    """Unpool(stride 2) + 5x5 conv decomposed by output parity.
    Input: standard layout at pre-unpool resolution (1 block).
    Output: parity-blocked (4 blocks, p = 2*py + px) at 2x resolution."""
    table = []
    for py in (0, 1):
        for px in (0, 1):
            taps = []
            for dy in range(-2, 3):
                if (dy - py) % 2:
                    continue
                for dx in range(-2, 3):
                    if (dx - px) % 2:
                        continue
                    taps.append((0, (py + dy) // 2, (px + dx) // 2,
                                 (dy + 2) * 5 + (dx + 2)))
            table.append(taps)
    return table


def _taps_par3():
    """3x3 conv on a 2x-resolution image stored parity-blocked (4 blocks in / out)."""
    table = []
    for qy in (0, 1):
        for qx in (0, 1):
            taps = []
            for dy in (-1, 0, 1):
                for dx in (-1, 0, 1):
                    py, px = (qy + dy) % 2, (qx + dx) % 2
                    sy, sx = (qy + dy - py) // 2, (qx + dx - px) // 2
                    taps.append((2 * py + px, sy, sx, (dy + 1) * 3 + (dx + 1)))
            table.append(taps)
    return table


def _mode_taps_pad(mode, W, kh=None, kw=None):
    if mode == "std":
        table = _taps_std(kh, kw)
    elif mode == "up5":
        table = _taps_up5()
    elif mode == "par3":
        table = _taps_par3()
    else:
        raise ValueError(mode)
    pad = 0
    for taps in table:
        for _, sy, sx, _ in taps:
            pad = max(pad, abs(sy) * W + abs(sx))
    return table, pad


def _pad_rows(a, pad):
    # Row halo so every shifted tap window stays in-bounds (content is masked anyway).
    # TODO(synk): have producers write into pre-padded buffers to drop this copy.
    if pad == 0:
        return a
    return jnp.pad(a, ((0, 0), (pad, pad), (0, 0)))


# ---------------------------------------------------------------------------
# Fused  conv (std / parity-decomposed 5x5 / parity-space 3x3, stride 1, no bias)
#        + BatchNorm(train)  [+ residual add] [+ ReLU]
# grid = (Cout blocks -> "parallel", Cin blocks -> "arbitrary" reduction, last).
# ---------------------------------------------------------------------------
def _make_conv_kernel(*, taps, pad, H, W, R, kb, bn, relu, has_res, eps):
    P_out = len(taps)
    need_mask = any(sy != 0 or sx != 0 for blk in taps for _, sy, sx, _ in blk)

    def kernel(*refs):
        refs = list(refs)
        a_ref = refs.pop(0)                       # (P_in, R + 2*pad, tc)   bf16
        w_ref = refs.pop(0)                       # (n_w, tc, tn)           bf16
        g_ref = refs.pop(0) if bn else None       # (1, tn) f32
        b_ref = refs.pop(0) if bn else None       # (1, tn) f32
        res_ref = refs.pop(0) if has_res else None
        o_ref = refs.pop(0)                       # (P_out, R, tn)
        acc_ref = refs.pop(0) if kb > 1 else None  # (P_out, R, tn) f32 scratch

        if need_mask:
            r = lax.broadcasted_iota(jnp.int32, (R, 1), 0)
            w_idx = r % W
            h_idx = (r // W) % H

        # Partial conv for this Cin block: one f32 (R, tn) slab per output block.
        parts = []
        for p_out in range(P_out):
            part = None
            for p_in, sy, sx, widx in taps[p_out]:
                shift = sy * W + sx
                tap = a_ref[p_in, pad + shift: pad + shift + R, :]
                d = jnp.dot(tap, w_ref[widx], preferred_element_type=jnp.float32)
                if sy != 0 or sx != 0:
                    valid = ((w_idx + sx >= 0) & (w_idx + sx < W) &
                             (h_idx + sy >= 0) & (h_idx + sy < H))
                    d = jnp.where(valid, d, 0.0)          # mask AFTER the dot
                part = d if part is None else part + d
            parts.append(part)

        def finish(ys):
            if bn:
                inv_n = 1.0 / (P_out * R)
                s1 = ys[0].sum(axis=0, keepdims=True)
                s2 = (ys[0] * ys[0]).sum(axis=0, keepdims=True)
                for yp in ys[1:]:
                    s1 = s1 + yp.sum(axis=0, keepdims=True)
                    s2 = s2 + (yp * yp).sum(axis=0, keepdims=True)
                mean = s1 * inv_n
                var = s2 * inv_n - mean * mean            # single-pass biased variance
                scale = g_ref[...] * lax.rsqrt(var + eps)
                bias = b_ref[...] - mean * scale
            for p in range(P_out):
                yp = ys[p]
                if bn:
                    yp = yp * scale + bias                # folded affine: one FMA/elem
                if has_res:
                    yp = yp + res_ref[p].astype(jnp.float32)
                if relu:
                    yp = jnp.maximum(yp, 0.0)
                o_ref[p] = yp.astype(o_ref.dtype)

        if kb == 1:
            finish(parts)                                 # no accumulator scratch
        else:
            k = pl.program_id(1)

            @pl.when(k == 0)
            def _():
                for p in range(P_out):
                    acc_ref[p] = parts[p]

            @pl.when(k > 0)
            def _():
                for p in range(P_out):
                    acc_ref[p] = acc_ref[p] + parts[p]

            @pl.when(k == kb - 1)
            def _():
                finish([acc_ref[p] for p in range(P_out)])

    return kernel


def conv_bn_pallas(a_pad, wmat, g, b, *, taps, pad, H, W, relu,
                   residual=None, out_dtype=jnp.bfloat16, eps=EPS):
    """a_pad: (P_in, R + 2*pad, Cin) activation with row halo.  wmat: (kh*kw, Cin, Cout)
    bf16.  g/b: (1, Cout) f32 or None.  residual: (P_out, R, Cout) or None.
    Returns (P_out, R, Cout)."""
    P_in, rows_in, Cin = a_pad.shape
    R = rows_in - 2 * pad
    n_w, cin_w, Cout = wmat.shape
    assert cin_w == Cin
    assert all(t[3] < n_w and t[0] < P_in for blk in taps for t in blk)
    P_out = len(taps)
    bn = g is not None
    has_res = residual is not None
    out_b = np.dtype(out_dtype).itemsize

    # Pick the biggest (tc, tn) that fits the per-generation VMEM budget.
    def est(tc, tn):
        v = 2 * n_w * tc * tn * wmat.dtype.itemsize            # weight double buffer
        v += 2 * P_in * rows_in * tc * a_pad.dtype.itemsize    # activation double buffer
        v += 2 * P_out * R * tn * out_b                        # output block
        if has_res:
            v += 2 * P_out * R * tn * residual.dtype.itemsize
        if Cin // tc > 1:
            v += P_out * R * tn * 4                            # f32 accumulator scratch
        return v

    tc, tn = Cin, Cout
    while est(tc, tn) > _TILE_BUDGET:
        if tc >= tn and tc > 128:
            tc //= 2
        elif tn > 128:
            tn //= 2
        elif tc > 128:
            tc //= 2
        else:
            break
    kb = Cin // tc
    jb = Cout // tn

    kernel = _make_conv_kernel(taps=taps, pad=pad, H=H, W=W, R=R, kb=kb,
                               bn=bn, relu=relu, has_res=has_res, eps=eps)

    in_specs = [pl.BlockSpec((P_in, rows_in, tc), lambda j, k: (0, 0, k)),
                pl.BlockSpec((n_w, tc, tn), lambda j, k: (0, k, j))]
    args = [a_pad, wmat]
    if bn:
        in_specs += [pl.BlockSpec((1, tn), lambda j, k: (0, j)),
                     pl.BlockSpec((1, tn), lambda j, k: (0, j))]
        args += [g, b]
    if has_res:
        in_specs += [pl.BlockSpec((P_out, R, tn), lambda j, k: (0, 0, j))]
        args += [residual]

    total_taps = sum(len(t) for t in taps)
    cost = pl.CostEstimate(
        flops=int(2 * R * Cin * Cout * total_taps),
        transcendentals=int(Cout if bn else 0),
        bytes_accessed=int(n_w * Cin * Cout * wmat.dtype.itemsize
                           + jb * P_in * rows_in * Cin * a_pad.dtype.itemsize
                           + P_out * R * Cout * out_b),
    )

    return pl.pallas_call(
        kernel,
        out_shape=jax.ShapeDtypeStruct((P_out, R, Cout), out_dtype),
        grid=(jb, kb),
        in_specs=in_specs,
        out_specs=pl.BlockSpec((P_out, R, tn), lambda j, k: (0, 0, j)),
        scratch_shapes=([pltpu.VMEM((P_out, R, tn), jnp.float32)] if kb > 1 else []),
        compiler_params=pltpu.CompilerParams(
            dimension_semantics=("parallel", "arbitrary"),
            vmem_limit_bytes=_VMEM_LIMIT),
        cost_estimate=cost,
    )(*args)


# ---------------------------------------------------------------------------
# Bilinear resize (align_corners=True) as two MXU matmuls, lane-dense-first.
# ---------------------------------------------------------------------------
def _make_bilinear_kernel(N):
    def kernel(y_ref, rh_ref, rwt_ref, o_ref):
        rh = rh_ref[...]                        # (Ho, H)
        rwt = rwt_ref[...]                      # (W, Wo)  Wo = 128 lanes
        for n in range(N):
            t = jnp.dot(y_ref[n], rwt, preferred_element_type=jnp.float32)   # (H, Wo)
            o_ref[n] = jnp.dot(rh, t, preferred_element_type=jnp.float32
                               ).astype(o_ref.dtype)                         # (Ho, Wo)
    return kernel


def _interp_matrix(out_size, in_size):
    """Interpolation matrix (out, in) for 1-D bilinear resize, align_corners=True."""
    i = jnp.arange(out_size, dtype=jnp.float32)
    src = i * (in_size - 1) / max(out_size - 1, 1)
    lo = jnp.clip(jnp.floor(src).astype(jnp.int32), 0, in_size - 2)
    frac = src - lo.astype(jnp.float32)
    return (jax.nn.one_hot(lo, in_size, dtype=jnp.float32) * (1.0 - frac)[:, None]
            + jax.nn.one_hot(lo + 1, in_size, dtype=jnp.float32) * frac[:, None])


def bilinear_pallas(y, output_size):
    """y: (N, H, W) -> (N, Ho, Wo), bilinear with align_corners=True."""
    N, H, W = y.shape
    Ho, Wo = output_size
    rh = _interp_matrix(Ho, H)            # (Ho, H)
    rwt = _interp_matrix(Wo, W).T         # (W, Wo)
    return pl.pallas_call(
        _make_bilinear_kernel(N),
        out_shape=jax.ShapeDtypeStruct((N, Ho, Wo), jnp.float32),
        grid=(1,),
        in_specs=[pl.BlockSpec((N, H, W), lambda i: (0, 0, 0)),
                  pl.BlockSpec((Ho, H), lambda i: (0, 0)),
                  pl.BlockSpec((W, Wo), lambda i: (0, 0))],
        out_specs=pl.BlockSpec((N, Ho, Wo), lambda i: (0, 0, 0)),
        compiler_params=pltpu.CompilerParams(vmem_limit_bytes=_VMEM_LIMIT),
    )(y, rh, rwt)


# ---------------------------------------------------------------------------
# Full UpProj forward.
# ---------------------------------------------------------------------------
def _deinterleave(xp, N, H, W):
    """Parity-blocked (4, N*H*W, C) -> standard flat (1, N*2H*2W, C)."""
    C = xp.shape[-1]
    x = xp.reshape(2, 2, N, H, W, C).transpose(2, 3, 0, 4, 1, 5)
    return x.reshape(1, N * 2 * H * 2 * W, C)


def upproj_forward(x_nchw, params, output_size, eps=EPS):
    N, C, H, W = x_nchw.shape
    a = jnp.transpose(x_nchw, (0, 2, 3, 1)).reshape(1, N * H * W, C).astype(jnp.bfloat16)

    # Decoder stem: conv2 (1x1, 2048->1024) + bn2 (no ReLU in the reference module)
    taps, pad = _mode_taps_pad("std", W, kh=1, kw=1)
    a = conv_bn_pallas(a, params['conv2_w'], params['bn2_g'], params['bn2_b'],
                       taps=taps, pad=pad, H=H, W=W, relu=False, eps=eps)

    n_layers = len(params['layers'])
    for li, lp in enumerate(params['layers']):
        up_taps, up_pad = _mode_taps_pad("up5", W)
        p3_taps, p3_pad = _mode_taps_pad("par3", W)
        a_pad = _pad_rows(a, up_pad)                 # one shared halo for u1 and bt
        # upper branch: Unpool+5x5 conv (parity-decomposed) + bn + relu
        u = conv_bn_pallas(a_pad, lp['u1_w'], lp['u1_g'], lp['u1_b'],
                           taps=up_taps, pad=up_pad, H=H, W=W, relu=True, eps=eps)
        # upper branch: 3x3 conv (parity space) + bn
        u = conv_bn_pallas(_pad_rows(u, p3_pad), lp['u2_w'], lp['u2_g'], lp['u2_b'],
                           taps=p3_taps, pad=p3_pad, H=H, W=W, relu=False, eps=eps)
        # bottom branch: Unpool+5x5 conv + bn, fused with (x1 + x2) residual and ReLU
        a = conv_bn_pallas(a_pad, lp['bt_w'], lp['bt_g'], lp['bt_b'],
                           taps=up_taps, pad=up_pad, H=H, W=W, relu=True,
                           residual=u, eps=eps)
        # `a` now holds the (2H x 2W) image parity-blocked over an (H, W) grid.
        if li + 1 < n_layers:
            a = _deinterleave(a, N, H, W)   # TODO(synk): fold into the next up5 kernel
            H, W = 2 * H, 2 * W

    # conv3 (3x3, 64->1, bias=False) runs in parity space on layer-4's parity output
    p3_taps, p3_pad = _mode_taps_pad("par3", W)
    y = conv_bn_pallas(_pad_rows(a, p3_pad), params['conv3_w'], None, None,
                       taps=p3_taps, pad=p3_pad, H=H, W=W, relu=False,
                       out_dtype=jnp.float32, eps=eps)               # (4, N*H*W, 1)
    y_img = y.reshape(2, 2, N, H, W).transpose(2, 3, 0, 4, 1).reshape(N, 2 * H, 2 * W)

    out = bilinear_pallas(y_img, output_size)                        # (N, Ho, Wo)
    return out[:, None, :, :]                                        # NCHW, C=1


# ---------------------------------------------------------------------------
# Pure-JAX f32 reference (same train-mode BN semantics, same bf16 weight values).
# ---------------------------------------------------------------------------
def upproj_reference(x_nchw, params, output_size, eps=EPS):
    x = jnp.transpose(x_nchw, (0, 2, 3, 1))  # NHWC

    def bn(y, g, b):
        m = jnp.mean(y, axis=(0, 1, 2), keepdims=True)
        v = jnp.mean((y - m) ** 2, axis=(0, 1, 2), keepdims=True)
        return (y - m) * lax.rsqrt(v + eps) * g.reshape(1, 1, 1, -1) + b.reshape(1, 1, 1, -1)

    def conv(y, w, kh, kw):
        w_hwio = w.astype(jnp.float32).reshape(kh, kw, w.shape[1], w.shape[2])
        return lax.conv_general_dilated(
            y, w_hwio, window_strides=(1, 1),
            padding=((kh // 2, kh // 2), (kw // 2, kw // 2)),
            dimension_numbers=('NHWC', 'HWIO', 'NHWC'))

    def unpool(y):
        return lax.pad(y, jnp.array(0.0, y.dtype),
                       ((0, 0, 0), (0, 1, 1), (0, 1, 1), (0, 0, 0)))

    h = bn(conv(x, params['conv2_w'], 1, 1), params['bn2_g'], params['bn2_b'])
    for lp in params['layers']:
        y = unpool(h)
        u = jax.nn.relu(bn(conv(y, lp['u1_w'], 5, 5), lp['u1_g'], lp['u1_b']))
        u = bn(conv(u, lp['u2_w'], 3, 3), lp['u2_g'], lp['u2_b'])
        bt = bn(conv(y, lp['bt_w'], 5, 5), lp['bt_g'], lp['bt_b'])
        h = jax.nn.relu(u + bt)
    yimg = conv(h, params['conv3_w'], 3, 3)[..., 0]   # (N, H, W)
    Ho, Wo = output_size
    rh = _interp_matrix(Ho, yimg.shape[1])
    rw = _interp_matrix(Wo, yimg.shape[2])
    out = jnp.einsum('oh,nhw,pw->nop', rh, yimg, rw)
    return out[:, None, :, :]


# ---------------------------------------------------------------------------
# Deterministic synthetic parameters, already in kernel layout (bf16 conv weights).
# ---------------------------------------------------------------------------
def make_params(key):
    keys = iter(jax.random.split(key, 48))

    def conv_w(cin, cout, kh, kw):
        fan_in = kh * kw * cin
        w = jax.random.normal(next(keys), (kh * kw, cin, cout), jnp.float32) / jnp.sqrt(fan_in)
        return w.astype(jnp.bfloat16)

    def bn_p(c):
        g = 1.0 + 0.1 * jax.random.normal(next(keys), (1, c), jnp.float32)
        b = 0.1 * jax.random.normal(next(keys), (1, c), jnp.float32)
        return g, b

    p = {'conv2_w': conv_w(2048, 1024, 1, 1)}
    p['bn2_g'], p['bn2_b'] = bn_p(1024)
    layers = []
    cin = 1024
    for _ in range(4):
        cout = cin // 2
        lp = {'u1_w': conv_w(cin, cout, 5, 5)}
        lp['u1_g'], lp['u1_b'] = bn_p(cout)
        lp['u2_w'] = conv_w(cout, cout, 3, 3)
        lp['u2_g'], lp['u2_b'] = bn_p(cout)
        lp['bt_w'] = conv_w(cin, cout, 5, 5)
        lp['bt_g'], lp['bt_b'] = bn_p(cout)
        layers.append(lp)
        cin = cout
    p['layers'] = layers
    p['conv3_w'] = conv_w(64, 1, 3, 3)
    return p


if __name__ == "__main__":
    key = jax.random.PRNGKey(0)
    k_param, k_x = jax.random.split(key)

    # Channel counts are fixed by the module (2048 -> 1024 -> ... -> 64 -> 1);
    # tiny spatial extent (2x2 -> 32x32 feature map) keeps the demo small.
    N, C_IN, H0, W0 = 2, 2048, 2, 2
    OUTPUT_SIZE = (96, 128)                  # lane-dense final width (128 lanes)

    params = make_params(k_param)
    x = jax.random.normal(k_x, (N, C_IN, H0, W0), jnp.float32)   # NCHW like PyTorch

    out = jax.block_until_ready(upproj_forward(x, params, OUTPUT_SIZE))
    assert out.shape == (N, 1) + OUTPUT_SIZE, out.shape

    ref = jax.block_until_ready(upproj_reference(x, params, OUTPUT_SIZE))
    denom = float(jnp.max(jnp.abs(ref))) + 1e-6
    rel_err = float(jnp.max(jnp.abs(out - ref))) / denom
    # Tolerance covers bf16 storage of inter-layer activations vs the f32 reference
    # path (both sides use bf16 MXU multiplicands; accumulation/BN stay f32).
    assert rel_err < 3e-2, f"mismatch vs reference: rel_err={rel_err}"

    print("KERNEL_OK")
</pallas_src>

<mosaic_0001>
module attributes {stable_mosaic.version = 11 : i64} {
  func.func @kernel(%arg0: i32, %arg1: i32, %arg2: memref<1x8x2048xbf16, #tpu.memory_space<vmem>>, %arg3: memref<1x2048x1024xbf16, #tpu.memory_space<vmem>>, %arg4: memref<1x1024xf32, #tpu.memory_space<vmem>>, %arg5: memref<1x1024xf32, #tpu.memory_space<vmem>>, %arg6: memref<1x8x1024xbf16, #tpu.memory_space<vmem>>) attributes {dimension_semantics = [#tpu.dimension_semantics<parallel>, #tpu.dimension_semantics<arbitrary>], iteration_bounds = array<i64: 1, 1>, scalar_prefetch = 0 : i64, scratch_operands = 0 : i64, tpu.core_type = #tpu.core_type<tc>, window_params = [{transform_indices = @transform_0, window_bounds = array<i64: 1, 8, 2048>}, {transform_indices = @transform_1, window_bounds = array<i64: 1, 2048, 1024>}, {transform_indices = @transform_2, window_bounds = array<i64: 1, 1024>}, {transform_indices = @transform_3, window_bounds = array<i64: 1, 1024>}, {transform_indices = @transform_4, window_bounds = array<i64: 1, 8, 1024>}]} {
    %c0 = arith.constant 0 : index
    %c0_0 = arith.constant 0 : index
    %c0_1 = arith.constant 0 : index
    %0 = vector.load %arg2[%c0, %c0_0, %c0_1] : memref<1x8x2048xbf16, #tpu.memory_space<vmem>>, vector<1x8x2048xbf16>
    %1 = vector.shape_cast %0 : vector<1x8x2048xbf16> to vector<8x2048xbf16>
    %c0_2 = arith.constant 0 : index
    %c0_3 = arith.constant 0 : index
    %c0_4 = arith.constant 0 : index
    %2 = vector.load %arg3[%c0_2, %c0_3, %c0_4] : memref<1x2048x1024xbf16, #tpu.memory_space<vmem>>, vector<1x2048x1024xbf16>
    %3 = vector.shape_cast %2 : vector<1x2048x1024xbf16> to vector<2048x1024xbf16>
    %cst = arith.constant dense<0.000000e+00> : vector<8x1024xf32>
    %4 = tpu.matmul %1, %3, %cst {dimension_numbers = #tpu.dot_dimension_numbers<[1], [0], [0], [1], [0, 0, 1, 1], [], []>} : vector<8x2048xbf16>, vector<2048x1024xbf16>, vector<8x1024xf32> -> vector<8x1024xf32>
    %cst_5 = arith.constant dense<0.000000e+00> : vector<1024xf32>
    %5 = vector.multi_reduction <add>, %4, %cst_5 [0] : vector<8x1024xf32> to vector<1024xf32>
    %6 = vector.shape_cast %5 : vector<1024xf32> to vector<1x1024xf32>
    %7 = arith.mulf %4, %4 : vector<8x1024xf32>
    %cst_6 = arith.constant dense<0.000000e+00> : vector<1024xf32>
    %8 = vector.multi_reduction <add>, %7, %cst_6 [0] : vector<8x1024xf32> to vector<1024xf32>
    %9 = vector.shape_cast %8 : vector<1024xf32> to vector<1x1024xf32>
    %cst_7 = arith.constant 1.250000e-01 : f32
    %10 = vector.broadcast %cst_7 : f32 to vector<1x1024xf32>
    %11 = arith.mulf %6, %10 : vector<1x1024xf32>
    %cst_8 = arith.constant 1.250000e-01 : f32
    %12 = vector.broadcast %cst_8 : f32 to vector<1x1024xf32>
    %13 = arith.mulf %9, %12 : vector<1x1024xf32>
    %14 = arith.mulf %11, %11 : vector<1x1024xf32>
    %15 = arith.subf %13, %14 : vector<1x1024xf32>
    %c0_9 = arith.constant 0 : index
    %c0_10 = arith.constant 0 : index
    %16 = vector.load %arg4[%c0_9, %c0_10] : memref<1x1024xf32, #tpu.memory_space<vmem>>, vector<1x1024xf32>
    %cst_11 = arith.constant 9.99999974E-6 : f32
    %17 = vector.broadcast %cst_11 : f32 to vector<1x1024xf32>
    %18 = arith.addf %15, %17 : vector<1x1024xf32>
    %19 = math.rsqrt %18 : vector<1x1024xf32>
    %20 = arith.mulf %16, %19 : vector<1x1024xf32>
    %c0_12 = arith.constant 0 : index
    %c0_13 = arith.constant 0 : index
    %21 = vector.load %arg5[%c0_12, %c0_13] : memref<1x1024xf32, #tpu.memory_space<vmem>>, vector<1x1024xf32>
    %22 = arith.mulf %11, %20 : vector<1x1024xf32>
    %23 = arith.subf %21, %22 : vector<1x1024xf32>
    %24 = vector.broadcast %20 : vector<1x1024xf32> to vector<8x1024xf32>
    %25 = arith.mulf %4, %24 : vector<8x1024xf32>
    %26 = vector.broadcast %23 : vector<1x1024xf32> to vector<8x1024xf32>
    %27 = arith.addf %25, %26 : vector<8x1024xf32>
    %28 = arith.truncf %27 : vector<8x1024xf32> to vector<8x1024xbf16>
    %c0_14 = arith.constant 0 : index
    %c0_15 = arith.constant 0 : index
    %c0_16 = arith.constant 0 : index
    %29 = vector.load %arg6[%c0_14, %c0_15, %c0_16] : memref<1x8x1024xbf16, #tpu.memory_space<vmem>>, vector<1x8x1024xbf16>
    %30 = vector.shape_cast %29 : vector<1x8x1024xbf16> to vector<8x1024xbf16>
    %31 = vector.shape_cast %28 : vector<8x1024xbf16> to vector<1x8x1024xbf16>
    tpu.vector_store %arg6[%c0_14, %c0_15, %c0_16], %31 {strides = array<i32>} : memref<1x8x1024xbf16, #tpu.memory_space<vmem>>, vector<1x8x1024xbf16>,
    return
  }
  func.func @transform_0(%arg0: i32, %arg1: i32) -> (i32, i32, i32) {
    %c0_i32 = arith.constant 0 : i32
    %c0_i32_0 = arith.constant 0 : i32
    %c0_i32_1 = arith.constant 0 : i32
    return %c0_i32, %c0_i32_0, %arg1 : i32, i32, i32
  }
  func.func @transform_1(%arg0: i32, %arg1: i32) -> (i32, i32, i32) {
    %c0_i32 = arith.constant 0 : i32
    %c0_i32_0 = arith.constant 0 : i32
    return %c0_i32, %arg1, %arg0 : i32, i32, i32
  }
  func.func @transform_2(%arg0: i32, %arg1: i32) -> (i32, i32) {
    %c0_i32 = arith.constant 0 : i32
    %c0_i32_0 = arith.constant 0 : i32
    return %c0_i32, %arg0 : i32, i32
  }
  func.func @transform_3(%arg0: i32, %arg1: i32) -> (i32, i32) {
    %c0_i32 = arith.constant 0 : i32
    %c0_i32_0 = arith.constant 0 : i32
    return %c0_i32, %arg0 : i32, i32
  }
  func.func @transform_4(%arg0: i32, %arg1: i32) -> (i32, i32, i32) {
    %c0_i32 = arith.constant 0 : i32
    %c0_i32_0 = arith.constant 0 : i32
    %c0_i32_1 = arith.constant 0 : i32
    return %c0_i32, %c0_i32_0, %arg0 : i32, i32, i32
  }
}

</mosaic_0001>

<llo_original>
// kernel: tpu_custom_call.1
$region0: #{tpu_custom_call.1}
  #allocation0 [shape = 'u32[]', space=smem, size = 0x4, offset = 0x4, fixed_abs, tag = 'smem constant byte address 0x4 - core index']
  #allocation1 [shape = 'u32[72,128]{1,0:T(1,128)}', space=vmem, size = 0x9000, scoped, tag = 'internal scratch']
  %s0 = inlined_call_operand.hbm [shape: bf16[1,8,2048], index: 0, kind: input, shape index: {}]
  %s1 = inlined_call_operand.hbm [shape: bf16[1,2048,1024], index: 1, kind: input, shape index: {}]
  %s2 = inlined_call_operand.hbm [shape: f32[1,1024], index: 2, kind: input, shape index: {}]
  %s3 = inlined_call_operand.hbm [shape: f32[1,1024], index: 3, kind: input, shape index: {}]
  %s4 = inlined_call_operand.hbm [shape: bf16[1,8,1024], index: 4, kind: output, shape index: {}]
  %s5 = sld [smem:[#allocation0]]
  $region42: #{tpu_custom_call.1} parent=0
    _
  %s7 = ssub.s32 1, %s5
  %s8 = scalar_select 0, %s7, %s5
  $region1: #{tpu_custom_call.1} parent=0
    #allocation2 [shape = 'u8[32768]{0}', space=vmem, size = 0x8000, scoped, tag = 'input window, operand 0, single buffered']
    #allocation3 [shape = 's32[1]{0}', space=sflag, size = 0x4, scoped, tag = 'scoped memory for tpu_custom_call.1']
    #allocation4 [shape = 's32[1]{0}', space=sflag, size = 0x4, scoped, tag = 'scoped memory for tpu_custom_call.1']
    #allocation5 [shape = 'u8[4194304]{0}', space=vmem, size = 0x400000, scoped, tag = 'input window, operand 1, single buffered']
    #allocation6 [shape = 's32[1]{0}', space=sflag, size = 0x4, scoped, tag = 'scoped memory for tpu_custom_call.1']
    #allocation7 [shape = 'u8[4096]{0}', space=vmem, size = 0x1000, scoped, tag = 'input window, operand 2, single buffered']
    #allocation8 [shape = 'u8[4096]{0}', space=vmem, size = 0x1000, scoped, tag = 'input window, operand 3, single buffered']
    #allocation9 [shape = 's32[1]{0}', space=sflag, size = 0x4, scoped, tag = 'scoped memory for tpu_custom_call.1']
    #allocation10 [shape = 'u8[16384]{0}', space=vmem, size = 0x4000, scoped, tag = 'output window, operand 0, single buffered']
    %9 = vsyncpa [#allocation3], 0
    %10 = vsyncpa [#allocation6], 0
    %11 = vsyncpa [#allocation9], 0
    %12 = vsyncpa [#allocation4], 0
    // Predicated region
    $region2: #{tpu_custom_call.1} parent=1 // pred_check
      _
    $region3: #{tpu_custom_call.1} parent=1 // pred_check_branch
      %14 = sbr.rel (0) target = $region5
    $region4: #{tpu_custom_call.1} parent=1 // pred_region
      %16 = vsyncadd [#allocation3], 0
      %s18 = sshll.u32 %s0, 4
      %s19 = int_to_ptr.hbm [resolvable:$true] %s18
      %s20 = sshll.u32 [#allocation2], 4
      %s21 = int_to_ptr.vmem [resolvable:$true] %s20
      %23 = dma.hbm_to_vmem [thread:$0]  %s19, 1024, %s21, [#allocation3]
    $region5: #{tpu_custom_call.1} parent=1 // pred_fallthru
      _
    // Predicated region
    $region6: #{tpu_custom_call.1} parent=1 // pred_check
      _
    $region7: #{tpu_custom_call.1} parent=1 // pred_check_branch
      %25 = sbr.rel (0) target = $region9
    $region8: #{tpu_custom_call.1} parent=1 // pred_region
      %27 = vsyncadd [#allocation6], 0
      %s28 = sshll.u32 %s1, 4
      %s29 = int_to_ptr.hbm [resolvable:$true] %s28
      %s30 = sshll.u32 [#allocation5], 4
      %s31 = int_to_ptr.vmem [resolvable:$true] %s30
      %36 = dma.hbm_to_vmem [thread:$0]  %s29, 131072, %s31, [#allocation6], 512, 512, 32
    $region9: #{tpu_custom_call.1} parent=1 // pred_fallthru
      _
    // Predicated region
    $region10: #{tpu_custom_call.1} parent=1 // pred_check
      _
    $region11: #{tpu_custom_call.1} parent=1 // pred_check_branch
      %38 = sbr.rel (0) target = $region13
    $region12: #{tpu_custom_call.1} parent=1 // pred_region
      %40 = vsyncadd [#allocation6], 0
      %s42 = sshll.u32 %s2, 4
      %s43 = int_to_ptr.hbm [resolvable:$true] %s42
      %s44 = sshll.u32 [#allocation7], 4
      %s45 = int_to_ptr.vmem [resolvable:$true] %s44
      %47 = dma.hbm_to_vmem [thread:$0]  %s43, 128, %s45, [#allocation6]
    $region13: #{tpu_custom_call.1} parent=1 // pred_fallthru
      _
    // Predicated region
    $region14: #{tpu_custom_call.1} parent=1 // pred_check
      _
    $region15: #{tpu_custom_call.1} parent=1 // pred_check_branch
      %49 = sbr.rel (0) target = $region17
    $region16: #{tpu_custom_call.1} parent=1 // pred_region
      %51 = vsyncadd [#allocation9], 0
      %s53 = sshll.u32 %s3, 4
      %s54 = int_to_ptr.hbm [resolvable:$true] %s53
      %s55 = sshll.u32 [#allocation8], 4
      %s56 = int_to_ptr.vmem [resolvable:$true] %s55
      %58 = dma.hbm_to_vmem [thread:$0]  %s54, 128, %s56, [#allocation9]
    $region17: #{tpu_custom_call.1} parent=1 // pred_fallthru
      _
    // Predicated region
    $region18: #{tpu_custom_call.1} parent=1 // pred_check
      _
    $region19: #{tpu_custom_call.1} parent=1 // pred_check_branch
      %60 = sbr.rel (0) target = $region21
    $region20: #{tpu_custom_call.1} parent=1 // pred_region
      %62 = dma.done [#allocation3], 1024
    $region21: #{tpu_custom_call.1} parent=1 // pred_fallthru
      _
    // Predicated region
    $region22: #{tpu_custom_call.1} parent=1 // pred_check
      _
    $region23: #{tpu_custom_call.1} parent=1 // pred_check_branch
      %64 = sbr.rel (0) target = $region25
    $region24: #{tpu_custom_call.1} parent=1 // pred_region
      %66 = dma.done [#allocation6], 131072
    $region25: #{tpu_custom_call.1} parent=1 // pred_fallthru
      _
    // Predicated region
    $region26: #{tpu_custom_call.1} parent=1 // pred_check
      _
    $region27: #{tpu_custom_call.1} parent=1 // pred_check_branch
      %68 = sbr.rel (0) target = $region29
    $region28: #{tpu_custom_call.1} parent=1 // pred_region
      %70 = dma.done [#allocation6], 128
    $region29: #{tpu_custom_call.1} parent=1 // pred_fallthru
      _
    // Predicated region
    $region30: #{tpu_custom_call.1} parent=1 // pred_check
      _
    $region31: #{tpu_custom_call.1} parent=1 // pred_check_branch
      %72 = sbr.rel (0) target = $region33
    $region32: #{tpu_custom_call.1} parent=1 // pred_region
      %74 = dma.done [#allocation9], 128
    $region33: #{tpu_custom_call.1} parent=1 // pred_fallthru
      _
    %v75 = vld [vmem:[#allocation2] sm:$0xff]
    %v76 = vld [vmem:[#allocation2 + $0x8] sm:$0xff]
    %v77 = vld [vmem:[#allocation2 + $0x10] sm:$0xff]
    %v78 = vld [vmem:[#allocation2 + $0x18] sm:$0xff]
    %v79 = vld [vmem:[#allocation2 + $0x20] sm:$0xff]
    %v80 = vld [vmem:[#allocation2 + $0x28] sm:$0xff]
    %v81 = vld [vmem:[#allocation2 + $0x30] sm:$0xff]
    %v82 = vld [vmem:[#allocation2 + $0x38] sm:$0xff]
    %v83 = vld [vmem:[#allocation5] sm:$0xff]
    %v84 = vld [vmem:[#allocation5 + $0x8] sm:$0xff]
    %v85 = vld [vmem:[#allocation5 + $0x10] sm:$0xff]
    %v86 = vld [vmem:[#allocation5 + $0x18] sm:$0xff]
    %v87 = vld [vmem:[#allocation5 + $0x20] sm:$0xff]
    %v88 = vld [vmem:[#allocation5 + $0x28] sm:$0xff]
    %v89 = vld [vmem:[#allocation5 + $0x30] sm:$0xff]
    %v90 = vld [vmem:[#allocation5 + $0x38] sm:$0xff]
    %v91 = vld [vmem:[#allocation5 + $0x40] sm:$0xff]
    %v92 = vld [vmem:[#allocation5 + $0x48] sm:$0xff]
    %v93 = vld [vmem:[#allocation5 + $0x50] sm:$0xff]
    %v94 = vld [vmem:[#allocation5 + $0x58] sm:$0xff]
    %v95 = vld [vmem:[#allocation5 + $0x60] sm:$0xff]
    %v96 = vld [vmem:[#allocation5 + $0x68] sm:$0xff]
    %v97 = vld [vmem:[#allocation5 + $0x70] sm:$0xff]
    %v98 = vld [vmem:[#allocation5 + $0x78] sm:$0xff]
    %v99 = vld [vmem:[#allocation5 + $0x80] sm:$0xff]
    %v100 = vld [vmem:[#allocation5 + $0x88] sm:$0xff]
    %v101 = vld [vmem:[#allocation5 + $0x90] sm:$0xff]
    %v102 = vld [vmem:[#allocation5 + $0x98] sm:$0xff]
    %v103 = vld [vmem:[#allocation5 + $0xa0] sm:$0xff]
    %v104 = vld [vmem:[#allocation5 + $0xa8] sm:$0xff]
    %v105 = vld [vmem:[#allocation5 + $0xb0] sm:$0xff]
    %v106 = vld [vmem:[#allocation5 + $0xb8] sm:$0xff]
    %v107 = vld [vmem:[#allocation5 + $0xc0] sm:$0xff]
    %v108 = vld [vmem:[#allocation5 + $0xc8] sm:$0xff]
    %v109 = vld [vmem:[#allocation5 + $0xd0] sm:$0xff]
    %v110 = vld [vmem:[#allocation5 + $0xd8] sm:$0xff]
    %v111 = vld [vmem:[#allocation5 + $0xe0] sm:$0xff]
    %v112 = vld [vmem:[#allocation5 + $0xe8] sm:$0xff]
    %v113 = vld [vmem:[#allocation5 + $0xf0] sm:$0xff]
    %v114 = vld [vmem:[#allocation5 + $0xf8] sm:$0xff]
    %v115 = vld [vmem:[#allocation5 + $0x100] sm:$0xff]
    %v116 = vld [vmem:[#allocation5 + $0x108] sm:$0xff]
    %v117 = vld [vmem:[#allocation5 + $0x110] sm:$0xff]
    %v118 = vld [vmem:[#allocation5 + $0x118] sm:$0xff]
    %v119 = vld [vmem:[#allocation5 + $0x120] sm:$0xff]
    %v120 = vld [vmem:[#allocation5 + $0x128] sm:$0xff]
    %v121 = vld [vmem:[#allocation5 + $0x130] sm:$0xff]
    %v122 = vld [vmem:[#allocation5 + $0x138] sm:$0xff]
    %v123 = vld [vmem:[#allocation5 + $0x140] sm:$0xff]
    %v124 = vld [vmem:[#allocation5 + $0x148] sm:$0xff]
    %v125 = vld [vmem:[#allocation5 + $0x150] sm:$0xff]
    %v126 = vld [vmem:[#allocation5 + $0x158] sm:$0xff]
    %v127 = vld [vmem:[#allocation5 + $0x160] sm:$0xff]
    %v128 = vld [vmem:[#allocation5 + $0x168] sm:$0xff]
    %v129 = vld [vmem:[#allocation5 + $0x170] sm:$0xff]
    %v130 = vld [vmem:[#allocation5 + $0x178] sm:$0xff]
    %v131 = vld [vmem:[#allocation5 + $0x180] sm:$0xff]
    %v132 = vld [vmem:[#allocation5 + $0x188] sm:$0xff]
    %v133 = vld [vmem:[#allocation5 + $0x190] sm:$0xff]
    %v134 = vld [vmem:[#allocation5 + $0x198] sm:$0xff]
    %v135 = vld [vmem:[#allocation5 + $0x1a0] sm:$0xff]
    %v136 = vld [vmem:[#allocation5 + $0x1a8] sm:$0xff]
    %v137 = vld [vmem:[#allocation5 + $0x1b0] sm:$0xff]
    %v138 = vld [vmem:[#allocation5 + $0x1b8] sm:$0xff]
    %v139 = vld [vmem:[#allocation5 + $0x1c0] sm:$0xff]
    %v140 = vld [vmem:[#allocation5 + $0x1c8] sm:$0xff]
    %v141 = vld [vmem:[#allocation5 + $0x1d0] sm:$0xff]
    %v142 = vld [vmem:[#allocation5 + $0x1d8] sm:$0xff]
    %v143 = vld [vmem:[#allocation5 + $0x1e0] sm:$0xff]
    %v144 = vld [vmem:[#allocation5 + $0x1e8] sm:$0xff]
    %v145 = vld [vmem:[#allocation5 + $0x1f0] sm:$0xff]
    %v146 = vld [vmem:[#allocation5 + $0x1f8] sm:$0xff]
    %v147 = vld [vmem:[#allocation5 + $0x200] sm:$0xff]
    %v148 = vld [vmem:[#allocation5 + $0x208] sm:$0xff]
    %v149 = vld [vmem:[#allocation5 + $0x210] sm:$0xff]
    %v150 = vld [vmem:[#allocation5 + $0x218] sm:$0xff]
    %v151 = vld [vmem:[#allocation5 + $0x220] sm:$0xff]
    %v152 = vld [vmem:[#allocation5 + $0x228] sm:$0xff]
    %v153 = vld [vmem:[#allocation5 + $0x230] sm:$0xff]
    %v154 = vld [vmem:[#allocation5 + $0x238] sm:$0xff]
    %v155 = vld [vmem:[#allocation5 + $0x240] sm:$0xff]
    %v156 = vld [vmem:[#allocation5 + $0x248] sm:$0xff]
    %v157 = vld [vmem:[#allocation5 + $0x250] sm:$0xff]
    %v158 = vld [vmem:[#allocation5 + $0x258] sm:$0xff]
    %v159 = vld [vmem:[#allocation5 + $0x260] sm:$0xff]
    %v160 = vld [vmem:[#allocation5 + $0x268] sm:$0xff]
    %v161 = vld [vmem:[#allocation5 + $0x270] sm:$0xff]
    %v162 = vld [vmem:[#allocation5 + $0x278] sm:$0xff]
    %v163 = vld [vmem:[#allocation5 + $0x280] sm:$0xff]
    %v164 = vld [vmem:[#allocation5 + $0x288] sm:$0xff]
    %v165 = vld [vmem:[#allocation5 + $0x290] sm:$0xff]
    %v166 = vld [vmem:[#allocation5 + $0x298] sm:$0xff]
    %v167 = vld [vmem:[#allocation5 + $0x2a0] sm:$0xff]
    %v168 = vld [vmem:[#allocation5 + $0x2a8] sm:$0xff]
    %v169 = vld [vmem:[#allocation5 + $0x2b0] sm:$0xff]
    %v170 = vld [vmem:[#allocation5 + $0x2b8] sm:$0xff]
    %v171 = vld [vmem:[#allocation5 + $0x2c0] sm:$0xff]
    %v172 = vld [vmem:[#allocation5 + $0x2c8] sm:$0xff]
    %v173 = vld [vmem:[#allocation5 + $0x2d0] sm:$0xff]
    %v174 = vld [vmem:[#allocation5 + $0x2d8] sm:$0xff]
    %v175 = vld [vmem:[#allocation5 + $0x2e0] sm:$0xff]
    %v176 = vld [vmem:[#allocation5 + $0x2e8] sm:$0xff]
    %v177 = vld [vmem:[#allocation5 + $0x2f0] sm:$0xff]
    %v178 = vld [vmem:[#allocation5 + $0x2f8] sm:$0xff]
    %v179 = vld [vmem:[#allocation5 + $0x300] sm:$0xff]
    %v180 = vld [vmem:[#allocation5 + $0x308] sm:$0xff]
    %v181 = vld [vmem:[#allocation5 + $0x310] sm:$0xff]
    %v182 = vld [vmem:[#allocation5 + $0x318] sm:$0xff]
    %v183 = vld [vmem:[#allocation5 + $0x320] sm:$0xff]
    %v184 = vld [vmem:[#allocation5 + $0x328] sm:$0xff]
    %v185 = vld [vmem:[#allocation5 + $0x330] sm:$0xff]
    %v186 = vld [vmem:[#allocation5 + $0x338] sm:$0xff]
    %v187 = vld [vmem:[#allocation5 + $0x340] sm:$0xff]
    %v188 = vld [vmem:[#allocation5 + $0x348] sm:$0xff]
    %v189 = vld [vmem:[#allocation5 + $0x350] sm:$0xff]
    %v190 = vld [vmem:[#allocation5 + $0x358] sm:$0xff]
    %v191 = vld [vmem:[#allocation5 + $0x360] sm:$0xff]
    %v192 = vld [vmem:[#allocation5 + $0x368] sm:$0xff]
    %v193 = vld [vmem:[#allocation5 + $0x370] sm:$0xff]
    %v194 = vld [vmem:[#allocation5 + $0x378] sm:$0xff]
    %v195 = vld [vmem:[#allocation5 + $0x380] sm:$0xff]
    %v196 = vld [vmem:[#allocation5 + $0x388] sm:$0xff]
    %v197 = vld [vmem:[#allocation5 + $0x390] sm:$0xff]
    %v198 = vld [vmem:[#allocation5 + $0x398] sm:$0xff]
    %v199 = vld [vmem:[#allocation5 + $0x3a0] sm:$0xff]
    %v200 = vld [vmem:[#allocation5 + $0x3a8] sm:$0xff]
    %v201 = vld [vmem:[#allocation5 + $0x3b0] sm:$0xff]
    %v202 = vld [vmem:[#allocation5 + $0x3b8] sm:$0xff]
    %v203 = vld [vmem:[#allocation5 + $0x3c0] sm:$0xff]
    %v204 = vld [vmem:[#allocation5 + $0x3c8] sm:$0xff]
    %v205 = vld [vmem:[#allocation5 + $0x3d0] sm:$0xff]
    %v206 = vld [vmem:[#allocation5 + $0x3d8] sm:$0xff]
    %v207 = vld [vmem:[#allocation5 + $0x3e0] sm:$0xff]
    %v208 = vld [vmem:[#allocation5 + $0x3e8] sm:$0xff]
    %v209 = vld [vmem:[#allocation5 + $0x3f0] sm:$0xff]
    %v210 = vld [vmem:[#allocation5 + $0x3f8] sm:$0xff]
    %v211 = vld [vmem:[#allocation5 + $0x400] sm:$0xff]
    %v212 = vld [vmem:[#allocation5 + $0x408] sm:$0xff]
    %v213 = vld [vmem:[#allocation5 + $0x410] sm:$0xff]
    %v214 = vld [vmem:[#allocation5 + $0x418] sm:$0xff]
    %v215 = vld [vmem:[#allocation5 + $0x420] sm:$0xff]
    %v216 = vld [vmem:[#allocation5 + $0x428] sm:$0xff]
    %v217 = vld [vmem:[#allocation5 + $0x430] sm:$0xff]
    %v218 = vld [vmem:[#allocation5 + $0x438] sm:$0xff]
    %v219 = vld [vmem:[#allocation5 + $0x440] sm:$0xff]
    %v220 = vld [vmem:[#allocation5 + $0x448] sm:$0xff]
    %v221 = vld [vmem:[#allocation5 + $0x450] sm:$0xff]
    %v222 = vld [vmem:[#allocation5 + $0x458] sm:$0xff]
    %v223 = vld [vmem:[#allocation5 + $0x460] sm:$0xff]
    %v224 = vld [vmem:[#allocation5 + $0x468] sm:$0xff]
    %v225 = vld [vmem:[#allocation5 + $0x470] sm:$0xff]
    %v226 = vld [vmem:[#allocation5 + $0x478] sm:$0xff]
    %v227 = vld [vmem:[#allocation5 + $0x480] sm:$0xff]
    %v228 = vld [vmem:[#allocation5 + $0x488] sm:$0xff]
    %v229 = vld [vmem:[#allocation5 + $0x490] sm:$0xff]
    %v230 = vld [vmem:[#allocation5 + $0x498] sm:$0xff]
    %v231 = vld [vmem:[#allocation5 + $0x4a0] sm:$0xff]
    %v232 = vld [vmem:[#allocation5 + $0x4a8] sm:$0xff]
    %v233 = vld [vmem:[#allocation5 + $0x4b0] sm:$0xff]
    %v234 = vld [vmem:[#allocation5 + $0x4b8] sm:$0xff]
    %v235 = vld [vmem:[#allocation5 + $0x4c0] sm:$0xff]
    %v236 = vld [vmem:[#allocation5 + $0x4c8] sm:$0xff]
    %v237 = vld [vmem:[#allocation5 + $0x4d0] sm:$0xff]
    %v238 = vld [vmem:[#allocation5 + $0x4d8] sm:$0xff]
    %v239 = vld [vmem:[#allocation5 + $0x4e0] sm:$0xff]
    %v240 = vld [vmem:[#allocation5 + $0x4e8] sm:$0xff]
    %v241 = vld [vmem:[#allocation5 + $0x4f0] sm:$0xff]
    %v242 = vld [vmem:[#allocation5 + $0x4f8] sm:$0xff]
    %v243 = vld [vmem:[#allocation5 + $0x500] sm:$0xff]
    %v244 = vld [vmem:[#allocation5 + $0x508] sm:$0xff]
    %v245 = vld [vmem:[#allocation5 + $0x510] sm:$0xff]
    %v246 = vld [vmem:[#allocation5 + $0x518] sm:$0xff]
    %v247 = vld [vmem:[#allocation5 + $0x520] sm:$0xff]
    %v248 = vld [vmem:[#allocation5 + $0x528] sm:$0xff]
    %v249 = vld [vmem:[#allocation5 + $0x530] sm:$0xff]
    %v250 = vld [vmem:[#allocation5 + $0x538] sm:$0xff]
    %v251 = vld [vmem:[#allocation5 + $0x540] sm:$0xff]
    %v252 = vld [vmem:[#allocation5 + $0x548] sm:$0xff]
    %v253 = vld [vmem:[#allocation5 + $0x550] sm:$0xff]
    %v254 = vld [vmem:[#allocation5 + $0x558] sm:$0xff]
    %v255 = vld [vmem:[#allocation5 + $0x560] sm:$0xff]
    %v256 = vld [vmem:[#allocation5 + $0x568] sm:$0xff]
    %v257 = vld [vmem:[#allocation5 + $0x570] sm:$0xff]
    %v258 = vld [vmem:[#allocation5 + $0x578] sm:$0xff]
    %v259 = vld [vmem:[#allocation5 + $0x580] sm:$0xff]
    %v260 = vld [vmem:[#allocation5 + $0x588] sm:$0xff]
    %v261 = vld [vmem:[#allocation5 + $0x590] sm:$0xff]
    %v262 = vld [vmem:[#allocation5 + $0x598] sm:$0xff]
    %v263 = vld [vmem:[#allocation5 + $0x5a0] sm:$0xff]
    %v264 = vld [vmem:[#allocation5 + $0x5a8] sm:$0xff]
    %v265 = vld [vmem:[#allocation5 + $0x5b0] sm:$0xff]
    %v266 = vld [vmem:[#allocation5 + $0x5b8] sm:$0xff]
    %v267 = vld [vmem:[#allocation5 + $0x5c0] sm:$0xff]
    %v268 = vld [vmem:[#allocation5 + $0x5c8] sm:$0xff]
    %v269 = vld [vmem:[#allocation5 + $0x5d0] sm:$0xff]
    %v270 = vld [vmem:[#allocation5 + $0x5d8] sm:$0xff]
    %v271 = vld [vmem:[#allocation5 + $0x5e0] sm:$0xff]
    %v272 = vld [vmem:[#allocation5 + $0x5e8] sm:$0xff]
    %v273 = vld [vmem:[#allocation5 + $0x5f0] sm:$0xff]
    %v274 = vld [vmem:[#allocation5 + $0x5f8] sm:$0xff]
    %v275 = vld [vmem:[#allocation5 + $0x600] sm:$0xff]
    %v276 = vld [vmem:[#allocation5 + $0x608] sm:$0xff]
    %v277 = vld [vmem:[#allocation5 + $0x610] sm:$0xff]
    %v278 = vld [vmem:[#allocation5 + $0x618] sm:$0xff]
    %v279 = vld [vmem:[#allocation5 + $0x620] sm:$0xff]
    %v280 = vld [vmem:[#allocation5 + $0x628] sm:$0xff]
    %v281 = vld [vmem:[#allocation5 + $0x630] sm:$0xff]
    %v282 = vld [vmem:[#allocation5 + $0x638] sm:$0xff]
    %v283 = vld [vmem:[#allocation5 + $0x640] sm:$0xff]
    %v284 = vld [vmem:[#allocation5 + $0x648] sm:$0xff]
    %v285 = vld [vmem:[#allocation5 + $0x650] sm:$0xff]
    %v286 = vld [vmem:[#allocation5 + $0x658] sm:$0xff]
    %v287 = vld [vmem:[#allocation5 + $0x660] sm:$0xff]
    %v288 = vld [vmem:[#allocation5 + $0x668] sm:$0xff]
    %v289 = vld [vmem:[#allocation5 + $0x670] sm:$0xff]
    %v290 = vld [vmem:[#allocation5 + $0x678] sm:$0xff]
    %v291 = vld [vmem:[#allocation5 + $0x680] sm:$0xff]
    %v292 = vld [vmem:[#allocation5 + $0x688] sm:$0xff]
    %v293 = vld [vmem:[#allocation5 + $0x690] sm:$0xff]
    %v294 = vld [vmem:[#allocation5 + $0x698] sm:$0xff]
    %v295 = vld [vmem:[#allocation5 + $0x6a0] sm:$0xff]
    %v296 = vld [vmem:[#allocation5 + $0x6a8] sm:$0xff]
    %v297 = vld [vmem:[#allocation5 + $0x6b0] sm:$0xff]
    %v298 = vld [vmem:[#allocation5 + $0x6b8] sm:$0xff]
    %v299 = vld [vmem:[#allocation5 + $0x6c0] sm:$0xff]
    %v300 = vld [vmem:[#allocation5 + $0x6c8] sm:$0xff]
    %v301 = vld [vmem:[#allocation5 + $0x6d0] sm:$0xff]
    %v302 = vld [vmem:[#allocation5 + $0x6d8] sm:$0xff]
    %v303 = vld [vmem:[#allocation5 + $0x6e0] sm:$0xff]
    %v304 = vld [vmem:[#allocation5 + $0x6e8] sm:$0xff]
    %v305 = vld [vmem:[#allocation5 + $0x6f0] sm:$0xff]
    %v306 = vld [vmem:[#allocation5 + $0x6f8] sm:$0xff]
    %v307 = vld [vmem:[#allocation5 + $0x700] sm:$0xff]
    %v308 = vld [vmem:[#allocation5 + $0x708] sm:$0xff]
    %v309 = vld [vmem:[#allocation5 + $0x710] sm:$0xff]
    %v310 = vld [vmem:[#allocation5 + $0x718] sm:$0xff]
    %v311 = vld [vmem:[#allocation5 + $0x720] sm:$0xff]
    %v312 = vld [vmem:[#allocation5 + $0x728] sm:$0xff]
    %v313 = vld [vmem:[#allocation5 + $0x730] sm:$0xff]
    %v314 = vld [vmem:[#allocation5 + $0x738] sm:$0xff]
    %v315 = vld [vmem:[#allocation5 + $0x740] sm:$0xff]
    %v316 = vld [vmem:[#allocation5 + $0x748] sm:$0xff]
    %v317 = vld [vmem:[#allocation5 + $0x750] sm:$0xff]
    %v318 = vld [vmem:[#allocation5 + $0x758] sm:$0xff]
    %v319 = vld [vmem:[#allocation5 + $0x760] sm:$0xff]
    %v320 = vld [vmem:[#allocation5 + $0x768] sm:$0xff]
    %v321 = vld [vmem:[#allocation5 + $0x770] sm:$0xff]
    %v322 = vld [vmem:[#allocation5 + $0x778] sm:$0xff]
    %v323 = vld [vmem:[#allocation5 + $0x780] sm:$0xff]
    %v324 = vld [vmem:[#allocation5 + $0x788] sm:$0xff]
    %v325 = vld [vmem:[#allocation5 + $0x790] sm:$0xff]
    %v326 = vld [vmem:[#allocation5 + $0x798] sm:$0xff]
    %v327 = vld [vmem:[#allocation5 + $0x7a0] sm:$0xff]
    %v328 = vld [vmem:[#allocation5 + $0x7a8] sm:$0xff]
    %v329 = vld [vmem:[#allocation5 + $0x7b0] sm:$0xff]
    %v330 = vld [vmem:[#allocation5 + $0x7b8] sm:$0xff]
    %v331 = vld [vmem:[#allocation5 + $0x7c0] sm:$0xff]
    %v332 = vld [vmem:[#allocation5 + $0x7c8] sm:$0xff]
    %v333 = vld [vmem:[#allocation5 + $0x7d0] sm:$0xff]
    %v334 = vld [vmem:[#allocation5 + $0x7d8] sm:$0xff]
    %v335 = vld [vmem:[#allocation5 + $0x7e0] sm:$0xff]
    %v336 = vld [vmem:[#allocation5 + $0x7e8] sm:$0xff]
    %v337 = vld [vmem:[#allocation5 + $0x7f0] sm:$0xff]
    %v338 = vld [vmem:[#allocation5 + $0x7f8] sm:$0xff]
    %v339 = vld [vmem:[#allocation5 + $0x800] sm:$0xff]
    %v340 = vld [vmem:[#allocation5 + $0x808] sm:$0xff]
    %v341 = vld [vmem:[#allocation5 + $0x810] sm:$0xff]
    %v342 = vld [vmem:[#allocation5 + $0x818] sm:$0xff]
    %v343 = vld [vmem:[#allocation5 + $0x820] sm:$0xff]
    %v344 = vld [vmem:[#allocation5 + $0x828] sm:$0xff]
    %v345 = vld [vmem:[#allocation5 + $0x830] sm:$0xff]
    %v346 = vld [vmem:[#allocation5 + $0x838] sm:$0xff]
    %v347 = vld [vmem:[#allocation5 + $0x840] sm:$0xff]
    %v348 = vld [vmem:[#allocation5 + $0x848] sm:$0xff]
    %v349 = vld [vmem:[#allocation5 + $0x850] sm:$0xff]
    %v350 = vld [vmem:[#allocation5 + $0x858] sm:$0xff]
    %v351 = vld [vmem:[#allocation5 + $0x860] sm:$0xff]
    %v352 = vld [vmem:[#allocation5 + $0x868] sm:$0xff]
    %v353 = vld [vmem:[#allocation5 + $0x870] sm:$0xff]
    %v354 = vld [vmem:[#allocation5 + $0x878] sm:$0xff]
    %v355 = vld [vmem:[#allocation5 + $0x880] sm:$0xff]
    %v356 = vld [vmem:[#allocation5 + $0x888] sm:$0xff]
    %v357 = vld [vmem:[#allocation5 + $0x890] sm:$0xff]
    %v358 = vld [vmem:[#allocation5 + $0x898] sm:$0xff]
    %v359 = vld [vmem:[#allocation5 + $0x8a0] sm:$0xff]
    %v360 = vld [vmem:[#allocation5 + $0x8a8] sm:$0xff]
    %v361 = vld [vmem:[#allocation5 + $0x8b0] sm:$0xff]
    %v362 = vld [vmem:[#allocation5 + $0x8b8] sm:$0xff]
    %v363 = vld [vmem:[#allocation5 + $0x8c0] sm:$0xff]
    %v364 = vld [vmem:[#allocation5 + $0x8c8] sm:$0xff]
    %v365 = vld [vmem:[#allocation5 + $0x8d0] sm:$0xff]
    %v366 = vld [vmem:[#allocation5 + $0x8d8] sm:$0xff]
    %v367 = vld [vmem:[#allocation5 + $0x8e0] sm:$0xff]
    %v368 = vld [vmem:[#allocation5 + $0x8e8] sm:$0xff]
    %v369 = vld [vmem:[#allocation5 + $0x8f0] sm:$0xff]
    %v370 = vld [vmem:[#allocation5 + $0x8f8] sm:$0xff]
    %v371 = vld [vmem:[#allocation5 + $0x900] sm:$0xff]
    %v372 = vld [vmem:[#allocation5 + $0x908] sm:$0xff]
    %v373 = vld [vmem:[#allocation5 + $0x910] sm:$0xff]
    %v374 = vld [vmem:[#allocation5 + $0x918] sm:$0xff]
    %v375 = vld [vmem:[#allocation5 + $0x920] sm:$0xff]
    %v376 = vld [vmem:[#allocation5 + $0x928] sm:$0xff]
    %v377 = vld [vmem:[#allocation5 + $0x930] sm:$0xff]
    %v378 = vld [vmem:[#allocation5 + $0x938] sm:$0xff]
    %v379 = vld [vmem:[#allocation5 + $0x940] sm:$0xff]
    %v380 = vld [vmem:[#allocation5 + $0x948] sm:$0xff]
    %v381 = vld [vmem:[#allocation5 + $0x950] sm:$0xff]
    %v382 = vld [vmem:[#allocation5 + $0x958] sm:$0xff]
    %v383 = vld [vmem:[#allocation5 + $0x960] sm:$0xff]
    %v384 = vld [vmem:[#allocation5 + $0x968] sm:$0xff]
    %v385 = vld [vmem:[#allocation5 + $0x970] sm:$0xff]
    %v386 = vld [vmem:[#allocation5 + $0x978] sm:$0xff]
    %v387 = vld [vmem:[#allocation5 + $0x980] sm:$0xff]
    %v388 = vld [vmem:[#allocation5 + $0x988] sm:$0xff]
    %v389 = vld [vmem:[#allocation5 + $0x990] sm:$0xff]
    %v390 = vld [vmem:[#allocation5 + $0x998] sm:$0xff]
    %v391 = vld [vmem:[#allocation5 + $0x9a0] sm:$0xff]
    %v392 = vld [vmem:[#allocation5 + $0x9a8] sm:$0xff]
    %v393 = vld [vmem:[#allocation5 + $0x9b0] sm:$0xff]
    %v394 = vld [vmem:[#allocation5 + $0x9b8] sm:$0xff]
    %v395 = vld [vmem:[#allocation5 + $0x9c0] sm:$0xff]
    %v396 = vld [vmem:[#allocation5 + $0x9c8] sm:$0xff]
    %v397 = vld [vmem:[#allocation5 + $0x9d0] sm:$0xff]
    %v398 = vld [vmem:[#allocation5 + $0x9d8] sm:$0xff]
    %v399 = vld [vmem:[#allocation5 + $0x9e0] sm:$0xff]
    %v400 = vld [vmem:[#allocation5 + $0x9e8] sm:$0xff]
    %v401 = vld [vmem:[#allocation5 + $0x9f0] sm:$0xff]
    %v402 = vld [vmem:[#allocation5 + $0x9f8] sm:$0xff]
    %v403 = vld [vmem:[#allocation5 + $0xa00] sm:$0xff]
    %v404 = vld [vmem:[#allocation5 + $0xa08] sm:$0xff]
    %v405 = vld [vmem:[#allocation5 + $0xa10] sm:$0xff]
    %v406 = vld [vmem:[#allocation5 + $0xa18] sm:$0xff]
    %v407 = vld [vmem:[#allocation5 + $0xa20] sm:$0xff]
    %v408 = vld [vmem:[#allocation5 + $0xa28] sm:$0xff]
    %v409 = vld [vmem:[#allocation5 + $0xa30] sm:$0xff]
    %v410 = vld [vmem:[#allocation5 + $0xa38] sm:$0xff]
    %v411 = vld [vmem:[#allocation5 + $0xa40] sm:$0xff]
    %v412 = vld [vmem:[#allocation5 + $0xa48] sm:$0xff]
    %v413 = vld [vmem:[#allocation5 + $0xa50] sm:$0xff]
    %v414 = vld [vmem:[#allocation5 + $0xa58] sm:$0xff]
    %v415 = vld [vmem:[#allocation5 + $0xa60] sm:$0xff]
    %v416 = vld [vmem:[#allocation5 + $0xa68] sm:$0xff]
    %v417 = vld [vmem:[#allocation5 + $0xa70] sm:$0xff]
    %v418 = vld [vmem:[#allocation5 + $0xa78] sm:$0xff]
    %v419 = vld [vmem:[#allocation5 + $0xa80] sm:$0xff]
    %v420 = vld [vmem:[#allocation5 + $0xa88] sm:$0xff]
    %v421 = vld [vmem:[#allocation5 + $0xa90] sm:$0xff]
    %v422 = vld [vmem:[#allocation5 + $0xa98] sm:$0xff]
    %v423 = vld [vmem:[#allocation5 + $0xaa0] sm:$0xff]
    %v424 = vld [vmem:[#allocation5 + $0xaa8] sm:$0xff]
    %v425 = vld [vmem:[#allocation5 + $0xab0] sm:$0xff]
    %v426 = vld [vmem:[#allocation5 + $0xab8] sm:$0xff]
    %v427 = vld [vmem:[#allocation5 + $0xac0] sm:$0xff]
    %v428 = vld [vmem:[#allocation5 + $0xac8] sm:$0xff]
    %v429 = vld [vmem:[#allocation5 + $0xad0] sm:$0xff]
    %v430 = vld [vmem:[#allocation5 + $0xad8] sm:$0xff]
    %v431 = vld [vmem:[#allocation5 + $0xae0] sm:$0xff]
    %v432 = vld [vmem:[#allocation5 + $0xae8] sm:$0xff]
    %v433 = vld [vmem:[#allocation5 + $0xaf0] sm:$0xff]
    %v434 = vld [vmem:[#allocation5 + $0xaf8] sm:$0xff]
    %v435 = vld [vmem:[#allocation5 + $0xb00] sm:$0xff]
    %v436 = vld [vmem:[#allocation5 + $0xb08] sm:$0xff]
    %v437 = vld [vmem:[#allocation5 + $0xb10] sm:$0xff]
    %v438 = vld [vmem:[#allocation5 + $0xb18] sm:$0xff]
    %v439 = vld [vmem:[#allocation5 + $0xb20] sm:$0xff]
    %v440 = vld [vmem:[#allocation5 + $0xb28] sm:$0xff]
    %v441 = vld [vmem:[#allocation5 + $0xb30] sm:$0xff]
    %v442 = vld [vmem:[#allocation5 + $0xb38] sm:$0xff]
    %v443 = vld [vmem:[#allocation5 + $0xb40] sm:$0xff]
    %v444 = vld [vmem:[#allocation5 + $0xb48] sm:$0xff]
    %v445 = vld [vmem:[#allocation5 + $0xb50] sm:$0xff]
    %v446 = vld [vmem:[#allocation5 + $0xb58] sm:$0xff]
    %v447 = vld [vmem:[#allocation5 + $0xb60] sm:$0xff]
    %v448 = vld [vmem:[#allocation5 + $0xb68] sm:$0xff]
    %v449 = vld [vmem:[#allocation5 + $0xb70] sm:$0xff]
    %v450 = vld [vmem:[#allocation5 + $0xb78] sm:$0xff]
    %v451 = vld [vmem:[#allocation5 + $0xb80] sm:$0xff]
    %v452 = vld [vmem:[#allocation5 + $0xb88] sm:$0xff]
    %v453 = vld [vmem:[#allocation5 + $0xb90] sm:$0xff]
    %v454 = vld [vmem:[#allocation5 + $0xb98] sm:$0xff]
    %v455 = vld [vmem:[#allocation5 + $0xba0] sm:$0xff]
    %v456 = vld [vmem:[#allocation5 + $0xba8] sm:$0xff]
    %v457 = vld [vmem:[#allocation5 + $0xbb0] sm:$0xff]
    %v458 = vld [vmem:[#allocation5 + $0xbb8] sm:$0xff]
    %v459 = vld [vmem:[#allocation5 + $0xbc0] sm:$0xff]
    %v460 = vld [vmem:[#allocation5 + $0xbc8] sm:$0xff]
    %v461 = vld [vmem:[#allocation5 + $0xbd0] sm:$0xff]
    %v462 = vld [vmem:[#allocation5 + $0xbd8] sm:$0xff]
    %v463 = vld [vmem:[#allocation5 + $0xbe0] sm:$0xff]
    %v464 = vld [vmem:[#allocation5 + $0xbe8] sm:$0xff]
    %v465 = vld [vmem:[#allocation5 + $0xbf0] sm:$0xff]
    %v466 = vld [vmem:[#allocation5 + $0xbf8] sm:$0xff]
    %v467 = vld [vmem:[#allocation5 + $0xc00] sm:$0xff]
    %v468 = vld [vmem:[#allocation5 + $0xc08] sm:$0xff]
    %v469 = vld [vmem:[#allocation5 + $0xc10] sm:$0xff]
    %v470 = vld [vmem:[#allocation5 + $0xc18] sm:$0xff]
    %v471 = vld [vmem:[#allocation5 + $0xc20] sm:$0xff]
    %v472 = vld [vmem:[#allocation5 + $0xc28] sm:$0xff]
    %v473 = vld [vmem:[#allocation5 + $0xc30] sm:$0xff]
    %v474 = vld [vmem:[#allocation5 + $0xc38] sm:$0xff]
    %v475 = vld [vmem:[#allocation5 + $0xc40] sm:$0xff]
    %v476 = vld [vmem:[#allocation5 + $0xc48] sm:$0xff]
    %v477 = vld [vmem:[#allocation5 + $0xc50] sm:$0xff]
    %v478 = vld [vmem:[#allocation5 + $0xc58] sm:$0xff]
    %v479 = vld [vmem:[#allocation5 + $0xc60] sm:$0xff]
    %v480 = vld [vmem:[#allocation5 + $0xc68] sm:$0xff]
    %v481 = vld [vmem:[#allocation5 + $0xc70] sm:$0xff]
    %v482 = vld [vmem:[#allocation5 + $0xc78] sm:$0xff]
    %v483 = vld [vmem:[#allocation5 + $0xc80] sm:$0xff]
    %v484 = vld [vmem:[#allocation5 + $0xc88] sm:$0xff]
    %v485 = vld [vmem:[#allocation5 + $0xc90] sm:$0xff]
    %v486 = vld [vmem:[#allocation5 + $0xc98] sm:$0xff]
    %v487 = vld [vmem:[#allocation5 + $0xca0] sm:$0xff]
    %v488 = vld [vmem:[#allocation5 + $0xca8] sm:$0xff]
    %v489 = vld [vmem:[#allocation5 + $0xcb0] sm:$0xff]
    %v490 = vld [vmem:[#allocation5 + $0xcb8] sm:$0xff]
    %v491 = vld [vmem:[#allocation5 + $0xcc0] sm:$0xff]
    %v492 = vld [vmem:[#allocation5 + $0xcc8] sm:$0xff]
    %v493 = vld [vmem:[#allocation5 + $0xcd0] sm:$0xff]
    %v494 = vld [vmem:[#allocation5 + $0xcd8] sm:$0xff]
    %v495 = vld [vmem:[#allocation5 + $0xce0] sm:$0xff]
    %v496 = vld [vmem:[#allocation5 + $0xce8] sm:$0xff]
    %v497 = vld [vmem:[#allocation5 + $0xcf0] sm:$0xff]
    %v498 = vld [vmem:[#allocation5 + $0xcf8] sm:$0xff]
    %v499 = vld [vmem:[#allocation5 + $0xd00] sm:$0xff]
    %v500 = vld [vmem:[#allocation5 + $0xd08] sm:$0xff]
    %v501 = vld [vmem:[#allocation5 + $0xd10] sm:$0xff]
    %v502 = vld [vmem:[#allocation5 + $0xd18] sm:$0xff]
    %v503 = vld [vmem:[#allocation5 + $0xd20] sm:$0xff]
    %v504 = vld [vmem:[#allocation5 + $0xd28] sm:$0xff]
    %v505 = vld [vmem:[#allocation5 + $0xd30] sm:$0xff]
    %v506 = vld [vmem:[#allocation5 + $0xd38] sm:$0xff]
    %v507 = vld [vmem:[#allocation5 + $0xd40] sm:$0xff]
    %v508 = vld [vmem:[#allocation5 + $0xd48] sm:$0xff]
    %v509 = vld [vmem:[#allocation5 + $0xd50] sm:$0xff]
    %v510 = vld [vmem:[#allocation5 + $0xd58] sm:$0xff]
    %v511 = vld [vmem:[#allocation5 + $0xd60] sm:$0xff]
    %v512 = vld [vmem:[#allocation5 + $0xd68] sm:$0xff]
    %v513 = vld [vmem:[#allocation5 + $0xd70] sm:$0xff]
    %v514 = vld [vmem:[#allocation5 + $0xd78] sm:$0xff]
    %v515 = vld [vmem:[#allocation5 + $0xd80] sm:$0xff]
    %v516 = vld [vmem:[#allocation5 + $0xd88] sm:$0xff]
    %v517 = vld [vmem:[#allocation5 + $0xd90] sm:$0xff]
    %v518 = vld [vmem:[#allocation5 + $0xd98] sm:$0xff]
    %v519 = vld [vmem:[#allocation5 + $0xda0] sm:$0xff]
    %v520 = vld [vmem:[#allocation5 + $0xda8] sm:$0xff]
    %v521 = vld [vmem:[#allocation5 + $0xdb0] sm:$0xff]
    %v522 = vld [vmem:[#allocation5 + $0xdb8] sm:$0xff]
    %v523 = vld [vmem:[#allocation5 + $0xdc0] sm:$0xff]
    %v524 = vld [vmem:[#allocation5 + $0xdc8] sm:$0xff]
    %v525 = vld [vmem:[#allocation5 + $0xdd0] sm:$0xff]
    %v526 = vld [vmem:[#allocation5 + $0xdd8] sm:$0xff]
    %v527 = vld [vmem:[#allocation5 + $0xde0] sm:$0xff]
    %v528 = vld [vmem:[#allocation5 + $0xde8] sm:$0xff]
    %v529 = vld [vmem:[#allocation5 + $0xdf0] sm:$0xff]
    %v530 = vld [vmem:[#allocation5 + $0xdf8] sm:$0xff]
    %v531 = vld [vmem:[#allocation5 + $0xe00] sm:$0xff]
    %v532 = vld [vmem:[#allocation5 + $0xe08] sm:$0xff]
    %v533 = vld [vmem:[#allocation5 + $0xe10] sm:$0xff]
    %v534 = vld [vmem:[#allocation5 + $0xe18] sm:$0xff]
    %v535 = vld [vmem:[#allocation5 + $0xe20] sm:$0xff]
    %v536 = vld [vmem:[#allocation5 + $0xe28] sm:$0xff]
    %v537 = vld [vmem:[#allocation5 + $0xe30] sm:$0xff]
    %v538 = vld [vmem:[#allocation5 + $0xe38] sm:$0xff]
    %v539 = vld [vmem:[#allocation5 + $0xe40] sm:$0xff]
    %v540 = vld [vmem:[#allocation5 + $0xe48] sm:$0xff]
    %v541 = vld [vmem:[#allocation5 + $0xe50] sm:$0xff]
    %v542 = vld [vmem:[#allocation5 + $0xe58] sm:$0xff]
    %v543 = vld [vmem:[#allocation5 + $0xe60] sm:$0xff]
    %v544 = vld [vmem:[#allocation5 + $0xe68] sm:$0xff]
    %v545 = vld [vmem:[#allocation5 + $0xe70] sm:$0xff]
    %v546 = vld [vmem:[#allocation5 + $0xe78] sm:$0xff]
    %v547 = vld [vmem:[#allocation5 + $0xe80] sm:$0xff]
    %v548 = vld [vmem:[#allocation5 + $0xe88] sm:$0xff]
    %v549 = vld [vmem:[#allocation5 + $0xe90] sm:$0xff]
    %v550 = vld [vmem:[#allocation5 + $0xe98] sm:$0xff]
    %v551 = vld [vmem:[#allocation5 + $0xea0] sm:$0xff]
    %v552 = vld [vmem:[#allocation5 + $0xea8] sm:$0xff]
    %v553 = vld [vmem:[#allocation5 + $0xeb0] sm:$0xff]
    %v554 = vld [vmem:[#allocation5 + $0xeb8] sm:$0xff]
    %v555 = vld [vmem:[#allocation5 + $0xec0] sm:$0xff]
    %v556 = vld [vmem:[#allocation5 + $0xec8] sm:$0xff]
    %v557 = vld [vmem:[#allocation5 + $0xed0] sm:$0xff]
    %v558 = vld [vmem:[#allocation5 + $0xed8] sm:$0xff]
    %v559 = vld [vmem:[#allocation5 + $0xee0] sm:$0xff]
    %v560 = vld [vmem:[#allocation5 + $0xee8] sm:$0xff]
    %v561 = vld [vmem:[#allocation5 + $0xef0] sm:$0xff]
    %v562 = vld [vmem:[#allocation5 + $0xef8] sm:$0xff]
    %v563 = vld [vmem:[#allocation5 + $0xf00] sm:$0xff]
    %v564 = vld [vmem:[#allocation5 + $0xf08] sm:$0xff]
    %v565 = vld [vmem:[#allocation5 + $0xf10] sm:$0xff]
    %v566 = vld [vmem:[#allocation5 + $0xf18] sm:$0xff]
    %v567 = vld [vmem:[#allocation5 + $0xf20] sm:$0xff]
    %v568 = vld [vmem:[#allocation5 + $0xf28] sm:$0xff]
    %v569 = vld [vmem:[#allocation5 + $0xf30] sm:$0xff]
    %v570 = vld [vmem:[#allocation5 + $0xf38] sm:$0xff]
    %v571 = vld [vmem:[#allocation5 + $0xf40] sm:$0xff]
    %v572 = vld [vmem:[#allocation5 + $0xf48] sm:$0xff]
    %v573 = vld [vmem:[#allocation5 + $0xf50] sm:$0xff]
    %v574 = vld [vmem:[#allocation5 + $0xf58] sm:$0xff]
    %v575 = vld [vmem:[#allocation5 + $0xf60] sm:$0xff]
    %v576 = vld [vmem:[#allocation5 + $0xf68] sm:$0xff]
    %v577 = vld [vmem:[#allocation5 + $0xf70] sm:$0xff]
    %v578 = vld [vmem:[#allocation5 + $0xf78] sm:$0xff]
    %v579 = vld [vmem:[#allocation5 + $0xf80] sm:$0xff]
    %v580 = vld [vmem:[#allocation5 + $0xf88] sm:$0xff]
    %v581 = vld [vmem:[#allocation5 + $0xf90] sm:$0xff]
    %v582 = vld [vmem:[#allocation5 + $0xf98] sm:$0xff]
    %v583 = vld [vmem:[#allocation5 + $0xfa0] sm:$0xff]
    %v584 = vld [vmem:[#allocation5 + $0xfa8] sm:$0xff]
    %v585 = vld [vmem:[#allocation5 + $0xfb0] sm:$0xff]
    %v586 = vld [vmem:[#allocation5 + $0xfb8] sm:$0xff]
    %v587 = vld [vmem:[#allocation5 + $0xfc0] sm:$0xff]
    %v588 = vld [vmem:[#allocation5 + $0xfc8] sm:$0xff]
    %v589 = vld [vmem:[#allocation5 + $0xfd0] sm:$0xff]
    %v590 = vld [vmem:[#allocation5 + $0xfd8] sm:$0xff]
    %v591 = vld [vmem:[#allocation5 + $0xfe0] sm:$0xff]
    %v592 = vld [vmem:[#allocation5 + $0xfe8] sm:$0xff]
    %v593 = vld [vmem:[#allocation5 + $0xff0] sm:$0xff]
    %v594 = vld [vmem:[#allocation5 + $0xff8] sm:$0xff]
    %v595 = vld [vmem:[#allocation5 + $0x1000] sm:$0xff]
    %v596 = vld [vmem:[#allocation5 + $0x1008] sm:$0xff]
    %v597 = vld [vmem:[#allocation5 + $0x1010] sm:$0xff]
    %v598 = vld [vmem:[#allocation5 + $0x1018] sm:$0xff]
    %v599 = vld [vmem:[#allocation5 + $0x1020] sm:$0xff]
    %v600 = vld [vmem:[#allocation5 + $0x1028] sm:$0xff]
    %v601 = vld [vmem:[#allocation5 + $0x1030] sm:$0xff]
    %v602 = vld [vmem:[#allocation5 + $0x1038] sm:$0xff]
    %v603 = vld [vmem:[#allocation5 + $0x1040] sm:$0xff]
    %v604 = vld [vmem:[#allocation5 + $0x1048] sm:$0xff]
    %v605 = vld [vmem:[#allocation5 + $0x1050] sm:$0xff]
    %v606 = vld [vmem:[#allocation5 + $0x1058] sm:$0xff]
    %v607 = vld [vmem:[#allocation5 + $0x1060] sm:$0xff]
    %v608 = vld [vmem:[#allocation5 + $0x1068] sm:$0xff]
    %v609 = vld [vmem:[#allocation5 + $0x1070] sm:$0xff]
    %v610 = vld [vmem:[#allocation5 + $0x1078] sm:$0xff]
    %v611 = vld [vmem:[#allocation5 + $0x1080] sm:$0xff]
    %v612 = vld [vmem:[#allocation5 + $0x1088] sm:$0xff]
    %v613 = vld [vmem:[#allocation5 + $0x1090] sm:$0xff]
    %v614 = vld [vmem:[#allocation5 + $0x1098] sm:$0xff]
    %v615 = vld [vmem:[#allocation5 + $0x10a0] sm:$0xff]
    %v616 = vld [vmem:[#allocation5 + $0x10a8] sm:$0xff]
    %v617 = vld [vmem:[#allocation5 + $0x10b0] sm:$0xff]
    %v618 = vld [vmem:[#allocation5 + $0x10b8] sm:$0xff]
    %v619 = vld [vmem:[#allocation5 + $0x10c0] sm:$0xff]
    %v620 = vld [vmem:[#allocation5 + $0x10c8] sm:$0xff]
    %v621 = vld [vmem:[#allocation5 + $0x10d0] sm:$0xff]
    %v622 = vld [vmem:[#allocation5 + $0x10d8] sm:$0xff]
    %v623 = vld [vmem:[#allocation5 + $0x10e0] sm:$0xff]
    %v624 = vld [vmem:[#allocation5 + $0x10e8] sm:$0xff]
    %v625 = vld [vmem:[#allocation5 + $0x10f0] sm:$0xff]
    %v626 = vld [vmem:[#allocation5 + $0x10f8] sm:$0xff]
    %v627 = vld [vmem:[#allocation5 + $0x1100] sm:$0xff]
    %v628 = vld [vmem:[#allocation5 + $0x1108] sm:$0xff]
    %v629 = vld [vmem:[#allocation5 + $0x1110] sm:$0xff]
    %v630 = vld [vmem:[#allocation5 + $0x1118] sm:$0xff]
    %v631 = vld [vmem:[#allocation5 + $0x1120] sm:$0xff]
    %v632 = vld [vmem:[#allocation5 + $0x1128] sm:$0xff]
    %v633 = vld [vmem:[#allocation5 + $0x1130] sm:$0xff]
    %v634 = vld [vmem:[#allocation5 + $0x1138] sm:$0xff]
    %v635 = vld [vmem:[#allocation5 + $0x1140] sm:$0xff]
    %v636 = vld [vmem:[#allocation5 + $0x1148] sm:$0xff]
    %v637 = vld [vmem:[#allocation5 + $0x1150] sm:$0xff]
    %v638 = vld [vmem:[#allocation5 + $0x1158] sm:$0xff]
    %v639 = vld [vmem:[#allocation5 + $0x1160] sm:$0xff]
    %v640 = vld [vmem:[#allocation5 + $0x1168] sm:$0xff]
    %v641 = vld [vmem:[#allocation5 + $0x1170] sm:$0xff]
    %v642 = vld [vmem:[#allocation5 + $0x1178] sm:$0xff]
    %v643 = vld [vmem:[#allocation5 + $0x1180] sm:$0xff]
    %v644 = vld [vmem:[#allocation5 + $0x1188] sm:$0xff]
    %v645 = vld [vmem:[#allocation5 + $0x1190] sm:$0xff]
    %v646 = vld [vmem:[#allocation5 + $0x1198] sm:$0xff]
    %v647 = vld [vmem:[#allocation5 + $0x11a0] sm:$0xff]
    %v648 = vld [vmem:[#allocation5 + $0x11a8] sm:$0xff]
    %v649 = vld [vmem:[#allocation5 + $0x11b0] sm:$0xff]
    %v650 = vld [vmem:[#allocation5 + $0x11b8] sm:$0xff]
    %v651 = vld [vmem:[#allocation5 + $0x11c0] sm:$0xff]
    %v652 = vld [vmem:[#allocation5 + $0x11c8] sm:$0xff]
    %v653 = vld [vmem:[#allocation5 + $0x11d0] sm:$0xff]
    %v654 = vld [vmem:[#allocation5 + $0x11d8] sm:$0xff]
    %v655 = vld [vmem:[#allocation5 + $0x11e0] sm:$0xff]
    %v656 = vld [vmem:[#allocation5 + $0x11e8] sm:$0xff]
    %v657 = vld [vmem:[#allocation5 + $0x11f0] sm:$0xff]
    %v658 = vld [vmem:[#allocation5 + $0x11f8] sm:$0xff]
    %v659 = vld [vmem:[#allocation5 + $0x1200] sm:$0xff]
    %v660 = vld [vmem:[#allocation5 + $0x1208] sm:$0xff]
    %v661 = vld [vmem:[#allocation5 + $0x1210] sm:$0xff]
    %v662 = vld [vmem:[#allocation5 + $0x1218] sm:$0xff]
    %v663 = vld [vmem:[#allocation5 + $0x1220] sm:$0xff]
    %v664 = vld [vmem:[#allocation5 + $0x1228] sm:$0xff]
    %v665 = vld [vmem:[#allocation5 + $0x1230] sm:$0xff]
    %v666 = vld [vmem:[#allocation5 + $0x1238] sm:$0xff]
    %v667 = vld [vmem:[#allocation5 + $0x1240] sm:$0xff]
    %v668 = vld [vmem:[#allocation5 + $0x1248] sm:$0xff]
    %v669 = vld [vmem:[#allocation5 + $0x1250] sm:$0xff]
    %v670 = vld [vmem:[#allocation5 + $0x1258] sm:$0xff]
    %v671 = vld [vmem:[#allocation5 + $0x1260] sm:$0xff]
    %v672 = vld [vmem:[#allocation5 + $0x1268] sm:$0xff]
    %v673 = vld [vmem:[#allocation5 + $0x1270] sm:$0xff]
    %v674 = vld [vmem:[#allocation5 + $0x1278] sm:$0xff]
    %v675 = vld [vmem:[#allocation5 + $0x1280] sm:$0xff]
    %v676 = vld [vmem:[#allocation5 + $0x1288] sm:$0xff]
    %v677 = vld [vmem:[#allocation5 + $0x1290] sm:$0xff]
    %v678 = vld [vmem:[#allocation5 + $0x1298] sm:$0xff]
    %v679 = vld [vmem:[#allocation5 + $0x12a0] sm:$0xff]
    %v680 = vld [vmem:[#allocation5 + $0x12a8] sm:$0xff]
    %v681 = vld [vmem:[#allocation5 + $0x12b0] sm:$0xff]
    %v682 = vld [vmem:[#allocation5 + $0x12b8] sm:$0xff]
    %v683 = vld [vmem:[#allocation5 + $0x12c0] sm:$0xff]
    %v684 = vld [vmem:[#allocation5 + $0x12c8] sm:$0xff]
    %v685 = vld [vmem:[#allocation5 + $0x12d0] sm:$0xff]
    %v686 = vld [vmem:[#allocation5 + $0x12d8] sm:$0xff]
    %v687 = vld [vmem:[#allocation5 + $0x12e0] sm:$0xff]
    %v688 = vld [vmem:[#allocation5 + $0x12e8] sm:$0xff]
    %v689 = vld [vmem:[#allocation5 + $0x12f0] sm:$0xff]
    %v690 = vld [vmem:[#allocation5 + $0x12f8] sm:$0xff]
    %v691 = vld [vmem:[#allocation5 + $0x1300] sm:$0xff]
    %v692 = vld [vmem:[#allocation5 + $0x1308] sm:$0xff]
    %v693 = vld [vmem:[#allocation5 + $0x1310] sm:$0xff]
    %v694 = vld [vmem:[#allocation5 + $0x1318] sm:$0xff]
    %v695 = vld [vmem:[#allocation5 + $0x1320] sm:$0xff]
    %v696 = vld [vmem:[#allocation5 + $0x1328] sm:$0xff]
    %v697 = vld [vmem:[#allocation5 + $0x1330] sm:$0xff]
    %v698 = vld [vmem:[#allocation5 + $0x1338] sm:$0xff]
    %v699 = vld [vmem:[#allocation5 + $0x1340] sm:$0xff]
    %v700 = vld [vmem:[#allocation5 + $0x1348] sm:$0xff]
    %v701 = vld [vmem:[#allocation5 + $0x1350] sm:$0xff]
    %v702 = vld [vmem:[#allocation5 + $0x1358] sm:$0xff]
    %v703 = vld [vmem:[#allocation5 + $0x1360] sm:$0xff]
    %v704 = vld [vmem:[#allocation5 + $0x1368] sm:$0xff]
    %v705 = vld [vmem:[#allocation5 + $0x1370] sm:$0xff]
    %v706 = vld [vmem:[#allocation5 + $0x1378] sm:$0xff]
    %v707 = vld [vmem:[#allocation5 + $0x1380] sm:$0xff]
    %v708 = vld [vmem:[#allocation5 + $0x1388] sm:$0xff]
    %v709 = vld [vmem:[#allocation5 + $0x1390] sm:$0xff]
    %v710 = vld [vmem:[#allocation5 + $0x1398] sm:$0xff]
    %v711 = vld [vmem:[#allocation5 + $0x13a0] sm:$0xff]
    %v712 = vld [vmem:[#allocation5 + $0x13a8] sm:$0xff]
    %v713 = vld [vmem:[#allocation5 + $0x13b0] sm:$0xff]
    %v714 = vld [vmem:[#allocation5 + $0x13b8] sm:$0xff]
    %v715 = vld [vmem:[#allocation5 + $0x13c0] sm:$0xff]
    %v716 = vld [vmem:[#allocation5 + $0x13c8] sm:$0xff]
    %v717 = vld [vmem:[#allocation5 + $0x13d0] sm:$0xff]
    %v718 = vld [vmem:[#allocation5 + $0x13d8] sm:$0xff]
    %v719 = vld [vmem:[#allocation5 + $0x13e0] sm:$0xff]
    %v720 = vld [vmem:[#allocation5 + $0x13e8] sm:$0xff]
    %v721 = vld [vmem:[#allocation5 + $0x13f0] sm:$0xff]
    %v722 = vld [vmem:[#allocation5 + $0x13f8] sm:$0xff]
    %v723 = vld [vmem:[#allocation5 + $0x1400] sm:$0xff]
    %v724 = vld [vmem:[#allocation5 + $0x1408] sm:$0xff]
    %v725 = vld [vmem:[#allocation5 + $0x1410] sm:$0xff]
    %v726 = vld [vmem:[#allocation5 + $0x1418] sm:$0xff]
    %v727 = vld [vmem:[#allocation5 + $0x1420] sm:$0xff]
    %v728 = vld [vmem:[#allocation5 + $0x1428] sm:$0xff]
    %v729 = vld [vmem:[#allocation5 + $0x1430] sm:$0xff]
    %v730 = vld [vmem:[#allocation5 + $0x1438] sm:$0xff]
    %v731 = vld [vmem:[#allocation5 + $0x1440] sm:$0xff]
    %v732 = vld [vmem:[#allocation5 + $0x1448] sm:$0xff]
    %v733 = vld [vmem:[#allocation5 + $0x1450] sm:$0xff]
    %v734 = vld [vmem:[#allocation5 + $0x1458] sm:$0xff]
    %v735 = vld [vmem:[#allocation5 + $0x1460] sm:$0xff]
    %v736 = vld [vmem:[#allocation5 + $0x1468] sm:$0xff]
    %v737 = vld [vmem:[#allocation5 + $0x1470] sm:$0xff]
    %v738 = vld [vmem:[#allocation5 + $0x1478] sm:$0xff]
    %v739 = vld [vmem:[#allocation5 + $0x1480] sm:$0xff]
    %v740 = vld [vmem:[#allocation5 + $0x1488] sm:$0xff]
    %v741 = vld [vmem:[#allocation5 + $0x1490] sm:$0xff]
    %v742 = vld [vmem:[#allocation5 + $0x1498] sm:$0xff]
    %v743 = vld [vmem:[#allocation5 + $0x14a0] sm:$0xff]
    %v744 = vld [vmem:[#allocation5 + $0x14a8] sm:$0xff]
    %v745 = vld [vmem:[#allocation5 + $0x14b0] sm:$0xff]
    %v746 = vld [vmem:[#allocation5 + $0x14b8] sm:$0xff]
    %v747 = vld [vmem:[#allocation5 + $0x14c0] sm:$0xff]
    %v748 = vld [vmem:[#allocation5 + $0x14c8] sm:$0xff]
    %v749 = vld [vmem:[#allocation5 + $0x14d0] sm:$0xff]
    %v750 = vld [vmem:[#allocation5 + $0x14d8] sm:$0xff]
    %v751 = vld [vmem:[#allocation5 + $0x14e0] sm:$0xff]
    %v752 = vld [vmem:[#allocation5 + $0x14e8] sm:$0xff]
    %v753 = vld [vmem:[#allocation5 + $0x14f0] sm:$0xff]
    %v754 = vld [vmem:[#allocation5 + $0x14f8] sm:$0xff]
    %v755 = vld [vmem:[#allocation5 + $0x1500] sm:$0xff]
    %v756 = vld [vmem:[#allocation5 + $0x1508] sm:$0xff]
    %v757 = vld [vmem:[#allocation5 + $0x1510] sm:$0xff]
    %v758 = vld [vmem:[#allocation5 + $0x1518] sm:$0xff]
    %v759 = vld [vmem:[#allocation5 + $0x1520] sm:$0xff]
    %v760 = vld [vmem:[#allocation5 + $0x1528] sm:$0xff]
    %v761 = vld [vmem:[#allocation5 + $0x1530] sm:$0xff]
    %v762 = vld [vmem:[#allocation5 + $0x1538] sm:$0xff]
    %v763 = vld [vmem:[#allocation5 + $0x1540] sm:$0xff]
    %v764 = vld [vmem:[#allocation5 + $0x1548] sm:$0xff]
    %v765 = vld [vmem:[#allocation5 + $0x1550] sm:$0xff]
    %v766 = vld [vmem:[#allocation5 + $0x1558] sm:$0xff]
    %v767 = vld [vmem:[#allocation5 + $0x1560] sm:$0xff]
    %v768 = vld [vmem:[#allocation5 + $0x1568] sm:$0xff]
    %v769 = vld [vmem:[#allocation5 + $0x1570] sm:$0xff]
    %v770 = vld [vmem:[#allocation5 + $0x1578] sm:$0xff]
    %v771 = vld [vmem:[#allocation5 + $0x1580] sm:$0xff]
    %v772 = vld [vmem:[#allocation5 + $0x1588] sm:$0xff]
    %v773 = vld [vmem:[#allocation5 + $0x1590] sm:$0xff]
    %v774 = vld [vmem:[#allocation5 + $0x1598] sm:$0xff]
    %v775 = vld [vmem:[#allocation5 + $0x15a0] sm:$0xff]
    %v776 = vld [vmem:[#allocation5 + $0x15a8] sm:$0xff]
    %v777 = vld [vmem:[#allocation5 + $0x15b0] sm:$0xff]
    %v778 = vld [vmem:[#allocation5 + $0x15b8] sm:$0xff]
    %v779 = vld [vmem:[#allocation5 + $0x15c0] sm:$0xff]
    %v780 = vld [vmem:[#allocation5 + $0x15c8] sm:$0xff]
    %v781 = vld [vmem:[#allocation5 + $0x15d0] sm:$0xff]
    %v782 = vld [vmem:[#allocation5 + $0x15d8] sm:$0xff]
    %v783 = vld [vmem:[#allocation5 + $0x15e0] sm:$0xff]
    %v784 = vld [vmem:[#allocation5 + $0x15e8] sm:$0xff]
    %v785 = vld [vmem:[#allocation5 + $0x15f0] sm:$0xff]
    %v786 = vld [vmem:[#allocation5 + $0x15f8] sm:$0xff]
    %v787 = vld [vmem:[#allocation5 + $0x1600] sm:$0xff]
    %v788 = vld [vmem:[#allocation5 + $0x1608] sm:$0xff]
    %v789 = vld [vmem:[#allocation5 + $0x1610] sm:$0xff]
    %v790 = vld [vmem:[#allocation5 + $0x1618] sm:$0xff]
    %v791 = vld [vmem:[#allocation5 + $0x1620] sm:$0xff]
    %v792 = vld [vmem:[#allocation5 + $0x1628] sm:$0xff]
    %v793 = vld [vmem:[#allocation5 + $0x1630] sm:$0xff]
    %v794 = vld [vmem:[#allocation5 + $0x1638] sm:$0xff]
    %v795 = vld [vmem:[#allocation5 + $0x1640] sm:$0xff]
    %v796 = vld [vmem:[#allocation5 + $0x1648] sm:$0xff]
    %v797 = vld [vmem:[#allocation5 + $0x1650] sm:$0xff]
    %v798 = vld [vmem:[#allocation5 + $0x1658] sm:$0xff]
    %v799 = vld [vmem:[#allocation5 + $0x1660] sm:$0xff]
    %v800 = vld [vmem:[#allocation5 + $0x1668] sm:$0xff]
    %v801 = vld [vmem:[#allocation5 + $0x1670] sm:$0xff]
    %v802 = vld [vmem:[#allocation5 + $0x1678] sm:$0xff]
    %v803 = vld [vmem:[#allocation5 + $0x1680] sm:$0xff]
    %v804 = vld [vmem:[#allocation5 + $0x1688] sm:$0xff]
    %v805 = vld [vmem:[#allocation5 + $0x1690] sm:$0xff]
    %v806 = vld [vmem:[#allocation5 + $0x1698] sm:$0xff]
    %v807 = vld [vmem:[#allocation5 + $0x16a0] sm:$0xff]
    %v808 = vld [vmem:[#allocation5 + $0x16a8] sm:$0xff]
    %v809 = vld [vmem:[#allocation5 + $0x16b0] sm:$0xff]
    %v810 = vld [vmem:[#allocation5 + $0x16b8] sm:$0xff]
    %v811 = vld [vmem:[#allocation5 + $0x16c0] sm:$0xff]
    %v812 = vld [vmem:[#allocation5 + $0x16c8] sm:$0xff]
    %v813 = vld [vmem:[#allocation5 + $0x16d0] sm:$0xff]
    %v814 = vld [vmem:[#allocation5 + $0x16d8] sm:$0xff]
    %v815 = vld [vmem:[#allocation5 + $0x16e0] sm:$0xff]
    %v816 = vld [vmem:[#allocation5 + $0x16e8] sm:$0xff]
    %v817 = vld [vmem:[#allocation5 + $0x16f0] sm:$0xff]
    %v818 = vld [vmem:[#allocation5 + $0x16f8] sm:$0xff]
    %v819 = vld [vmem:[#allocation5 + $0x1700] sm:$0xff]
    %v820 = vld [vmem:[#allocation5 + $0x1708] sm:$0xff]
    %v821 = vld [vmem:[#allocation5 + $0x1710] sm:$0xff]
    %v822 = vld [vmem:[#allocation5 + $0x1718] sm:$0xff]
    %v823 = vld [vmem:[#allocation5 + $0x1720] sm:$0xff]
    %v824 = vld [vmem:[#allocation5 + $0x1728] sm:$0xff]
    %v825 = vld [vmem:[#allocation5 + $0x1730] sm:$0xff]
    %v826 = vld [vmem:[#allocation5 + $0x1738] sm:$0xff]
    %v827 = vld [vmem:[#allocation5 + $0x1740] sm:$0xff]
    %v828 = vld [vmem:[#allocation5 + $0x1748] sm:$0xff]
    %v829 = vld [vmem:[#allocation5 + $0x1750] sm:$0xff]
    %v830 = vld [vmem:[#allocation5 + $0x1758] sm:$0xff]
    %v831 = vld [vmem:[#allocation5 + $0x1760] sm:$0xff]
    %v832 = vld [vmem:[#allocation5 + $0x1768] sm:$0xff]
    %v833 = vld [vmem:[#allocation5 + $0x1770] sm:$0xff]
    %v834 = vld [vmem:[#allocation5 + $0x1778] sm:$0xff]
    %v835 = vld [vmem:[#allocation5 + $0x1780] sm:$0xff]
    %v836 = vld [vmem:[#allocation5 + $0x1788] sm:$0xff]
    %v837 = vld [vmem:[#allocation5 + $0x1790] sm:$0xff]
    %v838 = vld [vmem:[#allocation5 + $0x1798] sm:$0xff]
    %v839 = vld [vmem:[#allocation5 + $0x17a0] sm:$0xff]
    %v840 = vld [vmem:[#allocation5 + $0x17a8] sm:$0xff]
    %v841 = vld [vmem:[#allocation5 + $0x17b0] sm:$0xff]
    %v842 = vld [vmem:[#allocation5 + $0x17b8] sm:$0xff]
    %v843 = vld [vmem:[#allocation5 + $0x17c0] sm:$0xff]
    %v844 = vld [vmem:[#allocation5 + $0x17c8] sm:$0xff]
    %v845 = vld [vmem:[#allocation5 + $0x17d0] sm:$0xff]
    %v846 = vld [vmem:[#allocation5 + $0x17d8] sm:$0xff]
    %v847 = vld [vmem:[#allocation5 + $0x17e0] sm:$0xff]
    %v848 = vld [vmem:[#allocation5 + $0x17e8] sm:$0xff]
    %v849 = vld [vmem:[#allocation5 + $0x17f0] sm:$0xff]
    %v850 = vld [vmem:[#allocation5 + $0x17f8] sm:$0xff]
    %v851 = vld [vmem:[#allocation5 + $0x1800] sm:$0xff]
    %v852 = vld [vmem:[#allocation5 + $0x1808] sm:$0xff]
    %v853 = vld [vmem:[#allocation5 + $0x1810] sm:$0xff]
    %v854 = vld [vmem:[#allocation5 + $0x1818] sm:$0xff]
    %v855 = vld [vmem:[#allocation5 + $0x1820] sm:$0xff]
    %v856 = vld [vmem:[#allocation5 + $0x1828] sm:$0xff]
    %v857 = vld [vmem:[#allocation5 + $0x1830] sm:$0xff]
    %v858 = vld [vmem:[#allocation5 + $0x1838] sm:$0xff]
    %v859 = vld [vmem:[#allocation5 + $0x1840] sm:$0xff]
    %v860 = vld [vmem:[#allocation5 + $0x1848] sm:$0xff]
    %v861 = vld [vmem:[#allocation5 + $0x1850] sm:$0xff]
    %v862 = vld [vmem:[#allocation5 + $0x1858] sm:$0xff]
    %v863 = vld [vmem:[#allocation5 + $0x1860] sm:$0xff]
    %v864 = vld [vmem:[#allocation5 + $0x1868] sm:$0xff]
    %v865 = vld [vmem:[#allocation5 + $0x1870] sm:$0xff]
    %v866 = vld [vmem:[#allocation5 + $0x1878] sm:$0xff]
    %v867 = vld [vmem:[#allocation5 + $0x1880] sm:$0xff]
    %v868 = vld [vmem:[#allocation5 + $0x1888] sm:$0xff]
    %v869 = vld [vmem:[#allocation5 + $0x1890] sm:$0xff]
    %v870 = vld [vmem:[#allocation5 + $0x1898] sm:$0xff]
    %v871 = vld [vmem:[#allocation5 + $0x18a0] sm:$0xff]
    %v872 = vld [vmem:[#allocation5 + $0x18a8] sm:$0xff]
    %v873 = vld [vmem:[#allocation5 + $0x18b0] sm:$0xff]
    %v874 = vld [vmem:[#allocation5 + $0x18b8] sm:$0xff]
    %v875 = vld [vmem:[#allocation5 + $0x18c0] sm:$0xff]
    %v876 = vld [vmem:[#allocation5 + $0x18c8] sm:$0xff]
    %v877 = vld [vmem:[#allocation5 + $0x18d0] sm:$0xff]
    %v878 = vld [vmem:[#allocation5 + $0x18d8] sm:$0xff]
    %v879 = vld [vmem:[#allocation5 + $0x18e0] sm:$0xff]
    %v880 = vld [vmem:[#allocation5 + $0x18e8] sm:$0xff]
    %v881 = vld [vmem:[#allocation5 + $0x18f0] sm:$0xff]
    %v882 = vld [vmem:[#allocation5 + $0x18f8] sm:$0xff]
    %v883 = vld [vmem:[#allocation5 + $0x1900] sm:$0xff]
    %v884 = vld [vmem:[#allocation5 + $0x1908] sm:$0xff]
    %v885 = vld [vmem:[#allocation5 + $0x1910] sm:$0xff]
    %v886 = vld [vmem:[#allocation5 + $0x1918] sm:$0xff]
    %v887 = vld [vmem:[#allocation5 + $0x1920] sm:$0xff]
    %v888 = vld [vmem:[#allocation5 + $0x1928] sm:$0xff]
    %v889 = vld [vmem:[#allocation5 + $0x1930] sm:$0xff]
    %v890 = vld [vmem:[#allocation5 + $0x1938] sm:$0xff]
    %v891 = vld [vmem:[#allocation5 + $0x1940] sm:$0xff]
    %v892 = vld [vmem:[#allocation5 + $0x1948] sm:$0xff]
    %v893 = vld [vmem:[#allocation5 + $0x1950] sm:$0xff]
    %v894 = vld [vmem:[#allocation5 + $0x1958] sm:$0xff]
    %v895 = vld [vmem:[#allocation5 + $0x1960] sm:$0xff]
    %v896 = vld [vmem:[#allocation5 + $0x1968] sm:$0xff]
    %v897 = vld [vmem:[#allocation5 + $0x1970] sm:$0xff]
    %v898 = vld [vmem:[#allocation5 + $0x1978] sm:$0xff]
    %v899 = vld [vmem:[#allocation5 + $0x1980] sm:$0xff]
    %v900 = vld [vmem:[#allocation5 + $0x1988] sm:$0xff]
    %v901 = vld [vmem:[#allocation5 + $0x1990] sm:$0xff]
    %v902 = vld [vmem:[#allocation5 + $0x1998] sm:$0xff]
    %v903 = vld [vmem:[#allocation5 + $0x19a0] sm:$0xff]
    %v904 = vld [vmem:[#allocation5 + $0x19a8] sm:$0xff]
    %v905 = vld [vmem:[#allocation5 + $0x19b0] sm:$0xff]
    %v906 = vld [vmem:[#allocation5 + $0x19b8] sm:$0xff]
    %v907 = vld [vmem:[#allocation5 + $0x19c0] sm:$0xff]
    %v908 = vld [vmem:[#allocation5 + $0x19c8] sm:$0xff]
    %v909 = vld [vmem:[#allocation5 + $0x19d0] sm:$0xff]
    %v910 = vld [vmem:[#allocation5 + $0x19d8] sm:$0xff]
    %v911 = vld [vmem:[#allocation5 + $0x19e0] sm:$0xff]
    %v912 = vld [vmem:[#allocation5 + $0x19e8] sm:$0xff]
    %v913 = vld [vmem:[#allocation5 + $0x19f0] sm:$0xff]
    %v914 = vld [vmem:[#allocation5 + $0x19f8] sm:$0xff]
    %v915 = vld [vmem:[#allocation5 + $0x1a00] sm:$0xff]
    %v916 = vld [vmem:[#allocation5 + $0x1a08] sm:$0xff]
    %v917 = vld [vmem:[#allocation5 + $0x1a10] sm:$0xff]
    %v918 = vld [vmem:[#allocation5 + $0x1a18] sm:$0xff]
    %v919 = vld [vmem:[#allocation5 + $0x1a20] sm:$0xff]
    %v920 = vld [vmem:[#allocation5 + $0x1a28] sm:$0xff]
    %v921 = vld [vmem:[#allocation5 + $0x1a30] sm:$0xff]
    %v922 = vld [vmem:[#allocation5 + $0x1a38] sm:$0xff]
    %v923 = vld [vmem:[#allocation5 + $0x1a40] sm:$0xff]
    %v924 = vld [vmem:[#allocation5 + $0x1a48] sm:$0xff]
    %v925 = vld [vmem:[#allocation5 + $0x1a50] sm:$0xff]
    %v926 = vld [vmem:[#allocation5 + $0x1a58] sm:$0xff]
    %v927 = vld [vmem:[#allocation5 + $0x1a60] sm:$0xff]
    %v928 = vld [vmem:[#allocation5 + $0x1a68] sm:$0xff]
    %v929 = vld [vmem:[#allocation5 + $0x1a70] sm:$0xff]
    %v930 = vld [vmem:[#allocation5 + $0x1a78] sm:$0xff]
    %v931 = vld [vmem:[#allocation5 + $0x1a80] sm:$0xff]
    %v932 = vld [vmem:[#allocation5 + $0x1a88] sm:$0xff]
    %v933 = vld [vmem:[#allocation5 + $0x1a90] sm:$0xff]
    %v934 = vld [vmem:[#allocation5 + $0x1a98] sm:$0xff]
    %v935 = vld [vmem:[#allocation5 + $0x1aa0] sm:$0xff]
    %v936 = vld [vmem:[#allocation5 + $0x1aa8] sm:$0xff]
    %v937 = vld [vmem:[#allocation5 + $0x1ab0] sm:$0xff]
    %v938 = vld [vmem:[#allocation5 + $0x1ab8] sm:$0xff]
    %v939 = vld [vmem:[#allocation5 + $0x1ac0] sm:$0xff]
    %v940 = vld [vmem:[#allocation5 + $0x1ac8] sm:$0xff]
    %v941 = vld [vmem:[#allocation5 + $0x1ad0] sm:$0xff]
    %v942 = vld [vmem:[#allocation5 + $0x1ad8] sm:$0xff]
    %v943 = vld [vmem:[#allocation5 + $0x1ae0] sm:$0xff]
    %v944 = vld [vmem:[#allocation5 + $0x1ae8] sm:$0xff]
    %v945 = vld [vmem:[#allocation5 + $0x1af0] sm:$0xff]
    %v946 = vld [vmem:[#allocation5 + $0x1af8] sm:$0xff]
    %v947 = vld [vmem:[#allocation5 + $0x1b00] sm:$0xff]
    %v948 = vld [vmem:[#allocation5 + $0x1b08] sm:$0xff]
    %v949 = vld [vmem:[#allocation5 + $0x1b10] sm:$0xff]
    %v950 = vld [vmem:[#allocation5 + $0x1b18] sm:$0xff]
    %v951 = vld [vmem:[#allocation5 + $0x1b20] sm:$0xff]
    %v952 = vld [vmem:[#allocation5 + $0x1b28] sm:$0xff]
    %v953 = vld [vmem:[#allocation5 + $0x1b30] sm:$0xff]
    %v954 = vld [vmem:[#allocation5 + $0x1b38] sm:$0xff]
    %v955 = vld [vmem:[#allocation5 + $0x1b40] sm:$0xff]
    %v956 = vld [vmem:[#allocation5 + $0x1b48] sm:$0xff]
    %v957 = vld [vmem:[#allocation5 + $0x1b50] sm:$0xff]
    %v958 = vld [vmem:[#allocation5 + $0x1b58] sm:$0xff]
    %v959 = vld [vmem:[#allocation5 + $0x1b60] sm:$0xff]
    %v960 = vld [vmem:[#allocation5 + $0x1b68] sm:$0xff]
    %v961 = vld [vmem:[#allocation5 + $0x1b70] sm:$0xff]
    %v962 = vld [vmem:[#allocation5 + $0x1b78] sm:$0xff]
    %v963 = vld [vmem:[#allocation5 + $0x1b80] sm:$0xff]
    %v964 = vld [vmem:[#allocation5 + $0x1b88] sm:$0xff]
    %v965 = vld [vmem:[#allocation5 + $0x1b90] sm:$0xff]
    %v966 = vld [vmem:[#allocation5 + $0x1b98] sm:$0xff]
    %v967 = vld [vmem:[#allocation5 + $0x1ba0] sm:$0xff]
    %v968 = vld [vmem:[#allocation5 + $0x1ba8] sm:$0xff]
    %v969 = vld [vmem:[#allocation5 + $0x1bb0] sm:$0xff]
    %v970 = vld [vmem:[#allocation5 + $0x1bb8] sm:$0xff]
    %v971 = vld [vmem:[#allocation5 + $0x1bc0] sm:$0xff]
    %v972 = vld [vmem:[#allocation5 + $0x1bc8] sm:$0xff]
    %v973 = vld [vmem:[#allocation5 + $0x1bd0] sm:$0xff]
    %v974 = vld [vmem:[#allocation5 + $0x1bd8] sm:$0xff]
    %v975 = vld [vmem:[#allocation5 + $0x1be0] sm:$0xff]
    %v976 = vld [vmem:[#allocation5 + $0x1be8] sm:$0xff]
    %v977 = vld [vmem:[#allocation5 + $0x1bf0] sm:$0xff]
    %v978 = vld [vmem:[#allocation5 + $0x1bf8] sm:$0xff]
    %v979 = vld [vmem:[#allocation5 + $0x1c00] sm:$0xff]
    %v980 = vld [vmem:[#allocation5 + $0x1c08] sm:$0xff]
    %v981 = vld [vmem:[#allocation5 + $0x1c10] sm:$0xff]
    %v982 = vld [vmem:[#allocation5 + $0x1c18] sm:$0xff]
    %v983 = vld [vmem:[#allocation5 + $0x1c20] sm:$0xff]
    %v984 = vld [vmem:[#allocation5 + $0x1c28] sm:$0xff]
    %v985 = vld [vmem:[#allocation5 + $0x1c30] sm:$0xff]
    %v986 = vld [vmem:[#allocation5 + $0x1c38] sm:$0xff]
    %v987 = vld [vmem:[#allocation5 + $0x1c40] sm:$0xff]
    %v988 = vld [vmem:[#allocation5 + $0x1c48] sm:$0xff]
    %v989 = vld [vmem:[#allocation5 + $0x1c50] sm:$0xff]
    %v990 = vld [vmem:[#allocation5 + $0x1c58] sm:$0xff]
    %v991 = vld [vmem:[#allocation5 + $0x1c60] sm:$0xff]
    %v992 = vld [vmem:[#allocation5 + $0x1c68] sm:$0xff]
    %v993 = vld [vmem:[#allocation5 + $0x1c70] sm:$0xff]
    %v994 = vld [vmem:[#allocation5 + $0x1c78] sm:$0xff]
    %v995 = vld [vmem:[#allocation5 + $0x1c80] sm:$0xff]
    %v996 = vld [vmem:[#allocation5 + $0x1c88] sm:$0xff]
    %v997 = vld [vmem:[#allocation5 + $0x1c90] sm:$0xff]
    %v998 = vld [vmem:[#allocation5 + $0x1c98] sm:$0xff]
    %v999 = vld [vmem:[#allocation5 + $0x1ca0] sm:$0xff]
    %v1000 = vld [vmem:[#allocation5 + $0x1ca8] sm:$0xff]
    %v1001 = vld [vmem:[#allocation5 + $0x1cb0] sm:$0xff]
    %v1002 = vld [vmem:[#allocation5 + $0x1cb8] sm:$0xff]
    %v1003 = vld [vmem:[#allocation5 + $0x1cc0] sm:$0xff]
    %v1004 = vld [vmem:[#allocation5 + $0x1cc8] sm:$0xff]
    %v1005 = vld [vmem:[#allocation5 + $0x1cd0] sm:$0xff]
    %v1006 = vld [vmem:[#allocation5 + $0x1cd8] sm:$0xff]
    %v1007 = vld [vmem:[#allocation5 + $0x1ce0] sm:$0xff]
    %v1008 = vld [vmem:[#allocation5 + $0x1ce8] sm:$0xff]
    %v1009 = vld [vmem:[#allocation5 + $0x1cf0] sm:$0xff]
    %v1010 = vld [vmem:[#allocation5 + $0x1cf8] sm:$0xff]
    %v1011 = vld [vmem:[#allocation5 + $0x1d00] sm:$0xff]
    %v1012 = vld [vmem:[#allocation5 + $0x1d08] sm:$0xff]
    %v1013 = vld [vmem:[#allocation5 + $0x1d10] sm:$0xff]
    %v1014 = vld [vmem:[#allocation5 + $0x1d18] sm:$0xff]
    %v1015 = vld [vmem:[#allocation5 + $0x1d20] sm:$0xff]
    %v1016 = vld [vmem:[#allocation5 + $0x1d28] sm:$0xff]
    %v1017 = vld [vmem:[#allocation5 + $0x1d30] sm:$0xff]
    %v1018 = vld [vmem:[#allocation5 + $0x1d38] sm:$0xff]
    %v1019 = vld [vmem:[#allocation5 + $0x1d40] sm:$0xff]
    %v1020 = vld [vmem:[#allocation5 + $0x1d48] sm:$0xff]
    %v1021 = vld [vmem:[#allocation5 + $0x1d50] sm:$0xff]
    %v1022 = vld [vmem:[#allocation5 + $0x1d58] sm:$0xff]
    %v1023 = vld [vmem:[#allocation5 + $0x1d60] sm:$0xff]
    %v1024 = vld [vmem:[#allocation5 + $0x1d68] sm:$0xff]
    %v1025 = vld [vmem:[#allocation5 + $0x1d70] sm:$0xff]
    %v1026 = vld [vmem:[#allocation5 + $0x1d78] sm:$0xff]
    %v1027 = vld [vmem:[#allocation5 + $0x1d80] sm:$0xff]
    %v1028 = vld [vmem:[#allocation5 + $0x1d88] sm:$0xff]
    %v1029 = vld [vmem:[#allocation5 + $0x1d90] sm:$0xff]
    %v1030 = vld [vmem:[#allocation5 + $0x1d98] sm:$0xff]
    %v1031 = vld [vmem:[#allocation5 + $0x1da0] sm:$0xff]
    %v1032 = vld [vmem:[#allocation5 + $0x1da8] sm:$0xff]
    %v1033 = vld [vmem:[#allocation5 + $0x1db0] sm:$0xff]
    %v1034 = vld [vmem:[#allocation5 + $0x1db8] sm:$0xff]
    %v1035 = vld [vmem:[#allocation5 + $0x1dc0] sm:$0xff]
    %v1036 = vld [vmem:[#allocation5 + $0x1dc8] sm:$0xff]
    %v1037 = vld [vmem:[#allocation5 + $0x1dd0] sm:$0xff]
    %v1038 = vld [vmem:[#allocation5 + $0x1dd8] sm:$0xff]
    %v1039 = vld [vmem:[#allocation5 + $0x1de0] sm:$0xff]
    %v1040 = vld [vmem:[#allocation5 + $0x1de8] sm:$0xff]
    %v1041 = vld [vmem:[#allocation5 + $0x1df0] sm:$0xff]
    %v1042 = vld [vmem:[#allocation5 + $0x1df8] sm:$0xff]
    %v1043 = vld [vmem:[#allocation5 + $0x1e00] sm:$0xff]
    %v1044 = vld [vmem:[#allocation5 + $0x1e08] sm:$0xff]
    %v1045 = vld [vmem:[#allocation5 + $0x1e10] sm:$0xff]
    %v1046 = vld [vmem:[#allocation5 + $0x1e18] sm:$0xff]
    %v1047 = vld [vmem:[#allocation5 + $0x1e20] sm:$0xff]
    %v1048 = vld [vmem:[#allocation5 + $0x1e28] sm:$0xff]
    %v1049 = vld [vmem:[#allocation5 + $0x1e30] sm:$0xff]
    %v1050 = vld [vmem:[#allocation5 + $0x1e38] sm:$0xff]
    %v1051 = vld [vmem:[#allocation5 + $0x1e40] sm:$0xff]
    %v1052 = vld [vmem:[#allocation5 + $0x1e48] sm:$0xff]
    %v1053 = vld [vmem:[#allocation5 + $0x1e50] sm:$0xff]
    %v1054 = vld [vmem:[#allocation5 + $0x1e58] sm:$0xff]
    %v1055 = vld [vmem:[#allocation5 + $0x1e60] sm:$0xff]
    %v1056 = vld [vmem:[#allocation5 + $0x1e68] sm:$0xff]
    %v1057 = vld [vmem:[#allocation5 + $0x1e70] sm:$0xff]
    %v1058 = vld [vmem:[#allocation5 + $0x1e78] sm:$0xff]
    %v1059 = vld [vmem:[#allocation5 + $0x1e80] sm:$0xff]
    %v1060 = vld [vmem:[#allocation5 + $0x1e88] sm:$0xff]
    %v1061 = vld [vmem:[#allocation5 + $0x1e90] sm:$0xff]
    %v1062 = vld [vmem:[#allocation5 + $0x1e98] sm:$0xff]
    %v1063 = vld [vmem:[#allocation5 + $0x1ea0] sm:$0xff]
    %v1064 = vld [vmem:[#allocation5 + $0x1ea8] sm:$0xff]
    %v1065 = vld [vmem:[#allocation5 + $0x1eb0] sm:$0xff]
    %v1066 = vld [vmem:[#allocation5 + $0x1eb8] sm:$0xff]
    %v1067 = vld [vmem:[#allocation5 + $0x1ec0] sm:$0xff]
    %v1068 = vld [vmem:[#allocation5 + $0x1ec8] sm:$0xff]
    %v1069 = vld [vmem:[#allocation5 + $0x1ed0] sm:$0xff]
    %v1070 = vld [vmem:[#allocation5 + $0x1ed8] sm:$0xff]
    %v1071 = vld [vmem:[#allocation5 + $0x1ee0] sm:$0xff]
    %v1072 = vld [vmem:[#allocation5 + $0x1ee8] sm:$0xff]
    %v1073 = vld [vmem:[#allocation5 + $0x1ef0] sm:$0xff]
    %v1074 = vld [vmem:[#allocation5 + $0x1ef8] sm:$0xff]
    %v1075 = vld [vmem:[#allocation5 + $0x1f00] sm:$0xff]
    %v1076 = vld [vmem:[#allocation5 + $0x1f08] sm:$0xff]
    %v1077 = vld [vmem:[#allocation5 + $0x1f10] sm:$0xff]
    %v1078 = vld [vmem:[#allocation5 + $0x1f18] sm:$0xff]
    %v1079 = vld [vmem:[#allocation5 + $0x1f20] sm:$0xff]
    %v1080 = vld [vmem:[#allocation5 + $0x1f28] sm:$0xff]
    %v1081 = vld [vmem:[#allocation5 + $0x1f30] sm:$0xff]
    %v1082 = vld [vmem:[#allocation5 + $0x1f38] sm:$0xff]
    %v1083 = vld [vmem:[#allocation5 + $0x1f40] sm:$0xff]
    %v1084 = vld [vmem:[#allocation5 + $0x1f48] sm:$0xff]
    %v1085 = vld [vmem:[#allocation5 + $0x1f50] sm:$0xff]
    %v1086 = vld [vmem:[#allocation5 + $0x1f58] sm:$0xff]
    %v1087 = vld [vmem:[#allocation5 + $0x1f60] sm:$0xff]
    %v1088 = vld [vmem:[#allocation5 + $0x1f68] sm:$0xff]
    %v1089 = vld [vmem:[#allocation5 + $0x1f70] sm:$0xff]
    %v1090 = vld [vmem:[#allocation5 + $0x1f78] sm:$0xff]
    %v1091 = vld [vmem:[#allocation5 + $0x1f80] sm:$0xff]
    %v1092 = vld [vmem:[#allocation5 + $0x1f88] sm:$0xff]
    %v1093 = vld [vmem:[#allocation5 + $0x1f90] sm:$0xff]
    %v1094 = vld [vmem:[#allocation5 + $0x1f98] sm:$0xff]
    %v1095 = vld [vmem:[#allocation5 + $0x1fa0] sm:$0xff]
    %v1096 = vld [vmem:[#allocation5 + $0x1fa8] sm:$0xff]
    %v1097 = vld [vmem:[#allocation5 + $0x1fb0] sm:$0xff]
    %v1098 = vld [vmem:[#allocation5 + $0x1fb8] sm:$0xff]
    %v1099 = vld [vmem:[#allocation5 + $0x1fc0] sm:$0xff]
    %v1100 = vld [vmem:[#allocation5 + $0x1fc8] sm:$0xff]
    %v1101 = vld [vmem:[#allocation5 + $0x1fd0] sm:$0xff]
    %v1102 = vld [vmem:[#allocation5 + $0x1fd8] sm:$0xff]
    %v1103 = vld [vmem:[#allocation5 + $0x1fe0] sm:$0xff]
    %v1104 = vld [vmem:[#allocation5 + $0x1fe8] sm:$0xff]
    %v1105 = vld [vmem:[#allocation5 + $0x1ff0] sm:$0xff]
    %v1106 = vld [vmem:[#allocation5 + $0x1ff8] sm:$0xff]
    %v1115 = vunpack.c.l.b16 %v75
    %v1116 = vunpack.c.h.b16 %v75
    %v1117 = vunpack.c.l.b16 %v76
    %v1118 = vunpack.c.h.b16 %v76
    %v1119 = vunpack.c.l.b16 %v77
    %v1120 = vunpack.c.h.b16 %v77
    %v1121 = vunpack.c.l.b16 %v78
    %v1122 = vunpack.c.h.b16 %v78
    %v1123 = vunpack.c.l.b16 %v79
    %v1124 = vunpack.c.h.b16 %v79
    %v1125 = vunpack.c.l.b16 %v80
    %v1126 = vunpack.c.h.b16 %v80
    %v1127 = vunpack.c.l.b16 %v81
    %v1128 = vunpack.c.h.b16 %v81
    %v1129 = vunpack.c.l.b16 %v82
    %v1130 = vunpack.c.h.b16 %v82
    %v1131 = vpack.c.b16 %v1115, %v1115
    %v1132 = vpack.c.b16 %v1116, %v1116
    %v1133 = vpack.c.b16 %v1117, %v1117
    %v1134 = vpack.c.b16 %v1118, %v1118
    %v1135 = vpack.c.b16 %v1119, %v1119
    %v1136 = vpack.c.b16 %v1120, %v1120
    %v1137 = vpack.c.b16 %v1121, %v1121
    %v1138 = vpack.c.b16 %v1122, %v1122
    %v1139 = vpack.c.b16 %v1123, %v1123
    %v1140 = vpack.c.b16 %v1124, %v1124
    %v1141 = vpack.c.b16 %v1125, %v1125
    %v1142 = vpack.c.b16 %v1126, %v1126
    %v1143 = vpack.c.b16 %v1127, %v1127
    %v1144 = vpack.c.b16 %v1128, %v1128
    %v1145 = vpack.c.b16 %v1129, %v1129
    %v1146 = vpack.c.b16 %v1130, %v1130
    %v2187 = vunpack.c.l.b16 %v83
    %v2188 = vunpack.c.h.b16 %v83
    %v2189 = vunpack.c.l.b16 %v84
    %v2190 = vunpack.c.h.b16 %v84
    %v2191 = vunpack.c.l.b16 %v85
    %v2192 = vunpack.c.h.b16 %v85
    %v2193 = vunpack.c.l.b16 %v86
    %v2194 = vunpack.c.h.b16 %v86
    %v2195 = vunpack.c.l.b16 %v87
    %v2196 = vunpack.c.h.b16 %v87
    %v2197 = vunpack.c.l.b16 %v88
    %v2198 = vunpack.c.h.b16 %v88
    %v2199 = vunpack.c.l.b16 %v89
    %v2200 = vunpack.c.h.b16 %v89
    %v2201 = vunpack.c.l.b16 %v90
    %v2202 = vunpack.c.h.b16 %v90
    %v2203 = vunpack.c.l.b16 %v91
    %v2204 = vunpack.c.h.b16 %v91
    %v2205 = vunpack.c.l.b16 %v92
    %v2206 = vunpack.c.h.b16 %v92
    %v2207 = vunpack.c.l.b16 %v93
    %v2208 = vunpack.c.h.b16 %v93
    %v2209 = vunpack.c.l.b16 %v94
    %v2210 = vunpack.c.h.b16 %v94
    %v2211 = vunpack.c.l.b16 %v95
    %v2212 = vunpack.c.h.b16 %v95
    %v2213 = vunpack.c.l.b16 %v96
    %v2214 = vunpack.c.h.b16 %v96
    %v2215 = vunpack.c.l.b16 %v97
    %v2216 = vunpack.c.h.b16 %v97
    %v2217 = vunpack.c.l.b16 %v98
    %v2218 = vunpack.c.h.b16 %v98
    %v2219 = vunpack.c.l.b16 %v99
    %v2220 = vunpack.c.h.b16 %v99
    %v2221 = vunpack.c.l.b16 %v100
    %v2222 = vunpack.c.h.b16 %v100
    %v2223 = vunpack.c.l.b16 %v101
    %v2224 = vunpack.c.h.b16 %v101
    %v2225 = vunpack.c.l.b16 %v102
    %v2226 = vunpack.c.h.b16 %v102
    %v2227 = vunpack.c.l.b16 %v103
    %v2228 = vunpack.c.h.b16 %v103
    %v2229 = vunpack.c.l.b16 %v104
    %v2230 = vunpack.c.h.b16 %v104
    %v2231 = vunpack.c.l.b16 %v105
    %v2232 = vunpack.c.h.b16 %v105
    %v2233 = vunpack.c.l.b16 %v106
    %v2234 = vunpack.c.h.b16 %v106
    %v2235 = vunpack.c.l.b16 %v107
    %v2236 = vunpack.c.h.b16 %v107
    %v2237 = vunpack.c.l.b16 %v108
    %v2238 = vunpack.c.h.b16 %v108
    %v2239 = vunpack.c.l.b16 %v109
    %v2240 = vunpack.c.h.b16 %v109
    %v2241 = vunpack.c.l.b16 %v110
    %v2242 = vunpack.c.h.b16 %v110
    %v2243 = vunpack.c.l.b16 %v111
    %v2244 = vunpack.c.h.b16 %v111
    %v2245 = vunpack.c.l.b16 %v112
    %v2246 = vunpack.c.h.b16 %v112
    %v2247 = vunpack.c.l.b16 %v113
    %v2248 = vunpack.c.h.b16 %v113
    %v2249 = vunpack.c.l.b16 %v114
    %v2250 = vunpack.c.h.b16 %v114
    %v2251 = vunpack.c.l.b16 %v115
    %v2252 = vunpack.c.h.b16 %v115
    %v2253 = vunpack.c.l.b16 %v116
    %v2254 = vunpack.c.h.b16 %v116
    %v2255 = vunpack.c.l.b16 %v117
    %v2256 = vunpack.c.h.b16 %v117
    %v2257 = vunpack.c.l.b16 %v118
    %v2258 = vunpack.c.h.b16 %v118
    %v2259 = vunpack.c.l.b16 %v119
    %v2260 = vunpack.c.h.b16 %v119
    %v2261 = vunpack.c.l.b16 %v120
    %v2262 = vunpack.c.h.b16 %v120
    %v2263 = vunpack.c.l.b16 %v121
    %v2264 = vunpack.c.h.b16 %v121
    %v2265 = vunpack.c.l.b16 %v122
    %v2266 = vunpack.c.h.b16 %v122
    %v2267 = vunpack.c.l.b16 %v123
    %v2268 = vunpack.c.h.b16 %v123
    %v2269 = vunpack.c.l.b16 %v124
    %v2270 = vunpack.c.h.b16 %v124
    %v2271 = vunpack.c.l.b16 %v125
    %v2272 = vunpack.c.h.b16 %v125
    %v2273 = vunpack.c.l.b16 %v126
    %v2274 = vunpack.c.h.b16 %v126
    %v2275 = vunpack.c.l.b16 %v127
    %v2276 = vunpack.c.h.b16 %v127
    %v2277 = vunpack.c.l.b16 %v128
    %v2278 = vunpack.c.h.b16 %v128
    %v2279 = vunpack.c.l.b16 %v129
    %v2280 = vunpack.c.h.b16 %v129
    %v2281 = vunpack.c.l.b16 %v130
    %v2282 = vunpack.c.h.b16 %v130
    %v2283 = vunpack.c.l.b16 %v131
    %v2284 = vunpack.c.h.b16 %v131
    %v2285 = vunpack.c.l.b16 %v132
    %v2286 = vunpack.c.h.b16 %v132
    %v2287 = vunpack.c.l.b16 %v133
    %v2288 = vunpack.c.h.b16 %v133
    %v2289 = vunpack.c.l.b16 %v134
    %v2290 = vunpack.c.h.b16 %v134
    %v2291 = vunpack.c.l.b16 %v135
    %v2292 = vunpack.c.h.b16 %v135
    %v2293 = vunpack.c.l.b16 %v136
    %v2294 = vunpack.c.h.b16 %v136
    %v2295 = vunpack.c.l.b16 %v137
    %v2296 = vunpack.c.h.b16 %v137
    %v2297 = vunpack.c.l.b16 %v138
    %v2298 = vunpack.c.h.b16 %v138
    %v2299 = vunpack.c.l.b16 %v139
    %v2300 = vunpack.c.h.b16 %v139
    %v2301 = vunpack.c.l.b16 %v140
    %v2302 = vunpack.c.h.b16 %v140
    %v2303 = vunpack.c.l.b16 %v141
    %v2304 = vunpack.c.h.b16 %v141
    %v2305 = vunpack.c.l.b16 %v142
    %v2306 = vunpack.c.h.b16 %v142
    %v2307 = vunpack.c.l.b16 %v143
    %v2308 = vunpack.c.h.b16 %v143
    %v2309 = vunpack.c.l.b16 %v144
    %v2310 = vunpack.c.h.b16 %v144
    %v2311 = vunpack.c.l.b16 %v145
    %v2312 = vunpack.c.h.b16 %v145
    %v2313 = vunpack.c.l.b16 %v146
    %v2314 = vunpack.c.h.b16 %v146
    %v2315 = vunpack.c.l.b16 %v147
    %v2316 = vunpack.c.h.b16 %v147
    %v2317 = vunpack.c.l.b16 %v148
    %v2318 = vunpack.c.h.b16 %v148
    %v2319 = vunpack.c.l.b16 %v149
    %v2320 = vunpack.c.h.b16 %v149
    %v2321 = vunpack.c.l.b16 %v150
    %v2322 = vunpack.c.h.b16 %v150
    %v2323 = vunpack.c.l.b16 %v151
    %v2324 = vunpack.c.h.b16 %v151
    %v2325 = vunpack.c.l.b16 %v152
    %v2326 = vunpack.c.h.b16 %v152
    %v2327 = vunpack.c.l.b16 %v153
    %v2328 = vunpack.c.h.b16 %v153
    %v2329 = vunpack.c.l.b16 %v154
    %v2330 = vunpack.c.h.b16 %v154
    %v2331 = vunpack.c.l.b16 %v155
    %v2332 = vunpack.c.h.b16 %v155
    %v2333 = vunpack.c.l.b16 %v156
    %v2334 = vunpack.c.h.b16 %v156
    %v2335 = vunpack.c.l.b16 %v157
    %v2336 = vunpack.c.h.b16 %v157
    %v2337 = vunpack.c.l.b16 %v158
    %v2338 = vunpack.c.h.b16 %v158
    %v2339 = vunpack.c.l.b16 %v159
    %v2340 = vunpack.c.h.b16 %v159
    %v2341 = vunpack.c.l.b16 %v160
    %v2342 = vunpack.c.h.b16 %v160
    %v2343 = vunpack.c.l.b16 %v161
    %v2344 = vunpack.c.h.b16 %v161
    %v2345 = vunpack.c.l.b16 %v162
    %v2346 = vunpack.c.h.b16 %v162
    %v2347 = vunpack.c.l.b16 %v163
    %v2348 = vunpack.c.h.b16 %v163
    %v2349 = vunpack.c.l.b16 %v164
    %v2350 = vunpack.c.h.b16 %v164
    %v2351 = vunpack.c.l.b16 %v165
    %v2352 = vunpack.c.h.b16 %v165
    %v2353 = vunpack.c.l.b16 %v166
    %v2354 = vunpack.c.h.b16 %v166
    %v2355 = vunpack.c.l.b16 %v167
    %v2356 = vunpack.c.h.b16 %v167
    %v2357 = vunpack.c.l.b16 %v168
    %v2358 = vunpack.c.h.b16 %v168
    %v2359 = vunpack.c.l.b16 %v169
    %v2360 = vunpack.c.h.b16 %v169
    %v2361 = vunpack.c.l.b16 %v170
    %v2362 = vunpack.c.h.b16 %v170
    %v2363 = vunpack.c.l.b16 %v171
    %v2364 = vunpack.c.h.b16 %v171
    %v2365 = vunpack.c.l.b16 %v172
    %v2366 = vunpack.c.h.b16 %v172
    %v2367 = vunpack.c.l.b16 %v173
    %v2368 = vunpack.c.h.b16 %v173
    %v2369 = vunpack.c.l.b16 %v174
    %v2370 = vunpack.c.h.b16 %v174
    %v2371 = vunpack.c.l.b16 %v175
    %v2372 = vunpack.c.h.b16 %v175
    %v2373 = vunpack.c.l.b16 %v176
    %v2374 = vunpack.c.h.b16 %v176
    %v2375 = vunpack.c.l.b16 %v177
    %v2376 = vunpack.c.h.b16 %v177
    %v2377 = vunpack.c.l.b16 %v178
    %v2378 = vunpack.c.h.b16 %v178
    %v2379 = vunpack.c.l.b16 %v179
    %v2380 = vunpack.c.h.b16 %v179
    %v2381 = vunpack.c.l.b16 %v180
    %v2382 = vunpack.c.h.b16 %v180
    %v2383 = vunpack.c.l.b16 %v181
    %v2384 = vunpack.c.h.b16 %v181
    %v2385 = vunpack.c.l.b16 %v182
    %v2386 = vunpack.c.h.b16 %v182
    %v2387 = vunpack.c.l.b16 %v183
    %v2388 = vunpack.c.h.b16 %v183
    %v2389 = vunpack.c.l.b16 %v184
    %v2390 = vunpack.c.h.b16 %v184
    %v2391 = vunpack.c.l.b16 %v185
    %v2392 = vunpack.c.h.b16 %v185
    %v2393 = vunpack.c.l.b16 %v186
    %v2394 = vunpack.c.h.b16 %v186
    %v2395 = vunpack.c.l.b16 %v187
    %v2396 = vunpack.c.h.b16 %v187
    %v2397 = vunpack.c.l.b16 %v188
    %v2398 = vunpack.c.h.b16 %v188
    %v2399 = vunpack.c.l.b16 %v189
    %v2400 = vunpack.c.h.b16 %v189
    %v2401 = vunpack.c.l.b16 %v190
    %v2402 = vunpack.c.h.b16 %v190
    %v2403 = vunpack.c.l.b16 %v191
    %v2404 = vunpack.c.h.b16 %v191
    %v2405 = vunpack.c.l.b16 %v192
    %v2406 = vunpack.c.h.b16 %v192
    %v2407 = vunpack.c.l.b16 %v193
    %v2408 = vunpack.c.h.b16 %v193
    %v2409 = vunpack.c.l.b16 %v194
    %v2410 = vunpack.c.h.b16 %v194
    %v2411 = vunpack.c.l.b16 %v195
    %v2412 = vunpack.c.h.b16 %v195
    %v2413 = vunpack.c.l.b16 %v196
    %v2414 = vunpack.c.h.b16 %v196
    %v2415 = vunpack.c.l.b16 %v197
    %v2416 = vunpack.c.h.b16 %v197
    %v2417 = vunpack.c.l.b16 %v198
    %v2418 = vunpack.c.h.b16 %v198
    %v2419 = vunpack.c.l.b16 %v199
    %v2420 = vunpack.c.h.b16 %v199
    %v2421 = vunpack.c.l.b16 %v200
    %v2422 = vunpack.c.h.b16 %v200
    %v2423 = vunpack.c.l.b16 %v201
    %v2424 = vunpack.c.h.b16 %v201
    %v2425 = vunpack.c.l.b16 %v202
    %v2426 = vunpack.c.h.b16 %v202
    %v2427 = vunpack.c.l.b16 %v203
    %v2428 = vunpack.c.h.b16 %v203
    %v2429 = vunpack.c.l.b16 %v204
    %v2430 = vunpack.c.h.b16 %v204
    %v2431 = vunpack.c.l.b16 %v205
    %v2432 = vunpack.c.h.b16 %v205
    %v2433 = vunpack.c.l.b16 %v206
    %v2434 = vunpack.c.h.b16 %v206
    %v2435 = vunpack.c.l.b16 %v207
    %v2436 = vunpack.c.h.b16 %v207
    %v2437 = vunpack.c.l.b16 %v208
    %v2438 = vunpack.c.h.b16 %v208
    %v2439 = vunpack.c.l.b16 %v209
    %v2440 = vunpack.c.h.b16 %v209
    %v2441 = vunpack.c.l.b16 %v210
    %v2442 = vunpack.c.h.b16 %v210
    %v2443 = vunpack.c.l.b16 %v211
    %v2444 = vunpack.c.h.b16 %v211
    %v2445 = vunpack.c.l.b16 %v212
    %v2446 = vunpack.c.h.b16 %v212
    %v2447 = vunpack.c.l.b16 %v213
    %v2448 = vunpack.c.h.b16 %v213
    %v2449 = vunpack.c.l.b16 %v214
    %v2450 = vunpack.c.h.b16 %v214
    %v2451 = vunpack.c.l.b16 %v215
    %v2452 = vunpack.c.h.b16 %v215
    %v2453 = vunpack.c.l.b16 %v216
    %v2454 = vunpack.c.h.b16 %v216
    %v2455 = vunpack.c.l.b16 %v217
    %v2456 = vunpack.c.h.b16 %v217
    %v2457 = vunpack.c.l.b16 %v218
    %v2458 = vunpack.c.h.b16 %v218
    %v2459 = vunpack.c.l.b16 %v219
    %v2460 = vunpack.c.h.b16 %v219
    %v2461 = vunpack.c.l.b16 %v220
    %v2462 = vunpack.c.h.b16 %v220
    %v2463 = vunpack.c.l.b16 %v221
    %v2464 = vunpack.c.h.b16 %v221
    %v2465 = vunpack.c.l.b16 %v222
    %v2466 = vunpack.c.h.b16 %v222
    %v2467 = vunpack.c.l.b16 %v223
    %v2468 = vunpack.c.h.b16 %v223
    %v2469 = vunpack.c.l.b16 %v224
    %v2470 = vunpack.c.h.b16 %v224
    %v2471 = vunpack.c.l.b16 %v225
    %v2472 = vunpack.c.h.b16 %v225
    %v2473 = vunpack.c.l.b16 %v226
    %v2474 = vunpack.c.h.b16 %v226
    %v2475 = vunpack.c.l.b16 %v227
    %v2476 = vunpack.c.h.b16 %v227
    %v2477 = vunpack.c.l.b16 %v228
    %v2478 = vunpack.c.h.b16 %v228
    %v2479 = vunpack.c.l.b16 %v229
    %v2480 = vunpack.c.h.b16 %v229
    %v2481 = vunpack.c.l.b16 %v230
    %v2482 = vunpack.c.h.b16 %v230
    %v2483 = vunpack.c.l.b16 %v231
    %v2484 = vunpack.c.h.b16 %v231
    %v2485 = vunpack.c.l.b16 %v232
    %v2486 = vunpack.c.h.b16 %v232
    %v2487 = vunpack.c.l.b16 %v233
    %v2488 = vunpack.c.h.b16 %v233
    %v2489 = vunpack.c.l.b16 %v234
    %v2490 = vunpack.c.h.b16 %v234
    %v2491 = vunpack.c.l.b16 %v235
    %v2492 = vunpack.c.h.b16 %v235
    %v2493 = vunpack.c.l.b16 %v236
    %v2494 = vunpack.c.h.b16 %v236
    %v2495 = vunpack.c.l.b16 %v237
    %v2496 = vunpack.c.h.b16 %v237
    %v2497 = vunpack.c.l.b16 %v238
    %v2498 = vunpack.c.h.b16 %v238
    %v2499 = vunpack.c.l.b16 %v239
    %v2500 = vunpack.c.h.b16 %v239
    %v2501 = vunpack.c.l.b16 %v240
    %v2502 = vunpack.c.h.b16 %v240
    %v2503 = vunpack.c.l.b16 %v241
    %v2504 = vunpack.c.h.b16 %v241
    %v2505 = vunpack.c.l.b16 %v242
    %v2506 = vunpack.c.h.b16 %v242
    %v2507 = vunpack.c.l.b16 %v243
    %v2508 = vunpack.c.h.b16 %v243
    %v2509 = vunpack.c.l.b16 %v244
    %v2510 = vunpack.c.h.b16 %v244
    %v2511 = vunpack.c.l.b16 %v245
    %v2512 = vunpack.c.h.b16 %v245
    %v2513 = vunpack.c.l.b16 %v246
    %v2514 = vunpack.c.h.b16 %v246
    %v2515 = vunpack.c.l.b16 %v247
    %v2516 = vunpack.c.h.b16 %v247
    %v2517 = vunpack.c.l.b16 %v248
    %v2518 = vunpack.c.h.b16 %v248
    %v2519 = vunpack.c.l.b16 %v249
    %v2520 = vunpack.c.h.b16 %v249
    %v2521 = vunpack.c.l.b16 %v250
    %v2522 = vunpack.c.h.b16 %v250
    %v2523 = vunpack.c.l.b16 %v251
    %v2524 = vunpack.c.h.b16 %v251
    %v2525 = vunpack.c.l.b16 %v252
    %v2526 = vunpack.c.h.b16 %v252
    %v2527 = vunpack.c.l.b16 %v253
    %v2528 = vunpack.c.h.b16 %v253
    %v2529 = vunpack.c.l.b16 %v254
    %v2530 = vunpack.c.h.b16 %v254
    %v2531 = vunpack.c.l.b16 %v255
    %v2532 = vunpack.c.h.b16 %v255
    %v2533 = vunpack.c.l.b16 %v256
    %v2534 = vunpack.c.h.b16 %v256
    %v2535 = vunpack.c.l.b16 %v257
    %v2536 = vunpack.c.h.b16 %v257
    %v2537 = vunpack.c.l.b16 %v258
    %v2538 = vunpack.c.h.b16 %v258
    %v2539 = vunpack.c.l.b16 %v259
    %v2540 = vunpack.c.h.b16 %v259
    %v2541 = vunpack.c.l.b16 %v260
    %v2542 = vunpack.c.h.b16 %v260
    %v2543 = vunpack.c.l.b16 %v261
    %v2544 = vunpack.c.h.b16 %v261
    %v2545 = vunpack.c.l.b16 %v262
    %v2546 = vunpack.c.h.b16 %v262
    %v2547 = vunpack.c.l.b16 %v263
    %v2548 = vunpack.c.h.b16 %v263
    %v2549 = vunpack.c.l.b16 %v264
    %v2550 = vunpack.c.h.b16 %v264
    %v2551 = vunpack.c.l.b16 %v265
    %v2552 = vunpack.c.h.b16 %v265
    %v2553 = vunpack.c.l.b16 %v266
    %v2554 = vunpack.c.h.b16 %v266
    %v2555 = vunpack.c.l.b16 %v267
    %v2556 = vunpack.c.h.b16 %v267
    %v2557 = vunpack.c.l.b16 %v268
    %v2558 = vunpack.c.h.b16 %v268
    %v2559 = vunpack.c.l.b16 %v269
    %v2560 = vunpack.c.h.b16 %v269
    %v2561 = vunpack.c.l.b16 %v270
    %v2562 = vunpack.c.h.b16 %v270
    %v2563 = vunpack.c.l.b16 %v271
    %v2564 = vunpack.c.h.b16 %v271
    %v2565 = vunpack.c.l.b16 %v272
    %v2566 = vunpack.c.h.b16 %v272
    %v2567 = vunpack.c.l.b16 %v273
    %v2568 = vunpack.c.h.b16 %v273
    %v2569 = vunpack.c.l.b16 %v274
    %v2570 = vunpack.c.h.b16 %v274
    %v2571 = vunpack.c.l.b16 %v275
    %v2572 = vunpack.c.h.b16 %v275
    %v2573 = vunpack.c.l.b16 %v276
    %v2574 = vunpack.c.h.b16 %v276
    %v2575 = vunpack.c.l.b16 %v277
    %v2576 = vunpack.c.h.b16 %v277
    %v2577 = vunpack.c.l.b16 %v278
    %v2578 = vunpack.c.h.b16 %v278
    %v2579 = vunpack.c.l.b16 %v279
    %v2580 = vunpack.c.h.b16 %v279
    %v2581 = vunpack.c.l.b16 %v280
    %v2582 = vunpack.c.h.b16 %v280
    %v2583 = vunpack.c.l.b16 %v281
    %v2584 = vunpack.c.h.b16 %v281
    %v2585 = vunpack.c.l.b16 %v282
    %v2586 = vunpack.c.h.b16 %v282
    %v2587 = vunpack.c.l.b16 %v283
    %v2588 = vunpack.c.h.b16 %v283
    %v2589 = vunpack.c.l.b16 %v284
    %v2590 = vunpack.c.h.b16 %v284
    %v2591 = vunpack.c.l.b16 %v285
    %v2592 = vunpack.c.h.b16 %v285
    %v2593 = vunpack.c.l.b16 %v286
    %v2594 = vunpack.c.h.b16 %v286
    %v2595 = vunpack.c.l.b16 %v287
    %v2596 = vunpack.c.h.b16 %v287
    %v2597 = vunpack.c.l.b16 %v288
    %v2598 = vunpack.c.h.b16 %v288
    %v2599 = vunpack.c.l.b16 %v289
    %v2600 = vunpack.c.h.b16 %v289
    %v2601 = vunpack.c.l.b16 %v290
    %v2602 = vunpack.c.h.b16 %v290
    %v2603 = vunpack.c.l.b16 %v291
    %v2604 = vunpack.c.h.b16 %v291
    %v2605 = vunpack.c.l.b16 %v292
    %v2606 = vunpack.c.h.b16 %v292
    %v2607 = vunpack.c.l.b16 %v293
    %v2608 = vunpack.c.h.b16 %v293
    %v2609 = vunpack.c.l.b16 %v294
    %v2610 = vunpack.c.h.b16 %v294
    %v2611 = vunpack.c.l.b16 %v295
    %v2612 = vunpack.c.h.b16 %v295
    %v2613 = vunpack.c.l.b16 %v296
    %v2614 = vunpack.c.h.b16 %v296
    %v2615 = vunpack.c.l.b16 %v297
    %v2616 = vunpack.c.h.b16 %v297
    %v2617 = vunpack.c.l.b16 %v298
    %v2618 = vunpack.c.h.b16 %v298
    %v2619 = vunpack.c.l.b16 %v299
    %v2620 = vunpack.c.h.b16 %v299
    %v2621 = vunpack.c.l.b16 %v300
    %v2622 = vunpack.c.h.b16 %v300
    %v2623 = vunpack.c.l.b16 %v301
    %v2624 = vunpack.c.h.b16 %v301
    %v2625 = vunpack.c.l.b16 %v302
    %v2626 = vunpack.c.h.b16 %v302
    %v2627 = vunpack.c.l.b16 %v303
    %v2628 = vunpack.c.h.b16 %v303
    %v2629 = vunpack.c.l.b16 %v304
    %v2630 = vunpack.c.h.b16 %v304
    %v2631 = vunpack.c.l.b16 %v305
    %v2632 = vunpack.c.h.b16 %v305
    %v2633 = vunpack.c.l.b16 %v306
    %v2634 = vunpack.c.h.b16 %v306
    %v2635 = vunpack.c.l.b16 %v307
    %v2636 = vunpack.c.h.b16 %v307
    %v2637 = vunpack.c.l.b16 %v308
    %v2638 = vunpack.c.h.b16 %v308
    %v2639 = vunpack.c.l.b16 %v309
    %v2640 = vunpack.c.h.b16 %v309
    %v2641 = vunpack.c.l.b16 %v310
    %v2642 = vunpack.c.h.b16 %v310
    %v2643 = vunpack.c.l.b16 %v311
    %v2644 = vunpack.c.h.b16 %v311
    %v2645 = vunpack.c.l.b16 %v312
    %v2646 = vunpack.c.h.b16 %v312
    %v2647 = vunpack.c.l.b16 %v313
    %v2648 = vunpack.c.h.b16 %v313
    %v2649 = vunpack.c.l.b16 %v314
    %v2650 = vunpack.c.h.b16 %v314
    %v2651 = vunpack.c.l.b16 %v315
    %v2652 = vunpack.c.h.b16 %v315
    %v2653 = vunpack.c.l.b16 %v316
    %v2654 = vunpack.c.h.b16 %v316
    %v2655 = vunpack.c.l.b16 %v317
    %v2656 = vunpack.c.h.b16 %v317
    %v2657 = vunpack.c.l.b16 %v318
    %v2658 = vunpack.c.h.b16 %v318
    %v2659 = vunpack.c.l.b16 %v319
    %v2660 = vunpack.c.h.b16 %v319
    %v2661 = vunpack.c.l.b16 %v320
    %v2662 = vunpack.c.h.b16 %v320
    %v2663 = vunpack.c.l.b16 %v321
    %v2664 = vunpack.c.h.b16 %v321
    %v2665 = vunpack.c.l.b16 %v322
    %v2666 = vunpack.c.h.b16 %v322
    %v2667 = vunpack.c.l.b16 %v323
    %v2668 = vunpack.c.h.b16 %v323
    %v2669 = vunpack.c.l.b16 %v324
    %v2670 = vunpack.c.h.b16 %v324
    %v2671 = vunpack.c.l.b16 %v325
    %v2672 = vunpack.c.h.b16 %v325
    %v2673 = vunpack.c.l.b16 %v326
    %v2674 = vunpack.c.h.b16 %v326
    %v2675 = vunpack.c.l.b16 %v327
    %v2676 = vunpack.c.h.b16 %v327
    %v2677 = vunpack.c.l.b16 %v328
    %v2678 = vunpack.c.h.b16 %v328
    %v2679 = vunpack.c.l.b16 %v329
    %v2680 = vunpack.c.h.b16 %v329
    %v2681 = vunpack.c.l.b16 %v330
    %v2682 = vunpack.c.h.b16 %v330
    %v2683 = vunpack.c.l.b16 %v331
    %v2684 = vunpack.c.h.b16 %v331
    %v2685 = vunpack.c.l.b16 %v332
    %v2686 = vunpack.c.h.b16 %v332
    %v2687 = vunpack.c.l.b16 %v333
    %v2688 = vunpack.c.h.b16 %v333
    %v2689 = vunpack.c.l.b16 %v334
    %v2690 = vunpack.c.h.b16 %v334
    %v2691 = vunpack.c.l.b16 %v335
    %v2692 = vunpack.c.h.b16 %v335
    %v2693 = vunpack.c.l.b16 %v336
    %v2694 = vunpack.c.h.b16 %v336
    %v2695 = vunpack.c.l.b16 %v337
    %v2696 = vunpack.c.h.b16 %v337
    %v2697 = vunpack.c.l.b16 %v338
    %v2698 = vunpack.c.h.b16 %v338
    %v2699 = vunpack.c.l.b16 %v339
    %v2700 = vunpack.c.h.b16 %v339
    %v2701 = vunpack.c.l.b16 %v340
    %v2702 = vunpack.c.h.b16 %v340
    %v2703 = vunpack.c.l.b16 %v341
    %v2704 = vunpack.c.h.b16 %v341
    %v2705 = vunpack.c.l.b16 %v342
    %v2706 = vunpack.c.h.b16 %v342
    %v2707 = vunpack.c.l.b16 %v343
    %v2708 = vunpack.c.h.b16 %v343
    %v2709 = vunpack.c.l.b16 %v344
    %v2710 = vunpack.c.h.b16 %v344
    %v2711 = vunpack.c.l.b16 %v345
    %v2712 = vunpack.c.h.b16 %v345
    %v2713 = vunpack.c.l.b16 %v346
    %v2714 = vunpack.c.h.b16 %v346
    %v2715 = vunpack.c.l.b16 %v347
    %v2716 = vunpack.c.h.b16 %v347
    %v2717 = vunpack.c.l.b16 %v348
    %v2718 = vunpack.c.h.b16 %v348
    %v2719 = vunpack.c.l.b16 %v349
    %v2720 = vunpack.c.h.b16 %v349
    %v2721 = vunpack.c.l.b16 %v350
    %v2722 = vunpack.c.h.b16 %v350
    %v2723 = vunpack.c.l.b16 %v351
    %v2724 = vunpack.c.h.b16 %v351
    %v2725 = vunpack.c.l.b16 %v352
    %v2726 = vunpack.c.h.b16 %v352
    %v2727 = vunpack.c.l.b16 %v353
    %v2728 = vunpack.c.h.b16 %v353
    %v2729 = vunpack.c.l.b16 %v354
    %v2730 = vunpack.c.h.b16 %v354
    %v2731 = vunpack.c.l.b16 %v355
    %v2732 = vunpack.c.h.b16 %v355
    %v2733 = vunpack.c.l.b16 %v356
    %v2734 = vunpack.c.h.b16 %v356
    %v2735 = vunpack.c.l.b16 %v357
    %v2736 = vunpack.c.h.b16 %v357
    %v2737 = vunpack.c.l.b16 %v358
    %v2738 = vunpack.c.h.b16 %v358
    %v2739 = vunpack.c.l.b16 %v359
    %v2740 = vunpack.c.h.b16 %v359
    %v2741 = vunpack.c.l.b16 %v360
    %v2742 = vunpack.c.h.b16 %v360
    %v2743 = vunpack.c.l.b16 %v361
    %v2744 = vunpack.c.h.b16 %v361
    %v2745 = vunpack.c.l.b16 %v362
    %v2746 = vunpack.c.h.b16 %v362
    %v2747 = vunpack.c.l.b16 %v363
    %v2748 = vunpack.c.h.b16 %v363
    %v2749 = vunpack.c.l.b16 %v364
    %v2750 = vunpack.c.h.b16 %v364
    %v2751 = vunpack.c.l.b16 %v365
    %v2752 = vunpack.c.h.b16 %v365
    %v2753 = vunpack.c.l.b16 %v366
    %v2754 = vunpack.c.h.b16 %v366
    %v2755 = vunpack.c.l.b16 %v367
    %v2756 = vunpack.c.h.b16 %v367
    %v2757 = vunpack.c.l.b16 %v368
    %v2758 = vunpack.c.h.b16 %v368
    %v2759 = vunpack.c.l.b16 %v369
    %v2760 = vunpack.c.h.b16 %v369
    %v2761 = vunpack.c.l.b16 %v370
    %v2762 = vunpack.c.h.b16 %v370
    %v2763 = vunpack.c.l.b16 %v371
    %v2764 = vunpack.c.h.b16 %v371
    %v2765 = vunpack.c.l.b16 %v372
    %v2766 = vunpack.c.h.b16 %v372
    %v2767 = vunpack.c.l.b16 %v373
    %v2768 = vunpack.c.h.b16 %v373
    %v2769 = vunpack.c.l.b16 %v374
    %v2770 = vunpack.c.h.b16 %v374
    %v2771 = vunpack.c.l.b16 %v375
    %v2772 = vunpack.c.h.b16 %v375
    %v2773 = vunpack.c.l.b16 %v376
    %v2774 = vunpack.c.h.b16 %v376
    %v2775 = vunpack.c.l.b16 %v377
    %v2776 = vunpack.c.h.b16 %v377
    %v2777 = vunpack.c.l.b16 %v378
    %v2778 = vunpack.c.h.b16 %v378
    %v2779 = vunpack.c.l.b16 %v379
    %v2780 = vunpack.c.h.b16 %v379
    %v2781 = vunpack.c.l.b16 %v380
    %v2782 = vunpack.c.h.b16 %v380
    %v2783 = vunpack.c.l.b16 %v381
    %v2784 = vunpack.c.h.b16 %v381
    %v2785 = vunpack.c.l.b16 %v382
    %v2786 = vunpack.c.h.b16 %v382
    %v2787 = vunpack.c.l.b16 %v383
    %v2788 = vunpack.c.h.b16 %v383
    %v2789 = vunpack.c.l.b16 %v384
    %v2790 = vunpack.c.h.b16 %v384
    %v2791 = vunpack.c.l.b16 %v385
    %v2792 = vunpack.c.h.b16 %v385
    %v2793 = vunpack.c.l.b16 %v386
    %v2794 = vunpack.c.h.b16 %v386
    %v2795 = vunpack.c.l.b16 %v387
    %v2796 = vunpack.c.h.b16 %v387
    %v2797 = vunpack.c.l.b16 %v388
    %v2798 = vunpack.c.h.b16 %v388
    %v2799 = vunpack.c.l.b16 %v389
    %v2800 = vunpack.c.h.b16 %v389
    %v2801 = vunpack.c.l.b16 %v390
    %v2802 = vunpack.c.h.b16 %v390
    %v2803 = vunpack.c.l.b16 %v391
    %v2804 = vunpack.c.h.b16 %v391
    %v2805 = vunpack.c.l.b16 %v392
    %v2806 = vunpack.c.h.b16 %v392
    %v2807 = vunpack.c.l.b16 %v393
    %v2808 = vunpack.c.h.b16 %v393
    %v2809 = vunpack.c.l.b16 %v394
    %v2810 = vunpack.c.h.b16 %v394
    %v2811 = vunpack.c.l.b16 %v395
    %v2812 = vunpack.c.h.b16 %v395
    %v2813 = vunpack.c.l.b16 %v396
    %v2814 = vunpack.c.h.b16 %v396
    %v2815 = vunpack.c.l.b16 %v397
    %v2816 = vunpack.c.h.b16 %v397
    %v2817 = vunpack.c.l.b16 %v398
    %v2818 = vunpack.c.h.b16 %v398
    %v2819 = vunpack.c.l.b16 %v399
    %v2820 = vunpack.c.h.b16 %v399
    %v2821 = vunpack.c.l.b16 %v400
    %v2822 = vunpack.c.h.b16 %v400
    %v2823 = vunpack.c.l.b16 %v401
    %v2824 = vunpack.c.h.b16 %v401
    %v2825 = vunpack.c.l.b16 %v402
    %v2826 = vunpack.c.h.b16 %v402
    %v2827 = vunpack.c.l.b16 %v403
    %v2828 = vunpack.c.h.b16 %v403
    %v2829 = vunpack.c.l.b16 %v404
    %v2830 = vunpack.c.h.b16 %v404
    %v2831 = vunpack.c.l.b16 %v405
    %v2832 = vunpack.c.h.b16 %v405
    %v2833 = vunpack.c.l.b16 %v406
    %v2834 = vunpack.c.h.b16 %v406
    %v2835 = vunpack.c.l.b16 %v407
    %v2836 = vunpack.c.h.b16 %v407
    %v2837 = vunpack.c.l.b16 %v408
    %v2838 = vunpack.c.h.b16 %v408
    %v2839 = vunpack.c.l.b16 %v409
    %v2840 = vunpack.c.h.b16 %v409
    %v2841 = vunpack.c.l.b16 %v410
    %v2842 = vunpack.c.h.b16 %v410
    %v2843 = vunpack.c.l.b16 %v411
    %v2844 = vunpack.c.h.b16 %v411
    %v2845 = vunpack.c.l.b16 %v412
    %v2846 = vunpack.c.h.b16 %v412
    %v2847 = vunpack.c.l.b16 %v413
    %v2848 = vunpack.c.h.b16 %v413
    %v2849 = vunpack.c.l.b16 %v414
    %v2850 = vunpack.c.h.b16 %v414
    %v2851 = vunpack.c.l.b16 %v415
    %v2852 = vunpack.c.h.b16 %v415
    %v2853 = vunpack.c.l.b16 %v416
    %v2854 = vunpack.c.h.b16 %v416
    %v2855 = vunpack.c.l.b16 %v417
    %v2856 = vunpack.c.h.b16 %v417
    %v2857 = vunpack.c.l.b16 %v418
    %v2858 = vunpack.c.h.b16 %v418
    %v2859 = vunpack.c.l.b16 %v419
    %v2860 = vunpack.c.h.b16 %v419
    %v2861 = vunpack.c.l.b16 %v420
    %v2862 = vunpack.c.h.b16 %v420
    %v2863 = vunpack.c.l.b16 %v421
    %v2864 = vunpack.c.h.b16 %v421
    %v2865 = vunpack.c.l.b16 %v422
    %v2866 = vunpack.c.h.b16 %v422
    %v2867 = vunpack.c.l.b16 %v423
    %v2868 = vunpack.c.h.b16 %v423
    %v2869 = vunpack.c.l.b16 %v424
    %v2870 = vunpack.c.h.b16 %v424
    %v2871 = vunpack.c.l.b16 %v425
    %v2872 = vunpack.c.h.b16 %v425
    %v2873 = vunpack.c.l.b16 %v426
    %v2874 = vunpack.c.h.b16 %v426
    %v2875 = vunpack.c.l.b16 %v427
    %v2876 = vunpack.c.h.b16 %v427
    %v2877 = vunpack.c.l.b16 %v428
    %v2878 = vunpack.c.h.b16 %v428
    %v2879 = vunpack.c.l.b16 %v429
    %v2880 = vunpack.c.h.b16 %v429
    %v2881 = vunpack.c.l.b16 %v430
    %v2882 = vunpack.c.h.b16 %v430
    %v2883 = vunpack.c.l.b16 %v431
    %v2884 = vunpack.c.h.b16 %v431
    %v2885 = vunpack.c.l.b16 %v432
    %v2886 = vunpack.c.h.b16 %v432
    %v2887 = vunpack.c.l.b16 %v433
    %v2888 = vunpack.c.h.b16 %v433
    %v2889 = vunpack.c.l.b16 %v434
    %v2890 = vunpack.c.h.b16 %v434
    %v2891 = vunpack.c.l.b16 %v435
    %v2892 = vunpack.c.h.b16 %v435
    %v2893 = vunpack.c.l.b16 %v436
    %v2894 = vunpack.c.h.b16 %v436
    %v2895 = vunpack.c.l.b16 %v437
    %v2896 = vunpack.c.h.b16 %v437
    %v2897 = vunpack.c.l.b16 %v438
    %v2898 = vunpack.c.h.b16 %v438
    %v2899 = vunpack.c.l.b16 %v439
    %v2900 = vunpack.c.h.b16 %v439
    %v2901 = vunpack.c.l.b16 %v440
    %v2902 = vunpack.c.h.b16 %v440
    %v2903 = vunpack.c.l.b16 %v441
    %v2904 = vunpack.c.h.b16 %v441
    %v2905 = vunpack.c.l.b16 %v442
    %v2906 = vunpack.c.h.b16 %v442
    %v2907 = vunpack.c.l.b16 %v443
    %v2908 = vunpack.c.h.b16 %v443
    %v2909 = vunpack.c.l.b16 %v444
    %v2910 = vunpack.c.h.b16 %v444
    %v2911 = vunpack.c.l.b16 %v445
    %v2912 = vunpack.c.h.b16 %v445
    %v2913 = vunpack.c.l.b16 %v446
    %v2914 = vunpack.c.h.b16 %v446
    %v2915 = vunpack.c.l.b16 %v447
    %v2916 = vunpack.c.h.b16 %v447
    %v2917 = vunpack.c.l.b16 %v448
    %v2918 = vunpack.c.h.b16 %v448
    %v2919 = vunpack.c.l.b16 %v449
    %v2920 = vunpack.c.h.b16 %v449
    %v2921 = vunpack.c.l.b16 %v450
    %v2922 = vunpack.c.h.b16 %v450
    %v2923 = vunpack.c.l.b16 %v451
    %v2924 = vunpack.c.h.b16 %v451
    %v2925 = vunpack.c.l.b16 %v452
    %v2926 = vunpack.c.h.b16 %v452
    %v2927 = vunpack.c.l.b16 %v453
    %v2928 = vunpack.c.h.b16 %v453
    %v2929 = vunpack.c.l.b16 %v454
    %v2930 = vunpack.c.h.b16 %v454
    %v2931 = vunpack.c.l.b16 %v455
    %v2932 = vunpack.c.h.b16 %v455
    %v2933 = vunpack.c.l.b16 %v456
    %v2934 = vunpack.c.h.b16 %v456
    %v2935 = vunpack.c.l.b16 %v457
    %v2936 = vunpack.c.h.b16 %v457
    %v2937 = vunpack.c.l.b16 %v458
    %v2938 = vunpack.c.h.b16 %v458
    %v2939 = vunpack.c.l.b16 %v459
    %v2940 = vunpack.c.h.b16 %v459
    %v2941 = vunpack.c.l.b16 %v460
    %v2942 = vunpack.c.h.b16 %v460
    %v2943 = vunpack.c.l.b16 %v461
    %v2944 = vunpack.c.h.b16 %v461
    %v2945 = vunpack.c.l.b16 %v462
    %v2946 = vunpack.c.h.b16 %v462
    %v2947 = vunpack.c.l.b16 %v463
    %v2948 = vunpack.c.h.b16 %v463
    %v2949 = vunpack.c.l.b16 %v464
    %v2950 = vunpack.c.h.b16 %v464
    %v2951 = vunpack.c.l.b16 %v465
    %v2952 = vunpack.c.h.b16 %v465
    %v2953 = vunpack.c.l.b16 %v466
    %v2954 = vunpack.c.h.b16 %v466
    %v2955 = vunpack.c.l.b16 %v467
    %v2956 = vunpack.c.h.b16 %v467
    %v2957 = vunpack.c.l.b16 %v468
    %v2958 = vunpack.c.h.b16 %v468
    %v2959 = vunpack.c.l.b16 %v469
    %v2960 = vunpack.c.h.b16 %v469
    %v2961 = vunpack.c.l.b16 %v470
    %v2962 = vunpack.c.h.b16 %v470
    %v2963 = vunpack.c.l.b16 %v471
    %v2964 = vunpack.c.h.b16 %v471
    %v2965 = vunpack.c.l.b16 %v472
    %v2966 = vunpack.c.h.b16 %v472
    %v2967 = vunpack.c.l.b16 %v473
    %v2968 = vunpack.c.h.b16 %v473
    %v2969 = vunpack.c.l.b16 %v474
    %v2970 = vunpack.c.h.b16 %v474
    %v2971 = vunpack.c.l.b16 %v475
    %v2972 = vunpack.c.h.b16 %v475
    %v2973 = vunpack.c.l.b16 %v476
    %v2974 = vunpack.c.h.b16 %v476
    %v2975 = vunpack.c.l.b16 %v477
    %v2976 = vunpack.c.h.b16 %v477
    %v2977 = vunpack.c.l.b16 %v478
    %v2978 = vunpack.c.h.b16 %v478
    %v2979 = vunpack.c.l.b16 %v479
    %v2980 = vunpack.c.h.b16 %v479
    %v2981 = vunpack.c.l.b16 %v480
    %v2982 = vunpack.c.h.b16 %v480
    %v2983 = vunpack.c.l.b16 %v481
    %v2984 = vunpack.c.h.b16 %v481
    %v2985 = vunpack.c.l.b16 %v482
    %v2986 = vunpack.c.h.b16 %v482
    %v2987 = vunpack.c.l.b16 %v483
    %v2988 = vunpack.c.h.b16 %v483
    %v2989 = vunpack.c.l.b16 %v484
    %v2990 = vunpack.c.h.b16 %v484
    %v2991 = vunpack.c.l.b16 %v485
    %v2992 = vunpack.c.h.b16 %v485
    %v2993 = vunpack.c.l.b16 %v486
    %v2994 = vunpack.c.h.b16 %v486
    %v2995 = vunpack.c.l.b16 %v487
    %v2996 = vunpack.c.h.b16 %v487
    %v2997 = vunpack.c.l.b16 %v488
    %v2998 = vunpack.c.h.b16 %v488
    %v2999 = vunpack.c.l.b16 %v489
    %v3000 = vunpack.c.h.b16 %v489
    %v3001 = vunpack.c.l.b16 %v490
    %v3002 = vunpack.c.h.b16 %v490
    %v3003 = vunpack.c.l.b16 %v491
    %v3004 = vunpack.c.h.b16 %v491
    %v3005 = vunpack.c.l.b16 %v492
    %v3006 = vunpack.c.h.b16 %v492
    %v3007 = vunpack.c.l.b16 %v493
    %v3008 = vunpack.c.h.b16 %v493
    %v3009 = vunpack.c.l.b16 %v494
    %v3010 = vunpack.c.h.b16 %v494
    %v3011 = vunpack.c.l.b16 %v495
    %v3012 = vunpack.c.h.b16 %v495
    %v3013 = vunpack.c.l.b16 %v496
    %v3014 = vunpack.c.h.b16 %v496
    %v3015 = vunpack.c.l.b16 %v497
    %v3016 = vunpack.c.h.b16 %v497
    %v3017 = vunpack.c.l.b16 %v498
    %v3018 = vunpack.c.h.b16 %v498
    %v3019 = vunpack.c.l.b16 %v499
    %v3020 = vunpack.c.h.b16 %v499
    %v3021 = vunpack.c.l.b16 %v500
    %v3022 = vunpack.c.h.b16 %v500
    %v3023 = vunpack.c.l.b16 %v501
    %v3024 = vunpack.c.h.b16 %v501
    %v3025 = vunpack.c.l.b16 %v502
    %v3026 = vunpack.c.h.b16 %v502
    %v3027 = vunpack.c.l.b16 %v503
    %v3028 = vunpack.c.h.b16 %v503
    %v3029 = vunpack.c.l.b16 %v504
    %v3030 = vunpack.c.h.b16 %v504
    %v3031 = vunpack.c.l.b16 %v505
    %v3032 = vunpack.c.h.b16 %v505
    %v3033 = vunpack.c.l.b16 %v506
    %v3034 = vunpack.c.h.b16 %v506
    %v3035 = vunpack.c.l.b16 %v507
    %v3036 = vunpack.c.h.b16 %v507
    %v3037 = vunpack.c.l.b16 %v508
    %v3038 = vunpack.c.h.b16 %v508
    %v3039 = vunpack.c.l.b16 %v509
    %v3040 = vunpack.c.h.b16 %v509
    %v3041 = vunpack.c.l.b16 %v510
    %v3042 = vunpack.c.h.b16 %v510
    %v3043 = vunpack.c.l.b16 %v511
    %v3044 = vunpack.c.h.b16 %v511
    %v3045 = vunpack.c.l.b16 %v512
    %v3046 = vunpack.c.h.b16 %v512
    %v3047 = vunpack.c.l.b16 %v513
    %v3048 = vunpack.c.h.b16 %v513
    %v3049 = vunpack.c.l.b16 %v514
    %v3050 = vunpack.c.h.b16 %v514
    %v3051 = vunpack.c.l.b16 %v515
    %v3052 = vunpack.c.h.b16 %v515
    %v3053 = vunpack.c.l.b16 %v516
    %v3054 = vunpack.c.h.b16 %v516
    %v3055 = vunpack.c.l.b16 %v517
    %v3056 = vunpack.c.h.b16 %v517
    %v3057 = vunpack.c.l.b16 %v518
    %v3058 = vunpack.c.h.b16 %v518
    %v3059 = vunpack.c.l.b16 %v519
    %v3060 = vunpack.c.h.b16 %v519
    %v3061 = vunpack.c.l.b16 %v520
    %v3062 = vunpack.c.h.b16 %v520
    %v3063 = vunpack.c.l.b16 %v521
    %v3064 = vunpack.c.h.b16 %v521
    %v3065 = vunpack.c.l.b16 %v522
    %v3066 = vunpack.c.h.b16 %v522
    %v3067 = vunpack.c.l.b16 %v523
    %v3068 = vunpack.c.h.b16 %v523
    %v3069 = vunpack.c.l.b16 %v524
    %v3070 = vunpack.c.h.b16 %v524
    %v3071 = vunpack.c.l.b16 %v525
    %v3072 = vunpack.c.h.b16 %v525
    %v3073 = vunpack.c.l.b16 %v526
    %v3074 = vunpack.c.h.b16 %v526
    %v3075 = vunpack.c.l.b16 %v527
    %v3076 = vunpack.c.h.b16 %v527
    %v3077 = vunpack.c.l.b16 %v528
    %v3078 = vunpack.c.h.b16 %v528
    %v3079 = vunpack.c.l.b16 %v529
    %v3080 = vunpack.c.h.b16 %v529
    %v3081 = vunpack.c.l.b16 %v530
    %v3082 = vunpack.c.h.b16 %v530
    %v3083 = vunpack.c.l.b16 %v531
    %v3084 = vunpack.c.h.b16 %v531
    %v3085 = vunpack.c.l.b16 %v532
    %v3086 = vunpack.c.h.b16 %v532
    %v3087 = vunpack.c.l.b16 %v533
    %v3088 = vunpack.c.h.b16 %v533
    %v3089 = vunpack.c.l.b16 %v534
    %v3090 = vunpack.c.h.b16 %v534
    %v3091 = vunpack.c.l.b16 %v535
    %v3092 = vunpack.c.h.b16 %v535
    %v3093 = vunpack.c.l.b16 %v536
    %v3094 = vunpack.c.h.b16 %v536
    %v3095 = vunpack.c.l.b16 %v537
    %v3096 = vunpack.c.h.b16 %v537
    %v3097 = vunpack.c.l.b16 %v538
    %v3098 = vunpack.c.h.b16 %v538
    %v3099 = vunpack.c.l.b16 %v539
    %v3100 = vunpack.c.h.b16 %v539
    %v3101 = vunpack.c.l.b16 %v540
    %v3102 = vunpack.c.h.b16 %v540
    %v3103 = vunpack.c.l.b16 %v541
    %v3104 = vunpack.c.h.b16 %v541
    %v3105 = vunpack.c.l.b16 %v542
    %v3106 = vunpack.c.h.b16 %v542
    %v3107 = vunpack.c.l.b16 %v543
    %v3108 = vunpack.c.h.b16 %v543
    %v3109 = vunpack.c.l.b16 %v544
    %v3110 = vunpack.c.h.b16 %v544
    %v3111 = vunpack.c.l.b16 %v545
    %v3112 = vunpack.c.h.b16 %v545
    %v3113 = vunpack.c.l.b16 %v546
    %v3114 = vunpack.c.h.b16 %v546
    %v3115 = vunpack.c.l.b16 %v547
    %v3116 = vunpack.c.h.b16 %v547
    %v3117 = vunpack.c.l.b16 %v548
    %v3118 = vunpack.c.h.b16 %v548
    %v3119 = vunpack.c.l.b16 %v549
    %v3120 = vunpack.c.h.b16 %v549
    %v3121 = vunpack.c.l.b16 %v550
    %v3122 = vunpack.c.h.b16 %v550
    %v3123 = vunpack.c.l.b16 %v551
    %v3124 = vunpack.c.h.b16 %v551
    %v3125 = vunpack.c.l.b16 %v552
    %v3126 = vunpack.c.h.b16 %v552
    %v3127 = vunpack.c.l.b16 %v553
    %v3128 = vunpack.c.h.b16 %v553
    %v3129 = vunpack.c.l.b16 %v554
    %v3130 = vunpack.c.h.b16 %v554
    %v3131 = vunpack.c.l.b16 %v555
    %v3132 = vunpack.c.h.b16 %v555
    %v3133 = vunpack.c.l.b16 %v556
    %v3134 = vunpack.c.h.b16 %v556
    %v3135 = vunpack.c.l.b16 %v557
    %v3136 = vunpack.c.h.b16 %v557
    %v3137 = vunpack.c.l.b16 %v558
    %v3138 = vunpack.c.h.b16 %v558
    %v3139 = vunpack.c.l.b16 %v559
    %v3140 = vunpack.c.h.b16 %v559
    %v3141 = vunpack.c.l.b16 %v560
    %v3142 = vunpack.c.h.b16 %v560
    %v3143 = vunpack.c.l.b16 %v561
    %v3144 = vunpack.c.h.b16 %v561
    %v3145 = vunpack.c.l.b16 %v562
    %v3146 = vunpack.c.h.b16 %v562
    %v3147 = vunpack.c.l.b16 %v563
    %v3148 = vunpack.c.h.b16 %v563
    %v3149 = vunpack.c.l.b16 %v564
    %v3150 = vunpack.c.h.b16 %v564
    %v3151 = vunpack.c.l.b16 %v565
    %v3152 = vunpack.c.h.b16 %v565
    %v3153 = vunpack.c.l.b16 %v566
    %v3154 = vunpack.c.h.b16 %v566
    %v3155 = vunpack.c.l.b16 %v567
    %v3156 = vunpack.c.h.b16 %v567
    %v3157 = vunpack.c.l.b16 %v568
    %v3158 = vunpack.c.h.b16 %v568
    %v3159 = vunpack.c.l.b16 %v569
    %v3160 = vunpack.c.h.b16 %v569
    %v3161 = vunpack.c.l.b16 %v570
    %v3162 = vunpack.c.h.b16 %v570
    %v3163 = vunpack.c.l.b16 %v571
    %v3164 = vunpack.c.h.b16 %v571
    %v3165 = vunpack.c.l.b16 %v572
    %v3166 = vunpack.c.h.b16 %v572
    %v3167 = vunpack.c.l.b16 %v573
    %v3168 = vunpack.c.h.b16 %v573
    %v3169 = vunpack.c.l.b16 %v574
    %v3170 = vunpack.c.h.b16 %v574
    %v3171 = vunpack.c.l.b16 %v575
    %v3172 = vunpack.c.h.b16 %v575
    %v3173 = vunpack.c.l.b16 %v576
    %v3174 = vunpack.c.h.b16 %v576
    %v3175 = vunpack.c.l.b16 %v577
    %v3176 = vunpack.c.h.b16 %v577
    %v3177 = vunpack.c.l.b16 %v578
    %v3178 = vunpack.c.h.b16 %v578
    %v3179 = vunpack.c.l.b16 %v579
    %v3180 = vunpack.c.h.b16 %v579
    %v3181 = vunpack.c.l.b16 %v580
    %v3182 = vunpack.c.h.b16 %v580
    %v3183 = vunpack.c.l.b16 %v581
    %v3184 = vunpack.c.h.b16 %v581
    %v3185 = vunpack.c.l.b16 %v582
    %v3186 = vunpack.c.h.b16 %v582
    %v3187 = vunpack.c.l.b16 %v583
    %v3188 = vunpack.c.h.b16 %v583
    %v3189 = vunpack.c.l.b16 %v584
    %v3190 = vunpack.c.h.b16 %v584
    %v3191 = vunpack.c.l.b16 %v585
    %v3192 = vunpack.c.h.b16 %v585
    %v3193 = vunpack.c.l.b16 %v586
    %v3194 = vunpack.c.h.b16 %v586
    %v3195 = vunpack.c.l.b16 %v587
    %v3196 = vunpack.c.h.b16 %v587
    %v3197 = vunpack.c.l.b16 %v588
    %v3198 = vunpack.c.h.b16 %v588
    %v3199 = vunpack.c.l.b16 %v589
    %v3200 = vunpack.c.h.b16 %v589
    %v3201 = vunpack.c.l.b16 %v590
    %v3202 = vunpack.c.h.b16 %v590
    %v3203 = vunpack.c.l.b16 %v591
    %v3204 = vunpack.c.h.b16 %v591
    %v3205 = vunpack.c.l.b16 %v592
    %v3206 = vunpack.c.h.b16 %v592
    %v3207 = vunpack.c.l.b16 %v593
    %v3208 = vunpack.c.h.b16 %v593
    %v3209 = vunpack.c.l.b16 %v594
    %v3210 = vunpack.c.h.b16 %v594
    %v3211 = vunpack.c.l.b16 %v595
    %v3212 = vunpack.c.h.b16 %v595
    %v3213 = vunpack.c.l.b16 %v596
    %v3214 = vunpack.c.h.b16 %v596
    %v3215 = vunpack.c.l.b16 %v597
    %v3216 = vunpack.c.h.b16 %v597
    %v3217 = vunpack.c.l.b16 %v598
    %v3218 = vunpack.c.h.b16 %v598
    %v3219 = vunpack.c.l.b16 %v599
    %v3220 = vunpack.c.h.b16 %v599
    %v3221 = vunpack.c.l.b16 %v600
    %v3222 = vunpack.c.h.b16 %v600
    %v3223 = vunpack.c.l.b16 %v601
    %v3224 = vunpack.c.h.b16 %v601
    %v3225 = vunpack.c.l.b16 %v602
    %v3226 = vunpack.c.h.b16 %v602
    %v3227 = vunpack.c.l.b16 %v603
    %v3228 = vunpack.c.h.b16 %v603
    %v3229 = vunpack.c.l.b16 %v604
    %v3230 = vunpack.c.h.b16 %v604
    %v3231 = vunpack.c.l.b16 %v605
    %v3232 = vunpack.c.h.b16 %v605
    %v3233 = vunpack.c.l.b16 %v606
    %v3234 = vunpack.c.h.b16 %v606
    %v3235 = vunpack.c.l.b16 %v607
    %v3236 = vunpack.c.h.b16 %v607
    %v3237 = vunpack.c.l.b16 %v608
    %v3238 = vunpack.c.h.b16 %v608
    %v3239 = vunpack.c.l.b16 %v609
    %v3240 = vunpack.c.h.b16 %v609
    %v3241 = vunpack.c.l.b16 %v610
    %v3242 = vunpack.c.h.b16 %v610
    %v3243 = vunpack.c.l.b16 %v611
    %v3244 = vunpack.c.h.b16 %v611
    %v3245 = vunpack.c.l.b16 %v612
    %v3246 = vunpack.c.h.b16 %v612
    %v3247 = vunpack.c.l.b16 %v613
    %v3248 = vunpack.c.h.b16 %v613
    %v3249 = vunpack.c.l.b16 %v614
    %v3250 = vunpack.c.h.b16 %v614
    %v3251 = vunpack.c.l.b16 %v615
    %v3252 = vunpack.c.h.b16 %v615
    %v3253 = vunpack.c.l.b16 %v616
    %v3254 = vunpack.c.h.b16 %v616
    %v3255 = vunpack.c.l.b16 %v617
    %v3256 = vunpack.c.h.b16 %v617
    %v3257 = vunpack.c.l.b16 %v618
    %v3258 = vunpack.c.h.b16 %v618
    %v3259 = vunpack.c.l.b16 %v619
    %v3260 = vunpack.c.h.b16 %v619
    %v3261 = vunpack.c.l.b16 %v620
    %v3262 = vunpack.c.h.b16 %v620
    %v3263 = vunpack.c.l.b16 %v621
    %v3264 = vunpack.c.h.b16 %v621
    %v3265 = vunpack.c.l.b16 %v622
    %v3266 = vunpack.c.h.b16 %v622
    %v3267 = vunpack.c.l.b16 %v623
    %v3268 = vunpack.c.h.b16 %v623
    %v3269 = vunpack.c.l.b16 %v624
    %v3270 = vunpack.c.h.b16 %v624
    %v3271 = vunpack.c.l.b16 %v625
    %v3272 = vunpack.c.h.b16 %v625
    %v3273 = vunpack.c.l.b16 %v626
    %v3274 = vunpack.c.h.b16 %v626
    %v3275 = vunpack.c.l.b16 %v627
    %v3276 = vunpack.c.h.b16 %v627
    %v3277 = vunpack.c.l.b16 %v628
    %v3278 = vunpack.c.h.b16 %v628
    %v3279 = vunpack.c.l.b16 %v629
    %v3280 = vunpack.c.h.b16 %v629
    %v3281 = vunpack.c.l.b16 %v630
    %v3282 = vunpack.c.h.b16 %v630
    %v3283 = vunpack.c.l.b16 %v631
    %v3284 = vunpack.c.h.b16 %v631
    %v3285 = vunpack.c.l.b16 %v632
    %v3286 = vunpack.c.h.b16 %v632
    %v3287 = vunpack.c.l.b16 %v633
    %v3288 = vunpack.c.h.b16 %v633
    %v3289 = vunpack.c.l.b16 %v634
    %v3290 = vunpack.c.h.b16 %v634
    %v3291 = vunpack.c.l.b16 %v635
    %v3292 = vunpack.c.h.b16 %v635
    %v3293 = vunpack.c.l.b16 %v636
    %v3294 = vunpack.c.h.b16 %v636
    %v3295 = vunpack.c.l.b16 %v637
    %v3296 = vunpack.c.h.b16 %v637
    %v3297 = vunpack.c.l.b16 %v638
    %v3298 = vunpack.c.h.b16 %v638
    %v3299 = vunpack.c.l.b16 %v639
    %v3300 = vunpack.c.h.b16 %v639
    %v3301 = vunpack.c.l.b16 %v640
    %v3302 = vunpack.c.h.b16 %v640
    %v3303 = vunpack.c.l.b16 %v641
    %v3304 = vunpack.c.h.b16 %v641
    %v3305 = vunpack.c.l.b16 %v642
    %v3306 = vunpack.c.h.b16 %v642
    %v3307 = vunpack.c.l.b16 %v643
    %v3308 = vunpack.c.h.b16 %v643
    %v3309 = vunpack.c.l.b16 %v644
    %v3310 = vunpack.c.h.b16 %v644
    %v3311 = vunpack.c.l.b16 %v645
    %v3312 = vunpack.c.h.b16 %v645
    %v3313 = vunpack.c.l.b16 %v646
    %v3314 = vunpack.c.h.b16 %v646
    %v3315 = vunpack.c.l.b16 %v647
    %v3316 = vunpack.c.h.b16 %v647
    %v3317 = vunpack.c.l.b16 %v648
    %v3318 = vunpack.c.h.b16 %v648
    %v3319 = vunpack.c.l.b16 %v649
    %v3320 = vunpack.c.h.b16 %v649
    %v3321 = vunpack.c.l.b16 %v650
    %v3322 = vunpack.c.h.b16 %v650
    %v3323 = vunpack.c.l.b16 %v651
    %v3324 = vunpack.c.h.b16 %v651
    %v3325 = vunpack.c.l.b16 %v652
    %v3326 = vunpack.c.h.b16 %v652
    %v3327 = vunpack.c.l.b16 %v653
    %v3328 = vunpack.c.h.b16 %v653
    %v3329 = vunpack.c.l.b16 %v654
    %v3330 = vunpack.c.h.b16 %v654
    %v3331 = vunpack.c.l.b16 %v655
    %v3332 = vunpack.c.h.b16 %v655
    %v3333 = vunpack.c.l.b16 %v656
    %v3334 = vunpack.c.h.b16 %v656
    %v3335 = vunpack.c.l.b16 %v657
    %v3336 = vunpack.c.h.b16 %v657
    %v3337 = vunpack.c.l.b16 %v658
    %v3338 = vunpack.c.h.b16 %v658
    %v3339 = vunpack.c.l.b16 %v659
    %v3340 = vunpack.c.h.b16 %v659
    %v3341 = vunpack.c.l.b16 %v660
    %v3342 = vunpack.c.h.b16 %v660
    %v3343 = vunpack.c.l.b16 %v661
    %v3344 = vunpack.c.h.b16 %v661
    %v3345 = vunpack.c.l.b16 %v662
    %v3346 = vunpack.c.h.b16 %v662
    %v3347 = vunpack.c.l.b16 %v663
    %v3348 = vunpack.c.h.b16 %v663
    %v3349 = vunpack.c.l.b16 %v664
    %v3350 = vunpack.c.h.b16 %v664
    %v3351 = vunpack.c.l.b16 %v665
    %v3352 = vunpack.c.h.b16 %v665
    %v3353 = vunpack.c.l.b16 %v666
    %v3354 = vunpack.c.h.b16 %v666
    %v3355 = vunpack.c.l.b16 %v667
    %v3356 = vunpack.c.h.b16 %v667
    %v3357 = vunpack.c.l.b16 %v668
    %v3358 = vunpack.c.h.b16 %v668
    %v3359 = vunpack.c.l.b16 %v669
    %v3360 = vunpack.c.h.b16 %v669
    %v3361 = vunpack.c.l.b16 %v670
    %v3362 = vunpack.c.h.b16 %v670
    %v3363 = vunpack.c.l.b16 %v671
    %v3364 = vunpack.c.h.b16 %v671
    %v3365 = vunpack.c.l.b16 %v672
    %v3366 = vunpack.c.h.b16 %v672
    %v3367 = vunpack.c.l.b16 %v673
    %v3368 = vunpack.c.h.b16 %v673
    %v3369 = vunpack.c.l.b16 %v674
    %v3370 = vunpack.c.h.b16 %v674
    %v3371 = vunpack.c.l.b16 %v675
    %v3372 = vunpack.c.h.b16 %v675
    %v3373 = vunpack.c.l.b16 %v676
    %v3374 = vunpack.c.h.b16 %v676
    %v3375 = vunpack.c.l.b16 %v677
    %v3376 = vunpack.c.h.b16 %v677
    %v3377 = vunpack.c.l.b16 %v678
    %v3378 = vunpack.c.h.b16 %v678
    %v3379 = vunpack.c.l.b16 %v679
    %v3380 = vunpack.c.h.b16 %v679
    %v3381 = vunpack.c.l.b16 %v680
    %v3382 = vunpack.c.h.b16 %v680
    %v3383 = vunpack.c.l.b16 %v681
    %v3384 = vunpack.c.h.b16 %v681
    %v3385 = vunpack.c.l.b16 %v682
    %v3386 = vunpack.c.h.b16 %v682
    %v3387 = vunpack.c.l.b16 %v683
    %v3388 = vunpack.c.h.b16 %v683
    %v3389 = vunpack.c.l.b16 %v684
    %v3390 = vunpack.c.h.b16 %v684
    %v3391 = vunpack.c.l.b16 %v685
    %v3392 = vunpack.c.h.b16 %v685
    %v3393 = vunpack.c.l.b16 %v686
    %v3394 = vunpack.c.h.b16 %v686
    %v3395 = vunpack.c.l.b16 %v687
    %v3396 = vunpack.c.h.b16 %v687
    %v3397 = vunpack.c.l.b16 %v688
    %v3398 = vunpack.c.h.b16 %v688
    %v3399 = vunpack.c.l.b16 %v689
    %v3400 = vunpack.c.h.b16 %v689
    %v3401 = vunpack.c.l.b16 %v690
    %v3402 = vunpack.c.h.b16 %v690
    %v3403 = vunpack.c.l.b16 %v691
    %v3404 = vunpack.c.h.b16 %v691
    %v3405 = vunpack.c.l.b16 %v692
    %v3406 = vunpack.c.h.b16 %v692
    %v3407 = vunpack.c.l.b16 %v693
    %v3408 = vunpack.c.h.b16 %v693
    %v3409 = vunpack.c.l.b16 %v694
    %v3410 = vunpack.c.h.b16 %v694
    %v3411 = vunpack.c.l.b16 %v695
    %v3412 = vunpack.c.h.b16 %v695
    %v3413 = vunpack.c.l.b16 %v696
    %v3414 = vunpack.c.h.b16 %v696
    %v3415 = vunpack.c.l.b16 %v697
    %v3416 = vunpack.c.h.b16 %v697
    %v3417 = vunpack.c.l.b16 %v698
    %v3418 = vunpack.c.h.b16 %v698
    %v3419 = vunpack.c.l.b16 %v699
    %v3420 = vunpack.c.h.b16 %v699
    %v3421 = vunpack.c.l.b16 %v700
    %v3422 = vunpack.c.h.b16 %v700
    %v3423 = vunpack.c.l.b16 %v701
    %v3424 = vunpack.c.h.b16 %v701
    %v3425 = vunpack.c.l.b16 %v702
    %v3426 = vunpack.c.h.b16 %v702
    %v3427 = vunpack.c.l.b16 %v703
    %v3428 = vunpack.c.h.b16 %v703
    %v3429 = vunpack.c.l.b16 %v704
    %v3430 = vunpack.c.h.b16 %v704
    %v3431 = vunpack.c.l.b16 %v705
    %v3432 = vunpack.c.h.b16 %v705
    %v3433 = vunpack.c.l.b16 %v706
    %v3434 = vunpack.c.h.b16 %v706
    %v3435 = vunpack.c.l.b16 %v707
    %v3436 = vunpack.c.h.b16 %v707
    %v3437 = vunpack.c.l.b16 %v708
    %v3438 = vunpack.c.h.b16 %v708
    %v3439 = vunpack.c.l.b16 %v709
    %v3440 = vunpack.c.h.b16 %v709
    %v3441 = vunpack.c.l.b16 %v710
    %v3442 = vunpack.c.h.b16 %v710
    %v3443 = vunpack.c.l.b16 %v711
    %v3444 = vunpack.c.h.b16 %v711
    %v3445 = vunpack.c.l.b16 %v712
    %v3446 = vunpack.c.h.b16 %v712
    %v3447 = vunpack.c.l.b16 %v713
    %v3448 = vunpack.c.h.b16 %v713
    %v3449 = vunpack.c.l.b16 %v714
    %v3450 = vunpack.c.h.b16 %v714
    %v3451 = vunpack.c.l.b16 %v715
    %v3452 = vunpack.c.h.b16 %v715
    %v3453 = vunpack.c.l.b16 %v716
    %v3454 = vunpack.c.h.b16 %v716
    %v3455 = vunpack.c.l.b16 %v717
    %v3456 = vunpack.c.h.b16 %v717
    %v3457 = vunpack.c.l.b16 %v718
    %v3458 = vunpack.c.h.b16 %v718
    %v3459 = vunpack.c.l.b16 %v719
    %v3460 = vunpack.c.h.b16 %v719
    %v3461 = vunpack.c.l.b16 %v720
    %v3462 = vunpack.c.h.b16 %v720
    %v3463 = vunpack.c.l.b16 %v721
    %v3464 = vunpack.c.h.b16 %v721
    %v3465 = vunpack.c.l.b16 %v722
    %v3466 = vunpack.c.h.b16 %v722
    %v3467 = vunpack.c.l.b16 %v723
    %v3468 = vunpack.c.h.b16 %v723
    %v3469 = vunpack.c.l.b16 %v724
    %v3470 = vunpack.c.h.b16 %v724
    %v3471 = vunpack.c.l.b16 %v725
    %v3472 = vunpack.c.h.b16 %v725
    %v3473 = vunpack.c.l.b16 %v726
    %v3474 = vunpack.c.h.b16 %v726
    %v3475 = vunpack.c.l.b16 %v727
    %v3476 = vunpack.c.h.b16 %v727
    %v3477 = vunpack.c.l.b16 %v728
    %v3478 = vunpack.c.h.b16 %v728
    %v3479 = vunpack.c.l.b16 %v729
    %v3480 = vunpack.c.h.b16 %v729
    %v3481 = vunpack.c.l.b16 %v730
    %v3482 = vunpack.c.h.b16 %v730
    %v3483 = vunpack.c.l.b16 %v731
    %v3484 = vunpack.c.h.b16 %v731
    %v3485 = vunpack.c.l.b16 %v732
    %v3486 = vunpack.c.h.b16 %v732
    %v3487 = vunpack.c.l.b16 %v733
    %v3488 = vunpack.c.h.b16 %v733
    %v3489 = vunpack.c.l.b16 %v734
    %v3490 = vunpack.c.h.b16 %v734
    %v3491 = vunpack.c.l.b16 %v735
    %v3492 = vunpack.c.h.b16 %v735
    %v3493 = vunpack.c.l.b16 %v736
    %v3494 = vunpack.c.h.b16 %v736
    %v3495 = vunpack.c.l.b16 %v737
    %v3496 = vunpack.c.h.b16 %v737
    %v3497 = vunpack.c.l.b16 %v738
    %v3498 = vunpack.c.h.b16 %v738
    %v3499 = vunpack.c.l.b16 %v739
    %v3500 = vunpack.c.h.b16 %v739
    %v3501 = vunpack.c.l.b16 %v740
    %v3502 = vunpack.c.h.b16 %v740
    %v3503 = vunpack.c.l.b16 %v741
    %v3504 = vunpack.c.h.b16 %v741
    %v3505 = vunpack.c.l.b16 %v742
    %v3506 = vunpack.c.h.b16 %v742
    %v3507 = vunpack.c.l.b16 %v743
    %v3508 = vunpack.c.h.b16 %v743
    %v3509 = vunpack.c.l.b16 %v744
    %v3510 = vunpack.c.h.b16 %v744
    %v3511 = vunpack.c.l.b16 %v745
    %v3512 = vunpack.c.h.b16 %v745
    %v3513 = vunpack.c.l.b16 %v746
    %v3514 = vunpack.c.h.b16 %v746
    %v3515 = vunpack.c.l.b16 %v747
    %v3516 = vunpack.c.h.b16 %v747
    %v3517 = vunpack.c.l.b16 %v748
    %v3518 = vunpack.c.h.b16 %v748
    %v3519 = vunpack.c.l.b16 %v749
    %v3520 = vunpack.c.h.b16 %v749
    %v3521 = vunpack.c.l.b16 %v750
    %v3522 = vunpack.c.h.b16 %v750
    %v3523 = vunpack.c.l.b16 %v751
    %v3524 = vunpack.c.h.b16 %v751
    %v3525 = vunpack.c.l.b16 %v752
    %v3526 = vunpack.c.h.b16 %v752
    %v3527 = vunpack.c.l.b16 %v753
    %v3528 = vunpack.c.h.b16 %v753
    %v3529 = vunpack.c.l.b16 %v754
    %v3530 = vunpack.c.h.b16 %v754
    %v3531 = vunpack.c.l.b16 %v755
    %v3532 = vunpack.c.h.b16 %v755
    %v3533 = vunpack.c.l.b16 %v756
    %v3534 = vunpack.c.h.b16 %v756
    %v3535 = vunpack.c.l.b16 %v757
    %v3536 = vunpack.c.h.b16 %v757
    %v3537 = vunpack.c.l.b16 %v758
    %v3538 = vunpack.c.h.b16 %v758
    %v3539 = vunpack.c.l.b16 %v759
    %v3540 = vunpack.c.h.b16 %v759
    %v3541 = vunpack.c.l.b16 %v760
    %v3542 = vunpack.c.h.b16 %v760
    %v3543 = vunpack.c.l.b16 %v761
    %v3544 = vunpack.c.h.b16 %v761
    %v3545 = vunpack.c.l.b16 %v762
    %v3546 = vunpack.c.h.b16 %v762
    %v3547 = vunpack.c.l.b16 %v763
    %v3548 = vunpack.c.h.b16 %v763
    %v3549 = vunpack.c.l.b16 %v764
    %v3550 = vunpack.c.h.b16 %v764
    %v3551 = vunpack.c.l.b16 %v765
    %v3552 = vunpack.c.h.b16 %v765
    %v3553 = vunpack.c.l.b16 %v766
    %v3554 = vunpack.c.h.b16 %v766
    %v3555 = vunpack.c.l.b16 %v767
    %v3556 = vunpack.c.h.b16 %v767
    %v3557 = vunpack.c.l.b16 %v768
    %v3558 = vunpack.c.h.b16 %v768
    %v3559 = vunpack.c.l.b16 %v769
    %v3560 = vunpack.c.h.b16 %v769
    %v3561 = vunpack.c.l.b16 %v770
    %v3562 = vunpack.c.h.b16 %v770
    %v3563 = vunpack.c.l.b16 %v771
    %v3564 = vunpack.c.h.b16 %v771
    %v3565 = vunpack.c.l.b16 %v772
    %v3566 = vunpack.c.h.b16 %v772
    %v3567 = vunpack.c.l.b16 %v773
    %v3568 = vunpack.c.h.b16 %v773
    %v3569 = vunpack.c.l.b16 %v774
    %v3570 = vunpack.c.h.b16 %v774
    %v3571 = vunpack.c.l.b16 %v775
    %v3572 = vunpack.c.h.b16 %v775
    %v3573 = vunpack.c.l.b16 %v776
    %v3574 = vunpack.c.h.b16 %v776
    %v3575 = vunpack.c.l.b16 %v777
    %v3576 = vunpack.c.h.b16 %v777
    %v3577 = vunpack.c.l.b16 %v778
    %v3578 = vunpack.c.h.b16 %v778
    %v3579 = vunpack.c.l.b16 %v779
    %v3580 = vunpack.c.h.b16 %v779
    %v3581 = vunpack.c.l.b16 %v780
    %v3582 = vunpack.c.h.b16 %v780
    %v3583 = vunpack.c.l.b16 %v781
    %v3584 = vunpack.c.h.b16 %v781
    %v3585 = vunpack.c.l.b16 %v782
    %v3586 = vunpack.c.h.b16 %v782
    %v3587 = vunpack.c.l.b16 %v783
    %v3588 = vunpack.c.h.b16 %v783
    %v3589 = vunpack.c.l.b16 %v784
    %v3590 = vunpack.c.h.b16 %v784
    %v3591 = vunpack.c.l.b16 %v785
    %v3592 = vunpack.c.h.b16 %v785
    %v3593 = vunpack.c.l.b16 %v786
    %v3594 = vunpack.c.h.b16 %v786
    %v3595 = vunpack.c.l.b16 %v787
    %v3596 = vunpack.c.h.b16 %v787
    %v3597 = vunpack.c.l.b16 %v788
    %v3598 = vunpack.c.h.b16 %v788
    %v3599 = vunpack.c.l.b16 %v789
    %v3600 = vunpack.c.h.b16 %v789
    %v3601 = vunpack.c.l.b16 %v790
    %v3602 = vunpack.c.h.b16 %v790
    %v3603 = vunpack.c.l.b16 %v791
    %v3604 = vunpack.c.h.b16 %v791
    %v3605 = vunpack.c.l.b16 %v792
    %v3606 = vunpack.c.h.b16 %v792
    %v3607 = vunpack.c.l.b16 %v793
    %v3608 = vunpack.c.h.b16 %v793
    %v3609 = vunpack.c.l.b16 %v794
    %v3610 = vunpack.c.h.b16 %v794
    %v3611 = vunpack.c.l.b16 %v795
    %v3612 = vunpack.c.h.b16 %v795
    %v3613 = vunpack.c.l.b16 %v796
    %v3614 = vunpack.c.h.b16 %v796
    %v3615 = vunpack.c.l.b16 %v797
    %v3616 = vunpack.c.h.b16 %v797
    %v3617 = vunpack.c.l.b16 %v798
    %v3618 = vunpack.c.h.b16 %v798
    %v3619 = vunpack.c.l.b16 %v799
    %v3620 = vunpack.c.h.b16 %v799
    %v3621 = vunpack.c.l.b16 %v800
    %v3622 = vunpack.c.h.b16 %v800
    %v3623 = vunpack.c.l.b16 %v801
    %v3624 = vunpack.c.h.b16 %v801
    %v3625 = vunpack.c.l.b16 %v802
    %v3626 = vunpack.c.h.b16 %v802
    %v3627 = vunpack.c.l.b16 %v803
    %v3628 = vunpack.c.h.b16 %v803
    %v3629 = vunpack.c.l.b16 %v804
    %v3630 = vunpack.c.h.b16 %v804
    %v3631 = vunpack.c.l.b16 %v805
    %v3632 = vunpack.c.h.b16 %v805
    %v3633 = vunpack.c.l.b16 %v806
    %v3634 = vunpack.c.h.b16 %v806
    %v3635 = vunpack.c.l.b16 %v807
    %v3636 = vunpack.c.h.b16 %v807
    %v3637 = vunpack.c.l.b16 %v808
    %v3638 = vunpack.c.h.b16 %v808
    %v3639 = vunpack.c.l.b16 %v809
    %v3640 = vunpack.c.h.b16 %v809
    %v3641 = vunpack.c.l.b16 %v810
    %v3642 = vunpack.c.h.b16 %v810
    %v3643 = vunpack.c.l.b16 %v811
    %v3644 = vunpack.c.h.b16 %v811
    %v3645 = vunpack.c.l.b16 %v812
    %v3646 = vunpack.c.h.b16 %v812
    %v3647 = vunpack.c.l.b16 %v813
    %v3648 = vunpack.c.h.b16 %v813
    %v3649 = vunpack.c.l.b16 %v814
    %v3650 = vunpack.c.h.b16 %v814
    %v3651 = vunpack.c.l.b16 %v815
    %v3652 = vunpack.c.h.b16 %v815
    %v3653 = vunpack.c.l.b16 %v816
    %v3654 = vunpack.c.h.b16 %v816
    %v3655 = vunpack.c.l.b16 %v817
    %v3656 = vunpack.c.h.b16 %v817
    %v3657 = vunpack.c.l.b16 %v818
    %v3658 = vunpack.c.h.b16 %v818
    %v3659 = vunpack.c.l.b16 %v819
    %v3660 = vunpack.c.h.b16 %v819
    %v3661 = vunpack.c.l.b16 %v820
    %v3662 = vunpack.c.h.b16 %v820
    %v3663 = vunpack.c.l.b16 %v821
    %v3664 = vunpack.c.h.b16 %v821
    %v3665 = vunpack.c.l.b16 %v822
    %v3666 = vunpack.c.h.b16 %v822
    %v3667 = vunpack.c.l.b16 %v823
    %v3668 = vunpack.c.h.b16 %v823
    %v3669 = vunpack.c.l.b16 %v824
    %v3670 = vunpack.c.h.b16 %v824
    %v3671 = vunpack.c.l.b16 %v825
    %v3672 = vunpack.c.h.b16 %v825
    %v3673 = vunpack.c.l.b16 %v826
    %v3674 = vunpack.c.h.b16 %v826
    %v3675 = vunpack.c.l.b16 %v827
    %v3676 = vunpack.c.h.b16 %v827
    %v3677 = vunpack.c.l.b16 %v828
    %v3678 = vunpack.c.h.b16 %v828
    %v3679 = vunpack.c.l.b16 %v829
    %v3680 = vunpack.c.h.b16 %v829
    %v3681 = vunpack.c.l.b16 %v830
    %v3682 = vunpack.c.h.b16 %v830
    %v3683 = vunpack.c.l.b16 %v831
    %v3684 = vunpack.c.h.b16 %v831
    %v3685 = vunpack.c.l.b16 %v832
    %v3686 = vunpack.c.h.b16 %v832
    %v3687 = vunpack.c.l.b16 %v833
    %v3688 = vunpack.c.h.b16 %v833
    %v3689 = vunpack.c.l.b16 %v834
    %v3690 = vunpack.c.h.b16 %v834
    %v3691 = vunpack.c.l.b16 %v835
    %v3692 = vunpack.c.h.b16 %v835
    %v3693 = vunpack.c.l.b16 %v836
    %v3694 = vunpack.c.h.b16 %v836
    %v3695 = vunpack.c.l.b16 %v837
    %v3696 = vunpack.c.h.b16 %v837
    %v3697 = vunpack.c.l.b16 %v838
    %v3698 = vunpack.c.h.b16 %v838
    %v3699 = vunpack.c.l.b16 %v839
    %v3700 = vunpack.c.h.b16 %v839
    %v3701 = vunpack.c.l.b16 %v840
    %v3702 = vunpack.c.h.b16 %v840
    %v3703 = vunpack.c.l.b16 %v841
    %v3704 = vunpack.c.h.b16 %v841
    %v3705 = vunpack.c.l.b16 %v842
    %v3706 = vunpack.c.h.b16 %v842
    %v3707 = vunpack.c.l.b16 %v843
    %v3708 = vunpack.c.h.b16 %v843
    %v3709 = vunpack.c.l.b16 %v844
    %v3710 = vunpack.c.h.b16 %v844
    %v3711 = vunpack.c.l.b16 %v845
    %v3712 = vunpack.c.h.b16 %v845
    %v3713 = vunpack.c.l.b16 %v846
    %v3714 = vunpack.c.h.b16 %v846
    %v3715 = vunpack.c.l.b16 %v847
    %v3716 = vunpack.c.h.b16 %v847
    %v3717 = vunpack.c.l.b16 %v848
    %v3718 = vunpack.c.h.b16 %v848
    %v3719 = vunpack.c.l.b16 %v849
    %v3720 = vunpack.c.h.b16 %v849
    %v3721 = vunpack.c.l.b16 %v850
    %v3722 = vunpack.c.h.b16 %v850
    %v3723 = vunpack.c.l.b16 %v851
    %v3724 = vunpack.c.h.b16 %v851
    %v3725 = vunpack.c.l.b16 %v852
    %v3726 = vunpack.c.h.b16 %v852
    %v3727 = vunpack.c.l.b16 %v853
    %v3728 = vunpack.c.h.b16 %v853
    %v3729 = vunpack.c.l.b16 %v854
    %v3730 = vunpack.c.h.b16 %v854
    %v3731 = vunpack.c.l.b16 %v855
    %v3732 = vunpack.c.h.b16 %v855
    %v3733 = vunpack.c.l.b16 %v856
    %v3734 = vunpack.c.h.b16 %v856
    %v3735 = vunpack.c.l.b16 %v857
    %v3736 = vunpack.c.h.b16 %v857
    %v3737 = vunpack.c.l.b16 %v858
    %v3738 = vunpack.c.h.b16 %v858
    %v3739 = vunpack.c.l.b16 %v859
    %v3740 = vunpack.c.h.b16 %v859
    %v3741 = vunpack.c.l.b16 %v860
    %v3742 = vunpack.c.h.b16 %v860
    %v3743 = vunpack.c.l.b16 %v861
    %v3744 = vunpack.c.h.b16 %v861
    %v3745 = vunpack.c.l.b16 %v862
    %v3746 = vunpack.c.h.b16 %v862
    %v3747 = vunpack.c.l.b16 %v863
    %v3748 = vunpack.c.h.b16 %v863
    %v3749 = vunpack.c.l.b16 %v864
    %v3750 = vunpack.c.h.b16 %v864
    %v3751 = vunpack.c.l.b16 %v865
    %v3752 = vunpack.c.h.b16 %v865
    %v3753 = vunpack.c.l.b16 %v866
    %v3754 = vunpack.c.h.b16 %v866
    %v3755 = vunpack.c.l.b16 %v867
    %v3756 = vunpack.c.h.b16 %v867
    %v3757 = vunpack.c.l.b16 %v868
    %v3758 = vunpack.c.h.b16 %v868
    %v3759 = vunpack.c.l.b16 %v869
    %v3760 = vunpack.c.h.b16 %v869
    %v3761 = vunpack.c.l.b16 %v870
    %v3762 = vunpack.c.h.b16 %v870
    %v3763 = vunpack.c.l.b16 %v871
    %v3764 = vunpack.c.h.b16 %v871
    %v3765 = vunpack.c.l.b16 %v872
    %v3766 = vunpack.c.h.b16 %v872
    %v3767 = vunpack.c.l.b16 %v873
    %v3768 = vunpack.c.h.b16 %v873
    %v3769 = vunpack.c.l.b16 %v874
    %v3770 = vunpack.c.h.b16 %v874
    %v3771 = vunpack.c.l.b16 %v875
    %v3772 = vunpack.c.h.b16 %v875
    %v3773 = vunpack.c.l.b16 %v876
    %v3774 = vunpack.c.h.b16 %v876
    %v3775 = vunpack.c.l.b16 %v877
    %v3776 = vunpack.c.h.b16 %v877
    %v3777 = vunpack.c.l.b16 %v878
    %v3778 = vunpack.c.h.b16 %v878
    %v3779 = vunpack.c.l.b16 %v879
    %v3780 = vunpack.c.h.b16 %v879
    %v3781 = vunpack.c.l.b16 %v880
    %v3782 = vunpack.c.h.b16 %v880
    %v3783 = vunpack.c.l.b16 %v881
    %v3784 = vunpack.c.h.b16 %v881
    %v3785 = vunpack.c.l.b16 %v882
    %v3786 = vunpack.c.h.b16 %v882
    %v3787 = vunpack.c.l.b16 %v883
    %v3788 = vunpack.c.h.b16 %v883
    %v3789 = vunpack.c.l.b16 %v884
    %v3790 = vunpack.c.h.b16 %v884
    %v3791 = vunpack.c.l.b16 %v885
    %v3792 = vunpack.c.h.b16 %v885
    %v3793 = vunpack.c.l.b16 %v886
    %v3794 = vunpack.c.h.b16 %v886
    %v3795 = vunpack.c.l.b16 %v887
    %v3796 = vunpack.c.h.b16 %v887
    %v3797 = vunpack.c.l.b16 %v888
    %v3798 = vunpack.c.h.b16 %v888
    %v3799 = vunpack.c.l.b16 %v889
    %v3800 = vunpack.c.h.b16 %v889
    %v3801 = vunpack.c.l.b16 %v890
    %v3802 = vunpack.c.h.b16 %v890
    %v3803 = vunpack.c.l.b16 %v891
    %v3804 = vunpack.c.h.b16 %v891
    %v3805 = vunpack.c.l.b16 %v892
    %v3806 = vunpack.c.h.b16 %v892
    %v3807 = vunpack.c.l.b16 %v893
    %v3808 = vunpack.c.h.b16 %v893
    %v3809 = vunpack.c.l.b16 %v894
    %v3810 = vunpack.c.h.b16 %v894
    %v3811 = vunpack.c.l.b16 %v895
    %v3812 = vunpack.c.h.b16 %v895
    %v3813 = vunpack.c.l.b16 %v896
    %v3814 = vunpack.c.h.b16 %v896
    %v3815 = vunpack.c.l.b16 %v897
    %v3816 = vunpack.c.h.b16 %v897
    %v3817 = vunpack.c.l.b16 %v898
    %v3818 = vunpack.c.h.b16 %v898
    %v3819 = vunpack.c.l.b16 %v899
    %v3820 = vunpack.c.h.b16 %v899
    %v3821 = vunpack.c.l.b16 %v900
    %v3822 = vunpack.c.h.b16 %v900
    %v3823 = vunpack.c.l.b16 %v901
    %v3824 = vunpack.c.h.b16 %v901
    %v3825 = vunpack.c.l.b16 %v902
    %v3826 = vunpack.c.h.b16 %v902
    %v3827 = vunpack.c.l.b16 %v903
    %v3828 = vunpack.c.h.b16 %v903
    %v3829 = vunpack.c.l.b16 %v904
    %v3830 = vunpack.c.h.b16 %v904
    %v3831 = vunpack.c.l.b16 %v905
    %v3832 = vunpack.c.h.b16 %v905
    %v3833 = vunpack.c.l.b16 %v906
    %v3834 = vunpack.c.h.b16 %v906
    %v3835 = vunpack.c.l.b16 %v907
    %v3836 = vunpack.c.h.b16 %v907
    %v3837 = vunpack.c.l.b16 %v908
    %v3838 = vunpack.c.h.b16 %v908
    %v3839 = vunpack.c.l.b16 %v909
    %v3840 = vunpack.c.h.b16 %v909
    %v3841 = vunpack.c.l.b16 %v910
    %v3842 = vunpack.c.h.b16 %v910
    %v3843 = vunpack.c.l.b16 %v911
    %v3844 = vunpack.c.h.b16 %v911
    %v3845 = vunpack.c.l.b16 %v912
    %v3846 = vunpack.c.h.b16 %v912
    %v3847 = vunpack.c.l.b16 %v913
    %v3848 = vunpack.c.h.b16 %v913
    %v3849 = vunpack.c.l.b16 %v914
    %v3850 = vunpack.c.h.b16 %v914
    %v3851 = vunpack.c.l.b16 %v915
    %v3852 = vunpack.c.h.b16 %v915
    %v3853 = vunpack.c.l.b16 %v916
    %v3854 = vunpack.c.h.b16 %v916
    %v3855 = vunpack.c.l.b16 %v917
    %v3856 = vunpack.c.h.b16 %v917
    %v3857 = vunpack.c.l.b16 %v918
    %v3858 = vunpack.c.h.b16 %v918
    %v3859 = vunpack.c.l.b16 %v919
    %v3860 = vunpack.c.h.b16 %v919
    %v3861 = vunpack.c.l.b16 %v920
    %v3862 = vunpack.c.h.b16 %v920
    %v3863 = vunpack.c.l.b16 %v921
    %v3864 = vunpack.c.h.b16 %v921
    %v3865 = vunpack.c.l.b16 %v922
    %v3866 = vunpack.c.h.b16 %v922
    %v3867 = vunpack.c.l.b16 %v923
    %v3868 = vunpack.c.h.b16 %v923
    %v3869 = vunpack.c.l.b16 %v924
    %v3870 = vunpack.c.h.b16 %v924
    %v3871 = vunpack.c.l.b16 %v925
    %v3872 = vunpack.c.h.b16 %v925
    %v3873 = vunpack.c.l.b16 %v926
    %v3874 = vunpack.c.h.b16 %v926
    %v3875 = vunpack.c.l.b16 %v927
    %v3876 = vunpack.c.h.b16 %v927
    %v3877 = vunpack.c.l.b16 %v928
    %v3878 = vunpack.c.h.b16 %v928
    %v3879 = vunpack.c.l.b16 %v929
    %v3880 = vunpack.c.h.b16 %v929
    %v3881 = vunpack.c.l.b16 %v930
    %v3882 = vunpack.c.h.b16 %v930
    %v3883 = vunpack.c.l.b16 %v931
    %v3884 = vunpack.c.h.b16 %v931
    %v3885 = vunpack.c.l.b16 %v932
    %v3886 = vunpack.c.h.b16 %v932
    %v3887 = vunpack.c.l.b16 %v933
    %v3888 = vunpack.c.h.b16 %v933
    %v3889 = vunpack.c.l.b16 %v934
    %v3890 = vunpack.c.h.b16 %v934
    %v3891 = vunpack.c.l.b16 %v935
    %v3892 = vunpack.c.h.b16 %v935
    %v3893 = vunpack.c.l.b16 %v936
    %v3894 = vunpack.c.h.b16 %v936
    %v3895 = vunpack.c.l.b16 %v937
    %v3896 = vunpack.c.h.b16 %v937
    %v3897 = vunpack.c.l.b16 %v938
    %v3898 = vunpack.c.h.b16 %v938
    %v3899 = vunpack.c.l.b16 %v939
    %v3900 = vunpack.c.h.b16 %v939
    %v3901 = vunpack.c.l.b16 %v940
    %v3902 = vunpack.c.h.b16 %v940
    %v3903 = vunpack.c.l.b16 %v941
    %v3904 = vunpack.c.h.b16 %v941
    %v3905 = vunpack.c.l.b16 %v942
    %v3906 = vunpack.c.h.b16 %v942
    %v3907 = vunpack.c.l.b16 %v943
    %v3908 = vunpack.c.h.b16 %v943
    %v3909 = vunpack.c.l.b16 %v944
    %v3910 = vunpack.c.h.b16 %v944
    %v3911 = vunpack.c.l.b16 %v945
    %v3912 = vunpack.c.h.b16 %v945
    %v3913 = vunpack.c.l.b16 %v946
    %v3914 = vunpack.c.h.b16 %v946
    %v3915 = vunpack.c.l.b16 %v947
    %v3916 = vunpack.c.h.b16 %v947
    %v3917 = vunpack.c.l.b16 %v948
    %v3918 = vunpack.c.h.b16 %v948
    %v3919 = vunpack.c.l.b16 %v949
    %v3920 = vunpack.c.h.b16 %v949
    %v3921 = vunpack.c.l.b16 %v950
    %v3922 = vunpack.c.h.b16 %v950
    %v3923 = vunpack.c.l.b16 %v951
    %v3924 = vunpack.c.h.b16 %v951
    %v3925 = vunpack.c.l.b16 %v952
    %v3926 = vunpack.c.h.b16 %v952
    %v3927 = vunpack.c.l.b16 %v953
    %v3928 = vunpack.c.h.b16 %v953
    %v3929 = vunpack.c.l.b16 %v954
    %v3930 = vunpack.c.h.b16 %v954
    %v3931 = vunpack.c.l.b16 %v955
    %v3932 = vunpack.c.h.b16 %v955
    %v3933 = vunpack.c.l.b16 %v956
    %v3934 = vunpack.c.h.b16 %v956
    %v3935 = vunpack.c.l.b16 %v957
    %v3936 = vunpack.c.h.b16 %v957
    %v3937 = vunpack.c.l.b16 %v958
    %v3938 = vunpack.c.h.b16 %v958
    %v3939 = vunpack.c.l.b16 %v959
    %v3940 = vunpack.c.h.b16 %v959
    %v3941 = vunpack.c.l.b16 %v960
    %v3942 = vunpack.c.h.b16 %v960
    %v3943 = vunpack.c.l.b16 %v961
    %v3944 = vunpack.c.h.b16 %v961
    %v3945 = vunpack.c.l.b16 %v962
    %v3946 = vunpack.c.h.b16 %v962
    %v3947 = vunpack.c.l.b16 %v963
    %v3948 = vunpack.c.h.b16 %v963
    %v3949 = vunpack.c.l.b16 %v964
    %v3950 = vunpack.c.h.b16 %v964
    %v3951 = vunpack.c.l.b16 %v965
    %v3952 = vunpack.c.h.b16 %v965
    %v3953 = vunpack.c.l.b16 %v966
    %v3954 = vunpack.c.h.b16 %v966
    %v3955 = vunpack.c.l.b16 %v967
    %v3956 = vunpack.c.h.b16 %v967
    %v3957 = vunpack.c.l.b16 %v968
    %v3958 = vunpack.c.h.b16 %v968
    %v3959 = vunpack.c.l.b16 %v969
    %v3960 = vunpack.c.h.b16 %v969
    %v3961 = vunpack.c.l.b16 %v970
    %v3962 = vunpack.c.h.b16 %v970
    %v3963 = vunpack.c.l.b16 %v971
    %v3964 = vunpack.c.h.b16 %v971
    %v3965 = vunpack.c.l.b16 %v972
    %v3966 = vunpack.c.h.b16 %v972
    %v3967 = vunpack.c.l.b16 %v973
    %v3968 = vunpack.c.h.b16 %v973
    %v3969 = vunpack.c.l.b16 %v974
    %v3970 = vunpack.c.h.b16 %v974
    %v3971 = vunpack.c.l.b16 %v975
    %v3972 = vunpack.c.h.b16 %v975
    %v3973 = vunpack.c.l.b16 %v976
    %v3974 = vunpack.c.h.b16 %v976
    %v3975 = vunpack.c.l.b16 %v977
    %v3976 = vunpack.c.h.b16 %v977
    %v3977 = vunpack.c.l.b16 %v978
    %v3978 = vunpack.c.h.b16 %v978
    %v3979 = vunpack.c.l.b16 %v979
    %v3980 = vunpack.c.h.b16 %v979
    %v3981 = vunpack.c.l.b16 %v980
    %v3982 = vunpack.c.h.b16 %v980
    %v3983 = vunpack.c.l.b16 %v981
    %v3984 = vunpack.c.h.b16 %v981
    %v3985 = vunpack.c.l.b16 %v982
    %v3986 = vunpack.c.h.b16 %v982
    %v3987 = vunpack.c.l.b16 %v983
    %v3988 = vunpack.c.h.b16 %v983
    %v3989 = vunpack.c.l.b16 %v984
    %v3990 = vunpack.c.h.b16 %v984
    %v3991 = vunpack.c.l.b16 %v985
    %v3992 = vunpack.c.h.b16 %v985
    %v3993 = vunpack.c.l.b16 %v986
    %v3994 = vunpack.c.h.b16 %v986
    %v3995 = vunpack.c.l.b16 %v987
    %v3996 = vunpack.c.h.b16 %v987
    %v3997 = vunpack.c.l.b16 %v988
    %v3998 = vunpack.c.h.b16 %v988
    %v3999 = vunpack.c.l.b16 %v989
    %v4000 = vunpack.c.h.b16 %v989
    %v4001 = vunpack.c.l.b16 %v990
    %v4002 = vunpack.c.h.b16 %v990
    %v4003 = vunpack.c.l.b16 %v991
    %v4004 = vunpack.c.h.b16 %v991
    %v4005 = vunpack.c.l.b16 %v992
    %v4006 = vunpack.c.h.b16 %v992
    %v4007 = vunpack.c.l.b16 %v993
    %v4008 = vunpack.c.h.b16 %v993
    %v4009 = vunpack.c.l.b16 %v994
    %v4010 = vunpack.c.h.b16 %v994
    %v4011 = vunpack.c.l.b16 %v995
    %v4012 = vunpack.c.h.b16 %v995
    %v4013 = vunpack.c.l.b16 %v996
    %v4014 = vunpack.c.h.b16 %v996
    %v4015 = vunpack.c.l.b16 %v997
    %v4016 = vunpack.c.h.b16 %v997
    %v4017 = vunpack.c.l.b16 %v998
    %v4018 = vunpack.c.h.b16 %v998
    %v4019 = vunpack.c.l.b16 %v999
    %v4020 = vunpack.c.h.b16 %v999
    %v4021 = vunpack.c.l.b16 %v1000
    %v4022 = vunpack.c.h.b16 %v1000
    %v4023 = vunpack.c.l.b16 %v1001
    %v4024 = vunpack.c.h.b16 %v1001
    %v4025 = vunpack.c.l.b16 %v1002
    %v4026 = vunpack.c.h.b16 %v1002
    %v4027 = vunpack.c.l.b16 %v1003
    %v4028 = vunpack.c.h.b16 %v1003
    %v4029 = vunpack.c.l.b16 %v1004
    %v4030 = vunpack.c.h.b16 %v1004
    %v4031 = vunpack.c.l.b16 %v1005
    %v4032 = vunpack.c.h.b16 %v1005
    %v4033 = vunpack.c.l.b16 %v1006
    %v4034 = vunpack.c.h.b16 %v1006
    %v4035 = vunpack.c.l.b16 %v1007
    %v4036 = vunpack.c.h.b16 %v1007
    %v4037 = vunpack.c.l.b16 %v1008
    %v4038 = vunpack.c.h.b16 %v1008
    %v4039 = vunpack.c.l.b16 %v1009
    %v4040 = vunpack.c.h.b16 %v1009
    %v4041 = vunpack.c.l.b16 %v1010
    %v4042 = vunpack.c.h.b16 %v1010
    %v4043 = vunpack.c.l.b16 %v1011
    %v4044 = vunpack.c.h.b16 %v1011
    %v4045 = vunpack.c.l.b16 %v1012
    %v4046 = vunpack.c.h.b16 %v1012
    %v4047 = vunpack.c.l.b16 %v1013
    %v4048 = vunpack.c.h.b16 %v1013
    %v4049 = vunpack.c.l.b16 %v1014
    %v4050 = vunpack.c.h.b16 %v1014
    %v4051 = vunpack.c.l.b16 %v1015
    %v4052 = vunpack.c.h.b16 %v1015
    %v4053 = vunpack.c.l.b16 %v1016
    %v4054 = vunpack.c.h.b16 %v1016
    %v4055 = vunpack.c.l.b16 %v1017
    %v4056 = vunpack.c.h.b16 %v1017
    %v4057 = vunpack.c.l.b16 %v1018
    %v4058 = vunpack.c.h.b16 %v1018
    %v4059 = vunpack.c.l.b16 %v1019
    %v4060 = vunpack.c.h.b16 %v1019
    %v4061 = vunpack.c.l.b16 %v1020
    %v4062 = vunpack.c.h.b16 %v1020
    %v4063 = vunpack.c.l.b16 %v1021
    %v4064 = vunpack.c.h.b16 %v1021
    %v4065 = vunpack.c.l.b16 %v1022
    %v4066 = vunpack.c.h.b16 %v1022
    %v4067 = vunpack.c.l.b16 %v1023
    %v4068 = vunpack.c.h.b16 %v1023
    %v4069 = vunpack.c.l.b16 %v1024
    %v4070 = vunpack.c.h.b16 %v1024
    %v4071 = vunpack.c.l.b16 %v1025
    %v4072 = vunpack.c.h.b16 %v1025
    %v4073 = vunpack.c.l.b16 %v1026
    %v4074 = vunpack.c.h.b16 %v1026
    %v4075 = vunpack.c.l.b16 %v1027
    %v4076 = vunpack.c.h.b16 %v1027
    %v4077 = vunpack.c.l.b16 %v1028
    %v4078 = vunpack.c.h.b16 %v1028
    %v4079 = vunpack.c.l.b16 %v1029
    %v4080 = vunpack.c.h.b16 %v1029
    %v4081 = vunpack.c.l.b16 %v1030
    %v4082 = vunpack.c.h.b16 %v1030
    %v4083 = vunpack.c.l.b16 %v1031
    %v4084 = vunpack.c.h.b16 %v1031
    %v4085 = vunpack.c.l.b16 %v1032
    %v4086 = vunpack.c.h.b16 %v1032
    %v4087 = vunpack.c.l.b16 %v1033
    %v4088 = vunpack.c.h.b16 %v1033
    %v4089 = vunpack.c.l.b16 %v1034
    %v4090 = vunpack.c.h.b16 %v1034
    %v4091 = vunpack.c.l.b16 %v1035
    %v4092 = vunpack.c.h.b16 %v1035
    %v4093 = vunpack.c.l.b16 %v1036
    %v4094 = vunpack.c.h.b16 %v1036
    %v4095 = vunpack.c.l.b16 %v1037
    %v4096 = vunpack.c.h.b16 %v1037
    %v4097 = vunpack.c.l.b16 %v1038
    %v4098 = vunpack.c.h.b16 %v1038
    %v4099 = vunpack.c.l.b16 %v1039
    %v4100 = vunpack.c.h.b16 %v1039
    %v4101 = vunpack.c.l.b16 %v1040
    %v4102 = vunpack.c.h.b16 %v1040
    %v4103 = vunpack.c.l.b16 %v1041
    %v4104 = vunpack.c.h.b16 %v1041
    %v4105 = vunpack.c.l.b16 %v1042
    %v4106 = vunpack.c.h.b16 %v1042
    %v4107 = vunpack.c.l.b16 %v1043
    %v4108 = vunpack.c.h.b16 %v1043
    %v4109 = vunpack.c.l.b16 %v1044
    %v4110 = vunpack.c.h.b16 %v1044
    %v4111 = vunpack.c.l.b16 %v1045
    %v4112 = vunpack.c.h.b16 %v1045
    %v4113 = vunpack.c.l.b16 %v1046
    %v4114 = vunpack.c.h.b16 %v1046
    %v4115 = vunpack.c.l.b16 %v1047
    %v4116 = vunpack.c.h.b16 %v1047
    %v4117 = vunpack.c.l.b16 %v1048
    %v4118 = vunpack.c.h.b16 %v1048
    %v4119 = vunpack.c.l.b16 %v1049
    %v4120 = vunpack.c.h.b16 %v1049
    %v4121 = vunpack.c.l.b16 %v1050
    %v4122 = vunpack.c.h.b16 %v1050
    %v4123 = vunpack.c.l.b16 %v1051
    %v4124 = vunpack.c.h.b16 %v1051
    %v4125 = vunpack.c.l.b16 %v1052
    %v4126 = vunpack.c.h.b16 %v1052
    %v4127 = vunpack.c.l.b16 %v1053
    %v4128 = vunpack.c.h.b16 %v1053
    %v4129 = vunpack.c.l.b16 %v1054
    %v4130 = vunpack.c.h.b16 %v1054
    %v4131 = vunpack.c.l.b16 %v1055
    %v4132 = vunpack.c.h.b16 %v1055
    %v4133 = vunpack.c.l.b16 %v1056
    %v4134 = vunpack.c.h.b16 %v1056
    %v4135 = vunpack.c.l.b16 %v1057
    %v4136 = vunpack.c.h.b16 %v1057
    %v4137 = vunpack.c.l.b16 %v1058
    %v4138 = vunpack.c.h.b16 %v1058
    %v4139 = vunpack.c.l.b16 %v1059
    %v4140 = vunpack.c.h.b16 %v1059
    %v4141 = vunpack.c.l.b16 %v1060
    %v4142 = vunpack.c.h.b16 %v1060
    %v4143 = vunpack.c.l.b16 %v1061
    %v4144 = vunpack.c.h.b16 %v1061
    %v4145 = vunpack.c.l.b16 %v1062
    %v4146 = vunpack.c.h.b16 %v1062
    %v4147 = vunpack.c.l.b16 %v1063
    %v4148 = vunpack.c.h.b16 %v1063
    %v4149 = vunpack.c.l.b16 %v1064
    %v4150 = vunpack.c.h.b16 %v1064
    %v4151 = vunpack.c.l.b16 %v1065
    %v4152 = vunpack.c.h.b16 %v1065
    %v4153 = vunpack.c.l.b16 %v1066
    %v4154 = vunpack.c.h.b16 %v1066
    %v4155 = vunpack.c.l.b16 %v1067
    %v4156 = vunpack.c.h.b16 %v1067
    %v4157 = vunpack.c.l.b16 %v1068
    %v4158 = vunpack.c.h.b16 %v1068
    %v4159 = vunpack.c.l.b16 %v1069
    %v4160 = vunpack.c.h.b16 %v1069
    %v4161 = vunpack.c.l.b16 %v1070
    %v4162 = vunpack.c.h.b16 %v1070
    %v4163 = vunpack.c.l.b16 %v1071
    %v4164 = vunpack.c.h.b16 %v1071
    %v4165 = vunpack.c.l.b16 %v1072
    %v4166 = vunpack.c.h.b16 %v1072
    %v4167 = vunpack.c.l.b16 %v1073
    %v4168 = vunpack.c.h.b16 %v1073
    %v4169 = vunpack.c.l.b16 %v1074
    %v4170 = vunpack.c.h.b16 %v1074
    %v4171 = vunpack.c.l.b16 %v1075
    %v4172 = vunpack.c.h.b16 %v1075
    %v4173 = vunpack.c.l.b16 %v1076
    %v4174 = vunpack.c.h.b16 %v1076
    %v4175 = vunpack.c.l.b16 %v1077
    %v4176 = vunpack.c.h.b16 %v1077
    %v4177 = vunpack.c.l.b16 %v1078
    %v4178 = vunpack.c.h.b16 %v1078
    %v4179 = vunpack.c.l.b16 %v1079
    %v4180 = vunpack.c.h.b16 %v1079
    %v4181 = vunpack.c.l.b16 %v1080
    %v4182 = vunpack.c.h.b16 %v1080
    %v4183 = vunpack.c.l.b16 %v1081
    %v4184 = vunpack.c.h.b16 %v1081
    %v4185 = vunpack.c.l.b16 %v1082
    %v4186 = vunpack.c.h.b16 %v1082
    %v4187 = vunpack.c.l.b16 %v1083
    %v4188 = vunpack.c.h.b16 %v1083
    %v4189 = vunpack.c.l.b16 %v1084
    %v4190 = vunpack.c.h.b16 %v1084
    %v4191 = vunpack.c.l.b16 %v1085
    %v4192 = vunpack.c.h.b16 %v1085
    %v4193 = vunpack.c.l.b16 %v1086
    %v4194 = vunpack.c.h.b16 %v1086
    %v4195 = vunpack.c.l.b16 %v1087
    %v4196 = vunpack.c.h.b16 %v1087
    %v4197 = vunpack.c.l.b16 %v1088
    %v4198 = vunpack.c.h.b16 %v1088
    %v4199 = vunpack.c.l.b16 %v1089
    %v4200 = vunpack.c.h.b16 %v1089
    %v4201 = vunpack.c.l.b16 %v1090
    %v4202 = vunpack.c.h.b16 %v1090
    %v4203 = vunpack.c.l.b16 %v1091
    %v4204 = vunpack.c.h.b16 %v1091
    %v4205 = vunpack.c.l.b16 %v1092
    %v4206 = vunpack.c.h.b16 %v1092
    %v4207 = vunpack.c.l.b16 %v1093
    %v4208 = vunpack.c.h.b16 %v1093
    %v4209 = vunpack.c.l.b16 %v1094
    %v4210 = vunpack.c.h.b16 %v1094
    %v4211 = vunpack.c.l.b16 %v1095
    %v4212 = vunpack.c.h.b16 %v1095
    %v4213 = vunpack.c.l.b16 %v1096
    %v4214 = vunpack.c.h.b16 %v1096
    %v4215 = vunpack.c.l.b16 %v1097
    %v4216 = vunpack.c.h.b16 %v1097
    %v4217 = vunpack.c.l.b16 %v1098
    %v4218 = vunpack.c.h.b16 %v1098
    %v4219 = vunpack.c.l.b16 %v1099
    %v4220 = vunpack.c.h.b16 %v1099
    %v4221 = vunpack.c.l.b16 %v1100
    %v4222 = vunpack.c.h.b16 %v1100
    %v4223 = vunpack.c.l.b16 %v1101
    %v4224 = vunpack.c.h.b16 %v1101
    %v4225 = vunpack.c.l.b16 %v1102
    %v4226 = vunpack.c.h.b16 %v1102
    %v4227 = vunpack.c.l.b16 %v1103
    %v4228 = vunpack.c.h.b16 %v1103
    %v4229 = vunpack.c.l.b16 %v1104
    %v4230 = vunpack.c.h.b16 %v1104
    %v4231 = vunpack.c.l.b16 %v1105
    %v4232 = vunpack.c.h.b16 %v1105
    %v4233 = vunpack.c.l.b16 %v1106
    %v4234 = vunpack.c.h.b16 %v1106
    %v4235 = vpack.c.b16 %v2195, %v2187
    %v4236 = vpack.c.b16 %v2196, %v2188
    %v4237 = vpack.c.b16 %v2197, %v2189
    %v4238 = vpack.c.b16 %v2198, %v2190
    %v4239 = vpack.c.b16 %v2199, %v2191
    %v4240 = vpack.c.b16 %v2200, %v2192
    %v4241 = vpack.c.b16 %v2201, %v2193
    %v4242 = vpack.c.b16 %v2202, %v2194
    %v4243 = vpack.c.b16 %v2211, %v2203
    %v4244 = vpack.c.b16 %v2212, %v2204
    %v4245 = vpack.c.b16 %v2213, %v2205
    %v4246 = vpack.c.b16 %v2214, %v2206
    %v4247 = vpack.c.b16 %v2215, %v2207
    %v4248 = vpack.c.b16 %v2216, %v2208
    %v4249 = vpack.c.b16 %v2217, %v2209
    %v4250 = vpack.c.b16 %v2218, %v2210
    %v4251 = vpack.c.b16 %v2227, %v2219
    %v4252 = vpack.c.b16 %v2228, %v2220
    %v4253 = vpack.c.b16 %v2229, %v2221
    %v4254 = vpack.c.b16 %v2230, %v2222
    %v4255 = vpack.c.b16 %v2231, %v2223
    %v4256 = vpack.c.b16 %v2232, %v2224
    %v4257 = vpack.c.b16 %v2233, %v2225
    %v4258 = vpack.c.b16 %v2234, %v2226
    %v4259 = vpack.c.b16 %v2243, %v2235
    %v4260 = vpack.c.b16 %v2244, %v2236
    %v4261 = vpack.c.b16 %v2245, %v2237
    %v4262 = vpack.c.b16 %v2246, %v2238
    %v4263 = vpack.c.b16 %v2247, %v2239
    %v4264 = vpack.c.b16 %v2248, %v2240
    %v4265 = vpack.c.b16 %v2249, %v2241
    %v4266 = vpack.c.b16 %v2250, %v2242
    %v4267 = vpack.c.b16 %v2259, %v2251
    %v4268 = vpack.c.b16 %v2260, %v2252
    %v4269 = vpack.c.b16 %v2261, %v2253
    %v4270 = vpack.c.b16 %v2262, %v2254
    %v4271 = vpack.c.b16 %v2263, %v2255
    %v4272 = vpack.c.b16 %v2264, %v2256
    %v4273 = vpack.c.b16 %v2265, %v2257
    %v4274 = vpack.c.b16 %v2266, %v2258
    %v4275 = vpack.c.b16 %v2275, %v2267
    %v4276 = vpack.c.b16 %v2276, %v2268
    %v4277 = vpack.c.b16 %v2277, %v2269
    %v4278 = vpack.c.b16 %v2278, %v2270
    %v4279 = vpack.c.b16 %v2279, %v2271
    %v4280 = vpack.c.b16 %v2280, %v2272
    %v4281 = vpack.c.b16 %v2281, %v2273
    %v4282 = vpack.c.b16 %v2282, %v2274
    %v4283 = vpack.c.b16 %v2291, %v2283
    %v4284 = vpack.c.b16 %v2292, %v2284
    %v4285 = vpack.c.b16 %v2293, %v2285
    %v4286 = vpack.c.b16 %v2294, %v2286
    %v4287 = vpack.c.b16 %v2295, %v2287
    %v4288 = vpack.c.b16 %v2296, %v2288
    %v4289 = vpack.c.b16 %v2297, %v2289
    %v4290 = vpack.c.b16 %v2298, %v2290
    %v4291 = vpack.c.b16 %v2307, %v2299
    %v4292 = vpack.c.b16 %v2308, %v2300
    %v4293 = vpack.c.b16 %v2309, %v2301
    %v4294 = vpack.c.b16 %v2310, %v2302
    %v4295 = vpack.c.b16 %v2311, %v2303
    %v4296 = vpack.c.b16 %v2312, %v2304
    %v4297 = vpack.c.b16 %v2313, %v2305
    %v4298 = vpack.c.b16 %v2314, %v2306
    %v4299 = vpack.c.b16 %v2323, %v2315
    %v4300 = vpack.c.b16 %v2324, %v2316
    %v4301 = vpack.c.b16 %v2325, %v2317
    %v4302 = vpack.c.b16 %v2326, %v2318
    %v4303 = vpack.c.b16 %v2327, %v2319
    %v4304 = vpack.c.b16 %v2328, %v2320
    %v4305 = vpack.c.b16 %v2329, %v2321
    %v4306 = vpack.c.b16 %v2330, %v2322
    %v4307 = vpack.c.b16 %v2339, %v2331
    %v4308 = vpack.c.b16 %v2340, %v2332
    %v4309 = vpack.c.b16 %v2341, %v2333
    %v4310 = vpack.c.b16 %v2342, %v2334
    %v4311 = vpack.c.b16 %v2343, %v2335
    %v4312 = vpack.c.b16 %v2344, %v2336
    %v4313 = vpack.c.b16 %v2345, %v2337
    %v4314 = vpack.c.b16 %v2346, %v2338
    %v4315 = vpack.c.b16 %v2355, %v2347
    %v4316 = vpack.c.b16 %v2356, %v2348
    %v4317 = vpack.c.b16 %v2357, %v2349
    %v4318 = vpack.c.b16 %v2358, %v2350
    %v4319 = vpack.c.b16 %v2359, %v2351
    %v4320 = vpack.c.b16 %v2360, %v2352
    %v4321 = vpack.c.b16 %v2361, %v2353
    %v4322 = vpack.c.b16 %v2362, %v2354
    %v4323 = vpack.c.b16 %v2371, %v2363
    %v4324 = vpack.c.b16 %v2372, %v2364
    %v4325 = vpack.c.b16 %v2373, %v2365
    %v4326 = vpack.c.b16 %v2374, %v2366
    %v4327 = vpack.c.b16 %v2375, %v2367
    %v4328 = vpack.c.b16 %v2376, %v2368
    %v4329 = vpack.c.b16 %v2377, %v2369
    %v4330 = vpack.c.b16 %v2378, %v2370
    %v4331 = vpack.c.b16 %v2387, %v2379
    %v4332 = vpack.c.b16 %v2388, %v2380
    %v4333 = vpack.c.b16 %v2389, %v2381
    %v4334 = vpack.c.b16 %v2390, %v2382
    %v4335 = vpack.c.b16 %v2391, %v2383
    %v4336 = vpack.c.b16 %v2392, %v2384
    %v4337 = vpack.c.b16 %v2393, %v2385
    %v4338 = vpack.c.b16 %v2394, %v2386
    %v4339 = vpack.c.b16 %v2403, %v2395
    %v4340 = vpack.c.b16 %v2404, %v2396
    %v4341 = vpack.c.b16 %v2405, %v2397
    %v4342 = vpack.c.b16 %v2406, %v2398
    %v4343 = vpack.c.b16 %v2407, %v2399
    %v4344 = vpack.c.b16 %v2408, %v2400
    %v4345 = vpack.c.b16 %v2409, %v2401
    %v4346 = vpack.c.b16 %v2410, %v2402
    %v4347 = vpack.c.b16 %v2419, %v2411
    %v4348 = vpack.c.b16 %v2420, %v2412
    %v4349 = vpack.c.b16 %v2421, %v2413
    %v4350 = vpack.c.b16 %v2422, %v2414
    %v4351 = vpack.c.b16 %v2423, %v2415
    %v4352 = vpack.c.b16 %v2424, %v2416
    %v4353 = vpack.c.b16 %v2425, %v2417
    %v4354 = vpack.c.b16 %v2426, %v2418
    %v4355 = vpack.c.b16 %v2435, %v2427
    %v4356 = vpack.c.b16 %v2436, %v2428
    %v4357 = vpack.c.b16 %v2437, %v2429
    %v4358 = vpack.c.b16 %v2438, %v2430
    %v4359 = vpack.c.b16 %v2439, %v2431
    %v4360 = vpack.c.b16 %v2440, %v2432
    %v4361 = vpack.c.b16 %v2441, %v2433
    %v4362 = vpack.c.b16 %v2442, %v2434
    %v4363 = vpack.c.b16 %v2451, %v2443
    %v4364 = vpack.c.b16 %v2452, %v2444
    %v4365 = vpack.c.b16 %v2453, %v2445
    %v4366 = vpack.c.b16 %v2454, %v2446
    %v4367 = vpack.c.b16 %v2455, %v2447
    %v4368 = vpack.c.b16 %v2456, %v2448
    %v4369 = vpack.c.b16 %v2457, %v2449
    %v4370 = vpack.c.b16 %v2458, %v2450
    %v4371 = vpack.c.b16 %v2467, %v2459
    %v4372 = vpack.c.b16 %v2468, %v2460
    %v4373 = vpack.c.b16 %v2469, %v2461
    %v4374 = vpack.c.b16 %v2470, %v2462
    %v4375 = vpack.c.b16 %v2471, %v2463
    %v4376 = vpack.c.b16 %v2472, %v2464
    %v4377 = vpack.c.b16 %v2473, %v2465
    %v4378 = vpack.c.b16 %v2474, %v2466
    %v4379 = vpack.c.b16 %v2483, %v2475
    %v4380 = vpack.c.b16 %v2484, %v2476
    %v4381 = vpack.c.b16 %v2485, %v2477
    %v4382 = vpack.c.b16 %v2486, %v2478
    %v4383 = vpack.c.b16 %v2487, %v2479
    %v4384 = vpack.c.b16 %v2488, %v2480
    %v4385 = vpack.c.b16 %v2489, %v2481
    %v4386 = vpack.c.b16 %v2490, %v2482
    %v4387 = vpack.c.b16 %v2499, %v2491
    %v4388 = vpack.c.b16 %v2500, %v2492
    %v4389 = vpack.c.b16 %v2501, %v2493
    %v4390 = vpack.c.b16 %v2502, %v2494
    %v4391 = vpack.c.b16 %v2503, %v2495
    %v4392 = vpack.c.b16 %v2504, %v2496
    %v4393 = vpack.c.b16 %v2505, %v2497
    %v4394 = vpack.c.b16 %v2506, %v2498
    %v4395 = vpack.c.b16 %v2515, %v2507
    %v4396 = vpack.c.b16 %v2516, %v2508
    %v4397 = vpack.c.b16 %v2517, %v2509
    %v4398 = vpack.c.b16 %v2518, %v2510
    %v4399 = vpack.c.b16 %v2519, %v2511
    %v4400 = vpack.c.b16 %v2520, %v2512
    %v4401 = vpack.c.b16 %v2521, %v2513
    %v4402 = vpack.c.b16 %v2522, %v2514
    %v4403 = vpack.c.b16 %v2531, %v2523
    %v4404 = vpack.c.b16 %v2532, %v2524
    %v4405 = vpack.c.b16 %v2533, %v2525
    %v4406 = vpack.c.b16 %v2534, %v2526
    %v4407 = vpack.c.b16 %v2535, %v2527
    %v4408 = vpack.c.b16 %v2536, %v2528
    %v4409 = vpack.c.b16 %v2537, %v2529
    %v4410 = vpack.c.b16 %v2538, %v2530
    %v4411 = vpack.c.b16 %v2547, %v2539
    %v4412 = vpack.c.b16 %v2548, %v2540
    %v4413 = vpack.c.b16 %v2549, %v2541
    %v4414 = vpack.c.b16 %v2550, %v2542
    %v4415 = vpack.c.b16 %v2551, %v2543
    %v4416 = vpack.c.b16 %v2552, %v2544
    %v4417 = vpack.c.b16 %v2553, %v2545
    %v4418 = vpack.c.b16 %v2554, %v2546
    %v4419 = vpack.c.b16 %v2563, %v2555
    %v4420 = vpack.c.b16 %v2564, %v2556
    %v4421 = vpack.c.b16 %v2565, %v2557
    %v4422 = vpack.c.b16 %v2566, %v2558
    %v4423 = vpack.c.b16 %v2567, %v2559
    %v4424 = vpack.c.b16 %v2568, %v2560
    %v4425 = vpack.c.b16 %v2569, %v2561
    %v4426 = vpack.c.b16 %v2570, %v2562
    %v4427 = vpack.c.b16 %v2579, %v2571
    %v4428 = vpack.c.b16 %v2580, %v2572
    %v4429 = vpack.c.b16 %v2581, %v2573
    %v4430 = vpack.c.b16 %v2582, %v2574
    %v4431 = vpack.c.b16 %v2583, %v2575
    %v4432 = vpack.c.b16 %v2584, %v2576
    %v4433 = vpack.c.b16 %v2585, %v2577
    %v4434 = vpack.c.b16 %v2586, %v2578
    %v4435 = vpack.c.b16 %v2595, %v2587
    %v4436 = vpack.c.b16 %v2596, %v2588
    %v4437 = vpack.c.b16 %v2597, %v2589
    %v4438 = vpack.c.b16 %v2598, %v2590
    %v4439 = vpack.c.b16 %v2599, %v2591
    %v4440 = vpack.c.b16 %v2600, %v2592
    %v4441 = vpack.c.b16 %v2601, %v2593
    %v4442 = vpack.c.b16 %v2602, %v2594
    %v4443 = vpack.c.b16 %v2611, %v2603
    %v4444 = vpack.c.b16 %v2612, %v2604
    %v4445 = vpack.c.b16 %v2613, %v2605
    %v4446 = vpack.c.b16 %v2614, %v2606
    %v4447 = vpack.c.b16 %v2615, %v2607
    %v4448 = vpack.c.b16 %v2616, %v2608
    %v4449 = vpack.c.b16 %v2617, %v2609
    %v4450 = vpack.c.b16 %v2618, %v2610
    %v4451 = vpack.c.b16 %v2627, %v2619
    %v4452 = vpack.c.b16 %v2628, %v2620
    %v4453 = vpack.c.b16 %v2629, %v2621
    %v4454 = vpack.c.b16 %v2630, %v2622
    %v4455 = vpack.c.b16 %v2631, %v2623
    %v4456 = vpack.c.b16 %v2632, %v2624
    %v4457 = vpack.c.b16 %v2633, %v2625
    %v4458 = vpack.c.b16 %v2634, %v2626
    %v4459 = vpack.c.b16 %v2643, %v2635
    %v4460 = vpack.c.b16 %v2644, %v2636
    %v4461 = vpack.c.b16 %v2645, %v2637
    %v4462 = vpack.c.b16 %v2646, %v2638
    %v4463 = vpack.c.b16 %v2647, %v2639
    %v4464 = vpack.c.b16 %v2648, %v2640
    %v4465 = vpack.c.b16 %v2649, %v2641
    %v4466 = vpack.c.b16 %v2650, %v2642
    %v4467 = vpack.c.b16 %v2659, %v2651
    %v4468 = vpack.c.b16 %v2660, %v2652
    %v4469 = vpack.c.b16 %v2661, %v2653
    %v4470 = vpack.c.b16 %v2662, %v2654
    %v4471 = vpack.c.b16 %v2663, %v2655
    %v4472 = vpack.c.b16 %v2664, %v2656
    %v4473 = vpack.c.b16 %v2665, %v2657
    %v4474 = vpack.c.b16 %v2666, %v2658
    %v4475 = vpack.c.b16 %v2675, %v2667
    %v4476 = vpack.c.b16 %v2676, %v2668
    %v4477 = vpack.c.b16 %v2677, %v2669
    %v4478 = vpack.c.b16 %v2678, %v2670
    %v4479 = vpack.c.b16 %v2679, %v2671
    %v4480 = vpack.c.b16 %v2680, %v2672
    %v4481 = vpack.c.b16 %v2681, %v2673
    %v4482 = vpack.c.b16 %v2682, %v2674
    %v4483 = vpack.c.b16 %v2691, %v2683
    %v4484 = vpack.c.b16 %v2692, %v2684
    %v4485 = vpack.c.b16 %v2693, %v2685
    %v4486 = vpack.c.b16 %v2694, %v2686
    %v4487 = vpack.c.b16 %v2695, %v2687
    %v4488 = vpack.c.b16 %v2696, %v2688
    %v4489 = vpack.c.b16 %v2697, %v2689
    %v4490 = vpack.c.b16 %v2698, %v2690
    %v4491 = vpack.c.b16 %v2707, %v2699
    %v4492 = vpack.c.b16 %v2708, %v2700
    %v4493 = vpack.c.b16 %v2709, %v2701
    %v4494 = vpack.c.b16 %v2710, %v2702
    %v4495 = vpack.c.b16 %v2711, %v2703
    %v4496 = vpack.c.b16 %v2712, %v2704
    %v4497 = vpack.c.b16 %v2713, %v2705
    %v4498 = vpack.c.b16 %v2714, %v2706
    %v4499 = vpack.c.b16 %v2723, %v2715
    %v4500 = vpack.c.b16 %v2724, %v2716
    %v4501 = vpack.c.b16 %v2725, %v2717
    %v4502 = vpack.c.b16 %v2726, %v2718
    %v4503 = vpack.c.b16 %v2727, %v2719
    %v4504 = vpack.c.b16 %v2728, %v2720
    %v4505 = vpack.c.b16 %v2729, %v2721
    %v4506 = vpack.c.b16 %v2730, %v2722
    %v4507 = vpack.c.b16 %v2739, %v2731
    %v4508 = vpack.c.b16 %v2740, %v2732
    %v4509 = vpack.c.b16 %v2741, %v2733
    %v4510 = vpack.c.b16 %v2742, %v2734
    %v4511 = vpack.c.b16 %v2743, %v2735
    %v4512 = vpack.c.b16 %v2744, %v2736
    %v4513 = vpack.c.b16 %v2745, %v2737
    %v4514 = vpack.c.b16 %v2746, %v2738
    %v4515 = vpack.c.b16 %v2755, %v2747
    %v4516 = vpack.c.b16 %v2756, %v2748
    %v4517 = vpack.c.b16 %v2757, %v2749
    %v4518 = vpack.c.b16 %v2758, %v2750
    %v4519 = vpack.c.b16 %v2759, %v2751
    %v4520 = vpack.c.b16 %v2760, %v2752
    %v4521 = vpack.c.b16 %v2761, %v2753
    %v4522 = vpack.c.b16 %v2762, %v2754
    %v4523 = vpack.c.b16 %v2771, %v2763
    %v4524 = vpack.c.b16 %v2772, %v2764
    %v4525 = vpack.c.b16 %v2773, %v2765
    %v4526 = vpack.c.b16 %v2774, %v2766
    %v4527 = vpack.c.b16 %v2775, %v2767
    %v4528 = vpack.c.b16 %v2776, %v2768
    %v4529 = vpack.c.b16 %v2777, %v2769
    %v4530 = vpack.c.b16 %v2778, %v2770
    %v4531 = vpack.c.b16 %v2787, %v2779
    %v4532 = vpack.c.b16 %v2788, %v2780
    %v4533 = vpack.c.b16 %v2789, %v2781
    %v4534 = vpack.c.b16 %v2790, %v2782
    %v4535 = vpack.c.b16 %v2791, %v2783
    %v4536 = vpack.c.b16 %v2792, %v2784
    %v4537 = vpack.c.b16 %v2793, %v2785
    %v4538 = vpack.c.b16 %v2794, %v2786
    %v4539 = vpack.c.b16 %v2803, %v2795
    %v4540 = vpack.c.b16 %v2804, %v2796
    %v4541 = vpack.c.b16 %v2805, %v2797
    %v4542 = vpack.c.b16 %v2806, %v2798
    %v4543 = vpack.c.b16 %v2807, %v2799
    %v4544 = vpack.c.b16 %v2808, %v2800
    %v4545 = vpack.c.b16 %v2809, %v2801
    %v4546 = vpack.c.b16 %v2810, %v2802
    %v4547 = vpack.c.b16 %v2819, %v2811
    %v4548 = vpack.c.b16 %v2820, %v2812
    %v4549 = vpack.c.b16 %v2821, %v2813
    %v4550 = vpack.c.b16 %v2822, %v2814
    %v4551 = vpack.c.b16 %v2823, %v2815
    %v4552 = vpack.c.b16 %v2824, %v2816
    %v4553 = vpack.c.b16 %v2825, %v2817
    %v4554 = vpack.c.b16 %v2826, %v2818
    %v4555 = vpack.c.b16 %v2835, %v2827
    %v4556 = vpack.c.b16 %v2836, %v2828
    %v4557 = vpack.c.b16 %v2837, %v2829
    %v4558 = vpack.c.b16 %v2838, %v2830
    %v4559 = vpack.c.b16 %v2839, %v2831
    %v4560 = vpack.c.b16 %v2840, %v2832
    %v4561 = vpack.c.b16 %v2841, %v2833
    %v4562 = vpack.c.b16 %v2842, %v2834
    %v4563 = vpack.c.b16 %v2851, %v2843
    %v4564 = vpack.c.b16 %v2852, %v2844
    %v4565 = vpack.c.b16 %v2853, %v2845
    %v4566 = vpack.c.b16 %v2854, %v2846
    %v4567 = vpack.c.b16 %v2855, %v2847
    %v4568 = vpack.c.b16 %v2856, %v2848
    %v4569 = vpack.c.b16 %v2857, %v2849
    %v4570 = vpack.c.b16 %v2858, %v2850
    %v4571 = vpack.c.b16 %v2867, %v2859
    %v4572 = vpack.c.b16 %v2868, %v2860
    %v4573 = vpack.c.b16 %v2869, %v2861
    %v4574 = vpack.c.b16 %v2870, %v2862
    %v4575 = vpack.c.b16 %v2871, %v2863
    %v4576 = vpack.c.b16 %v2872, %v2864
    %v4577 = vpack.c.b16 %v2873, %v2865
    %v4578 = vpack.c.b16 %v2874, %v2866
    %v4579 = vpack.c.b16 %v2883, %v2875
    %v4580 = vpack.c.b16 %v2884, %v2876
    %v4581 = vpack.c.b16 %v2885, %v2877
    %v4582 = vpack.c.b16 %v2886, %v2878
    %v4583 = vpack.c.b16 %v2887, %v2879
    %v4584 = vpack.c.b16 %v2888, %v2880
    %v4585 = vpack.c.b16 %v2889, %v2881
    %v4586 = vpack.c.b16 %v2890, %v2882
    %v4587 = vpack.c.b16 %v2899, %v2891
    %v4588 = vpack.c.b16 %v2900, %v2892
    %v4589 = vpack.c.b16 %v2901, %v2893
    %v4590 = vpack.c.b16 %v2902, %v2894
    %v4591 = vpack.c.b16 %v2903, %v2895
    %v4592 = vpack.c.b16 %v2904, %v2896
    %v4593 = vpack.c.b16 %v2905, %v2897
    %v4594 = vpack.c.b16 %v2906, %v2898
    %v4595 = vpack.c.b16 %v2915, %v2907
    %v4596 = vpack.c.b16 %v2916, %v2908
    %v4597 = vpack.c.b16 %v2917, %v2909
    %v4598 = vpack.c.b16 %v2918, %v2910
    %v4599 = vpack.c.b16 %v2919, %v2911
    %v4600 = vpack.c.b16 %v2920, %v2912
    %v4601 = vpack.c.b16 %v2921, %v2913
    %v4602 = vpack.c.b16 %v2922, %v2914
    %v4603 = vpack.c.b16 %v2931, %v2923
    %v4604 = vpack.c.b16 %v2932, %v2924
    %v4605 = vpack.c.b16 %v2933, %v2925
    %v4606 = vpack.c.b16 %v2934, %v2926
    %v4607 = vpack.c.b16 %v2935, %v2927
    %v4608 = vpack.c.b16 %v2936, %v2928
    %v4609 = vpack.c.b16 %v2937, %v2929
    %v4610 = vpack.c.b16 %v2938, %v2930
    %v4611 = vpack.c.b16 %v2947, %v2939
    %v4612 = vpack.c.b16 %v2948, %v2940
    %v4613 = vpack.c.b16 %v2949, %v2941
    %v4614 = vpack.c.b16 %v2950, %v2942
    %v4615 = vpack.c.b16 %v2951, %v2943
    %v4616 = vpack.c.b16 %v2952, %v2944
    %v4617 = vpack.c.b16 %v2953, %v2945
    %v4618 = vpack.c.b16 %v2954, %v2946
    %v4619 = vpack.c.b16 %v2963, %v2955
    %v4620 = vpack.c.b16 %v2964, %v2956
    %v4621 = vpack.c.b16 %v2965, %v2957
    %v4622 = vpack.c.b16 %v2966, %v2958
    %v4623 = vpack.c.b16 %v2967, %v2959
    %v4624 = vpack.c.b16 %v2968, %v2960
    %v4625 = vpack.c.b16 %v2969, %v2961
    %v4626 = vpack.c.b16 %v2970, %v2962
    %v4627 = vpack.c.b16 %v2979, %v2971
    %v4628 = vpack.c.b16 %v2980, %v2972
    %v4629 = vpack.c.b16 %v2981, %v2973
    %v4630 = vpack.c.b16 %v2982, %v2974
    %v4631 = vpack.c.b16 %v2983, %v2975
    %v4632 = vpack.c.b16 %v2984, %v2976
    %v4633 = vpack.c.b16 %v2985, %v2977
    %v4634 = vpack.c.b16 %v2986, %v2978
    %v4635 = vpack.c.b16 %v2995, %v2987
    %v4636 = vpack.c.b16 %v2996, %v2988
    %v4637 = vpack.c.b16 %v2997, %v2989
    %v4638 = vpack.c.b16 %v2998, %v2990
    %v4639 = vpack.c.b16 %v2999, %v2991
    %v4640 = vpack.c.b16 %v3000, %v2992
    %v4641 = vpack.c.b16 %v3001, %v2993
    %v4642 = vpack.c.b16 %v3002, %v2994
    %v4643 = vpack.c.b16 %v3011, %v3003
    %v4644 = vpack.c.b16 %v3012, %v3004
    %v4645 = vpack.c.b16 %v3013, %v3005
    %v4646 = vpack.c.b16 %v3014, %v3006
    %v4647 = vpack.c.b16 %v3015, %v3007
    %v4648 = vpack.c.b16 %v3016, %v3008
    %v4649 = vpack.c.b16 %v3017, %v3009
    %v4650 = vpack.c.b16 %v3018, %v3010
    %v4651 = vpack.c.b16 %v3027, %v3019
    %v4652 = vpack.c.b16 %v3028, %v3020
    %v4653 = vpack.c.b16 %v3029, %v3021
    %v4654 = vpack.c.b16 %v3030, %v3022
    %v4655 = vpack.c.b16 %v3031, %v3023
    %v4656 = vpack.c.b16 %v3032, %v3024
    %v4657 = vpack.c.b16 %v3033, %v3025
    %v4658 = vpack.c.b16 %v3034, %v3026
    %v4659 = vpack.c.b16 %v3043, %v3035
    %v4660 = vpack.c.b16 %v3044, %v3036
    %v4661 = vpack.c.b16 %v3045, %v3037
    %v4662 = vpack.c.b16 %v3046, %v3038
    %v4663 = vpack.c.b16 %v3047, %v3039
    %v4664 = vpack.c.b16 %v3048, %v3040
    %v4665 = vpack.c.b16 %v3049, %v3041
    %v4666 = vpack.c.b16 %v3050, %v3042
    %v4667 = vpack.c.b16 %v3059, %v3051
    %v4668 = vpack.c.b16 %v3060, %v3052
    %v4669 = vpack.c.b16 %v3061, %v3053
    %v4670 = vpack.c.b16 %v3062, %v3054
    %v4671 = vpack.c.b16 %v3063, %v3055
    %v4672 = vpack.c.b16 %v3064, %v3056
    %v4673 = vpack.c.b16 %v3065, %v3057
    %v4674 = vpack.c.b16 %v3066, %v3058
    %v4675 = vpack.c.b16 %v3075, %v3067
    %v4676 = vpack.c.b16 %v3076, %v3068
    %v4677 = vpack.c.b16 %v3077, %v3069
    %v4678 = vpack.c.b16 %v3078, %v3070
    %v4679 = vpack.c.b16 %v3079, %v3071
    %v4680 = vpack.c.b16 %v3080, %v3072
    %v4681 = vpack.c.b16 %v3081, %v3073
    %v4682 = vpack.c.b16 %v3082, %v3074
    %v4683 = vpack.c.b16 %v3091, %v3083
    %v4684 = vpack.c.b16 %v3092, %v3084
    %v4685 = vpack.c.b16 %v3093, %v3085
    %v4686 = vpack.c.b16 %v3094, %v3086
    %v4687 = vpack.c.b16 %v3095, %v3087
    %v4688 = vpack.c.b16 %v3096, %v3088
    %v4689 = vpack.c.b16 %v3097, %v3089
    %v4690 = vpack.c.b16 %v3098, %v3090
    %v4691 = vpack.c.b16 %v3107, %v3099
    %v4692 = vpack.c.b16 %v3108, %v3100
    %v4693 = vpack.c.b16 %v3109, %v3101
    %v4694 = vpack.c.b16 %v3110, %v3102
    %v4695 = vpack.c.b16 %v3111, %v3103
    %v4696 = vpack.c.b16 %v3112, %v3104
    %v4697 = vpack.c.b16 %v3113, %v3105
    %v4698 = vpack.c.b16 %v3114, %v3106
    %v4699 = vpack.c.b16 %v3123, %v3115
    %v4700 = vpack.c.b16 %v3124, %v3116
    %v4701 = vpack.c.b16 %v3125, %v3117
    %v4702 = vpack.c.b16 %v3126, %v3118
    %v4703 = vpack.c.b16 %v3127, %v3119
    %v4704 = vpack.c.b16 %v3128, %v3120
    %v4705 = vpack.c.b16 %v3129, %v3121
    %v4706 = vpack.c.b16 %v3130, %v3122
    %v4707 = vpack.c.b16 %v3139, %v3131
    %v4708 = vpack.c.b16 %v3140, %v3132
    %v4709 = vpack.c.b16 %v3141, %v3133
    %v4710 = vpack.c.b16 %v3142, %v3134
    %v4711 = vpack.c.b16 %v3143, %v3135
    %v4712 = vpack.c.b16 %v3144, %v3136
    %v4713 = vpack.c.b16 %v3145, %v3137
    %v4714 = vpack.c.b16 %v3146, %v3138
    %v4715 = vpack.c.b16 %v3155, %v3147
    %v4716 = vpack.c.b16 %v3156, %v3148
    %v4717 = vpack.c.b16 %v3157, %v3149
    %v4718 = vpack.c.b16 %v3158, %v3150
    %v4719 = vpack.c.b16 %v3159, %v3151
    %v4720 = vpack.c.b16 %v3160, %v3152
    %v4721 = vpack.c.b16 %v3161, %v3153
    %v4722 = vpack.c.b16 %v3162, %v3154
    %v4723 = vpack.c.b16 %v3171, %v3163
    %v4724 = vpack.c.b16 %v3172, %v3164
    %v4725 = vpack.c.b16 %v3173, %v3165
    %v4726 = vpack.c.b16 %v3174, %v3166
    %v4727 = vpack.c.b16 %v3175, %v3167
    %v4728 = vpack.c.b16 %v3176, %v3168
    %v4729 = vpack.c.b16 %v3177, %v3169
    %v4730 = vpack.c.b16 %v3178, %v3170
    %v4731 = vpack.c.b16 %v3187, %v3179
    %v4732 = vpack.c.b16 %v3188, %v3180
    %v4733 = vpack.c.b16 %v3189, %v3181
    %v4734 = vpack.c.b16 %v3190, %v3182
    %v4735 = vpack.c.b16 %v3191, %v3183
    %v4736 = vpack.c.b16 %v3192, %v3184
    %v4737 = vpack.c.b16 %v3193, %v3185
    %v4738 = vpack.c.b16 %v3194, %v3186
    %v4739 = vpack.c.b16 %v3203, %v3195
    %v4740 = vpack.c.b16 %v3204, %v3196
    %v4741 = vpack.c.b16 %v3205, %v3197
    %v4742 = vpack.c.b16 %v3206, %v3198
    %v4743 = vpack.c.b16 %v3207, %v3199
    %v4744 = vpack.c.b16 %v3208, %v3200
    %v4745 = vpack.c.b16 %v3209, %v3201
    %v4746 = vpack.c.b16 %v3210, %v3202
    %v4747 = vpack.c.b16 %v3219, %v3211
    %v4748 = vpack.c.b16 %v3220, %v3212
    %v4749 = vpack.c.b16 %v3221, %v3213
    %v4750 = vpack.c.b16 %v3222, %v3214
    %v4751 = vpack.c.b16 %v3223, %v3215
    %v4752 = vpack.c.b16 %v3224, %v3216
    %v4753 = vpack.c.b16 %v3225, %v3217
    %v4754 = vpack.c.b16 %v3226, %v3218
    %v4755 = vpack.c.b16 %v3235, %v3227
    %v4756 = vpack.c.b16 %v3236, %v3228
    %v4757 = vpack.c.b16 %v3237, %v3229
    %v4758 = vpack.c.b16 %v3238, %v3230
    %v4759 = vpack.c.b16 %v3239, %v3231
    %v4760 = vpack.c.b16 %v3240, %v3232
    %v4761 = vpack.c.b16 %v3241, %v3233
    %v4762 = vpack.c.b16 %v3242, %v3234
    %v4763 = vpack.c.b16 %v3251, %v3243
    %v4764 = vpack.c.b16 %v3252, %v3244
    %v4765 = vpack.c.b16 %v3253, %v3245
    %v4766 = vpack.c.b16 %v3254, %v3246
    %v4767 = vpack.c.b16 %v3255, %v3247
    %v4768 = vpack.c.b16 %v3256, %v3248
    %v4769 = vpack.c.b16 %v3257, %v3249
    %v4770 = vpack.c.b16 %v3258, %v3250
    %v4771 = vpack.c.b16 %v3267, %v3259
    %v4772 = vpack.c.b16 %v3268, %v3260
    %v4773 = vpack.c.b16 %v3269, %v3261
    %v4774 = vpack.c.b16 %v3270, %v3262
    %v4775 = vpack.c.b16 %v3271, %v3263
    %v4776 = vpack.c.b16 %v3272, %v3264
    %v4777 = vpack.c.b16 %v3273, %v3265
    %v4778 = vpack.c.b16 %v3274, %v3266
    %v4779 = vpack.c.b16 %v3283, %v3275
    %v4780 = vpack.c.b16 %v3284, %v3276
    %v4781 = vpack.c.b16 %v3285, %v3277
    %v4782 = vpack.c.b16 %v3286, %v3278
    %v4783 = vpack.c.b16 %v3287, %v3279
    %v4784 = vpack.c.b16 %v3288, %v3280
    %v4785 = vpack.c.b16 %v3289, %v3281
    %v4786 = vpack.c.b16 %v3290, %v3282
    %v4787 = vpack.c.b16 %v3299, %v3291
    %v4788 = vpack.c.b16 %v3300, %v3292
    %v4789 = vpack.c.b16 %v3301, %v3293
    %v4790 = vpack.c.b16 %v3302, %v3294
    %v4791 = vpack.c.b16 %v3303, %v3295
    %v4792 = vpack.c.b16 %v3304, %v3296
    %v4793 = vpack.c.b16 %v3305, %v3297
    %v4794 = vpack.c.b16 %v3306, %v3298
    %v4795 = vpack.c.b16 %v3315, %v3307
    %v4796 = vpack.c.b16 %v3316, %v3308
    %v4797 = vpack.c.b16 %v3317, %v3309
    %v4798 = vpack.c.b16 %v3318, %v3310
    %v4799 = vpack.c.b16 %v3319, %v3311
    %v4800 = vpack.c.b16 %v3320, %v3312
    %v4801 = vpack.c.b16 %v3321, %v3313
    %v4802 = vpack.c.b16 %v3322, %v3314
    %v4803 = vpack.c.b16 %v3331, %v3323
    %v4804 = vpack.c.b16 %v3332, %v3324
    %v4805 = vpack.c.b16 %v3333, %v3325
    %v4806 = vpack.c.b16 %v3334, %v3326
    %v4807 = vpack.c.b16 %v3335, %v3327
    %v4808 = vpack.c.b16 %v3336, %v3328
    %v4809 = vpack.c.b16 %v3337, %v3329
    %v4810 = vpack.c.b16 %v3338, %v3330
    %v4811 = vpack.c.b16 %v3347, %v3339
    %v4812 = vpack.c.b16 %v3348, %v3340
    %v4813 = vpack.c.b16 %v3349, %v3341
    %v4814 = vpack.c.b16 %v3350, %v3342
    %v4815 = vpack.c.b16 %v3351, %v3343
    %v4816 = vpack.c.b16 %v3352, %v3344
    %v4817 = vpack.c.b16 %v3353, %v3345
    %v4818 = vpack.c.b16 %v3354, %v3346
    %v4819 = vpack.c.b16 %v3363, %v3355
    %v4820 = vpack.c.b16 %v3364, %v3356
    %v4821 = vpack.c.b16 %v3365, %v3357
    %v4822 = vpack.c.b16 %v3366, %v3358
    %v4823 = vpack.c.b16 %v3367, %v3359
    %v4824 = vpack.c.b16 %v3368, %v3360
    %v4825 = vpack.c.b16 %v3369, %v3361
    %v4826 = vpack.c.b16 %v3370, %v3362
    %v4827 = vpack.c.b16 %v3379, %v3371
    %v4828 = vpack.c.b16 %v3380, %v3372
    %v4829 = vpack.c.b16 %v3381, %v3373
    %v4830 = vpack.c.b16 %v3382, %v3374
    %v4831 = vpack.c.b16 %v3383, %v3375
    %v4832 = vpack.c.b16 %v3384, %v3376
    %v4833 = vpack.c.b16 %v3385, %v3377
    %v4834 = vpack.c.b16 %v3386, %v3378
    %v4835 = vpack.c.b16 %v3395, %v3387
    %v4836 = vpack.c.b16 %v3396, %v3388
    %v4837 = vpack.c.b16 %v3397, %v3389
    %v4838 = vpack.c.b16 %v3398, %v3390
    %v4839 = vpack.c.b16 %v3399, %v3391
    %v4840 = vpack.c.b16 %v3400, %v3392
    %v4841 = vpack.c.b16 %v3401, %v3393
    %v4842 = vpack.c.b16 %v3402, %v3394
    %v4843 = vpack.c.b16 %v3411, %v3403
    %v4844 = vpack.c.b16 %v3412, %v3404
    %v4845 = vpack.c.b16 %v3413, %v3405
    %v4846 = vpack.c.b16 %v3414, %v3406
    %v4847 = vpack.c.b16 %v3415, %v3407
    %v4848 = vpack.c.b16 %v3416, %v3408
    %v4849 = vpack.c.b16 %v3417, %v3409
    %v4850 = vpack.c.b16 %v3418, %v3410
    %v4851 = vpack.c.b16 %v3427, %v3419
    %v4852 = vpack.c.b16 %v3428, %v3420
    %v4853 = vpack.c.b16 %v3429, %v3421
    %v4854 = vpack.c.b16 %v3430, %v3422
    %v4855 = vpack.c.b16 %v3431, %v3423
    %v4856 = vpack.c.b16 %v3432, %v3424
    %v4857 = vpack.c.b16 %v3433, %v3425
    %v4858 = vpack.c.b16 %v3434, %v3426
    %v4859 = vpack.c.b16 %v3443, %v3435
    %v4860 = vpack.c.b16 %v3444, %v3436
    %v4861 = vpack.c.b16 %v3445, %v3437
    %v4862 = vpack.c.b16 %v3446, %v3438
    %v4863 = vpack.c.b16 %v3447, %v3439
    %v4864 = vpack.c.b16 %v3448, %v3440
    %v4865 = vpack.c.b16 %v3449, %v3441
    %v4866 = vpack.c.b16 %v3450, %v3442
    %v4867 = vpack.c.b16 %v3459, %v3451
    %v4868 = vpack.c.b16 %v3460, %v3452
    %v4869 = vpack.c.b16 %v3461, %v3453
    %v4870 = vpack.c.b16 %v3462, %v3454
    %v4871 = vpack.c.b16 %v3463, %v3455
    %v4872 = vpack.c.b16 %v3464, %v3456
    %v4873 = vpack.c.b16 %v3465, %v3457
    %v4874 = vpack.c.b16 %v3466, %v3458
    %v4875 = vpack.c.b16 %v3475, %v3467
    %v4876 = vpack.c.b16 %v3476, %v3468
    %v4877 = vpack.c.b16 %v3477, %v3469
    %v4878 = vpack.c.b16 %v3478, %v3470
    %v4879 = vpack.c.b16 %v3479, %v3471
    %v4880 = vpack.c.b16 %v3480, %v3472
    %v4881 = vpack.c.b16 %v3481, %v3473
    %v4882 = vpack.c.b16 %v3482, %v3474
    %v4883 = vpack.c.b16 %v3491, %v3483
    %v4884 = vpack.c.b16 %v3492, %v3484
    %v4885 = vpack.c.b16 %v3493, %v3485
    %v4886 = vpack.c.b16 %v3494, %v3486
    %v4887 = vpack.c.b16 %v3495, %v3487
    %v4888 = vpack.c.b16 %v3496, %v3488
    %v4889 = vpack.c.b16 %v3497, %v3489
    %v4890 = vpack.c.b16 %v3498, %v3490
    %v4891 = vpack.c.b16 %v3507, %v3499
    %v4892 = vpack.c.b16 %v3508, %v3500
    %v4893 = vpack.c.b16 %v3509, %v3501
    %v4894 = vpack.c.b16 %v3510, %v3502
    %v4895 = vpack.c.b16 %v3511, %v3503
    %v4896 = vpack.c.b16 %v3512, %v3504
    %v4897 = vpack.c.b16 %v3513, %v3505
    %v4898 = vpack.c.b16 %v3514, %v3506
    %v4899 = vpack.c.b16 %v3523, %v3515
    %v4900 = vpack.c.b16 %v3524, %v3516
    %v4901 = vpack.c.b16 %v3525, %v3517
    %v4902 = vpack.c.b16 %v3526, %v3518
    %v4903 = vpack.c.b16 %v3527, %v3519
    %v4904 = vpack.c.b16 %v3528, %v3520
    %v4905 = vpack.c.b16 %v3529, %v3521
    %v4906 = vpack.c.b16 %v3530, %v3522
    %v4907 = vpack.c.b16 %v3539, %v3531
    %v4908 = vpack.c.b16 %v3540, %v3532
    %v4909 = vpack.c.b16 %v3541, %v3533
    %v4910 = vpack.c.b16 %v3542, %v3534
    %v4911 = vpack.c.b16 %v3543, %v3535
    %v4912 = vpack.c.b16 %v3544, %v3536
    %v4913 = vpack.c.b16 %v3545, %v3537
    %v4914 = vpack.c.b16 %v3546, %v3538
    %v4915 = vpack.c.b16 %v3555, %v3547
    %v4916 = vpack.c.b16 %v3556, %v3548
    %v4917 = vpack.c.b16 %v3557, %v3549
    %v4918 = vpack.c.b16 %v3558, %v3550
    %v4919 = vpack.c.b16 %v3559, %v3551
    %v4920 = vpack.c.b16 %v3560, %v3552
    %v4921 = vpack.c.b16 %v3561, %v3553
    %v4922 = vpack.c.b16 %v3562, %v3554
    %v4923 = vpack.c.b16 %v3571, %v3563
    %v4924 = vpack.c.b16 %v3572, %v3564
    %v4925 = vpack.c.b16 %v3573, %v3565
    %v4926 = vpack.c.b16 %v3574, %v3566
    %v4927 = vpack.c.b16 %v3575, %v3567
    %v4928 = vpack.c.b16 %v3576, %v3568
    %v4929 = vpack.c.b16 %v3577, %v3569
    %v4930 = vpack.c.b16 %v3578, %v3570
    %v4931 = vpack.c.b16 %v3587, %v3579
    %v4932 = vpack.c.b16 %v3588, %v3580
    %v4933 = vpack.c.b16 %v3589, %v3581
    %v4934 = vpack.c.b16 %v3590, %v3582
    %v4935 = vpack.c.b16 %v3591, %v3583
    %v4936 = vpack.c.b16 %v3592, %v3584
    %v4937 = vpack.c.b16 %v3593, %v3585
    %v4938 = vpack.c.b16 %v3594, %v3586
    %v4939 = vpack.c.b16 %v3603, %v3595
    %v4940 = vpack.c.b16 %v3604, %v3596
    %v4941 = vpack.c.b16 %v3605, %v3597
    %v4942 = vpack.c.b16 %v3606, %v3598
    %v4943 = vpack.c.b16 %v3607, %v3599
    %v4944 = vpack.c.b16 %v3608, %v3600
    %v4945 = vpack.c.b16 %v3609, %v3601
    %v4946 = vpack.c.b16 %v3610, %v3602
    %v4947 = vpack.c.b16 %v3619, %v3611
    %v4948 = vpack.c.b16 %v3620, %v3612
    %v4949 = vpack.c.b16 %v3621, %v3613
    %v4950 = vpack.c.b16 %v3622, %v3614
    %v4951 = vpack.c.b16 %v3623, %v3615
    %v4952 = vpack.c.b16 %v3624, %v3616
    %v4953 = vpack.c.b16 %v3625, %v3617
    %v4954 = vpack.c.b16 %v3626, %v3618
    %v4955 = vpack.c.b16 %v3635, %v3627
    %v4956 = vpack.c.b16 %v3636, %v3628
    %v4957 = vpack.c.b16 %v3637, %v3629
    %v4958 = vpack.c.b16 %v3638, %v3630
    %v4959 = vpack.c.b16 %v3639, %v3631
    %v4960 = vpack.c.b16 %v3640, %v3632
    %v4961 = vpack.c.b16 %v3641, %v3633
    %v4962 = vpack.c.b16 %v3642, %v3634
    %v4963 = vpack.c.b16 %v3651, %v3643
    %v4964 = vpack.c.b16 %v3652, %v3644
    %v4965 = vpack.c.b16 %v3653, %v3645
    %v4966 = vpack.c.b16 %v3654, %v3646
    %v4967 = vpack.c.b16 %v3655, %v3647
    %v4968 = vpack.c.b16 %v3656, %v3648
    %v4969 = vpack.c.b16 %v3657, %v3649
    %v4970 = vpack.c.b16 %v3658, %v3650
    %v4971 = vpack.c.b16 %v3667, %v3659
    %v4972 = vpack.c.b16 %v3668, %v3660
    %v4973 = vpack.c.b16 %v3669, %v3661
    %v4974 = vpack.c.b16 %v3670, %v3662
    %v4975 = vpack.c.b16 %v3671, %v3663
    %v4976 = vpack.c.b16 %v3672, %v3664
    %v4977 = vpack.c.b16 %v3673, %v3665
    %v4978 = vpack.c.b16 %v3674, %v3666
    %v4979 = vpack.c.b16 %v3683, %v3675
    %v4980 = vpack.c.b16 %v3684, %v3676
    %v4981 = vpack.c.b16 %v3685, %v3677
    %v4982 = vpack.c.b16 %v3686, %v3678
    %v4983 = vpack.c.b16 %v3687, %v3679
    %v4984 = vpack.c.b16 %v3688, %v3680
    %v4985 = vpack.c.b16 %v3689, %v3681
    %v4986 = vpack.c.b16 %v3690, %v3682
    %v4987 = vpack.c.b16 %v3699, %v3691
    %v4988 = vpack.c.b16 %v3700, %v3692
    %v4989 = vpack.c.b16 %v3701, %v3693
    %v4990 = vpack.c.b16 %v3702, %v3694
    %v4991 = vpack.c.b16 %v3703, %v3695
    %v4992 = vpack.c.b16 %v3704, %v3696
    %v4993 = vpack.c.b16 %v3705, %v3697
    %v4994 = vpack.c.b16 %v3706, %v3698
    %v4995 = vpack.c.b16 %v3715, %v3707
    %v4996 = vpack.c.b16 %v3716, %v3708
    %v4997 = vpack.c.b16 %v3717, %v3709
    %v4998 = vpack.c.b16 %v3718, %v3710
    %v4999 = vpack.c.b16 %v3719, %v3711
    %v5000 = vpack.c.b16 %v3720, %v3712
    %v5001 = vpack.c.b16 %v3721, %v3713
    %v5002 = vpack.c.b16 %v3722, %v3714
    %v5003 = vpack.c.b16 %v3731, %v3723
    %v5004 = vpack.c.b16 %v3732, %v3724
    %v5005 = vpack.c.b16 %v3733, %v3725
    %v5006 = vpack.c.b16 %v3734, %v3726
    %v5007 = vpack.c.b16 %v3735, %v3727
    %v5008 = vpack.c.b16 %v3736, %v3728
    %v5009 = vpack.c.b16 %v3737, %v3729
    %v5010 = vpack.c.b16 %v3738, %v3730
    %v5011 = vpack.c.b16 %v3747, %v3739
    %v5012 = vpack.c.b16 %v3748, %v3740
    %v5013 = vpack.c.b16 %v3749, %v3741
    %v5014 = vpack.c.b16 %v3750, %v3742
    %v5015 = vpack.c.b16 %v3751, %v3743
    %v5016 = vpack.c.b16 %v3752, %v3744
    %v5017 = vpack.c.b16 %v3753, %v3745
    %v5018 = vpack.c.b16 %v3754, %v3746
    %v5019 = vpack.c.b16 %v3763, %v3755
    %v5020 = vpack.c.b16 %v3764, %v3756
    %v5021 = vpack.c.b16 %v3765, %v3757
    %v5022 = vpack.c.b16 %v3766, %v3758
    %v5023 = vpack.c.b16 %v3767, %v3759
    %v5024 = vpack.c.b16 %v3768, %v3760
    %v5025 = vpack.c.b16 %v3769, %v3761
    %v5026 = vpack.c.b16 %v3770, %v3762
    %v5027 = vpack.c.b16 %v3779, %v3771
    %v5028 = vpack.c.b16 %v3780, %v3772
    %v5029 = vpack.c.b16 %v3781, %v3773
    %v5030 = vpack.c.b16 %v3782, %v3774
    %v5031 = vpack.c.b16 %v3783, %v3775
    %v5032 = vpack.c.b16 %v3784, %v3776
    %v5033 = vpack.c.b16 %v3785, %v3777
    %v5034 = vpack.c.b16 %v3786, %v3778
    %v5035 = vpack.c.b16 %v3795, %v3787
    %v5036 = vpack.c.b16 %v3796, %v3788
    %v5037 = vpack.c.b16 %v3797, %v3789
    %v5038 = vpack.c.b16 %v3798, %v3790
    %v5039 = vpack.c.b16 %v3799, %v3791
    %v5040 = vpack.c.b16 %v3800, %v3792
    %v5041 = vpack.c.b16 %v3801, %v3793
    %v5042 = vpack.c.b16 %v3802, %v3794
    %v5043 = vpack.c.b16 %v3811, %v3803
    %v5044 = vpack.c.b16 %v3812, %v3804
    %v5045 = vpack.c.b16 %v3813, %v3805
    %v5046 = vpack.c.b16 %v3814, %v3806
    %v5047 = vpack.c.b16 %v3815, %v3807
    %v5048 = vpack.c.b16 %v3816, %v3808
    %v5049 = vpack.c.b16 %v3817, %v3809
    %v5050 = vpack.c.b16 %v3818, %v3810
    %v5051 = vpack.c.b16 %v3827, %v3819
    %v5052 = vpack.c.b16 %v3828, %v3820
    %v5053 = vpack.c.b16 %v3829, %v3821
    %v5054 = vpack.c.b16 %v3830, %v3822
    %v5055 = vpack.c.b16 %v3831, %v3823
    %v5056 = vpack.c.b16 %v3832, %v3824
    %v5057 = vpack.c.b16 %v3833, %v3825
    %v5058 = vpack.c.b16 %v3834, %v3826
    %v5059 = vpack.c.b16 %v3843, %v3835
    %v5060 = vpack.c.b16 %v3844, %v3836
    %v5061 = vpack.c.b16 %v3845, %v3837
    %v5062 = vpack.c.b16 %v3846, %v3838
    %v5063 = vpack.c.b16 %v3847, %v3839
    %v5064 = vpack.c.b16 %v3848, %v3840
    %v5065 = vpack.c.b16 %v3849, %v3841
    %v5066 = vpack.c.b16 %v3850, %v3842
    %v5067 = vpack.c.b16 %v3859, %v3851
    %v5068 = vpack.c.b16 %v3860, %v3852
    %v5069 = vpack.c.b16 %v3861, %v3853
    %v5070 = vpack.c.b16 %v3862, %v3854
    %v5071 = vpack.c.b16 %v3863, %v3855
    %v5072 = vpack.c.b16 %v3864, %v3856
    %v5073 = vpack.c.b16 %v3865, %v3857
    %v5074 = vpack.c.b16 %v3866, %v3858
    %v5075 = vpack.c.b16 %v3875, %v3867
    %v5076 = vpack.c.b16 %v3876, %v3868
    %v5077 = vpack.c.b16 %v3877, %v3869
    %v5078 = vpack.c.b16 %v3878, %v3870
    %v5079 = vpack.c.b16 %v3879, %v3871
    %v5080 = vpack.c.b16 %v3880, %v3872
    %v5081 = vpack.c.b16 %v3881, %v3873
    %v5082 = vpack.c.b16 %v3882, %v3874
    %v5083 = vpack.c.b16 %v3891, %v3883
    %v5084 = vpack.c.b16 %v3892, %v3884
    %v5085 = vpack.c.b16 %v3893, %v3885
    %v5086 = vpack.c.b16 %v3894, %v3886
    %v5087 = vpack.c.b16 %v3895, %v3887
    %v5088 = vpack.c.b16 %v3896, %v3888
    %v5089 = vpack.c.b16 %v3897, %v3889
    %v5090 = vpack.c.b16 %v3898, %v3890
    %v5091 = vpack.c.b16 %v3907, %v3899
    %v5092 = vpack.c.b16 %v3908, %v3900
    %v5093 = vpack.c.b16 %v3909, %v3901
    %v5094 = vpack.c.b16 %v3910, %v3902
    %v5095 = vpack.c.b16 %v3911, %v3903
    %v5096 = vpack.c.b16 %v3912, %v3904
    %v5097 = vpack.c.b16 %v3913, %v3905
    %v5098 = vpack.c.b16 %v3914, %v3906
    %v5099 = vpack.c.b16 %v3923, %v3915
    %v5100 = vpack.c.b16 %v3924, %v3916
    %v5101 = vpack.c.b16 %v3925, %v3917
    %v5102 = vpack.c.b16 %v3926, %v3918
    %v5103 = vpack.c.b16 %v3927, %v3919
    %v5104 = vpack.c.b16 %v3928, %v3920
    %v5105 = vpack.c.b16 %v3929, %v3921
    %v5106 = vpack.c.b16 %v3930, %v3922
    %v5107 = vpack.c.b16 %v3939, %v3931
    %v5108 = vpack.c.b16 %v3940, %v3932
    %v5109 = vpack.c.b16 %v3941, %v3933
    %v5110 = vpack.c.b16 %v3942, %v3934
    %v5111 = vpack.c.b16 %v3943, %v3935
    %v5112 = vpack.c.b16 %v3944, %v3936
    %v5113 = vpack.c.b16 %v3945, %v3937
    %v5114 = vpack.c.b16 %v3946, %v3938
    %v5115 = vpack.c.b16 %v3955, %v3947
    %v5116 = vpack.c.b16 %v3956, %v3948
    %v5117 = vpack.c.b16 %v3957, %v3949
    %v5118 = vpack.c.b16 %v3958, %v3950
    %v5119 = vpack.c.b16 %v3959, %v3951
    %v5120 = vpack.c.b16 %v3960, %v3952
    %v5121 = vpack.c.b16 %v3961, %v3953
    %v5122 = vpack.c.b16 %v3962, %v3954
    %v5123 = vpack.c.b16 %v3971, %v3963
    %v5124 = vpack.c.b16 %v3972, %v3964
    %v5125 = vpack.c.b16 %v3973, %v3965
    %v5126 = vpack.c.b16 %v3974, %v3966
    %v5127 = vpack.c.b16 %v3975, %v3967
    %v5128 = vpack.c.b16 %v3976, %v3968
    %v5129 = vpack.c.b16 %v3977, %v3969
    %v5130 = vpack.c.b16 %v3978, %v3970
    %v5131 = vpack.c.b16 %v3987, %v3979
    %v5132 = vpack.c.b16 %v3988, %v3980
    %v5133 = vpack.c.b16 %v3989, %v3981
    %v5134 = vpack.c.b16 %v3990, %v3982
    %v5135 = vpack.c.b16 %v3991, %v3983
    %v5136 = vpack.c.b16 %v3992, %v3984
    %v5137 = vpack.c.b16 %v3993, %v3985
    %v5138 = vpack.c.b16 %v3994, %v3986
    %v5139 = vpack.c.b16 %v4003, %v3995
    %v5140 = vpack.c.b16 %v4004, %v3996
    %v5141 = vpack.c.b16 %v4005, %v3997
    %v5142 = vpack.c.b16 %v4006, %v3998
    %v5143 = vpack.c.b16 %v4007, %v3999
    %v5144 = vpack.c.b16 %v4008, %v4000
    %v5145 = vpack.c.b16 %v4009, %v4001
    %v5146 = vpack.c.b16 %v4010, %v4002
    %v5147 = vpack.c.b16 %v4019, %v4011
    %v5148 = vpack.c.b16 %v4020, %v4012
    %v5149 = vpack.c.b16 %v4021, %v4013
    %v5150 = vpack.c.b16 %v4022, %v4014
    %v5151 = vpack.c.b16 %v4023, %v4015
    %v5152 = vpack.c.b16 %v4024, %v4016
    %v5153 = vpack.c.b16 %v4025, %v4017
    %v5154 = vpack.c.b16 %v4026, %v4018
    %v5155 = vpack.c.b16 %v4035, %v4027
    %v5156 = vpack.c.b16 %v4036, %v4028
    %v5157 = vpack.c.b16 %v4037, %v4029
    %v5158 = vpack.c.b16 %v4038, %v4030
    %v5159 = vpack.c.b16 %v4039, %v4031
    %v5160 = vpack.c.b16 %v4040, %v4032
    %v5161 = vpack.c.b16 %v4041, %v4033
    %v5162 = vpack.c.b16 %v4042, %v4034
    %v5163 = vpack.c.b16 %v4051, %v4043
    %v5164 = vpack.c.b16 %v4052, %v4044
    %v5165 = vpack.c.b16 %v4053, %v4045
    %v5166 = vpack.c.b16 %v4054, %v4046
    %v5167 = vpack.c.b16 %v4055, %v4047
    %v5168 = vpack.c.b16 %v4056, %v4048
    %v5169 = vpack.c.b16 %v4057, %v4049
    %v5170 = vpack.c.b16 %v4058, %v4050
    %v5171 = vpack.c.b16 %v4067, %v4059
    %v5172 = vpack.c.b16 %v4068, %v4060
    %v5173 = vpack.c.b16 %v4069, %v4061
    %v5174 = vpack.c.b16 %v4070, %v4062
    %v5175 = vpack.c.b16 %v4071, %v4063
    %v5176 = vpack.c.b16 %v4072, %v4064
    %v5177 = vpack.c.b16 %v4073, %v4065
    %v5178 = vpack.c.b16 %v4074, %v4066
    %v5179 = vpack.c.b16 %v4083, %v4075
    %v5180 = vpack.c.b16 %v4084, %v4076
    %v5181 = vpack.c.b16 %v4085, %v4077
    %v5182 = vpack.c.b16 %v4086, %v4078
    %v5183 = vpack.c.b16 %v4087, %v4079
    %v5184 = vpack.c.b16 %v4088, %v4080
    %v5185 = vpack.c.b16 %v4089, %v4081
    %v5186 = vpack.c.b16 %v4090, %v4082
    %v5187 = vpack.c.b16 %v4099, %v4091
    %v5188 = vpack.c.b16 %v4100, %v4092
    %v5189 = vpack.c.b16 %v4101, %v4093
    %v5190 = vpack.c.b16 %v4102, %v4094
    %v5191 = vpack.c.b16 %v4103, %v4095
    %v5192 = vpack.c.b16 %v4104, %v4096
    %v5193 = vpack.c.b16 %v4105, %v4097
    %v5194 = vpack.c.b16 %v4106, %v4098
    %v5195 = vpack.c.b16 %v4115, %v4107
    %v5196 = vpack.c.b16 %v4116, %v4108
    %v5197 = vpack.c.b16 %v4117, %v4109
    %v5198 = vpack.c.b16 %v4118, %v4110
    %v5199 = vpack.c.b16 %v4119, %v4111
    %v5200 = vpack.c.b16 %v4120, %v4112
    %v5201 = vpack.c.b16 %v4121, %v4113
    %v5202 = vpack.c.b16 %v4122, %v4114
    %v5203 = vpack.c.b16 %v4131, %v4123
    %v5204 = vpack.c.b16 %v4132, %v4124
    %v5205 = vpack.c.b16 %v4133, %v4125
    %v5206 = vpack.c.b16 %v4134, %v4126
    %v5207 = vpack.c.b16 %v4135, %v4127
    %v5208 = vpack.c.b16 %v4136, %v4128
    %v5209 = vpack.c.b16 %v4137, %v4129
    %v5210 = vpack.c.b16 %v4138, %v4130
    %v5211 = vpack.c.b16 %v4147, %v4139
    %v5212 = vpack.c.b16 %v4148, %v4140
    %v5213 = vpack.c.b16 %v4149, %v4141
    %v5214 = vpack.c.b16 %v4150, %v4142
    %v5215 = vpack.c.b16 %v4151, %v4143
    %v5216 = vpack.c.b16 %v4152, %v4144
    %v5217 = vpack.c.b16 %v4153, %v4145
    %v5218 = vpack.c.b16 %v4154, %v4146
    %v5219 = vpack.c.b16 %v4163, %v4155
    %v5220 = vpack.c.b16 %v4164, %v4156
    %v5221 = vpack.c.b16 %v4165, %v4157
    %v5222 = vpack.c.b16 %v4166, %v4158
    %v5223 = vpack.c.b16 %v4167, %v4159
    %v5224 = vpack.c.b16 %v4168, %v4160
    %v5225 = vpack.c.b16 %v4169, %v4161
    %v5226 = vpack.c.b16 %v4170, %v4162
    %v5227 = vpack.c.b16 %v4179, %v4171
    %v5228 = vpack.c.b16 %v4180, %v4172
    %v5229 = vpack.c.b16 %v4181, %v4173
    %v5230 = vpack.c.b16 %v4182, %v4174
    %v5231 = vpack.c.b16 %v4183, %v4175
    %v5232 = vpack.c.b16 %v4184, %v4176
    %v5233 = vpack.c.b16 %v4185, %v4177
    %v5234 = vpack.c.b16 %v4186, %v4178
    %v5235 = vpack.c.b16 %v4195, %v4187
    %v5236 = vpack.c.b16 %v4196, %v4188
    %v5237 = vpack.c.b16 %v4197, %v4189
    %v5238 = vpack.c.b16 %v4198, %v4190
    %v5239 = vpack.c.b16 %v4199, %v4191
    %v5240 = vpack.c.b16 %v4200, %v4192
    %v5241 = vpack.c.b16 %v4201, %v4193
    %v5242 = vpack.c.b16 %v4202, %v4194
    %v5243 = vpack.c.b16 %v4211, %v4203
    %v5244 = vpack.c.b16 %v4212, %v4204
    %v5245 = vpack.c.b16 %v4213, %v4205
    %v5246 = vpack.c.b16 %v4214, %v4206
    %v5247 = vpack.c.b16 %v4215, %v4207
    %v5248 = vpack.c.b16 %v4216, %v4208
    %v5249 = vpack.c.b16 %v4217, %v4209
    %v5250 = vpack.c.b16 %v4218, %v4210
    %v5251 = vpack.c.b16 %v4227, %v4219
    %v5252 = vpack.c.b16 %v4228, %v4220
    %v5253 = vpack.c.b16 %v4229, %v4221
    %v5254 = vpack.c.b16 %v4230, %v4222
    %v5255 = vpack.c.b16 %v4231, %v4223
    %v5256 = vpack.c.b16 %v4232, %v4224
    %v5257 = vpack.c.b16 %v4233, %v4225
    %v5258 = vpack.c.b16 %v4234, %v4226
    %6283 = vmatpush.bf16.msra.mxu0 %v4291
    %6284 = vmatpush.bf16.msra.mxu0 %v4283
    %6285 = vmatpush.bf16.msra.mxu0 %v4275
    %6286 = vmatpush.bf16.msra.mxu0 %v4267
    %6287 = vmatpush.bf16.msra.mxu0 %v4259
    %6288 = vmatpush.bf16.msra.mxu0 %v4251
    %6289 = vmatpush.bf16.msra.mxu0 %v4243
    %6290 = vmatpush.bf16.msra.mxu0 %v4235
    %6291 = vmatmul.bf16.gmra.mxu0 %v1131
    %v6292 = vpop.f32.mrf.mxu0
    %v6293 = vadd.f32 0.0, %v6292
    %v6294 = vpop.f32.mrf.mxu0
    %6295 = vdwg.mxu0
    %6296 = vmatpush.bf16.msra.mxu0 %v4355
    %6297 = vmatpush.bf16.msra.mxu0 %v4347
    %6298 = vmatpush.bf16.msra.mxu0 %v4339
    %6299 = vmatpush.bf16.msra.mxu0 %v4331
    %6300 = vmatpush.bf16.msra.mxu0 %v4323
    %6301 = vmatpush.bf16.msra.mxu0 %v4315
    %6302 = vmatpush.bf16.msra.mxu0 %v4307
    %6303 = vmatpush.bf16.msra.mxu0 %v4299
    %6304 = vmatmul.bf16.gmra.mxu0 %v1132
    %v6305 = vpop.f32.mrf.mxu0
    %v6306 = vadd.f32 %v6293, %v6305
    %v6307 = vpop.f32.mrf.mxu0
    %6308 = vdwg.mxu0
    %6309 = vmatpush.bf16.msra.mxu0 %v4419
    %6310 = vmatpush.bf16.msra.mxu0 %v4411
    %6311 = vmatpush.bf16.msra.mxu0 %v4403
    %6312 = vmatpush.bf16.msra.mxu0 %v4395
    %6313 = vmatpush.bf16.msra.mxu0 %v4387
    %6314 = vmatpush.bf16.msra.mxu0 %v4379
    %6315 = vmatpush.bf16.msra.mxu0 %v4371
    %6316 = vmatpush.bf16.msra.mxu0 %v4363
    %6317 = vmatmul.bf16.gmra.mxu0 %v1133
    %v6318 = vpop.f32.mrf.mxu0
    %v6319 = vadd.f32 %v6306, %v6318
    %v6320 = vpop.f32.mrf.mxu0
    %6321 = vdwg.mxu0
    %6322 = vmatpush.bf16.msra.mxu0 %v4483
    %6323 = vmatpush.bf16.msra.mxu0 %v4475
    %6324 = vmatpush.bf16.msra.mxu0 %v4467
    %6325 = vmatpush.bf16.msra.mxu0 %v4459
    %6326 = vmatpush.bf16.msra.mxu0 %v4451
    %6327 = vmatpush.bf16.msra.mxu0 %v4443
    %6328 = vmatpush.bf16.msra.mxu0 %v4435
    %6329 = vmatpush.bf16.msra.mxu0 %v4427
    %6330 = vmatmul.bf16.gmra.mxu0 %v1134
    %v6331 = vpop.f32.mrf.mxu0
    %v6332 = vadd.f32 %v6319, %v6331
    %v6333 = vpop.f32.mrf.mxu0
    %6334 = vdwg.mxu0
    %6335 = vmatpush.bf16.msra.mxu0 %v4547
    %6336 = vmatpush.bf16.msra.mxu0 %v4539
    %6337 = vmatpush.bf16.msra.mxu0 %v4531
    %6338 = vmatpush.bf16.msra.mxu0 %v4523
    %6339 = vmatpush.bf16.msra.mxu0 %v4515
    %6340 = vmatpush.bf16.msra.mxu0 %v4507
    %6341 = vmatpush.bf16.msra.mxu0 %v4499
    %6342 = vmatpush.bf16.msra.mxu0 %v4491
    %6343 = vmatmul.bf16.gmra.mxu0 %v1135
    %v6344 = vpop.f32.mrf.mxu0
    %v6345 = vadd.f32 %v6332, %v6344
    %v6346 = vpop.f32.mrf.mxu0
    %6347 = vdwg.mxu0
    %6348 = vmatpush.bf16.msra.mxu0 %v4611
    %6349 = vmatpush.bf16.msra.mxu0 %v4603
    %6350 = vmatpush.bf16.msra.mxu0 %v4595
    %6351 = vmatpush.bf16.msra.mxu0 %v4587
    %6352 = vmatpush.bf16.msra.mxu0 %v4579
    %6353 = vmatpush.bf16.msra.mxu0 %v4571
    %6354 = vmatpush.bf16.msra.mxu0 %v4563
    %6355 = vmatpush.bf16.msra.mxu0 %v4555
    %6356 = vmatmul.bf16.gmra.mxu0 %v1136
    %v6357 = vpop.f32.mrf.mxu0
    %v6358 = vadd.f32 %v6345, %v6357
    %v6359 = vpop.f32.mrf.mxu0
    %6360 = vdwg.mxu0
    %6361 = vmatpush.bf16.msra.mxu0 %v4675
    %6362 = vmatpush.bf16.msra.mxu0 %v4667
    %6363 = vmatpush.bf16.msra.mxu0 %v4659
    %6364 = vmatpush.bf16.msra.mxu0 %v4651
    %6365 = vmatpush.bf16.msra.mxu0 %v4643
    %6366 = vmatpush.bf16.msra.mxu0 %v4635
    %6367 = vmatpush.bf16.msra.mxu0 %v4627
    %6368 = vmatpush.bf16.msra.mxu0 %v4619
    %6369 = vmatmul.bf16.gmra.mxu0 %v1137
    %v6370 = vpop.f32.mrf.mxu0
    %v6371 = vadd.f32 %v6358, %v6370
    %v6372 = vpop.f32.mrf.mxu0
    %6373 = vdwg.mxu0
    %6374 = vmatpush.bf16.msra.mxu0 %v4739
    %6375 = vmatpush.bf16.msra.mxu0 %v4731
    %6376 = vmatpush.bf16.msra.mxu0 %v4723
    %6377 = vmatpush.bf16.msra.mxu0 %v4715
    %6378 = vmatpush.bf16.msra.mxu0 %v4707
    %6379 = vmatpush.bf16.msra.mxu0 %v4699
    %6380 = vmatpush.bf16.msra.mxu0 %v4691
    %6381 = vmatpush.bf16.msra.mxu0 %v4683
    %6382 = vmatmul.bf16.gmra.mxu0 %v1138
    %v6383 = vpop.f32.mrf.mxu0
    %v6384 = vadd.f32 %v6371, %v6383
    %v6385 = vpop.f32.mrf.mxu0
    %6386 = vdwg.mxu0
    %6387 = vmatpush.bf16.msra.mxu0 %v4803
    %6388 = vmatpush.bf16.msra.mxu0 %v4795
    %6389 = vmatpush.bf16.msra.mxu0 %v4787
    %6390 = vmatpush.bf16.msra.mxu0 %v4779
    %6391 = vmatpush.bf16.msra.mxu0 %v4771
    %6392 = vmatpush.bf16.msra.mxu0 %v4763
    %6393 = vmatpush.bf16.msra.mxu0 %v4755
    %6394 = vmatpush.bf16.msra.mxu0 %v4747
    %6395 = vmatmul.bf16.gmra.mxu0 %v1139
    %v6396 = vpop.f32.mrf.mxu0
    %v6397 = vadd.f32 %v6384, %v6396
    %v6398 = vpop.f32.mrf.mxu0
    %6399 = vdwg.mxu0
    %6400 = vmatpush.bf16.msra.mxu0 %v4867
    %6401 = vmatpush.bf16.msra.mxu0 %v4859
    %6402 = vmatpush.bf16.msra.mxu0 %v4851
    %6403 = vmatpush.bf16.msra.mxu0 %v4843
    %6404 = vmatpush.bf16.msra.mxu0 %v4835
    %6405 = vmatpush.bf16.msra.mxu0 %v4827
    %6406 = vmatpush.bf16.msra.mxu0 %v4819
    %6407 = vmatpush.bf16.msra.mxu0 %v4811
    %6408 = vmatmul.bf16.gmra.mxu0 %v1140
    %v6409 = vpop.f32.mrf.mxu0
    %v6410 = vadd.f32 %v6397, %v6409
    %v6411 = vpop.f32.mrf.mxu0
    %6412 = vdwg.mxu0
    %6413 = vmatpush.bf16.msra.mxu0 %v4931
    %6414 = vmatpush.bf16.msra.mxu0 %v4923
    %6415 = vmatpush.bf16.msra.mxu0 %v4915
    %6416 = vmatpush.bf16.msra.mxu0 %v4907
    %6417 = vmatpush.bf16.msra.mxu0 %v4899
    %6418 = vmatpush.bf16.msra.mxu0 %v4891
    %6419 = vmatpush.bf16.msra.mxu0 %v4883
    %6420 = vmatpush.bf16.msra.mxu0 %v4875
    %6421 = vmatmul.bf16.gmra.mxu0 %v1141
    %v6422 = vpop.f32.mrf.mxu0
    %v6423 = vadd.f32 %v6410, %v6422
    %v6424 = vpop.f32.mrf.mxu0
    %6425 = vdwg.mxu0
    %6426 = vmatpush.bf16.msra.mxu0 %v4995
    %6427 = vmatpush.bf16.msra.mxu0 %v4987
    %6428 = vmatpush.bf16.msra.mxu0 %v4979
    %6429 = vmatpush.bf16.msra.mxu0 %v4971
    %6430 = vmatpush.bf16.msra.mxu0 %v4963
    %6431 = vmatpush.bf16.msra.mxu0 %v4955
    %6432 = vmatpush.bf16.msra.mxu0 %v4947
    %6433 = vmatpush.bf16.msra.mxu0 %v4939
    %6434 = vmatmul.bf16.gmra.mxu0 %v1142
    %v6435 = vpop.f32.mrf.mxu0
    %v6436 = vadd.f32 %v6423, %v6435
    %v6437 = vpop.f32.mrf.mxu0
    %6438 = vdwg.mxu0
    %6439 = vmatpush.bf16.msra.mxu0 %v5059
    %6440 = vmatpush.bf16.msra.mxu0 %v5051
    %6441 = vmatpush.bf16.msra.mxu0 %v5043
    %6442 = vmatpush.bf16.msra.mxu0 %v5035
    %6443 = vmatpush.bf16.msra.mxu0 %v5027
    %6444 = vmatpush.bf16.msra.mxu0 %v5019
    %6445 = vmatpush.bf16.msra.mxu0 %v5011
    %6446 = vmatpush.bf16.msra.mxu0 %v5003
    %6447 = vmatmul.bf16.gmra.mxu0 %v1143
    %v6448 = vpop.f32.mrf.mxu0
    %v6449 = vadd.f32 %v6436, %v6448
    %v6450 = vpop.f32.mrf.mxu0
    %6451 = vdwg.mxu0
    %6452 = vmatpush.bf16.msra.mxu0 %v5123
    %6453 = vmatpush.bf16.msra.mxu0 %v5115
    %6454 = vmatpush.bf16.msra.mxu0 %v5107
    %6455 = vmatpush.bf16.msra.mxu0 %v5099
    %6456 = vmatpush.bf16.msra.mxu0 %v5091
    %6457 = vmatpush.bf16.msra.mxu0 %v5083
    %6458 = vmatpush.bf16.msra.mxu0 %v5075
    %6459 = vmatpush.bf16.msra.mxu0 %v5067
    %6460 = vmatmul.bf16.gmra.mxu0 %v1144
    %v6461 = vpop.f32.mrf.mxu0
    %v6462 = vadd.f32 %v6449, %v6461
    %v6463 = vpop.f32.mrf.mxu0
    %6464 = vdwg.mxu0
    %6465 = vmatpush.bf16.msra.mxu0 %v5187
    %6466 = vmatpush.bf16.msra.mxu0 %v5179
    %6467 = vmatpush.bf16.msra.mxu0 %v5171
    %6468 = vmatpush.bf16.msra.mxu0 %v5163
    %6469 = vmatpush.bf16.msra.mxu0 %v5155
    %6470 = vmatpush.bf16.msra.mxu0 %v5147
    %6471 = vmatpush.bf16.msra.mxu0 %v5139
    %6472 = vmatpush.bf16.msra.mxu0 %v5131
    %6473 = vmatmul.bf16.gmra.mxu0 %v1145
    %v6474 = vpop.f32.mrf.mxu0
    %v6475 = vadd.f32 %v6462, %v6474
    %v6476 = vpop.f32.mrf.mxu0
    %6477 = vdwg.mxu0
    %6478 = vmatpush.bf16.msra.mxu0 %v5251
    %6479 = vmatpush.bf16.msra.mxu0 %v5243
    %6480 = vmatpush.bf16.msra.mxu0 %v5235
    %6481 = vmatpush.bf16.msra.mxu0 %v5227
    %6482 = vmatpush.bf16.msra.mxu0 %v5219
    %6483 = vmatpush.bf16.msra.mxu0 %v5211
    %6484 = vmatpush.bf16.msra.mxu0 %v5203
    %6485 = vmatpush.bf16.msra.mxu0 %v5195
    %6486 = vmatmul.bf16.gmra.mxu0 %v1146
    %v6487 = vpop.f32.mrf.mxu0
    %v6488 = vadd.f32 %v6475, %v6487
    %v6489 = vpop.f32.mrf.mxu0
    %6490 = vdwg.mxu0
    %6491 = vmatpush.bf16.msra.mxu0 %v4292
    %6492 = vmatpush.bf16.msra.mxu0 %v4284
    %6493 = vmatpush.bf16.msra.mxu0 %v4276
    %6494 = vmatpush.bf16.msra.mxu0 %v4268
    %6495 = vmatpush.bf16.msra.mxu0 %v4260
    %6496 = vmatpush.bf16.msra.mxu0 %v4252
    %6497 = vmatpush.bf16.msra.mxu0 %v4244
    %6498 = vmatpush.bf16.msra.mxu0 %v4236
    %6499 = vmatmul.bf16.gmra.mxu0 %v1131
    %v6500 = vpop.f32.mrf.mxu0
    %v6501 = vadd.f32 0.0, %v6500
    %v6502 = vpop.f32.mrf.mxu0
    %6503 = vdwg.mxu0
    %6504 = vmatpush.bf16.msra.mxu0 %v4356
    %6505 = vmatpush.bf16.msra.mxu0 %v4348
    %6506 = vmatpush.bf16.msra.mxu0 %v4340
    %6507 = vmatpush.bf16.msra.mxu0 %v4332
    %6508 = vmatpush.bf16.msra.mxu0 %v4324
    %6509 = vmatpush.bf16.msra.mxu0 %v4316
    %6510 = vmatpush.bf16.msra.mxu0 %v4308
    %6511 = vmatpush.bf16.msra.mxu0 %v4300
    %6512 = vmatmul.bf16.gmra.mxu0 %v1132
    %v6513 = vpop.f32.mrf.mxu0
    %v6514 = vadd.f32 %v6501, %v6513
    %v6515 = vpop.f32.mrf.mxu0
    %6516 = vdwg.mxu0
    %6517 = vmatpush.bf16.msra.mxu0 %v4420
    %6518 = vmatpush.bf16.msra.mxu0 %v4412
    %6519 = vmatpush.bf16.msra.mxu0 %v4404
    %6520 = vmatpush.bf16.msra.mxu0 %v4396
    %6521 = vmatpush.bf16.msra.mxu0 %v4388
    %6522 = vmatpush.bf16.msra.mxu0 %v4380
    %6523 = vmatpush.bf16.msra.mxu0 %v4372
    %6524 = vmatpush.bf16.msra.mxu0 %v4364
    %6525 = vmatmul.bf16.gmra.mxu0 %v1133
    %v6526 = vpop.f32.mrf.mxu0
    %v6527 = vadd.f32 %v6514, %v6526
    %v6528 = vpop.f32.mrf.mxu0
    %6529 = vdwg.mxu0
    %6530 = vmatpush.bf16.msra.mxu0 %v4484
    %6531 = vmatpush.bf16.msra.mxu0 %v4476
    %6532 = vmatpush.bf16.msra.mxu0 %v4468
    %6533 = vmatpush.bf16.msra.mxu0 %v4460
    %6534 = vmatpush.bf16.msra.mxu0 %v4452
    %6535 = vmatpush.bf16.msra.mxu0 %v4444
    %6536 = vmatpush.bf16.msra.mxu0 %v4436
    %6537 = vmatpush.bf16.msra.mxu0 %v4428
    %6538 = vmatmul.bf16.gmra.mxu0 %v1134
    %v6539 = vpop.f32.mrf.mxu0
    %v6540 = vadd.f32 %v6527, %v6539
    %v6541 = vpop.f32.mrf.mxu0
    %6542 = vdwg.mxu0
    %6543 = vmatpush.bf16.msra.mxu0 %v4548
    %6544 = vmatpush.bf16.msra.mxu0 %v4540
    %6545 = vmatpush.bf16.msra.mxu0 %v4532
    %6546 = vmatpush.bf16.msra.mxu0 %v4524
    %6547 = vmatpush.bf16.msra.mxu0 %v4516
    %6548 = vmatpush.bf16.msra.mxu0 %v4508
    %6549 = vmatpush.bf16.msra.mxu0 %v4500
    %6550 = vmatpush.bf16.msra.mxu0 %v4492
    %6551 = vmatmul.bf16.gmra.mxu0 %v1135
    %v6552 = vpop.f32.mrf.mxu0
    %v6553 = vadd.f32 %v6540, %v6552
    %v6554 = vpop.f32.mrf.mxu0
    %6555 = vdwg.mxu0
    %6556 = vmatpush.bf16.msra.mxu0 %v4612
    %6557 = vmatpush.bf16.msra.mxu0 %v4604
    %6558 = vmatpush.bf16.msra.mxu0 %v4596
    %6559 = vmatpush.bf16.msra.mxu0 %v4588
    %6560 = vmatpush.bf16.msra.mxu0 %v4580
    %6561 = vmatpush.bf16.msra.mxu0 %v4572
    %6562 = vmatpush.bf16.msra.mxu0 %v4564
    %6563 = vmatpush.bf16.msra.mxu0 %v4556
    %6564 = vmatmul.bf16.gmra.mxu0 %v1136
    %v6565 = vpop.f32.mrf.mxu0
    %v6566 = vadd.f32 %v6553, %v6565
    %v6567 = vpop.f32.mrf.mxu0
    %6568 = vdwg.mxu0
    %6569 = vmatpush.bf16.msra.mxu0 %v4676
    %6570 = vmatpush.bf16.msra.mxu0 %v4668
    %6571 = vmatpush.bf16.msra.mxu0 %v4660
    %6572 = vmatpush.bf16.msra.mxu0 %v4652
    %6573 = vmatpush.bf16.msra.mxu0 %v4644
    %6574 = vmatpush.bf16.msra.mxu0 %v4636
    %6575 = vmatpush.bf16.msra.mxu0 %v4628
    %6576 = vmatpush.bf16.msra.mxu0 %v4620
    %6577 = vmatmul.bf16.gmra.mxu0 %v1137
    %v6578 = vpop.f32.mrf.mxu0
    %v6579 = vadd.f32 %v6566, %v6578
    %v6580 = vpop.f32.mrf.mxu0
    %6581 = vdwg.mxu0
    %6582 = vmatpush.bf16.msra.mxu0 %v4740
    %6583 = vmatpush.bf16.msra.mxu0 %v4732
    %6584 = vmatpush.bf16.msra.mxu0 %v4724
    %6585 = vmatpush.bf16.msra.mxu0 %v4716
    %6586 = vmatpush.bf16.msra.mxu0 %v4708
    %6587 = vmatpush.bf16.msra.mxu0 %v4700
    %6588 = vmatpush.bf16.msra.mxu0 %v4692
    %6589 = vmatpush.bf16.msra.mxu0 %v4684
    %6590 = vmatmul.bf16.gmra.mxu0 %v1138
    %v6591 = vpop.f32.mrf.mxu0
    %v6592 = vadd.f32 %v6579, %v6591
    %v6593 = vpop.f32.mrf.mxu0
    %6594 = vdwg.mxu0
    %6595 = vmatpush.bf16.msra.mxu0 %v4804
    %6596 = vmatpush.bf16.msra.mxu0 %v4796
    %6597 = vmatpush.bf16.msra.mxu0 %v4788
    %6598 = vmatpush.bf16.msra.mxu0 %v4780
    %6599 = vmatpush.bf16.msra.mxu0 %v4772
    %6600 = vmatpush.bf16.msra.mxu0 %v4764
    %6601 = vmatpush.bf16.msra.mxu0 %v4756
    %6602 = vmatpush.bf16.msra.mxu0 %v4748
    %6603 = vmatmul.bf16.gmra.mxu0 %v1139
    %v6604 = vpop.f32.mrf.mxu0
    %v6605 = vadd.f32 %v6592, %v6604
    %v6606 = vpop.f32.mrf.mxu0
    %6607 = vdwg.mxu0
    %6608 = vmatpush.bf16.msra.mxu0 %v4868
    %6609 = vmatpush.bf16.msra.mxu0 %v4860
    %6610 = vmatpush.bf16.msra.mxu0 %v4852
    %6611 = vmatpush.bf16.msra.mxu0 %v4844
    %6612 = vmatpush.bf16.msra.mxu0 %v4836
    %6613 = vmatpush.bf16.msra.mxu0 %v4828
    %6614 = vmatpush.bf16.msra.mxu0 %v4820
    %6615 = vmatpush.bf16.msra.mxu0 %v4812
    %6616 = vmatmul.bf16.gmra.mxu0 %v1140
    %v6617 = vpop.f32.mrf.mxu0
    %v6618 = vadd.f32 %v6605, %v6617
    %v6619 = vpop.f32.mrf.mxu0
    %6620 = vdwg.mxu0
    %6621 = vmatpush.bf16.msra.mxu0 %v4932
    %6622 = vmatpush.bf16.msra.mxu0 %v4924
    %6623 = vmatpush.bf16.msra.mxu0 %v4916
    %6624 = vmatpush.bf16.msra.mxu0 %v4908
    %6625 = vmatpush.bf16.msra.mxu0 %v4900
    %6626 = vmatpush.bf16.msra.mxu0 %v4892
    %6627 = vmatpush.bf16.msra.mxu0 %v4884
    %6628 = vmatpush.bf16.msra.mxu0 %v4876
    %6629 = vmatmul.bf16.gmra.mxu0 %v1141
    %v6630 = vpop.f32.mrf.mxu0
    %v6631 = vadd.f32 %v6618, %v6630
    %v6632 = vpop.f32.mrf.mxu0
    %6633 = vdwg.mxu0
    %6634 = vmatpush.bf16.msra.mxu0 %v4996
    %6635 = vmatpush.bf16.msra.mxu0 %v4988
    %6636 = vmatpush.bf16.msra.mxu0 %v4980
    %6637 = vmatpush.bf16.msra.mxu0 %v4972
    %6638 = vmatpush.bf16.msra.mxu0 %v4964
    %6639 = vmatpush.bf16.msra.mxu0 %v4956
    %6640 = vmatpush.bf16.msra.mxu0 %v4948
    %6641 = vmatpush.bf16.msra.mxu0 %v4940
    %6642 = vmatmul.bf16.gmra.mxu0 %v1142
    %v6643 = vpop.f32.mrf.mxu0
    %v6644 = vadd.f32 %v6631, %v6643
    %v6645 = vpop.f32.mrf.mxu0
    %6646 = vdwg.mxu0
    %6647 = vmatpush.bf16.msra.mxu0 %v5060
    %6648 = vmatpush.bf16.msra.mxu0 %v5052
    %6649 = vmatpush.bf16.msra.mxu0 %v5044
    %6650 = vmatpush.bf16.msra.mxu0 %v5036
    %6651 = vmatpush.bf16.msra.mxu0 %v5028
    %6652 = vmatpush.bf16.msra.mxu0 %v5020
    %6653 = vmatpush.bf16.msra.mxu0 %v5012
    %6654 = vmatpush.bf16.msra.mxu0 %v5004
    %6655 = vmatmul.bf16.gmra.mxu0 %v1143
    %v6656 = vpop.f32.mrf.mxu0
    %v6657 = vadd.f32 %v6644, %v6656
    %v6658 = vpop.f32.mrf.mxu0
    %6659 = vdwg.mxu0
    %6660 = vmatpush.bf16.msra.mxu0 %v5124
    %6661 = vmatpush.bf16.msra.mxu0 %v5116
    %6662 = vmatpush.bf16.msra.mxu0 %v5108
    %6663 = vmatpush.bf16.msra.mxu0 %v5100
    %6664 = vmatpush.bf16.msra.mxu0 %v5092
    %6665 = vmatpush.bf16.msra.mxu0 %v5084
    %6666 = vmatpush.bf16.msra.mxu0 %v5076
    %6667 = vmatpush.bf16.msra.mxu0 %v5068
    %6668 = vmatmul.bf16.gmra.mxu0 %v1144
    %v6669 = vpop.f32.mrf.mxu0
    %v6670 = vadd.f32 %v6657, %v6669
    %v6671 = vpop.f32.mrf.mxu0
    %6672 = vdwg.mxu0
    %6673 = vmatpush.bf16.msra.mxu0 %v5188
    %6674 = vmatpush.bf16.msra.mxu0 %v5180
    %6675 = vmatpush.bf16.msra.mxu0 %v5172
    %6676 = vmatpush.bf16.msra.mxu0 %v5164
    %6677 = vmatpush.bf16.msra.mxu0 %v5156
    %6678 = vmatpush.bf16.msra.mxu0 %v5148
    %6679 = vmatpush.bf16.msra.mxu0 %v5140
    %6680 = vmatpush.bf16.msra.mxu0 %v5132
    %6681 = vmatmul.bf16.gmra.mxu0 %v1145
    %v6682 = vpop.f32.mrf.mxu0
    %v6683 = vadd.f32 %v6670, %v6682
    %v6684 = vpop.f32.mrf.mxu0
    %6685 = vdwg.mxu0
    %6686 = vmatpush.bf16.msra.mxu0 %v5252
    %6687 = vmatpush.bf16.msra.mxu0 %v5244
    %6688 = vmatpush.bf16.msra.mxu0 %v5236
    %6689 = vmatpush.bf16.msra.mxu0 %v5228
    %6690 = vmatpush.bf16.msra.mxu0 %v5220
    %6691 = vmatpush.bf16.msra.mxu0 %v5212
    %6692 = vmatpush.bf16.msra.mxu0 %v5204
    %6693 = vmatpush.bf16.msra.mxu0 %v5196
    %6694 = vmatmul.bf16.gmra.mxu0 %v1146
    %v6695 = vpop.f32.mrf.mxu0
    %v6696 = vadd.f32 %v6683, %v6695
    %v6697 = vpop.f32.mrf.mxu0
    %6698 = vdwg.mxu0
    %6699 = vmatpush.bf16.msra.mxu0 %v4293
    %6700 = vmatpush.bf16.msra.mxu0 %v4285
    %6701 = vmatpush.bf16.msra.mxu0 %v4277
    %6702 = vmatpush.bf16.msra.mxu0 %v4269
    %6703 = vmatpush.bf16.msra.mxu0 %v4261
    %6704 = vmatpush.bf16.msra.mxu0 %v4253
    %6705 = vmatpush.bf16.msra.mxu0 %v4245
    %6706 = vmatpush.bf16.msra.mxu0 %v4237
    %6707 = vmatmul.bf16.gmra.mxu0 %v1131
    %v6708 = vpop.f32.mrf.mxu0
    %v6709 = vadd.f32 0.0, %v6708
    %v6710 = vpop.f32.mrf.mxu0
    %6711 = vdwg.mxu0
    %6712 = vmatpush.bf16.msra.mxu0 %v4357
    %6713 = vmatpush.bf16.msra.mxu0 %v4349
    %6714 = vmatpush.bf16.msra.mxu0 %v4341
    %6715 = vmatpush.bf16.msra.mxu0 %v4333
    %6716 = vmatpush.bf16.msra.mxu0 %v4325
    %6717 = vmatpush.bf16.msra.mxu0 %v4317
    %6718 = vmatpush.bf16.msra.mxu0 %v4309
    %6719 = vmatpush.bf16.msra.mxu0 %v4301
    %6720 = vmatmul.bf16.gmra.mxu0 %v1132
    %v6721 = vpop.f32.mrf.mxu0
    %v6722 = vadd.f32 %v6709, %v6721
    %v6723 = vpop.f32.mrf.mxu0
    %6724 = vdwg.mxu0
    %6725 = vmatpush.bf16.msra.mxu0 %v4421
    %6726 = vmatpush.bf16.msra.mxu0 %v4413
    %6727 = vmatpush.bf16.msra.mxu0 %v4405
    %6728 = vmatpush.bf16.msra.mxu0 %v4397
    %6729 = vmatpush.bf16.msra.mxu0 %v4389
    %6730 = vmatpush.bf16.msra.mxu0 %v4381
    %6731 = vmatpush.bf16.msra.mxu0 %v4373
    %6732 = vmatpush.bf16.msra.mxu0 %v4365
    %6733 = vmatmul.bf16.gmra.mxu0 %v1133
    %v6734 = vpop.f32.mrf.mxu0
    %v6735 = vadd.f32 %v6722, %v6734
    %v6736 = vpop.f32.mrf.mxu0
    %6737 = vdwg.mxu0
    %6738 = vmatpush.bf16.msra.mxu0 %v4485
    %6739 = vmatpush.bf16.msra.mxu0 %v4477
    %6740 = vmatpush.bf16.msra.mxu0 %v4469
    %6741 = vmatpush.bf16.msra.mxu0 %v4461
    %6742 = vmatpush.bf16.msra.mxu0 %v4453
    %6743 = vmatpush.bf16.msra.mxu0 %v4445
    %6744 = vmatpush.bf16.msra.mxu0 %v4437
    %6745 = vmatpush.bf16.msra.mxu0 %v4429
    %6746 = vmatmul.bf16.gmra.mxu0 %v1134
    %v6747 = vpop.f32.mrf.mxu0
    %v6748 = vadd.f32 %v6735, %v6747
    %v6749 = vpop.f32.mrf.mxu0
    %6750 = vdwg.mxu0
    %6751 = vmatpush.bf16.msra.mxu0 %v4549
    %6752 = vmatpush.bf16.msra.mxu0 %v4541
    %6753 = vmatpush.bf16.msra.mxu0 %v4533
    %6754 = vmatpush.bf16.msra.mxu0 %v4525
    %6755 = vmatpush.bf16.msra.mxu0 %v4517
    %6756 = vmatpush.bf16.msra.mxu0 %v4509
    %6757 = vmatpush.bf16.msra.mxu0 %v4501
    %6758 = vmatpush.bf16.msra.mxu0 %v4493
    %6759 = vmatmul.bf16.gmra.mxu0 %v1135
    %v6760 = vpop.f32.mrf.mxu0
    %v6761 = vadd.f32 %v6748, %v6760
    %v6762 = vpop.f32.mrf.mxu0
    %6763 = vdwg.mxu0
    %6764 = vmatpush.bf16.msra.mxu0 %v4613
    %6765 = vmatpush.bf16.msra.mxu0 %v4605
    %6766 = vmatpush.bf16.msra.mxu0 %v4597
    %6767 = vmatpush.bf16.msra.mxu0 %v4589
    %6768 = vmatpush.bf16.msra.mxu0 %v4581
    %6769 = vmatpush.bf16.msra.mxu0 %v4573
    %6770 = vmatpush.bf16.msra.mxu0 %v4565
    %6771 = vmatpush.bf16.msra.mxu0 %v4557
    %6772 = vmatmul.bf16.gmra.mxu0 %v1136
    %v6773 = vpop.f32.mrf.mxu0
    %v6774 = vadd.f32 %v6761, %v6773
    %v6775 = vpop.f32.mrf.mxu0
    %6776 = vdwg.mxu0
    %6777 = vmatpush.bf16.msra.mxu0 %v4677
    %6778 = vmatpush.bf16.msra.mxu0 %v4669
    %6779 = vmatpush.bf16.msra.mxu0 %v4661
    %6780 = vmatpush.bf16.msra.mxu0 %v4653
    %6781 = vmatpush.bf16.msra.mxu0 %v4645
    %6782 = vmatpush.bf16.msra.mxu0 %v4637
    %6783 = vmatpush.bf16.msra.mxu0 %v4629
    %6784 = vmatpush.bf16.msra.mxu0 %v4621
    %6785 = vmatmul.bf16.gmra.mxu0 %v1137
    %v6786 = vpop.f32.mrf.mxu0
    %v6787 = vadd.f32 %v6774, %v6786
    %v6788 = vpop.f32.mrf.mxu0
    %6789 = vdwg.mxu0
    %6790 = vmatpush.bf16.msra.mxu0 %v4741
    %6791 = vmatpush.bf16.msra.mxu0 %v4733
    %6792 = vmatpush.bf16.msra.mxu0 %v4725
    %6793 = vmatpush.bf16.msra.mxu0 %v4717
    %6794 = vmatpush.bf16.msra.mxu0 %v4709
    %6795 = vmatpush.bf16.msra.mxu0 %v4701
    %6796 = vmatpush.bf16.msra.mxu0 %v4693
    %6797 = vmatpush.bf16.msra.mxu0 %v4685
    %6798 = vmatmul.bf16.gmra.mxu0 %v1138
    %v6799 = vpop.f32.mrf.mxu0
    %v6800 = vadd.f32 %v6787, %v6799
    %v6801 = vpop.f32.mrf.mxu0
    %6802 = vdwg.mxu0
    %6803 = vmatpush.bf16.msra.mxu0 %v4805
    %6804 = vmatpush.bf16.msra.mxu0 %v4797
    %6805 = vmatpush.bf16.msra.mxu0 %v4789
    %6806 = vmatpush.bf16.msra.mxu0 %v4781
    %6807 = vmatpush.bf16.msra.mxu0 %v4773
    %6808 = vmatpush.bf16.msra.mxu0 %v4765
    %6809 = vmatpush.bf16.msra.mxu0 %v4757
    %6810 = vmatpush.bf16.msra.mxu0 %v4749
    %6811 = vmatmul.bf16.gmra.mxu0 %v1139
    %v6812 = vpop.f32.mrf.mxu0
    %v6813 = vadd.f32 %v6800, %v6812
    %v6814 = vpop.f32.mrf.mxu0
    %6815 = vdwg.mxu0
    %6816 = vmatpush.bf16.msra.mxu0 %v4869
    %6817 = vmatpush.bf16.msra.mxu0 %v4861
    %6818 = vmatpush.bf16.msra.mxu0 %v4853
    %6819 = vmatpush.bf16.msra.mxu0 %v4845
    %6820 = vmatpush.bf16.msra.mxu0 %v4837
    %6821 = vmatpush.bf16.msra.mxu0 %v4829
    %6822 = vmatpush.bf16.msra.mxu0 %v4821
    %6823 = vmatpush.bf16.msra.mxu0 %v4813
    %6824 = vmatmul.bf16.gmra.mxu0 %v1140
    %v6825 = vpop.f32.mrf.mxu0
    %v6826 = vadd.f32 %v6813, %v6825
    %v6827 = vpop.f32.mrf.mxu0
    %6828 = vdwg.mxu0
    %6829 = vmatpush.bf16.msra.mxu0 %v4933
    %6830 = vmatpush.bf16.msra.mxu0 %v4925
    %6831 = vmatpush.bf16.msra.mxu0 %v4917
    %6832 = vmatpush.bf16.msra.mxu0 %v4909
    %6833 = vmatpush.bf16.msra.mxu0 %v4901
    %6834 = vmatpush.bf16.msra.mxu0 %v4893
    %6835 = vmatpush.bf16.msra.mxu0 %v4885
    %6836 = vmatpush.bf16.msra.mxu0 %v4877
    %6837 = vmatmul.bf16.gmra.mxu0 %v1141
    %v6838 = vpop.f32.mrf.mxu0
    %v6839 = vadd.f32 %v6826, %v6838
    %v6840 = vpop.f32.mrf.mxu0
    %6841 = vdwg.mxu0
    %6842 = vmatpush.bf16.msra.mxu0 %v4997
    %6843 = vmatpush.bf16.msra.mxu0 %v4989
    %6844 = vmatpush.bf16.msra.mxu0 %v4981
    %6845 = vmatpush.bf16.msra.mxu0 %v4973
    %6846 = vmatpush.bf16.msra.mxu0 %v4965
    %6847 = vmatpush.bf16.msra.mxu0 %v4957
    %6848 = vmatpush.bf16.msra.mxu0 %v4949
    %6849 = vmatpush.bf16.msra.mxu0 %v4941
    %6850 = vmatmul.bf16.gmra.mxu0 %v1142
    %v6851 = vpop.f32.mrf.mxu0
    %v6852 = vadd.f32 %v6839, %v6851
    %v6853 = vpop.f32.mrf.mxu0
    %6854 = vdwg.mxu0
    %6855 = vmatpush.bf16.msra.mxu0 %v5061
    %6856 = vmatpush.bf16.msra.mxu0 %v5053
    %6857 = vmatpush.bf16.msra.mxu0 %v5045
    %6858 = vmatpush.bf16.msra.mxu0 %v5037
    %6859 = vmatpush.bf16.msra.mxu0 %v5029
    %6860 = vmatpush.bf16.msra.mxu0 %v5021
    %6861 = vmatpush.bf16.msra.mxu0 %v5013
    %6862 = vmatpush.bf16.msra.mxu0 %v5005
    %6863 = vmatmul.bf16.gmra.mxu0 %v1143
    %v6864 = vpop.f32.mrf.mxu0
    %v6865 = vadd.f32 %v6852, %v6864
    %v6866 = vpop.f32.mrf.mxu0
    %6867 = vdwg.mxu0
    %6868 = vmatpush.bf16.msra.mxu0 %v5125
    %6869 = vmatpush.bf16.msra.mxu0 %v5117
    %6870 = vmatpush.bf16.msra.mxu0 %v5109
    %6871 = vmatpush.bf16.msra.mxu0 %v5101
    %6872 = vmatpush.bf16.msra.mxu0 %v5093
    %6873 = vmatpush.bf16.msra.mxu0 %v5085
    %6874 = vmatpush.bf16.msra.mxu0 %v5077
    %6875 = vmatpush.bf16.msra.mxu0 %v5069
    %6876 = vmatmul.bf16.gmra.mxu0 %v1144
    %v6877 = vpop.f32.mrf.mxu0
    %v6878 = vadd.f32 %v6865, %v6877
    %v6879 = vpop.f32.mrf.mxu0
    %6880 = vdwg.mxu0
    %6881 = vmatpush.bf16.msra.mxu0 %v5189
    %6882 = vmatpush.bf16.msra.mxu0 %v5181
    %6883 = vmatpush.bf16.msra.mxu0 %v5173
    %6884 = vmatpush.bf16.msra.mxu0 %v5165
    %6885 = vmatpush.bf16.msra.mxu0 %v5157
    %6886 = vmatpush.bf16.msra.mxu0 %v5149
    %6887 = vmatpush.bf16.msra.mxu0 %v5141
    %6888 = vmatpush.bf16.msra.mxu0 %v5133
    %6889 = vmatmul.bf16.gmra.mxu0 %v1145
    %v6890 = vpop.f32.mrf.mxu0
    %v6891 = vadd.f32 %v6878, %v6890
    %v6892 = vpop.f32.mrf.mxu0
    %6893 = vdwg.mxu0
    %6894 = vmatpush.bf16.msra.mxu0 %v5253
    %6895 = vmatpush.bf16.msra.mxu0 %v5245
    %6896 = vmatpush.bf16.msra.mxu0 %v5237
    %6897 = vmatpush.bf16.msra.mxu0 %v5229
    %6898 = vmatpush.bf16.msra.mxu0 %v5221
    %6899 = vmatpush.bf16.msra.mxu0 %v5213
    %6900 = vmatpush.bf16.msra.mxu0 %v5205
    %6901 = vmatpush.bf16.msra.mxu0 %v5197
    %6902 = vmatmul.bf16.gmra.mxu0 %v1146
    %v6903 = vpop.f32.mrf.mxu0
    %v6904 = vadd.f32 %v6891, %v6903
    %v6905 = vpop.f32.mrf.mxu0
    %6906 = vdwg.mxu0
    %6907 = vmatpush.bf16.msra.mxu0 %v4294
    %6908 = vmatpush.bf16.msra.mxu0 %v4286
    %6909 = vmatpush.bf16.msra.mxu0 %v4278
    %6910 = vmatpush.bf16.msra.mxu0 %v4270
    %6911 = vmatpush.bf16.msra.mxu0 %v4262
    %6912 = vmatpush.bf16.msra.mxu0 %v4254
    %6913 = vmatpush.bf16.msra.mxu0 %v4246
    %6914 = vmatpush.bf16.msra.mxu0 %v4238
    %6915 = vmatmul.bf16.gmra.mxu0 %v1131
    %v6916 = vpop.f32.mrf.mxu0
    %v6917 = vadd.f32 0.0, %v6916
    %v6918 = vpop.f32.mrf.mxu0
    %6919 = vdwg.mxu0
    %6920 = vmatpush.bf16.msra.mxu0 %v4358
    %6921 = vmatpush.bf16.msra.mxu0 %v4350
    %6922 = vmatpush.bf16.msra.mxu0 %v4342
    %6923 = vmatpush.bf16.msra.mxu0 %v4334
    %6924 = vmatpush.bf16.msra.mxu0 %v4326
    %6925 = vmatpush.bf16.msra.mxu0 %v4318
    %6926 = vmatpush.bf16.msra.mxu0 %v4310
    %6927 = vmatpush.bf16.msra.mxu0 %v4302
    %6928 = vmatmul.bf16.gmra.mxu0 %v1132
    %v6929 = vpop.f32.mrf.mxu0
    %v6930 = vadd.f32 %v6917, %v6929
    %v6931 = vpop.f32.mrf.mxu0
    %6932 = vdwg.mxu0
    %6933 = vmatpush.bf16.msra.mxu0 %v4422
    %6934 = vmatpush.bf16.msra.mxu0 %v4414
    %6935 = vmatpush.bf16.msra.mxu0 %v4406
    %6936 = vmatpush.bf16.msra.mxu0 %v4398
    %6937 = vmatpush.bf16.msra.mxu0 %v4390
    %6938 = vmatpush.bf16.msra.mxu0 %v4382
    %6939 = vmatpush.bf16.msra.mxu0 %v4374
    %6940 = vmatpush.bf16.msra.mxu0 %v4366
    %6941 = vmatmul.bf16.gmra.mxu0 %v1133
    %v6942 = vpop.f32.mrf.mxu0
    %v6943 = vadd.f32 %v6930, %v6942
    %v6944 = vpop.f32.mrf.mxu0
    %6945 = vdwg.mxu0
    %6946 = vmatpush.bf16.msra.mxu0 %v4486
    %6947 = vmatpush.bf16.msra.mxu0 %v4478
    %6948 = vmatpush.bf16.msra.mxu0 %v4470
    %6949 = vmatpush.bf16.msra.mxu0 %v4462
    %6950 = vmatpush.bf16.msra.mxu0 %v4454
    %6951 = vmatpush.bf16.msra.mxu0 %v4446
    %6952 = vmatpush.bf16.msra.mxu0 %v4438
    %6953 = vmatpush.bf16.msra.mxu0 %v4430
    %6954 = vmatmul.bf16.gmra.mxu0 %v1134
    %v6955 = vpop.f32.mrf.mxu0
    %v6956 = vadd.f32 %v6943, %v6955
    %v6957 = vpop.f32.mrf.mxu0
    %6958 = vdwg.mxu0
    %6959 = vmatpush.bf16.msra.mxu0 %v4550
    %6960 = vmatpush.bf16.msra.mxu0 %v4542
    %6961 = vmatpush.bf16.msra.mxu0 %v4534
    %6962 = vmatpush.bf16.msra.mxu0 %v4526
    %6963 = vmatpush.bf16.msra.mxu0 %v4518
    %6964 = vmatpush.bf16.msra.mxu0 %v4510
    %6965 = vmatpush.bf16.msra.mxu0 %v4502
    %6966 = vmatpush.bf16.msra.mxu0 %v4494
    %6967 = vmatmul.bf16.gmra.mxu0 %v1135
    %v6968 = vpop.f32.mrf.mxu0
    %v6969 = vadd.f32 %v6956, %v6968
    %v6970 = vpop.f32.mrf.mxu0
    %6971 = vdwg.mxu0
    %6972 = vmatpush.bf16.msra.mxu0 %v4614
    %6973 = vmatpush.bf16.msra.mxu0 %v4606
    %6974 = vmatpush.bf16.msra.mxu0 %v4598
    %6975 = vmatpush.bf16.msra.mxu0 %v4590
    %6976 = vmatpush.bf16.msra.mxu0 %v4582
    %6977 = vmatpush.bf16.msra.mxu0 %v4574
    %6978 = vmatpush.bf16.msra.mxu0 %v4566
    %6979 = vmatpush.bf16.msra.mxu0 %v4558
    %6980 = vmatmul.bf16.gmra.mxu0 %v1136
    %v6981 = vpop.f32.mrf.mxu0
    %v6982 = vadd.f32 %v6969, %v6981
    %v6983 = vpop.f32.mrf.mxu0
    %6984 = vdwg.mxu0
    %6985 = vmatpush.bf16.msra.mxu0 %v4678
    %6986 = vmatpush.bf16.msra.mxu0 %v4670
    %6987 = vmatpush.bf16.msra.mxu0 %v4662
    %6988 = vmatpush.bf16.msra.mxu0 %v4654
    %6989 = vmatpush.bf16.msra.mxu0 %v4646
    %6990 = vmatpush.bf16.msra.mxu0 %v4638
    %6991 = vmatpush.bf16.msra.mxu0 %v4630
    %6992 = vmatpush.bf16.msra.mxu0 %v4622
    %6993 = vmatmul.bf16.gmra.mxu0 %v1137
    %v6994 = vpop.f32.mrf.mxu0
    %v6995 = vadd.f32 %v6982, %v6994
    %v6996 = vpop.f32.mrf.mxu0
    %6997 = vdwg.mxu0
    %6998 = vmatpush.bf16.msra.mxu0 %v4742
    %6999 = vmatpush.bf16.msra.mxu0 %v4734
    %7000 = vmatpush.bf16.msra.mxu0 %v4726
    %7001 = vmatpush.bf16.msra.mxu0 %v4718
    %7002 = vmatpush.bf16.msra.mxu0 %v4710
    %7003 = vmatpush.bf16.msra.mxu0 %v4702
    %7004 = vmatpush.bf16.msra.mxu0 %v4694
    %7005 = vmatpush.bf16.msra.mxu0 %v4686
    %7006 = vmatmul.bf16.gmra.mxu0 %v1138
    %v7007 = vpop.f32.mrf.mxu0
    %v7008 = vadd.f32 %v6995, %v7007
    %v7009 = vpop.f32.mrf.mxu0
    %7010 = vdwg.mxu0
    %7011 = vmatpush.bf16.msra.mxu0 %v4806
    %7012 = vmatpush.bf16.msra.mxu0 %v4798
    %7013 = vmatpush.bf16.msra.mxu0 %v4790
    %7014 = vmatpush.bf16.msra.mxu0 %v4782
    %7015 = vmatpush.bf16.msra.mxu0 %v4774
    %7016 = vmatpush.bf16.msra.mxu0 %v4766
    %7017 = vmatpush.bf16.msra.mxu0 %v4758
    %7018 = vmatpush.bf16.msra.mxu0 %v4750
    %7019 = vmatmul.bf16.gmra.mxu0 %v1139
    %v7020 = vpop.f32.mrf.mxu0
    %v7021 = vadd.f32 %v7008, %v7020
    %v7022 = vpop.f32.mrf.mxu0
    %7023 = vdwg.mxu0
    %7024 = vmatpush.bf16.msra.mxu0 %v4870
    %7025 = vmatpush.bf16.msra.mxu0 %v4862
    %7026 = vmatpush.bf16.msra.mxu0 %v4854
    %7027 = vmatpush.bf16.msra.mxu0 %v4846
    %7028 = vmatpush.bf16.msra.mxu0 %v4838
    %7029 = vmatpush.bf16.msra.mxu0 %v4830
    %7030 = vmatpush.bf16.msra.mxu0 %v4822
    %7031 = vmatpush.bf16.msra.mxu0 %v4814
    %7032 = vmatmul.bf16.gmra.mxu0 %v1140
    %v7033 = vpop.f32.mrf.mxu0
    %v7034 = vadd.f32 %v7021, %v7033
    %v7035 = vpop.f32.mrf.mxu0
    %7036 = vdwg.mxu0
    %7037 = vmatpush.bf16.msra.mxu0 %v4934
    %7038 = vmatpush.bf16.msra.mxu0 %v4926
    %7039 = vmatpush.bf16.msra.mxu0 %v4918
    %7040 = vmatpush.bf16.msra.mxu0 %v4910
    %7041 = vmatpush.bf16.msra.mxu0 %v4902
    %7042 = vmatpush.bf16.msra.mxu0 %v4894
    %7043 = vmatpush.bf16.msra.mxu0 %v4886
    %7044 = vmatpush.bf16.msra.mxu0 %v4878
    %7045 = vmatmul.bf16.gmra.mxu0 %v1141
    %v7046 = vpop.f32.mrf.mxu0
    %v7047 = vadd.f32 %v7034, %v7046
    %v7048 = vpop.f32.mrf.mxu0
    %7049 = vdwg.mxu0
    %7050 = vmatpush.bf16.msra.mxu0 %v4998
    %7051 = vmatpush.bf16.msra.mxu0 %v4990
    %7052 = vmatpush.bf16.msra.mxu0 %v4982
    %7053 = vmatpush.bf16.msra.mxu0 %v4974
    %7054 = vmatpush.bf16.msra.mxu0 %v4966
    %7055 = vmatpush.bf16.msra.mxu0 %v4958
    %7056 = vmatpush.bf16.msra.mxu0 %v4950
    %7057 = vmatpush.bf16.msra.mxu0 %v4942
    %7058 = vmatmul.bf16.gmra.mxu0 %v1142
    %v7059 = vpop.f32.mrf.mxu0
    %v7060 = vadd.f32 %v7047, %v7059
    %v7061 = vpop.f32.mrf.mxu0
    %7062 = vdwg.mxu0
    %7063 = vmatpush.bf16.msra.mxu0 %v5062
    %7064 = vmatpush.bf16.msra.mxu0 %v5054
    %7065 = vmatpush.bf16.msra.mxu0 %v5046
    %7066 = vmatpush.bf16.msra.mxu0 %v5038
    %7067 = vmatpush.bf16.msra.mxu0 %v5030
    %7068 = vmatpush.bf16.msra.mxu0 %v5022
    %7069 = vmatpush.bf16.msra.mxu0 %v5014
    %7070 = vmatpush.bf16.msra.mxu0 %v5006
    %7071 = vmatmul.bf16.gmra.mxu0 %v1143
    %v7072 = vpop.f32.mrf.mxu0
    %v7073 = vadd.f32 %v7060, %v7072
    %v7074 = vpop.f32.mrf.mxu0
    %7075 = vdwg.mxu0
    %7076 = vmatpush.bf16.msra.mxu0 %v5126
    %7077 = vmatpush.bf16.msra.mxu0 %v5118
    %7078 = vmatpush.bf16.msra.mxu0 %v5110
    %7079 = vmatpush.bf16.msra.mxu0 %v5102
    %7080 = vmatpush.bf16.msra.mxu0 %v5094
    %7081 = vmatpush.bf16.msra.mxu0 %v5086
    %7082 = vmatpush.bf16.msra.mxu0 %v5078
    %7083 = vmatpush.bf16.msra.mxu0 %v5070
    %7084 = vmatmul.bf16.gmra.mxu0 %v1144
    %v7085 = vpop.f32.mrf.mxu0
    %v7086 = vadd.f32 %v7073, %v7085
    %v7087 = vpop.f32.mrf.mxu0
    %7088 = vdwg.mxu0
    %7089 = vmatpush.bf16.msra.mxu0 %v5190
    %7090 = vmatpush.bf16.msra.mxu0 %v5182
    %7091 = vmatpush.bf16.msra.mxu0 %v5174
    %7092 = vmatpush.bf16.msra.mxu0 %v5166
    %7093 = vmatpush.bf16.msra.mxu0 %v5158
    %7094 = vmatpush.bf16.msra.mxu0 %v5150
    %7095 = vmatpush.bf16.msra.mxu0 %v5142
    %7096 = vmatpush.bf16.msra.mxu0 %v5134
    %7097 = vmatmul.bf16.gmra.mxu0 %v1145
    %v7098 = vpop.f32.mrf.mxu0
    %v7099 = vadd.f32 %v7086, %v7098
    %v7100 = vpop.f32.mrf.mxu0
    %7101 = vdwg.mxu0
    %7102 = vmatpush.bf16.msra.mxu0 %v5254
    %7103 = vmatpush.bf16.msra.mxu0 %v5246
    %7104 = vmatpush.bf16.msra.mxu0 %v5238
    %7105 = vmatpush.bf16.msra.mxu0 %v5230
    %7106 = vmatpush.bf16.msra.mxu0 %v5222
    %7107 = vmatpush.bf16.msra.mxu0 %v5214
    %7108 = vmatpush.bf16.msra.mxu0 %v5206
    %7109 = vmatpush.bf16.msra.mxu0 %v5198
    %7110 = vmatmul.bf16.gmra.mxu0 %v1146
    %v7111 = vpop.f32.mrf.mxu0
    %v7112 = vadd.f32 %v7099, %v7111
    %v7113 = vpop.f32.mrf.mxu0
    %7114 = vdwg.mxu0
    %7115 = vmatpush.bf16.msra.mxu0 %v4295
    %7116 = vmatpush.bf16.msra.mxu0 %v4287
    %7117 = vmatpush.bf16.msra.mxu0 %v4279
    %7118 = vmatpush.bf16.msra.mxu0 %v4271
    %7119 = vmatpush.bf16.msra.mxu0 %v4263
    %7120 = vmatpush.bf16.msra.mxu0 %v4255
    %7121 = vmatpush.bf16.msra.mxu0 %v4247
    %7122 = vmatpush.bf16.msra.mxu0 %v4239
    %7123 = vmatmul.bf16.gmra.mxu0 %v1131
    %v7124 = vpop.f32.mrf.mxu0
    %v7125 = vadd.f32 0.0, %v7124
    %v7126 = vpop.f32.mrf.mxu0
    %7127 = vdwg.mxu0
    %7128 = vmatpush.bf16.msra.mxu0 %v4359
    %7129 = vmatpush.bf16.msra.mxu0 %v4351
    %7130 = vmatpush.bf16.msra.mxu0 %v4343
    %7131 = vmatpush.bf16.msra.mxu0 %v4335
    %7132 = vmatpush.bf16.msra.mxu0 %v4327
    %7133 = vmatpush.bf16.msra.mxu0 %v4319
    %7134 = vmatpush.bf16.msra.mxu0 %v4311
    %7135 = vmatpush.bf16.msra.mxu0 %v4303
    %7136 = vmatmul.bf16.gmra.mxu0 %v1132
    %v7137 = vpop.f32.mrf.mxu0
    %v7138 = vadd.f32 %v7125, %v7137
    %v7139 = vpop.f32.mrf.mxu0
    %7140 = vdwg.mxu0
    %7141 = vmatpush.bf16.msra.mxu0 %v4423
    %7142 = vmatpush.bf16.msra.mxu0 %v4415
    %7143 = vmatpush.bf16.msra.mxu0 %v4407
    %7144 = vmatpush.bf16.msra.mxu0 %v4399
    %7145 = vmatpush.bf16.msra.mxu0 %v4391
    %7146 = vmatpush.bf16.msra.mxu0 %v4383
    %7147 = vmatpush.bf16.msra.mxu0 %v4375
    %7148 = vmatpush.bf16.msra.mxu0 %v4367
    %7149 = vmatmul.bf16.gmra.mxu0 %v1133
    %v7150 = vpop.f32.mrf.mxu0
    %v7151 = vadd.f32 %v7138, %v7150
    %v7152 = vpop.f32.mrf.mxu0
    %7153 = vdwg.mxu0
    %7154 = vmatpush.bf16.msra.mxu0 %v4487
    %7155 = vmatpush.bf16.msra.mxu0 %v4479
    %7156 = vmatpush.bf16.msra.mxu0 %v4471
    %7157 = vmatpush.bf16.msra.mxu0 %v4463
    %7158 = vmatpush.bf16.msra.mxu0 %v4455
    %7159 = vmatpush.bf16.msra.mxu0 %v4447
    %7160 = vmatpush.bf16.msra.mxu0 %v4439
    %7161 = vmatpush.bf16.msra.mxu0 %v4431
    %7162 = vmatmul.bf16.gmra.mxu0 %v1134
    %v7163 = vpop.f32.mrf.mxu0
    %v7164 = vadd.f32 %v7151, %v7163
    %v7165 = vpop.f32.mrf.mxu0
    %7166 = vdwg.mxu0
    %7167 = vmatpush.bf16.msra.mxu0 %v4551
    %7168 = vmatpush.bf16.msra.mxu0 %v4543
    %7169 = vmatpush.bf16.msra.mxu0 %v4535
    %7170 = vmatpush.bf16.msra.mxu0 %v4527
    %7171 = vmatpush.bf16.msra.mxu0 %v4519
    %7172 = vmatpush.bf16.msra.mxu0 %v4511
    %7173 = vmatpush.bf16.msra.mxu0 %v4503
    %7174 = vmatpush.bf16.msra.mxu0 %v4495
    %7175 = vmatmul.bf16.gmra.mxu0 %v1135
    %v7176 = vpop.f32.mrf.mxu0
    %v7177 = vadd.f32 %v7164, %v7176
    %v7178 = vpop.f32.mrf.mxu0
    %7179 = vdwg.mxu0
    %7180 = vmatpush.bf16.msra.mxu0 %v4615
    %7181 = vmatpush.bf16.msra.mxu0 %v4607
    %7182 = vmatpush.bf16.msra.mxu0 %v4599
    %7183 = vmatpush.bf16.msra.mxu0 %v4591
    %7184 = vmatpush.bf16.msra.mxu0 %v4583
    %7185 = vmatpush.bf16.msra.mxu0 %v4575
    %7186 = vmatpush.bf16.msra.mxu0 %v4567
    %7187 = vmatpush.bf16.msra.mxu0 %v4559
    %7188 = vmatmul.bf16.gmra.mxu0 %v1136
    %v7189 = vpop.f32.mrf.mxu0
    %v7190 = vadd.f32 %v7177, %v7189
    %v7191 = vpop.f32.mrf.mxu0
    %7192 = vdwg.mxu0
    %7193 = vmatpush.bf16.msra.mxu0 %v4679
    %7194 = vmatpush.bf16.msra.mxu0 %v4671
    %7195 = vmatpush.bf16.msra.mxu0 %v4663
    %7196 = vmatpush.bf16.msra.mxu0 %v4655
    %7197 = vmatpush.bf16.msra.mxu0 %v4647
    %7198 = vmatpush.bf16.msra.mxu0 %v4639
    %7199 = vmatpush.bf16.msra.mxu0 %v4631
    %7200 = vmatpush.bf16.msra.mxu0 %v4623
    %7201 = vmatmul.bf16.gmra.mxu0 %v1137
    %v7202 = vpop.f32.mrf.mxu0
    %v7203 = vadd.f32 %v7190, %v7202
    %v7204 = vpop.f32.mrf.mxu0
    %7205 = vdwg.mxu0
    %7206 = vmatpush.bf16.msra.mxu0 %v4743
    %7207 = vmatpush.bf16.msra.mxu0 %v4735
    %7208 = vmatpush.bf16.msra.mxu0 %v4727
    %7209 = vmatpush.bf16.msra.mxu0 %v4719
    %7210 = vmatpush.bf16.msra.mxu0 %v4711
    %7211 = vmatpush.bf16.msra.mxu0 %v4703
    %7212 = vmatpush.bf16.msra.mxu0 %v4695
    %7213 = vmatpush.bf16.msra.mxu0 %v4687
    %7214 = vmatmul.bf16.gmra.mxu0 %v1138
    %v7215 = vpop.f32.mrf.mxu0
    %v7216 = vadd.f32 %v7203, %v7215
    %v7217 = vpop.f32.mrf.mxu0
    %7218 = vdwg.mxu0
    %7219 = vmatpush.bf16.msra.mxu0 %v4807
    %7220 = vmatpush.bf16.msra.mxu0 %v4799
    %7221 = vmatpush.bf16.msra.mxu0 %v4791
    %7222 = vmatpush.bf16.msra.mxu0 %v4783
    %7223 = vmatpush.bf16.msra.mxu0 %v4775
    %7224 = vmatpush.bf16.msra.mxu0 %v4767
    %7225 = vmatpush.bf16.msra.mxu0 %v4759
    %7226 = vmatpush.bf16.msra.mxu0 %v4751
    %7227 = vmatmul.bf16.gmra.mxu0 %v1139
    %v7228 = vpop.f32.mrf.mxu0
    %v7229 = vadd.f32 %v7216, %v7228
    %v7230 = vpop.f32.mrf.mxu0
    %7231 = vdwg.mxu0
    %7232 = vmatpush.bf16.msra.mxu0 %v4871
    %7233 = vmatpush.bf16.msra.mxu0 %v4863
    %7234 = vmatpush.bf16.msra.mxu0 %v4855
    %7235 = vmatpush.bf16.msra.mxu0 %v4847
    %7236 = vmatpush.bf16.msra.mxu0 %v4839
    %7237 = vmatpush.bf16.msra.mxu0 %v4831
    %7238 = vmatpush.bf16.msra.mxu0 %v4823
    %7239 = vmatpush.bf16.msra.mxu0 %v4815
    %7240 = vmatmul.bf16.gmra.mxu0 %v1140
    %v7241 = vpop.f32.mrf.mxu0
    %v7242 = vadd.f32 %v7229, %v7241
    %v7243 = vpop.f32.mrf.mxu0
    %7244 = vdwg.mxu0
    %7245 = vmatpush.bf16.msra.mxu0 %v4935
    %7246 = vmatpush.bf16.msra.mxu0 %v4927
    %7247 = vmatpush.bf16.msra.mxu0 %v4919
    %7248 = vmatpush.bf16.msra.mxu0 %v4911
    %7249 = vmatpush.bf16.msra.mxu0 %v4903
    %7250 = vmatpush.bf16.msra.mxu0 %v4895
    %7251 = vmatpush.bf16.msra.mxu0 %v4887
    %7252 = vmatpush.bf16.msra.mxu0 %v4879
    %7253 = vmatmul.bf16.gmra.mxu0 %v1141
    %v7254 = vpop.f32.mrf.mxu0
    %v7255 = vadd.f32 %v7242, %v7254
    %v7256 = vpop.f32.mrf.mxu0
    %7257 = vdwg.mxu0
    %7258 = vmatpush.bf16.msra.mxu0 %v4999
    %7259 = vmatpush.bf16.msra.mxu0 %v4991
    %7260 = vmatpush.bf16.msra.mxu0 %v4983
    %7261 = vmatpush.bf16.msra.mxu0 %v4975
    %7262 = vmatpush.bf16.msra.mxu0 %v4967
    %7263 = vmatpush.bf16.msra.mxu0 %v4959
    %7264 = vmatpush.bf16.msra.mxu0 %v4951
    %7265 = vmatpush.bf16.msra.mxu0 %v4943
    %7266 = vmatmul.bf16.gmra.mxu0 %v1142
    %v7267 = vpop.f32.mrf.mxu0
    %v7268 = vadd.f32 %v7255, %v7267
    %v7269 = vpop.f32.mrf.mxu0
    %7270 = vdwg.mxu0
    %7271 = vmatpush.bf16.msra.mxu0 %v5063
    %7272 = vmatpush.bf16.msra.mxu0 %v5055
    %7273 = vmatpush.bf16.msra.mxu0 %v5047
    %7274 = vmatpush.bf16.msra.mxu0 %v5039
    %7275 = vmatpush.bf16.msra.mxu0 %v5031
    %7276 = vmatpush.bf16.msra.mxu0 %v5023
    %7277 = vmatpush.bf16.msra.mxu0 %v5015
    %7278 = vmatpush.bf16.msra.mxu0 %v5007
    %7279 = vmatmul.bf16.gmra.mxu0 %v1143
    %v7280 = vpop.f32.mrf.mxu0
    %v7281 = vadd.f32 %v7268, %v7280
    %v7282 = vpop.f32.mrf.mxu0
    %7283 = vdwg.mxu0
    %7284 = vmatpush.bf16.msra.mxu0 %v5127
    %7285 = vmatpush.bf16.msra.mxu0 %v5119
    %7286 = vmatpush.bf16.msra.mxu0 %v5111
    %7287 = vmatpush.bf16.msra.mxu0 %v5103
    %7288 = vmatpush.bf16.msra.mxu0 %v5095
    %7289 = vmatpush.bf16.msra.mxu0 %v5087
    %7290 = vmatpush.bf16.msra.mxu0 %v5079
    %7291 = vmatpush.bf16.msra.mxu0 %v5071
    %7292 = vmatmul.bf16.gmra.mxu0 %v1144
    %v7293 = vpop.f32.mrf.mxu0
    %v7294 = vadd.f32 %v7281, %v7293
    %v7295 = vpop.f32.mrf.mxu0
    %7296 = vdwg.mxu0
    %7297 = vmatpush.bf16.msra.mxu0 %v5191
    %7298 = vmatpush.bf16.msra.mxu0 %v5183
    %7299 = vmatpush.bf16.msra.mxu0 %v5175
    %7300 = vmatpush.bf16.msra.mxu0 %v5167
    %7301 = vmatpush.bf16.msra.mxu0 %v5159
    %7302 = vmatpush.bf16.msra.mxu0 %v5151
    %7303 = vmatpush.bf16.msra.mxu0 %v5143
    %7304 = vmatpush.bf16.msra.mxu0 %v5135
    %7305 = vmatmul.bf16.gmra.mxu0 %v1145
    %v7306 = vpop.f32.mrf.mxu0
    %v7307 = vadd.f32 %v7294, %v7306
    %v7308 = vpop.f32.mrf.mxu0
    %7309 = vdwg.mxu0
    %7310 = vmatpush.bf16.msra.mxu0 %v5255
    %7311 = vmatpush.bf16.msra.mxu0 %v5247
    %7312 = vmatpush.bf16.msra.mxu0 %v5239
    %7313 = vmatpush.bf16.msra.mxu0 %v5231
    %7314 = vmatpush.bf16.msra.mxu0 %v5223
    %7315 = vmatpush.bf16.msra.mxu0 %v5215
    %7316 = vmatpush.bf16.msra.mxu0 %v5207
    %7317 = vmatpush.bf16.msra.mxu0 %v5199
    %7318 = vmatmul.bf16.gmra.mxu0 %v1146
    %v7319 = vpop.f32.mrf.mxu0
    %v7320 = vadd.f32 %v7307, %v7319
    %v7321 = vpop.f32.mrf.mxu0
    %7322 = vdwg.mxu0
    %7323 = vmatpush.bf16.msra.mxu0 %v4296
    %7324 = vmatpush.bf16.msra.mxu0 %v4288
    %7325 = vmatpush.bf16.msra.mxu0 %v4280
    %7326 = vmatpush.bf16.msra.mxu0 %v4272
    %7327 = vmatpush.bf16.msra.mxu0 %v4264
    %7328 = vmatpush.bf16.msra.mxu0 %v4256
    %7329 = vmatpush.bf16.msra.mxu0 %v4248
    %7330 = vmatpush.bf16.msra.mxu0 %v4240
    %7331 = vmatmul.bf16.gmra.mxu0 %v1131
    %v7332 = vpop.f32.mrf.mxu0
    %v7333 = vadd.f32 0.0, %v7332
    %v7334 = vpop.f32.mrf.mxu0
    %7335 = vdwg.mxu0
    %7336 = vmatpush.bf16.msra.mxu0 %v4360
    %7337 = vmatpush.bf16.msra.mxu0 %v4352
    %7338 = vmatpush.bf16.msra.mxu0 %v4344
    %7339 = vmatpush.bf16.msra.mxu0 %v4336
    %7340 = vmatpush.bf16.msra.mxu0 %v4328
    %7341 = vmatpush.bf16.msra.mxu0 %v4320
    %7342 = vmatpush.bf16.msra.mxu0 %v4312
    %7343 = vmatpush.bf16.msra.mxu0 %v4304
    %7344 = vmatmul.bf16.gmra.mxu0 %v1132
    %v7345 = vpop.f32.mrf.mxu0
    %v7346 = vadd.f32 %v7333, %v7345
    %v7347 = vpop.f32.mrf.mxu0
    %7348 = vdwg.mxu0
    %7349 = vmatpush.bf16.msra.mxu0 %v4424
    %7350 = vmatpush.bf16.msra.mxu0 %v4416
    %7351 = vmatpush.bf16.msra.mxu0 %v4408
    %7352 = vmatpush.bf16.msra.mxu0 %v4400
    %7353 = vmatpush.bf16.msra.mxu0 %v4392
    %7354 = vmatpush.bf16.msra.mxu0 %v4384
    %7355 = vmatpush.bf16.msra.mxu0 %v4376
    %7356 = vmatpush.bf16.msra.mxu0 %v4368
    %7357 = vmatmul.bf16.gmra.mxu0 %v1133
    %v7358 = vpop.f32.mrf.mxu0
    %v7359 = vadd.f32 %v7346, %v7358
    %v7360 = vpop.f32.mrf.mxu0
    %7361 = vdwg.mxu0
    %7362 = vmatpush.bf16.msra.mxu0 %v4488
    %7363 = vmatpush.bf16.msra.mxu0 %v4480
    %7364 = vmatpush.bf16.msra.mxu0 %v4472
    %7365 = vmatpush.bf16.msra.mxu0 %v4464
    %7366 = vmatpush.bf16.msra.mxu0 %v4456
    %7367 = vmatpush.bf16.msra.mxu0 %v4448
    %7368 = vmatpush.bf16.msra.mxu0 %v4440
    %7369 = vmatpush.bf16.msra.mxu0 %v4432
    %7370 = vmatmul.bf16.gmra.mxu0 %v1134
    %v7371 = vpop.f32.mrf.mxu0
    %v7372 = vadd.f32 %v7359, %v7371
    %v7373 = vpop.f32.mrf.mxu0
    %7374 = vdwg.mxu0
    %7375 = vmatpush.bf16.msra.mxu0 %v4552
    %7376 = vmatpush.bf16.msra.mxu0 %v4544
    %7377 = vmatpush.bf16.msra.mxu0 %v4536
    %7378 = vmatpush.bf16.msra.mxu0 %v4528
    %7379 = vmatpush.bf16.msra.mxu0 %v4520
    %7380 = vmatpush.bf16.msra.mxu0 %v4512
    %7381 = vmatpush.bf16.msra.mxu0 %v4504
    %7382 = vmatpush.bf16.msra.mxu0 %v4496
    %7383 = vmatmul.bf16.gmra.mxu0 %v1135
    %v7384 = vpop.f32.mrf.mxu0
    %v7385 = vadd.f32 %v7372, %v7384
    %v7386 = vpop.f32.mrf.mxu0
    %7387 = vdwg.mxu0
    %7388 = vmatpush.bf16.msra.mxu0 %v4616
    %7389 = vmatpush.bf16.msra.mxu0 %v4608
    %7390 = vmatpush.bf16.msra.mxu0 %v4600
    %7391 = vmatpush.bf16.msra.mxu0 %v4592
    %7392 = vmatpush.bf16.msra.mxu0 %v4584
    %7393 = vmatpush.bf16.msra.mxu0 %v4576
    %7394 = vmatpush.bf16.msra.mxu0 %v4568
    %7395 = vmatpush.bf16.msra.mxu0 %v4560
    %7396 = vmatmul.bf16.gmra.mxu0 %v1136
    %v7397 = vpop.f32.mrf.mxu0
    %v7398 = vadd.f32 %v7385, %v7397
    %v7399 = vpop.f32.mrf.mxu0
    %7400 = vdwg.mxu0
    %7401 = vmatpush.bf16.msra.mxu0 %v4680
    %7402 = vmatpush.bf16.msra.mxu0 %v4672
    %7403 = vmatpush.bf16.msra.mxu0 %v4664
    %7404 = vmatpush.bf16.msra.mxu0 %v4656
    %7405 = vmatpush.bf16.msra.mxu0 %v4648
    %7406 = vmatpush.bf16.msra.mxu0 %v4640
    %7407 = vmatpush.bf16.msra.mxu0 %v4632
    %7408 = vmatpush.bf16.msra.mxu0 %v4624
    %7409 = vmatmul.bf16.gmra.mxu0 %v1137
    %v7410 = vpop.f32.mrf.mxu0
    %v7411 = vadd.f32 %v7398, %v7410
    %v7412 = vpop.f32.mrf.mxu0
    %7413 = vdwg.mxu0
    %7414 = vmatpush.bf16.msra.mxu0 %v4744
    %7415 = vmatpush.bf16.msra.mxu0 %v4736
    %7416 = vmatpush.bf16.msra.mxu0 %v4728
    %7417 = vmatpush.bf16.msra.mxu0 %v4720
    %7418 = vmatpush.bf16.msra.mxu0 %v4712
    %7419 = vmatpush.bf16.msra.mxu0 %v4704
    %7420 = vmatpush.bf16.msra.mxu0 %v4696
    %7421 = vmatpush.bf16.msra.mxu0 %v4688
    %7422 = vmatmul.bf16.gmra.mxu0 %v1138
    %v7423 = vpop.f32.mrf.mxu0
    %v7424 = vadd.f32 %v7411, %v7423
    %v7425 = vpop.f32.mrf.mxu0
    %7426 = vdwg.mxu0
    %7427 = vmatpush.bf16.msra.mxu0 %v4808
    %7428 = vmatpush.bf16.msra.mxu0 %v4800
    %7429 = vmatpush.bf16.msra.mxu0 %v4792
    %7430 = vmatpush.bf16.msra.mxu0 %v4784
    %7431 = vmatpush.bf16.msra.mxu0 %v4776
    %7432 = vmatpush.bf16.msra.mxu0 %v4768
    %7433 = vmatpush.bf16.msra.mxu0 %v4760
    %7434 = vmatpush.bf16.msra.mxu0 %v4752
    %7435 = vmatmul.bf16.gmra.mxu0 %v1139
    %v7436 = vpop.f32.mrf.mxu0
    %v7437 = vadd.f32 %v7424, %v7436
    %v7438 = vpop.f32.mrf.mxu0
    %7439 = vdwg.mxu0
    %7440 = vmatpush.bf16.msra.mxu0 %v4872
    %7441 = vmatpush.bf16.msra.mxu0 %v4864
    %7442 = vmatpush.bf16.msra.mxu0 %v4856
    %7443 = vmatpush.bf16.msra.mxu0 %v4848
    %7444 = vmatpush.bf16.msra.mxu0 %v4840
    %7445 = vmatpush.bf16.msra.mxu0 %v4832
    %7446 = vmatpush.bf16.msra.mxu0 %v4824
    %7447 = vmatpush.bf16.msra.mxu0 %v4816
    %7448 = vmatmul.bf16.gmra.mxu0 %v1140
    %v7449 = vpop.f32.mrf.mxu0
    %v7450 = vadd.f32 %v7437, %v7449
    %v7451 = vpop.f32.mrf.mxu0
    %7452 = vdwg.mxu0
    %7453 = vmatpush.bf16.msra.mxu0 %v4936
    %7454 = vmatpush.bf16.msra.mxu0 %v4928
    %7455 = vmatpush.bf16.msra.mxu0 %v4920
    %7456 = vmatpush.bf16.msra.mxu0 %v4912
    %7457 = vmatpush.bf16.msra.mxu0 %v4904
    %7458 = vmatpush.bf16.msra.mxu0 %v4896
    %7459 = vmatpush.bf16.msra.mxu0 %v4888
    %7460 = vmatpush.bf16.msra.mxu0 %v4880
    %7461 = vmatmul.bf16.gmra.mxu0 %v1141
    %v7462 = vpop.f32.mrf.mxu0
    %v7463 = vadd.f32 %v7450, %v7462
    %v7464 = vpop.f32.mrf.mxu0
    %7465 = vdwg.mxu0
    %7466 = vmatpush.bf16.msra.mxu0 %v5000
    %7467 = vmatpush.bf16.msra.mxu0 %v4992
    %7468 = vmatpush.bf16.msra.mxu0 %v4984
    %7469 = vmatpush.bf16.msra.mxu0 %v4976
    %7470 = vmatpush.bf16.msra.mxu0 %v4968
    %7471 = vmatpush.bf16.msra.mxu0 %v4960
    %7472 = vmatpush.bf16.msra.mxu0 %v4952
    %7473 = vmatpush.bf16.msra.mxu0 %v4944
    %7474 = vmatmul.bf16.gmra.mxu0 %v1142
    %v7475 = vpop.f32.mrf.mxu0
    %v7476 = vadd.f32 %v7463, %v7475
    %v7477 = vpop.f32.mrf.mxu0
    %7478 = vdwg.mxu0
    %7479 = vmatpush.bf16.msra.mxu0 %v5064
    %7480 = vmatpush.bf16.msra.mxu0 %v5056
    %7481 = vmatpush.bf16.msra.mxu0 %v5048
    %7482 = vmatpush.bf16.msra.mxu0 %v5040
    %7483 = vmatpush.bf16.msra.mxu0 %v5032
    %7484 = vmatpush.bf16.msra.mxu0 %v5024
    %7485 = vmatpush.bf16.msra.mxu0 %v5016
    %7486 = vmatpush.bf16.msra.mxu0 %v5008
    %7487 = vmatmul.bf16.gmra.mxu0 %v1143
    %v7488 = vpop.f32.mrf.mxu0
    %v7489 = vadd.f32 %v7476, %v7488
    %v7490 = vpop.f32.mrf.mxu0
    %7491 = vdwg.mxu0
    %7492 = vmatpush.bf16.msra.mxu0 %v5128
    %7493 = vmatpush.bf16.msra.mxu0 %v5120
    %7494 = vmatpush.bf16.msra.mxu0 %v5112
    %7495 = vmatpush.bf16.msra.mxu0 %v5104
    %7496 = vmatpush.bf16.msra.mxu0 %v5096
    %7497 = vmatpush.bf16.msra.mxu0 %v5088
    %7498 = vmatpush.bf16.msra.mxu0 %v5080
    %7499 = vmatpush.bf16.msra.mxu0 %v5072
    %7500 = vmatmul.bf16.gmra.mxu0 %v1144
    %v7501 = vpop.f32.mrf.mxu0
    %v7502 = vadd.f32 %v7489, %v7501
    %v7503 = vpop.f32.mrf.mxu0
    %7504 = vdwg.mxu0
    %7505 = vmatpush.bf16.msra.mxu0 %v5192
    %7506 = vmatpush.bf16.msra.mxu0 %v5184
    %7507 = vmatpush.bf16.msra.mxu0 %v5176
    %7508 = vmatpush.bf16.msra.mxu0 %v5168
    %7509 = vmatpush.bf16.msra.mxu0 %v5160
    %7510 = vmatpush.bf16.msra.mxu0 %v5152
    %7511 = vmatpush.bf16.msra.mxu0 %v5144
    %7512 = vmatpush.bf16.msra.mxu0 %v5136
    %7513 = vmatmul.bf16.gmra.mxu0 %v1145
    %v7514 = vpop.f32.mrf.mxu0
    %v7515 = vadd.f32 %v7502, %v7514
    %v7516 = vpop.f32.mrf.mxu0
    %7517 = vdwg.mxu0
    %7518 = vmatpush.bf16.msra.mxu0 %v5256
    %7519 = vmatpush.bf16.msra.mxu0 %v5248
    %7520 = vmatpush.bf16.msra.mxu0 %v5240
    %7521 = vmatpush.bf16.msra.mxu0 %v5232
    %7522 = vmatpush.bf16.msra.mxu0 %v5224
    %7523 = vmatpush.bf16.msra.mxu0 %v5216
    %7524 = vmatpush.bf16.msra.mxu0 %v5208
    %7525 = vmatpush.bf16.msra.mxu0 %v5200
    %7526 = vmatmul.bf16.gmra.mxu0 %v1146
    %v7527 = vpop.f32.mrf.mxu0
    %v7528 = vadd.f32 %v7515, %v7527
    %v7529 = vpop.f32.mrf.mxu0
    %7530 = vdwg.mxu0
    %7531 = vmatpush.bf16.msra.mxu0 %v4297
    %7532 = vmatpush.bf16.msra.mxu0 %v4289
    %7533 = vmatpush.bf16.msra.mxu0 %v4281
    %7534 = vmatpush.bf16.msra.mxu0 %v4273
    %7535 = vmatpush.bf16.msra.mxu0 %v4265
    %7536 = vmatpush.bf16.msra.mxu0 %v4257
    %7537 = vmatpush.bf16.msra.mxu0 %v4249
    %7538 = vmatpush.bf16.msra.mxu0 %v4241
    %7539 = vmatmul.bf16.gmra.mxu0 %v1131
    %v7540 = vpop.f32.mrf.mxu0
    %v7541 = vadd.f32 0.0, %v7540
    %v7542 = vpop.f32.mrf.mxu0
    %7543 = vdwg.mxu0
    %7544 = vmatpush.bf16.msra.mxu0 %v4361
    %7545 = vmatpush.bf16.msra.mxu0 %v4353
    %7546 = vmatpush.bf16.msra.mxu0 %v4345
    %7547 = vmatpush.bf16.msra.mxu0 %v4337
    %7548 = vmatpush.bf16.msra.mxu0 %v4329
    %7549 = vmatpush.bf16.msra.mxu0 %v4321
    %7550 = vmatpush.bf16.msra.mxu0 %v4313
    %7551 = vmatpush.bf16.msra.mxu0 %v4305
    %7552 = vmatmul.bf16.gmra.mxu0 %v1132
    %v7553 = vpop.f32.mrf.mxu0
    %v7554 = vadd.f32 %v7541, %v7553
    %v7555 = vpop.f32.mrf.mxu0
    %7556 = vdwg.mxu0
    %7557 = vmatpush.bf16.msra.mxu0 %v4425
    %7558 = vmatpush.bf16.msra.mxu0 %v4417
    %7559 = vmatpush.bf16.msra.mxu0 %v4409
    %7560 = vmatpush.bf16.msra.mxu0 %v4401
    %7561 = vmatpush.bf16.msra.mxu0 %v4393
    %7562 = vmatpush.bf16.msra.mxu0 %v4385
    %7563 = vmatpush.bf16.msra.mxu0 %v4377
    %7564 = vmatpush.bf16.msra.mxu0 %v4369
    %7565 = vmatmul.bf16.gmra.mxu0 %v1133
    %v7566 = vpop.f32.mrf.mxu0
    %v7567 = vadd.f32 %v7554, %v7566
    %v7568 = vpop.f32.mrf.mxu0
    %7569 = vdwg.mxu0
    %7570 = vmatpush.bf16.msra.mxu0 %v4489
    %7571 = vmatpush.bf16.msra.mxu0 %v4481
    %7572 = vmatpush.bf16.msra.mxu0 %v4473
    %7573 = vmatpush.bf16.msra.mxu0 %v4465
    %7574 = vmatpush.bf16.msra.mxu0 %v4457
    %7575 = vmatpush.bf16.msra.mxu0 %v4449
    %7576 = vmatpush.bf16.msra.mxu0 %v4441
    %7577 = vmatpush.bf16.msra.mxu0 %v4433
    %7578 = vmatmul.bf16.gmra.mxu0 %v1134
    %v7579 = vpop.f32.mrf.mxu0
    %v7580 = vadd.f32 %v7567, %v7579
    %v7581 = vpop.f32.mrf.mxu0
    %7582 = vdwg.mxu0
    %7583 = vmatpush.bf16.msra.mxu0 %v4553
    %7584 = vmatpush.bf16.msra.mxu0 %v4545
    %7585 = vmatpush.bf16.msra.mxu0 %v4537
    %7586 = vmatpush.bf16.msra.mxu0 %v4529
    %7587 = vmatpush.bf16.msra.mxu0 %v4521
    %7588 = vmatpush.bf16.msra.mxu0 %v4513
    %7589 = vmatpush.bf16.msra.mxu0 %v4505
    %7590 = vmatpush.bf16.msra.mxu0 %v4497
    %7591 = vmatmul.bf16.gmra.mxu0 %v1135
    %v7592 = vpop.f32.mrf.mxu0
    %v7593 = vadd.f32 %v7580, %v7592
    %v7594 = vpop.f32.mrf.mxu0
    %7595 = vdwg.mxu0
    %7596 = vmatpush.bf16.msra.mxu0 %v4617
    %7597 = vmatpush.bf16.msra.mxu0 %v4609
    %7598 = vmatpush.bf16.msra.mxu0 %v4601
    %7599 = vmatpush.bf16.msra.mxu0 %v4593
    %7600 = vmatpush.bf16.msra.mxu0 %v4585
    %7601 = vmatpush.bf16.msra.mxu0 %v4577
    %7602 = vmatpush.bf16.msra.mxu0 %v4569
    %7603 = vmatpush.bf16.msra.mxu0 %v4561
    %7604 = vmatmul.bf16.gmra.mxu0 %v1136
    %v7605 = vpop.f32.mrf.mxu0
    %v7606 = vadd.f32 %v7593, %v7605
    %v7607 = vpop.f32.mrf.mxu0
    %7608 = vdwg.mxu0
    %7609 = vmatpush.bf16.msra.mxu0 %v4681
    %7610 = vmatpush.bf16.msra.mxu0 %v4673
    %7611 = vmatpush.bf16.msra.mxu0 %v4665
    %7612 = vmatpush.bf16.msra.mxu0 %v4657
    %7613 = vmatpush.bf16.msra.mxu0 %v4649
    %7614 = vmatpush.bf16.msra.mxu0 %v4641
    %7615 = vmatpush.bf16.msra.mxu0 %v4633
    %7616 = vmatpush.bf16.msra.mxu0 %v4625
    %7617 = vmatmul.bf16.gmra.mxu0 %v1137
    %v7618 = vpop.f32.mrf.mxu0
    %v7619 = vadd.f32 %v7606, %v7618
    %v7620 = vpop.f32.mrf.mxu0
    %7621 = vdwg.mxu0
    %7622 = vmatpush.bf16.msra.mxu0 %v4745
    %7623 = vmatpush.bf16.msra.mxu0 %v4737
    %7624 = vmatpush.bf16.msra.mxu0 %v4729
    %7625 = vmatpush.bf16.msra.mxu0 %v4721
    %7626 = vmatpush.bf16.msra.mxu0 %v4713
    %7627 = vmatpush.bf16.msra.mxu0 %v4705
    %7628 = vmatpush.bf16.msra.mxu0 %v4697
    %7629 = vmatpush.bf16.msra.mxu0 %v4689
    %7630 = vmatmul.bf16.gmra.mxu0 %v1138
    %v7631 = vpop.f32.mrf.mxu0
    %v7632 = vadd.f32 %v7619, %v7631
    %v7633 = vpop.f32.mrf.mxu0
    %7634 = vdwg.mxu0
    %7635 = vmatpush.bf16.msra.mxu0 %v4809
    %7636 = vmatpush.bf16.msra.mxu0 %v4801
    %7637 = vmatpush.bf16.msra.mxu0 %v4793
    %7638 = vmatpush.bf16.msra.mxu0 %v4785
    %7639 = vmatpush.bf16.msra.mxu0 %v4777
    %7640 = vmatpush.bf16.msra.mxu0 %v4769
    %7641 = vmatpush.bf16.msra.mxu0 %v4761
    %7642 = vmatpush.bf16.msra.mxu0 %v4753
    %7643 = vmatmul.bf16.gmra.mxu0 %v1139
    %v7644 = vpop.f32.mrf.mxu0
    %v7645 = vadd.f32 %v7632, %v7644
    %v7646 = vpop.f32.mrf.mxu0
    %7647 = vdwg.mxu0
    %7648 = vmatpush.bf16.msra.mxu0 %v4873
    %7649 = vmatpush.bf16.msra.mxu0 %v4865
    %7650 = vmatpush.bf16.msra.mxu0 %v4857
    %7651 = vmatpush.bf16.msra.mxu0 %v4849
    %7652 = vmatpush.bf16.msra.mxu0 %v4841
    %7653 = vmatpush.bf16.msra.mxu0 %v4833
    %7654 = vmatpush.bf16.msra.mxu0 %v4825
    %7655 = vmatpush.bf16.msra.mxu0 %v4817
    %7656 = vmatmul.bf16.gmra.mxu0 %v1140
    %v7657 = vpop.f32.mrf.mxu0
    %v7658 = vadd.f32 %v7645, %v7657
    %v7659 = vpop.f32.mrf.mxu0
    %7660 = vdwg.mxu0
    %7661 = vmatpush.bf16.msra.mxu0 %v4937
    %7662 = vmatpush.bf16.msra.mxu0 %v4929
    %7663 = vmatpush.bf16.msra.mxu0 %v4921
    %7664 = vmatpush.bf16.msra.mxu0 %v4913
    %7665 = vmatpush.bf16.msra.mxu0 %v4905
    %7666 = vmatpush.bf16.msra.mxu0 %v4897
    %7667 = vmatpush.bf16.msra.mxu0 %v4889
    %7668 = vmatpush.bf16.msra.mxu0 %v4881
    %7669 = vmatmul.bf16.gmra.mxu0 %v1141
    %v7670 = vpop.f32.mrf.mxu0
    %v7671 = vadd.f32 %v7658, %v7670
    %v7672 = vpop.f32.mrf.mxu0
    %7673 = vdwg.mxu0
    %7674 = vmatpush.bf16.msra.mxu0 %v5001
    %7675 = vmatpush.bf16.msra.mxu0 %v4993
    %7676 = vmatpush.bf16.msra.mxu0 %v4985
    %7677 = vmatpush.bf16.msra.mxu0 %v4977
    %7678 = vmatpush.bf16.msra.mxu0 %v4969
    %7679 = vmatpush.bf16.msra.mxu0 %v4961
    %7680 = vmatpush.bf16.msra.mxu0 %v4953
    %7681 = vmatpush.bf16.msra.mxu0 %v4945
    %7682 = vmatmul.bf16.gmra.mxu0 %v1142
    %v7683 = vpop.f32.mrf.mxu0
    %v7684 = vadd.f32 %v7671, %v7683
    %v7685 = vpop.f32.mrf.mxu0
    %7686 = vdwg.mxu0
    %7687 = vmatpush.bf16.msra.mxu0 %v5065
    %7688 = vmatpush.bf16.msra.mxu0 %v5057
    %7689 = vmatpush.bf16.msra.mxu0 %v5049
    %7690 = vmatpush.bf16.msra.mxu0 %v5041
    %7691 = vmatpush.bf16.msra.mxu0 %v5033
    %7692 = vmatpush.bf16.msra.mxu0 %v5025
    %7693 = vmatpush.bf16.msra.mxu0 %v5017
    %7694 = vmatpush.bf16.msra.mxu0 %v5009
    %7695 = vmatmul.bf16.gmra.mxu0 %v1143
    %v7696 = vpop.f32.mrf.mxu0
    %v7697 = vadd.f32 %v7684, %v7696
    %v7698 = vpop.f32.mrf.mxu0
    %7699 = vdwg.mxu0
    %7700 = vmatpush.bf16.msra.mxu0 %v5129
    %7701 = vmatpush.bf16.msra.mxu0 %v5121
    %7702 = vmatpush.bf16.msra.mxu0 %v5113
    %7703 = vmatpush.bf16.msra.mxu0 %v5105
    %7704 = vmatpush.bf16.msra.mxu0 %v5097
    %7705 = vmatpush.bf16.msra.mxu0 %v5089
    %7706 = vmatpush.bf16.msra.mxu0 %v5081
    %7707 = vmatpush.bf16.msra.mxu0 %v5073
    %7708 = vmatmul.bf16.gmra.mxu0 %v1144
    %v7709 = vpop.f32.mrf.mxu0
    %v7710 = vadd.f32 %v7697, %v7709
    %v7711 = vpop.f32.mrf.mxu0
    %7712 = vdwg.mxu0
    %7713 = vmatpush.bf16.msra.mxu0 %v5193
    %7714 = vmatpush.bf16.msra.mxu0 %v5185
    %7715 = vmatpush.bf16.msra.mxu0 %v5177
    %7716 = vmatpush.bf16.msra.mxu0 %v5169
    %7717 = vmatpush.bf16.msra.mxu0 %v5161
    %7718 = vmatpush.bf16.msra.mxu0 %v5153
    %7719 = vmatpush.bf16.msra.mxu0 %v5145
    %7720 = vmatpush.bf16.msra.mxu0 %v5137
    %7721 = vmatmul.bf16.gmra.mxu0 %v1145
    %v7722 = vpop.f32.mrf.mxu0
    %v7723 = vadd.f32 %v7710, %v7722
    %v7724 = vpop.f32.mrf.mxu0
    %7725 = vdwg.mxu0
    %7726 = vmatpush.bf16.msra.mxu0 %v5257
    %7727 = vmatpush.bf16.msra.mxu0 %v5249
    %7728 = vmatpush.bf16.msra.mxu0 %v5241
    %7729 = vmatpush.bf16.msra.mxu0 %v5233
    %7730 = vmatpush.bf16.msra.mxu0 %v5225
    %7731 = vmatpush.bf16.msra.mxu0 %v5217
    %7732 = vmatpush.bf16.msra.mxu0 %v5209
    %7733 = vmatpush.bf16.msra.mxu0 %v5201
    %7734 = vmatmul.bf16.gmra.mxu0 %v1146
    %v7735 = vpop.f32.mrf.mxu0
    %v7736 = vadd.f32 %v7723, %v7735
    %v7737 = vpop.f32.mrf.mxu0
    %7738 = vdwg.mxu0
    %7739 = vmatpush.bf16.msra.mxu0 %v4298
    %7740 = vmatpush.bf16.msra.mxu0 %v4290
    %7741 = vmatpush.bf16.msra.mxu0 %v4282
    %7742 = vmatpush.bf16.msra.mxu0 %v4274
    %7743 = vmatpush.bf16.msra.mxu0 %v4266
    %7744 = vmatpush.bf16.msra.mxu0 %v4258
    %7745 = vmatpush.bf16.msra.mxu0 %v4250
    %7746 = vmatpush.bf16.msra.mxu0 %v4242
    %7747 = vmatmul.bf16.gmra.mxu0 %v1131
    %v7748 = vpop.f32.mrf.mxu0
    %v7749 = vadd.f32 0.0, %v7748
    %v7750 = vpop.f32.mrf.mxu0
    %7751 = vdwg.mxu0
    %7752 = vmatpush.bf16.msra.mxu0 %v4362
    %7753 = vmatpush.bf16.msra.mxu0 %v4354
    %7754 = vmatpush.bf16.msra.mxu0 %v4346
    %7755 = vmatpush.bf16.msra.mxu0 %v4338
    %7756 = vmatpush.bf16.msra.mxu0 %v4330
    %7757 = vmatpush.bf16.msra.mxu0 %v4322
    %7758 = vmatpush.bf16.msra.mxu0 %v4314
    %7759 = vmatpush.bf16.msra.mxu0 %v4306
    %7760 = vmatmul.bf16.gmra.mxu0 %v1132
    %v7761 = vpop.f32.mrf.mxu0
    %v7762 = vadd.f32 %v7749, %v7761
    %v7763 = vpop.f32.mrf.mxu0
    %7764 = vdwg.mxu0
    %7765 = vmatpush.bf16.msra.mxu0 %v4426
    %7766 = vmatpush.bf16.msra.mxu0 %v4418
    %7767 = vmatpush.bf16.msra.mxu0 %v4410
    %7768 = vmatpush.bf16.msra.mxu0 %v4402
    %7769 = vmatpush.bf16.msra.mxu0 %v4394
    %7770 = vmatpush.bf16.msra.mxu0 %v4386
    %7771 = vmatpush.bf16.msra.mxu0 %v4378
    %7772 = vmatpush.bf16.msra.mxu0 %v4370
    %7773 = vmatmul.bf16.gmra.mxu0 %v1133
    %v7774 = vpop.f32.mrf.mxu0
    %v7775 = vadd.f32 %v7762, %v7774
    %v7776 = vpop.f32.mrf.mxu0
    %7777 = vdwg.mxu0
    %7778 = vmatpush.bf16.msra.mxu0 %v4490
    %7779 = vmatpush.bf16.msra.mxu0 %v4482
    %7780 = vmatpush.bf16.msra.mxu0 %v4474
    %7781 = vmatpush.bf16.msra.mxu0 %v4466
    %7782 = vmatpush.bf16.msra.mxu0 %v4458
    %7783 = vmatpush.bf16.msra.mxu0 %v4450
    %7784 = vmatpush.bf16.msra.mxu0 %v4442
    %7785 = vmatpush.bf16.msra.mxu0 %v4434
    %7786 = vmatmul.bf16.gmra.mxu0 %v1134
    %v7787 = vpop.f32.mrf.mxu0
    %v7788 = vadd.f32 %v7775, %v7787
    %v7789 = vpop.f32.mrf.mxu0
    %7790 = vdwg.mxu0
    %7791 = vmatpush.bf16.msra.mxu0 %v4554
    %7792 = vmatpush.bf16.msra.mxu0 %v4546
    %7793 = vmatpush.bf16.msra.mxu0 %v4538
    %7794 = vmatpush.bf16.msra.mxu0 %v4530
    %7795 = vmatpush.bf16.msra.mxu0 %v4522
    %7796 = vmatpush.bf16.msra.mxu0 %v4514
    %7797 = vmatpush.bf16.msra.mxu0 %v4506
    %7798 = vmatpush.bf16.msra.mxu0 %v4498
    %7799 = vmatmul.bf16.gmra.mxu0 %v1135
    %v7800 = vpop.f32.mrf.mxu0
    %v7801 = vadd.f32 %v7788, %v7800
    %v7802 = vpop.f32.mrf.mxu0
    %7803 = vdwg.mxu0
    %7804 = vmatpush.bf16.msra.mxu0 %v4618
    %7805 = vmatpush.bf16.msra.mxu0 %v4610
    %7806 = vmatpush.bf16.msra.mxu0 %v4602
    %7807 = vmatpush.bf16.msra.mxu0 %v4594
    %7808 = vmatpush.bf16.msra.mxu0 %v4586
    %7809 = vmatpush.bf16.msra.mxu0 %v4578
    %7810 = vmatpush.bf16.msra.mxu0 %v4570
    %7811 = vmatpush.bf16.msra.mxu0 %v4562
    %7812 = vmatmul.bf16.gmra.mxu0 %v1136
    %v7813 = vpop.f32.mrf.mxu0
    %v7814 = vadd.f32 %v7801, %v7813
    %v7815 = vpop.f32.mrf.mxu0
    %7816 = vdwg.mxu0
    %7817 = vmatpush.bf16.msra.mxu0 %v4682
    %7818 = vmatpush.bf16.msra.mxu0 %v4674
    %7819 = vmatpush.bf16.msra.mxu0 %v4666
    %7820 = vmatpush.bf16.msra.mxu0 %v4658
    %7821 = vmatpush.bf16.msra.mxu0 %v4650
    %7822 = vmatpush.bf16.msra.mxu0 %v4642
    %7823 = vmatpush.bf16.msra.mxu0 %v4634
    %7824 = vmatpush.bf16.msra.mxu0 %v4626
    %7825 = vmatmul.bf16.gmra.mxu0 %v1137
    %v7826 = vpop.f32.mrf.mxu0
    %v7827 = vadd.f32 %v7814, %v7826
    %v7828 = vpop.f32.mrf.mxu0
    %7829 = vdwg.mxu0
    %7830 = vmatpush.bf16.msra.mxu0 %v4746
    %7831 = vmatpush.bf16.msra.mxu0 %v4738
    %7832 = vmatpush.bf16.msra.mxu0 %v4730
    %7833 = vmatpush.bf16.msra.mxu0 %v4722
    %7834 = vmatpush.bf16.msra.mxu0 %v4714
    %7835 = vmatpush.bf16.msra.mxu0 %v4706
    %7836 = vmatpush.bf16.msra.mxu0 %v4698
    %7837 = vmatpush.bf16.msra.mxu0 %v4690
    %7838 = vmatmul.bf16.gmra.mxu0 %v1138
    %v7839 = vpop.f32.mrf.mxu0
    %v7840 = vadd.f32 %v7827, %v7839
    %v7841 = vpop.f32.mrf.mxu0
    %7842 = vdwg.mxu0
    %7843 = vmatpush.bf16.msra.mxu0 %v4810
    %7844 = vmatpush.bf16.msra.mxu0 %v4802
    %7845 = vmatpush.bf16.msra.mxu0 %v4794
    %7846 = vmatpush.bf16.msra.mxu0 %v4786
    %7847 = vmatpush.bf16.msra.mxu0 %v4778
    %7848 = vmatpush.bf16.msra.mxu0 %v4770
    %7849 = vmatpush.bf16.msra.mxu0 %v4762
    %7850 = vmatpush.bf16.msra.mxu0 %v4754
    %7851 = vmatmul.bf16.gmra.mxu0 %v1139
    %v7852 = vpop.f32.mrf.mxu0
    %v7853 = vadd.f32 %v7840, %v7852
    %v7854 = vpop.f32.mrf.mxu0
    %7855 = vdwg.mxu0
    %7856 = vmatpush.bf16.msra.mxu0 %v4874
    %7857 = vmatpush.bf16.msra.mxu0 %v4866
    %7858 = vmatpush.bf16.msra.mxu0 %v4858
    %7859 = vmatpush.bf16.msra.mxu0 %v4850
    %7860 = vmatpush.bf16.msra.mxu0 %v4842
    %7861 = vmatpush.bf16.msra.mxu0 %v4834
    %7862 = vmatpush.bf16.msra.mxu0 %v4826
    %7863 = vmatpush.bf16.msra.mxu0 %v4818
    %7864 = vmatmul.bf16.gmra.mxu0 %v1140
    %v7865 = vpop.f32.mrf.mxu0
    %v7866 = vadd.f32 %v7853, %v7865
    %v7867 = vpop.f32.mrf.mxu0
    %7868 = vdwg.mxu0
    %7869 = vmatpush.bf16.msra.mxu0 %v4938
    %7870 = vmatpush.bf16.msra.mxu0 %v4930
    %7871 = vmatpush.bf16.msra.mxu0 %v4922
    %7872 = vmatpush.bf16.msra.mxu0 %v4914
    %7873 = vmatpush.bf16.msra.mxu0 %v4906
    %7874 = vmatpush.bf16.msra.mxu0 %v4898
    %7875 = vmatpush.bf16.msra.mxu0 %v4890
    %7876 = vmatpush.bf16.msra.mxu0 %v4882
    %7877 = vmatmul.bf16.gmra.mxu0 %v1141
    %v7878 = vpop.f32.mrf.mxu0
    %v7879 = vadd.f32 %v7866, %v7878
    %v7880 = vpop.f32.mrf.mxu0
    %7881 = vdwg.mxu0
    %7882 = vmatpush.bf16.msra.mxu0 %v5002
    %7883 = vmatpush.bf16.msra.mxu0 %v4994
    %7884 = vmatpush.bf16.msra.mxu0 %v4986
    %7885 = vmatpush.bf16.msra.mxu0 %v4978
    %7886 = vmatpush.bf16.msra.mxu0 %v4970
    %7887 = vmatpush.bf16.msra.mxu0 %v4962
    %7888 = vmatpush.bf16.msra.mxu0 %v4954
    %7889 = vmatpush.bf16.msra.mxu0 %v4946
    %7890 = vmatmul.bf16.gmra.mxu0 %v1142
    %v7891 = vpop.f32.mrf.mxu0
    %v7892 = vadd.f32 %v7879, %v7891
    %v7893 = vpop.f32.mrf.mxu0
    %7894 = vdwg.mxu0
    %7895 = vmatpush.bf16.msra.mxu0 %v5066
    %7896 = vmatpush.bf16.msra.mxu0 %v5058
    %7897 = vmatpush.bf16.msra.mxu0 %v5050
    %7898 = vmatpush.bf16.msra.mxu0 %v5042
    %7899 = vmatpush.bf16.msra.mxu0 %v5034
    %7900 = vmatpush.bf16.msra.mxu0 %v5026
    %7901 = vmatpush.bf16.msra.mxu0 %v5018
    %7902 = vmatpush.bf16.msra.mxu0 %v5010
    %7903 = vmatmul.bf16.gmra.mxu0 %v1143
    %v7904 = vpop.f32.mrf.mxu0
    %v7905 = vadd.f32 %v7892, %v7904
    %v7906 = vpop.f32.mrf.mxu0
    %7907 = vdwg.mxu0
    %7908 = vmatpush.bf16.msra.mxu0 %v5130
    %7909 = vmatpush.bf16.msra.mxu0 %v5122
    %7910 = vmatpush.bf16.msra.mxu0 %v5114
    %7911 = vmatpush.bf16.msra.mxu0 %v5106
    %7912 = vmatpush.bf16.msra.mxu0 %v5098
    %7913 = vmatpush.bf16.msra.mxu0 %v5090
    %7914 = vmatpush.bf16.msra.mxu0 %v5082
    %7915 = vmatpush.bf16.msra.mxu0 %v5074
    %7916 = vmatmul.bf16.gmra.mxu0 %v1144
    %v7917 = vpop.f32.mrf.mxu0
    %v7918 = vadd.f32 %v7905, %v7917
    %v7919 = vpop.f32.mrf.mxu0
    %7920 = vdwg.mxu0
    %7921 = vmatpush.bf16.msra.mxu0 %v5194
    %7922 = vmatpush.bf16.msra.mxu0 %v5186
    %7923 = vmatpush.bf16.msra.mxu0 %v5178
    %7924 = vmatpush.bf16.msra.mxu0 %v5170
    %7925 = vmatpush.bf16.msra.mxu0 %v5162
    %7926 = vmatpush.bf16.msra.mxu0 %v5154
    %7927 = vmatpush.bf16.msra.mxu0 %v5146
    %7928 = vmatpush.bf16.msra.mxu0 %v5138
    %7929 = vmatmul.bf16.gmra.mxu0 %v1145
    %v7930 = vpop.f32.mrf.mxu0
    %v7931 = vadd.f32 %v7918, %v7930
    %v7932 = vpop.f32.mrf.mxu0
    %7933 = vdwg.mxu0
    %7934 = vmatpush.bf16.msra.mxu0 %v5258
    %7935 = vmatpush.bf16.msra.mxu0 %v5250
    %7936 = vmatpush.bf16.msra.mxu0 %v5242
    %7937 = vmatpush.bf16.msra.mxu0 %v5234
    %7938 = vmatpush.bf16.msra.mxu0 %v5226
    %7939 = vmatpush.bf16.msra.mxu0 %v5218
    %7940 = vmatpush.bf16.msra.mxu0 %v5210
    %7941 = vmatpush.bf16.msra.mxu0 %v5202
    %7942 = vmatmul.bf16.gmra.mxu0 %v1146
    %v7943 = vpop.f32.mrf.mxu0
    %v7944 = vadd.f32 %v7931, %v7943
    %v7945 = vpop.f32.mrf.mxu0
    %7946 = vdwg.mxu0
    %v7947 = vrot.slane %v6488, 4
    %v7948 = vadd.f32 %v6488, %v7947
    %v7949 = vrot.slane %v7948, 2
    %v7950 = vadd.f32 %v7948, %v7949
    %v7951 = vrot.slane %v7950, 1
    %v7952 = vadd.f32 %v7950, %v7951
    %v7953 = vrot.slane %v6696, 4
    %v7954 = vadd.f32 %v6696, %v7953
    %v7955 = vrot.slane %v7954, 2
    %v7956 = vadd.f32 %v7954, %v7955
    %v7957 = vrot.slane %v7956, 1
    %v7958 = vadd.f32 %v7956, %v7957
    %v7959 = vrot.slane %v6904, 4
    %v7960 = vadd.f32 %v6904, %v7959
    %v7961 = vrot.slane %v7960, 2
    %v7962 = vadd.f32 %v7960, %v7961
    %v7963 = vrot.slane %v7962, 1
    %v7964 = vadd.f32 %v7962, %v7963
    %v7965 = vrot.slane %v7112, 4
    %v7966 = vadd.f32 %v7112, %v7965
    %v7967 = vrot.slane %v7966, 2
    %v7968 = vadd.f32 %v7966, %v7967
    %v7969 = vrot.slane %v7968, 1
    %v7970 = vadd.f32 %v7968, %v7969
    %v7971 = vrot.slane %v7320, 4
    %v7972 = vadd.f32 %v7320, %v7971
    %v7973 = vrot.slane %v7972, 2
    %v7974 = vadd.f32 %v7972, %v7973
    %v7975 = vrot.slane %v7974, 1
    %v7976 = vadd.f32 %v7974, %v7975
    %v7977 = vrot.slane %v7528, 4
    %v7978 = vadd.f32 %v7528, %v7977
    %v7979 = vrot.slane %v7978, 2
    %v7980 = vadd.f32 %v7978, %v7979
    %v7981 = vrot.slane %v7980, 1
    %v7982 = vadd.f32 %v7980, %v7981
    %v7983 = vrot.slane %v7736, 4
    %v7984 = vadd.f32 %v7736, %v7983
    %v7985 = vrot.slane %v7984, 2
    %v7986 = vadd.f32 %v7984, %v7985
    %v7987 = vrot.slane %v7986, 1
    %v7988 = vadd.f32 %v7986, %v7987
    %v7989 = vrot.slane %v7944, 4
    %v7990 = vadd.f32 %v7944, %v7989
    %v7991 = vrot.slane %v7990, 2
    %v7992 = vadd.f32 %v7990, %v7991
    %v7993 = vrot.slane %v7992, 1
    %v7994 = vadd.f32 %v7992, %v7993
    %v7995 = vmul.f32 %v6488, %v6488
    %v7996 = vmul.f32 %v6696, %v6696
    %v7997 = vmul.f32 %v6904, %v6904
    %v7998 = vmul.f32 %v7112, %v7112
    %v7999 = vmul.f32 %v7320, %v7320
    %v8000 = vmul.f32 %v7528, %v7528
    %v8001 = vmul.f32 %v7736, %v7736
    %v8002 = vmul.f32 %v7944, %v7944
    %v8003 = vrot.slane %v7995, 4
    %v8004 = vadd.f32 %v7995, %v8003
    %v8005 = vrot.slane %v8004, 2
    %v8006 = vadd.f32 %v8004, %v8005
    %v8007 = vrot.slane %v8006, 1
    %v8008 = vadd.f32 %v8006, %v8007
    %v8009 = vrot.slane %v7996, 4
    %v8010 = vadd.f32 %v7996, %v8009
    %v8011 = vrot.slane %v8010, 2
    %v8012 = vadd.f32 %v8010, %v8011
    %v8013 = vrot.slane %v8012, 1
    %v8014 = vadd.f32 %v8012, %v8013
    %v8015 = vrot.slane %v7997, 4
    %v8016 = vadd.f32 %v7997, %v8015
    %v8017 = vrot.slane %v8016, 2
    %v8018 = vadd.f32 %v8016, %v8017
    %v8019 = vrot.slane %v8018, 1
    %v8020 = vadd.f32 %v8018, %v8019
    %v8021 = vrot.slane %v7998, 4
    %v8022 = vadd.f32 %v7998, %v8021
    %v8023 = vrot.slane %v8022, 2
    %v8024 = vadd.f32 %v8022, %v8023
    %v8025 = vrot.slane %v8024, 1
    %v8026 = vadd.f32 %v8024, %v8025
    %v8027 = vrot.slane %v7999, 4
    %v8028 = vadd.f32 %v7999, %v8027
    %v8029 = vrot.slane %v8028, 2
    %v8030 = vadd.f32 %v8028, %v8029
    %v8031 = vrot.slane %v8030, 1
    %v8032 = vadd.f32 %v8030, %v8031
    %v8033 = vrot.slane %v8000, 4
    %v8034 = vadd.f32 %v8000, %v8033
    %v8035 = vrot.slane %v8034, 2
    %v8036 = vadd.f32 %v8034, %v8035
    %v8037 = vrot.slane %v8036, 1
    %v8038 = vadd.f32 %v8036, %v8037
    %v8039 = vrot.slane %v8001, 4
    %v8040 = vadd.f32 %v8001, %v8039
    %v8041 = vrot.slane %v8040, 2
    %v8042 = vadd.f32 %v8040, %v8041
    %v8043 = vrot.slane %v8042, 1
    %v8044 = vadd.f32 %v8042, %v8043
    %v8045 = vrot.slane %v8002, 4
    %v8046 = vadd.f32 %v8002, %v8045
    %v8047 = vrot.slane %v8046, 2
    %v8048 = vadd.f32 %v8046, %v8047
    %v8049 = vrot.slane %v8048, 1
    %v8050 = vadd.f32 %v8048, %v8049
    %v8051 = vmul.f32 %v7952, 0.125
    %v8052 = vmul.f32 %v7958, 0.125
    %v8053 = vmul.f32 %v7964, 0.125
    %v8054 = vmul.f32 %v7970, 0.125
    %v8055 = vmul.f32 %v7976, 0.125
    %v8056 = vmul.f32 %v7982, 0.125
    %v8057 = vmul.f32 %v7988, 0.125
    %v8058 = vmul.f32 %v7994, 0.125
    %v8059 = vmul.f32 %v8008, 0.125
    %v8060 = vmul.f32 %v8014, 0.125
    %v8061 = vmul.f32 %v8020, 0.125
    %v8062 = vmul.f32 %v8026, 0.125
    %v8063 = vmul.f32 %v8032, 0.125
    %v8064 = vmul.f32 %v8038, 0.125
    %v8065 = vmul.f32 %v8044, 0.125
    %v8066 = vmul.f32 %v8050, 0.125
    %v8067 = vmul.f32 %v8051, %v8051
    %v8068 = vmul.f32 %v8052, %v8052
    %v8069 = vmul.f32 %v8053, %v8053
    %v8070 = vmul.f32 %v8054, %v8054
    %v8071 = vmul.f32 %v8055, %v8055
    %v8072 = vmul.f32 %v8056, %v8056
    %v8073 = vmul.f32 %v8057, %v8057
    %v8074 = vmul.f32 %v8058, %v8058
    %v8075 = vsub.f32 %v8059, %v8067
    %v8076 = vsub.f32 %v8060, %v8068
    %v8077 = vsub.f32 %v8061, %v8069
    %v8078 = vsub.f32 %v8062, %v8070
    %v8079 = vsub.f32 %v8063, %v8071
    %v8080 = vsub.f32 %v8064, %v8072
    %v8081 = vsub.f32 %v8065, %v8073
    %v8082 = vsub.f32 %v8066, %v8074
    %v8083 = vld [vmem:[#allocation7] sm:$0xff]
    %v8084 = vadd.f32 %v8075, 1e-05
    %v8085 = vadd.f32 %v8076, 1e-05
    %v8086 = vadd.f32 %v8077, 1e-05
    %v8087 = vadd.f32 %v8078, 1e-05
    %v8088 = vadd.f32 %v8079, 1e-05
    %v8089 = vadd.f32 %v8080, 1e-05
    %v8090 = vadd.f32 %v8081, 1e-05
    %v8091 = vadd.f32 %v8082, 1e-05
    %v8092 = vrsqrt.pop %v8084
    %v8093 = vmul.f32 %v8092, %v8084
    %v8094 = vmul.f32 %v8093, %v8092
    %v8095 = vmul.f32 0.5, %v8094
    %v8096 = vsub.f32 1.5, %v8095
    %v8097 = vmul.f32 %v8092, %v8096
    %vm8098 = vweird.f32 %v8084
    %vm8099 = vweird.f32 %v8092
    %vm8100 = vmor %vm8098, %vm8099
    %v8101 = vsel %vm8100, %v8092, %v8097
    %v8102 = vrsqrt.pop %v8085
    %v8103 = vmul.f32 %v8102, %v8085
    %v8104 = vmul.f32 %v8103, %v8102
    %v8105 = vmul.f32 0.5, %v8104
    %v8106 = vsub.f32 1.5, %v8105
    %v8107 = vmul.f32 %v8102, %v8106
    %vm8108 = vweird.f32 %v8085
    %vm8109 = vweird.f32 %v8102
    %vm8110 = vmor %vm8108, %vm8109
    %v8111 = vsel %vm8110, %v8102, %v8107
    %v8112 = vrsqrt.pop %v8086
    %v8113 = vmul.f32 %v8112, %v8086
    %v8114 = vmul.f32 %v8113, %v8112
    %v8115 = vmul.f32 0.5, %v8114
    %v8116 = vsub.f32 1.5, %v8115
    %v8117 = vmul.f32 %v8112, %v8116
    %vm8118 = vweird.f32 %v8086
    %vm8119 = vweird.f32 %v8112
    %vm8120 = vmor %vm8118, %vm8119
    %v8121 = vsel %vm8120, %v8112, %v8117
    %v8122 = vrsqrt.pop %v8087
    %v8123 = vmul.f32 %v8122, %v8087
    %v8124 = vmul.f32 %v8123, %v8122
    %v8125 = vmul.f32 0.5, %v8124
    %v8126 = vsub.f32 1.5, %v8125
    %v8127 = vmul.f32 %v8122, %v8126
    %vm8128 = vweird.f32 %v8087
    %vm8129 = vweird.f32 %v8122
    %vm8130 = vmor %vm8128, %vm8129
    %v8131 = vsel %vm8130, %v8122, %v8127
    %v8132 = vrsqrt.pop %v8088
    %v8133 = vmul.f32 %v8132, %v8088
    %v8134 = vmul.f32 %v8133, %v8132
    %v8135 = vmul.f32 0.5, %v8134
    %v8136 = vsub.f32 1.5, %v8135
    %v8137 = vmul.f32 %v8132, %v8136
    %vm8138 = vweird.f32 %v8088
    %vm8139 = vweird.f32 %v8132
    %vm8140 = vmor %vm8138, %vm8139
    %v8141 = vsel %vm8140, %v8132, %v8137
    %v8142 = vrsqrt.pop %v8089
    %v8143 = vmul.f32 %v8142, %v8089
    %v8144 = vmul.f32 %v8143, %v8142
    %v8145 = vmul.f32 0.5, %v8144
    %v8146 = vsub.f32 1.5, %v8145
    %v8147 = vmul.f32 %v8142, %v8146
    %vm8148 = vweird.f32 %v8089
    %vm8149 = vweird.f32 %v8142
    %vm8150 = vmor %vm8148, %vm8149
    %v8151 = vsel %vm8150, %v8142, %v8147
    %v8152 = vrsqrt.pop %v8090
    %v8153 = vmul.f32 %v8152, %v8090
    %v8154 = vmul.f32 %v8153, %v8152
    %v8155 = vmul.f32 0.5, %v8154
    %v8156 = vsub.f32 1.5, %v8155
    %v8157 = vmul.f32 %v8152, %v8156
    %vm8158 = vweird.f32 %v8090
    %vm8159 = vweird.f32 %v8152
    %vm8160 = vmor %vm8158, %vm8159
    %v8161 = vsel %vm8160, %v8152, %v8157
    %v8162 = vrsqrt.pop %v8091
    %v8163 = vmul.f32 %v8162, %v8091
    %v8164 = vmul.f32 %v8163, %v8162
    %v8165 = vmul.f32 0.5, %v8164
    %v8166 = vsub.f32 1.5, %v8165
    %v8167 = vmul.f32 %v8162, %v8166
    %vm8168 = vweird.f32 %v8091
    %vm8169 = vweird.f32 %v8162
    %vm8170 = vmor %vm8168, %vm8169
    %v8171 = vsel %vm8170, %v8162, %v8167
    %v8180 = vrot.slane %v8111, 7
    %v8181 = vrot.slane %v8121, 6
    %v8182 = vrot.slane %v8131, 5
    %v8183 = vrot.slane %v8141, 4
    %v8184 = vrot.slane %v8151, 3
    %v8185 = vrot.slane %v8161, 2
    %v8186 = vrot.slane %v8171, 1
    %vm8187 = vcmask 1040384
    %v8188 = vsel %vm8187, %v8101, %v8180
    %vm8189 = vcmask 1042434
    %v8190 = vsel %vm8189, %v8181, %v8182
    %vm8191 = vcmask 1041408
    %v8192 = vsel %vm8191, %v8188, %v8190
    %vm8193 = vcmask 1044484
    %v8194 = vsel %vm8193, %v8183, %v8184
    %vm8195 = vcmask 1046534
    %v8196 = vsel %vm8195, %v8185, %v8186
    %vm8197 = vcmask 1045508
    %v8198 = vsel %vm8197, %v8194, %v8196
    %vm8199 = vcmask 1043456
    %v8200 = vsel %vm8199, %v8192, %v8198
    %v8202 = vmul.f32 %v8083, %v8200
    %v8203 = vld [vmem:[#allocation8] sm:$0xff]
    %v8205 = vperm.slane %v8202, 0
    %v8206 = vperm.slane %v8202, 1
    %v8207 = vperm.slane %v8202, 2
    %v8208 = vperm.slane %v8202, 3
    %v8209 = vperm.slane %v8202, 4
    %v8210 = vperm.slane %v8202, 5
    %v8211 = vperm.slane %v8202, 6
    %v8212 = vperm.slane %v8202, 7
    %v8221 = vmul.f32 %v8051, %v8205
    %v8222 = vmul.f32 %v8052, %v8206
    %v8223 = vmul.f32 %v8053, %v8207
    %v8224 = vmul.f32 %v8054, %v8208
    %v8225 = vmul.f32 %v8055, %v8209
    %v8226 = vmul.f32 %v8056, %v8210
    %v8227 = vmul.f32 %v8057, %v8211
    %v8228 = vmul.f32 %v8058, %v8212
    %v8237 = vrot.slane %v8222, 7
    %v8238 = vrot.slane %v8223, 6
    %v8239 = vrot.slane %v8224, 5
    %v8240 = vrot.slane %v8225, 4
    %v8241 = vrot.slane %v8226, 3
    %v8242 = vrot.slane %v8227, 2
    %v8243 = vrot.slane %v8228, 1
    %v8244 = vsel %vm8187, %v8221, %v8237
    %v8245 = vsel %vm8189, %v8238, %v8239
    %v8246 = vsel %vm8191, %v8244, %v8245
    %v8247 = vsel %vm8193, %v8240, %v8241
    %v8248 = vsel %vm8195, %v8242, %v8243
    %v8249 = vsel %vm8197, %v8247, %v8248
    %v8250 = vsel %vm8199, %v8246, %v8249
    %v8252 = vsub.f32 %v8203, %v8250
    %v8253 = vmul.f32 %v6488, %v8205
    %v8254 = vmul.f32 %v6696, %v8206
    %v8255 = vmul.f32 %v6904, %v8207
    %v8256 = vmul.f32 %v7112, %v8208
    %v8257 = vmul.f32 %v7320, %v8209
    %v8258 = vmul.f32 %v7528, %v8210
    %v8259 = vmul.f32 %v7736, %v8211
    %v8260 = vmul.f32 %v7944, %v8212
    %v8262 = vperm.slane %v8252, 0
    %v8263 = vperm.slane %v8252, 1
    %v8264 = vperm.slane %v8252, 2
    %v8265 = vperm.slane %v8252, 3
    %v8266 = vperm.slane %v8252, 4
    %v8267 = vperm.slane %v8252, 5
    %v8268 = vperm.slane %v8252, 6
    %v8269 = vperm.slane %v8252, 7
    %v8278 = vadd.f32 %v8253, %v8262
    %v8279 = vadd.f32 %v8254, %v8263
    %v8280 = vadd.f32 %v8255, %v8264
    %v8281 = vadd.f32 %v8256, %v8265
    %v8282 = vadd.f32 %v8257, %v8266
    %v8283 = vadd.f32 %v8258, %v8267
    %v8284 = vadd.f32 %v8259, %v8268
    %v8285 = vadd.f32 %v8260, %v8269
    %v8286 = vpack.c.bf16 %v8279, %v8278
    %v8287 = vpack.c.bf16 %v8281, %v8280
    %v8288 = vpack.c.bf16 %v8283, %v8282
    %v8289 = vpack.c.bf16 %v8285, %v8284
    %8290 = vst [vmem:[#allocation10] sm:$0xff] %v8286
    %8291 = vst [vmem:[#allocation10 + $0x8] sm:$0xff] %v8287
    %8292 = vst [vmem:[#allocation10 + $0x10] sm:$0xff] %v8288
    %8293 = vst [vmem:[#allocation10 + $0x18] sm:$0xff] %v8289
    // Predicated region
    $region34: #{tpu_custom_call.1} parent=1 // pred_check
      _
    $region35: #{tpu_custom_call.1} parent=1 // pred_check_branch
      %8295 = sbr.rel (0) target = $region37
    $region36: #{tpu_custom_call.1} parent=1 // pred_region
      %8297 = vsyncadd [#allocation4], 0
      %s8299 = sshll.u32 [#allocation10], 4
      %s8300 = int_to_ptr.vmem [resolvable:$true] %s8299
      %s8301 = sshll.u32 %s4, 4
      %s8302 = int_to_ptr.hbm [resolvable:$true] %s8301
      %8304 = dma.vmem_to_hbm [thread:$0]  %s8300, 512, %s8302, [#allocation4]
    $region37: #{tpu_custom_call.1} parent=1 // pred_fallthru
      _
    // Predicated region
    $region38: #{tpu_custom_call.1} parent=1 // pred_check
      _
    $region39: #{tpu_custom_call.1} parent=1 // pred_check_branch
      %8306 = sbr.rel (0) target = $region41
    $region40: #{tpu_custom_call.1} parent=1 // pred_region
      %8308 = dma.done [#allocation4], 512
    $region41: #{tpu_custom_call.1} parent=1 // pred_fallthru
      _
    %8309 = vsyncpa [#allocation3], 1
    %8310 = vsyncpa [#allocation6], 1
    %8311 = vsyncpa [#allocation9], 1
    %8312 = vsyncpa [#allocation4], 1

</llo_original>
